<compile_context>
chip_gen: v6e
topology: v6e:2x2x1
jax: 0.10.0
libtpu: 0.0.40
codegen_flags: <defaults>
</compile_context>

<pallas_src>
import jax
import jax.numpy as jnp
from jax import lax
from jax.experimental import pallas as pl
from jax.experimental.pallas import tpu as pltpu

F32 = jnp.float32
BF16 = jnp.bfloat16
_HEAD_SLOT = 128          # lanes per head slot (head_size zero-padded up to this)


def _round_up(x, m):
    return (x + m - 1) // m * m


def _vmem_limit_bytes():
    """Generation-aware scoped-VMEM budget: ~3/4 of physical VMEM, safe fallback."""
    try:
        cap = getattr(pltpu.get_tpu_info(), "vmem_capacity_bytes", None)
        if cap:
            return int(min(cap * 3 // 4, 112 * 1024 * 1024))
    except Exception:
        pass
    return 48 * 1024 * 1024


def _layernorm(x, gamma, beta, lane_mask, d_true, eps=1e-5):
    """LayerNorm over the last axis.  `x` is exactly zero in the padded lanes, so the
    raw sum is already the true sum; the resident 0/1 `lane_mask` only zeros
    (x - mean) in the pad lanes before the variance step.  gamma/beta are zero-padded,
    so the output stays exactly zero in the pad lanes."""
    inv_d = 1.0 / d_true
    mean = jnp.sum(x, axis=-1, keepdims=True) * inv_d
    xc = (x - mean) * lane_mask
    var = jnp.sum(xc * xc, axis=-1, keepdims=True) * inv_d
    return xc * lax.rsqrt(var + eps) * gamma + beta


# ---------------------------------------------------------------------------
# Fused Block kernel
# ---------------------------------------------------------------------------
def _make_block_kernel(d_true, seq_true, seq_pad, tq, num_heads, head_size):
    hsp = _HEAD_SLOT
    scale = float(head_size) ** -0.5

    def kernel(x_ref, mask_ref, g1_ref, be1_ref, wq_ref, wk_ref, wv_ref,
               wp_ref, bp_ref, g2_ref, be2_ref, w1_ref, b1_ref, w2_ref, b2_ref,
               o_ref, k_sc, v_sc):
        qi = pl.program_id(1)
        lane_mask = mask_ref[...]
        g1, be1 = g1_ref[...], be1_ref[...]

        # K / V for the whole sequence: computed once per batch element, kept
        # resident in bf16 VMEM scratch for all query tiles of that element.
        @pl.when(qi == 0)
        def _():
            lnf = _layernorm(x_ref[0], g1, be1, lane_mask, d_true).astype(BF16)
            k_sc[...] = jnp.dot(lnf, wk_ref[...],
                                preferred_element_type=F32).astype(BF16)
            v_sc[...] = jnp.dot(lnf, wv_ref[...],
                                preferred_element_type=F32).astype(BF16)

        # ---- query tile (sublane-aligned dynamic slice of the resident x block)
        row0 = pl.multiple_of(qi * tq, tq)
        x_q = x_ref[0, pl.ds(row0, tq), :]                       # (tq, Dp) fp32
        ln_q = _layernorm(x_q, g1, be1, lane_mask, d_true).astype(BF16)
        q = jnp.dot(ln_q, wq_ref[...], preferred_element_type=F32)   # (tq, H*hsp)
        k = k_sc[...]                                            # (Tp, H*hsp) bf16
        v = v_sc[...]

        if seq_pad > seq_true:                                   # mask padded keys
            key_ok = lax.broadcasted_iota(jnp.int32, (tq, seq_pad), 1) < seq_true

        head_outs = []
        for h in range(num_heads):                               # small static loop
            lo = h * hsp                                         # 128-aligned slices
            qh = q[:, lo:lo + hsp].astype(BF16)
            kh = k[:, lo:lo + hsp]
            vh = v[:, lo:lo + hsp]
            s = lax.dot_general(qh, kh, (((1,), (1,)), ((), ())),
                                preferred_element_type=F32) * scale
            if seq_pad > seq_true:
                s = jnp.where(key_ok, s, -1e30)
            s = s - jnp.max(s, axis=-1, keepdims=True)
            e = jnp.exp(s)
            w = e * pl.reciprocal(jnp.sum(e, axis=-1, keepdims=True), approx=True)
            head_outs.append(jnp.dot(w.astype(BF16), vh,          # (tq, hsp)
                                     preferred_element_type=F32))

        # Single wide-K projection over all heads (lane-aligned concat).
        o_cat = jnp.concatenate(head_outs, axis=-1).astype(BF16)  # (tq, H*hsp)
        attn = jnp.dot(o_cat, wp_ref[...], preferred_element_type=F32) + bp_ref[...]
        y = x_q + attn                                            # residual 1 (fp32)

        # ---- FFN, fused (attention result never leaves VMEM)
        ln2 = _layernorm(y, g2_ref[...], be2_ref[...], lane_mask, d_true).astype(BF16)
        h1 = jnp.maximum(jnp.dot(ln2, w1_ref[...], preferred_element_type=F32)
                         + b1_ref[...], 0.0).astype(BF16)
        ffn = jnp.dot(h1, w2_ref[...], preferred_element_type=F32) + b2_ref[...]
        o_ref[0] = (y + ffn).astype(o_ref.dtype)                  # residual 2

    return kernel


# ---------------------------------------------------------------------------
# Wrapper
# ---------------------------------------------------------------------------
def block_forward(x, params, num_heads, *, tq=512):
    """Block.forward: x + MHA(LN1(x)); result + FFN(LN2(result)).  x: (B,T,d_emb) f32."""
    B, T, D = x.shape
    hs = D // num_heads
    hid = 4 * D
    hsp = _HEAD_SLOT
    assert hs <= hsp, "head_size larger than one lane tile is not supported here"

    Dp = _round_up(D, 128)
    HIDp = _round_up(hid, 128)
    HH = num_heads * hsp
    TQ = min(_round_up(tq, 8), _round_up(T, 8))
    Tp = _round_up(T, TQ)

    def pad_vec(a, n):                         # (k,) -> (1, n) fp32, zero pad lanes
        return jnp.pad(a.astype(F32), (0, n - a.shape[0]))[None, :]

    def pad_mat(a, r, c):                      # dense bf16 weight, zero padded
        return jnp.pad(a, ((0, r - a.shape[0]), (0, c - a.shape[1]))).astype(BF16)

    def pack_qkv(w):                           # (D, H*hs) -> (Dp, H*hsp)
        w = w.reshape(D, num_heads, hs)
        w = jnp.pad(w, ((0, Dp - D), (0, 0), (0, hsp - hs)))
        return w.reshape(Dp, HH).astype(BF16)

    def pack_proj(w):                          # (H*hs, D) -> (H*hsp, Dp)
        w = w.reshape(num_heads, hs, D)
        w = jnp.pad(w, ((0, 0), (0, hsp - hs), (0, Dp - D)))
        return w.reshape(HH, Dp).astype(BF16)

    xp = jnp.pad(x.astype(F32), ((0, 0), (0, Tp - T), (0, Dp - D)))
    lane_mask = (jnp.arange(Dp) < D).astype(F32)[None, :]

    operands = (
        xp, lane_mask,
        pad_vec(params["ln1_g"], Dp), pad_vec(params["ln1_b"], Dp),
        pack_qkv(params["wq"]), pack_qkv(params["wk"]), pack_qkv(params["wv"]),
        pack_proj(params["w_proj"]), pad_vec(params["b_proj"], Dp),
        pad_vec(params["ln2_g"], Dp), pad_vec(params["ln2_b"], Dp),
        pad_mat(params["w1"], Dp, HIDp), pad_vec(params["b1"], HIDp),
        pad_mat(params["w2"], HIDp, Dp), pad_vec(params["b2"], Dp),
    )

    kernel = _make_block_kernel(D, T, Tp, TQ, num_heads, hs)

    def build(single_buffer_weights):
        def const_spec(shape):
            kw = {}
            if single_buffer_weights:
                # Resident operands never change block index -> 1 buffer is enough.
                kw["pipeline_mode"] = pl.Buffered(1)
            return pl.BlockSpec(shape, lambda b, q: (0,) * len(shape), **kw)

        in_specs = [
            pl.BlockSpec((1, Tp, Dp), lambda b, q: (b, 0, 0)),    # x (streamed per b)
            const_spec((1, Dp)),                                  # lane mask
            const_spec((1, Dp)), const_spec((1, Dp)),             # ln1 gamma / beta
            const_spec((Dp, HH)), const_spec((Dp, HH)), const_spec((Dp, HH)),  # Wq/Wk/Wv
            const_spec((HH, Dp)), const_spec((1, Dp)),            # Wproj / bproj
            const_spec((1, Dp)), const_spec((1, Dp)),             # ln2 gamma / beta
            const_spec((Dp, HIDp)), const_spec((1, HIDp)),        # W1 / b1
            const_spec((HIDp, Dp)), const_spec((1, Dp)),          # W2 / b2
        ]
        return pl.pallas_call(
            kernel,
            out_shape=jax.ShapeDtypeStruct((B, Tp, Dp), F32),
            grid_spec=pltpu.PrefetchScalarGridSpec(
                num_scalar_prefetch=0,
                grid=(B, Tp // TQ),
                in_specs=in_specs,
                out_specs=pl.BlockSpec((1, TQ, Dp), lambda b, q: (b, q, 0)),
                scratch_shapes=[pltpu.VMEM((Tp, HH), BF16),       # K (per batch elem)
                                pltpu.VMEM((Tp, HH), BF16)],      # V
            ),
            compiler_params=pltpu.CompilerParams(
                dimension_semantics=("parallel", "arbitrary"),
                vmem_limit_bytes=_vmem_limit_bytes()),
        )

    try:
        out = build(True)(*operands)
    except Exception:
        # Fallback for Pallas builds that reject pipeline_mode=pl.Buffered(1).
        out = build(False)(*operands)

    return out[:, :T, :D]


# ---------------------------------------------------------------------------
# Plain-JAX reference (mirrors the kernel's bf16-operand / fp32-accumulate matmuls)
# ---------------------------------------------------------------------------
def block_reference(x, params, num_heads):
    B, T, D = x.shape
    hs = D // num_heads

    def mm(a, b):
        return jnp.dot(a.astype(BF16), b.astype(BF16), preferred_element_type=F32)

    def ln(v, g, b, eps=1e-5):
        m = jnp.mean(v, axis=-1, keepdims=True)
        c = v - m
        var = jnp.mean(c * c, axis=-1, keepdims=True)
        return c * lax.rsqrt(var + eps) * g + b

    outs = []
    for bi in range(B):
        xb = x[bi].astype(F32)
        l1 = ln(xb, params["ln1_g"], params["ln1_b"])
        q, k, v = mm(l1, params["wq"]), mm(l1, params["wk"]), mm(l1, params["wv"])
        heads = []
        for h in range(num_heads):
            sl = slice(h * hs, (h + 1) * hs)
            s = jnp.dot(q[:, sl].astype(BF16), k[:, sl].astype(BF16).T,
                        preferred_element_type=F32) * (float(hs) ** -0.5)
            w = jax.nn.softmax(s, axis=-1)          # attn dropout == identity (eval)
            heads.append(jnp.dot(w.astype(BF16), v[:, sl].astype(BF16),
                                 preferred_element_type=F32))
        attn = mm(jnp.concatenate(heads, axis=-1), params["w_proj"]) + params["b_proj"]
        y = xb + attn                               # proj dropout == identity (eval)
        l2 = ln(y, params["ln2_g"], params["ln2_b"])
        hdn = jnp.maximum(mm(l2, params["w1"]) + params["b1"], 0.0)
        outs.append(y + mm(hdn, params["w2"]) + params["b2"])   # ffn dropout == identity
    return jnp.stack(outs)


def init_block_params(key, d_emb, num_heads):
    """nn.Linear-style init (uniform +-1/sqrt(fan_in)); weights stored (in, out)."""
    hs = d_emb // num_heads
    hh = num_heads * hs
    hid = 4 * d_emb
    ks = jax.random.split(key, 9)

    def u(k, shape, fan_in):
        lim = 1.0 / fan_in ** 0.5
        return jax.random.uniform(k, shape, F32, -lim, lim)

    return {
        "wq": u(ks[0], (d_emb, hh), d_emb),
        "wk": u(ks[1], (d_emb, hh), d_emb),
        "wv": u(ks[2], (d_emb, hh), d_emb),
        "w_proj": u(ks[3], (hh, d_emb), hh),
        "b_proj": u(ks[4], (d_emb,), hh),
        "w1": u(ks[5], (d_emb, hid), d_emb),
        "b1": u(ks[6], (hid,), d_emb),
        "w2": u(ks[7], (hid, d_emb), hid),
        "b2": u(ks[8], (d_emb,), hid),
        "ln1_g": jnp.ones((d_emb,), F32),
        "ln1_b": jnp.zeros((d_emb,), F32),
        "ln2_g": jnp.ones((d_emb,), F32),
        "ln2_b": jnp.zeros((d_emb,), F32),
    }


if __name__ == "__main__":
    # Shapes from the spec: d_emb=100, num_heads=6 -> head_size = 16, concat = 96,
    # hidden = 400 (lane-padded to 128 / head-slot 128 / 512 in the wrapper).
    d_emb, num_heads = 100, 6
    batch, seq = 2, 8

    key = jax.random.PRNGKey(0)
    kx, kp = jax.random.split(key)
    x = jax.random.normal(kx, (batch, seq, d_emb), F32)
    params = init_block_params(kp, d_emb, num_heads)

    out = block_forward(x, params, num_heads)
    out = jax.block_until_ready(out)

    ref = block_reference(x, params, num_heads)
    assert out.shape == (batch, seq, d_emb)
    max_err = float(jnp.max(jnp.abs(out - ref)))
    assert jnp.allclose(out, ref, atol=2e-2, rtol=2e-2), f"max abs err {max_err}"
    print("KERNEL_OK")
</pallas_src>

<mosaic_0001>
module attributes {stable_mosaic.version = 11 : i64} {
  func.func @kernel(%arg0: i32, %arg1: i32, %arg2: memref<1x8x128xf32, #tpu.memory_space<vmem>>, %arg3: memref<1x128xf32, #tpu.memory_space<vmem>>, %arg4: memref<1x128xf32, #tpu.memory_space<vmem>>, %arg5: memref<1x128xf32, #tpu.memory_space<vmem>>, %arg6: memref<128x768xbf16, #tpu.memory_space<vmem>>, %arg7: memref<128x768xbf16, #tpu.memory_space<vmem>>, %arg8: memref<128x768xbf16, #tpu.memory_space<vmem>>, %arg9: memref<768x128xbf16, #tpu.memory_space<vmem>>, %arg10: memref<1x128xf32, #tpu.memory_space<vmem>>, %arg11: memref<1x128xf32, #tpu.memory_space<vmem>>, %arg12: memref<1x128xf32, #tpu.memory_space<vmem>>, %arg13: memref<128x512xbf16, #tpu.memory_space<vmem>>, %arg14: memref<1x512xf32, #tpu.memory_space<vmem>>, %arg15: memref<512x128xbf16, #tpu.memory_space<vmem>>, %arg16: memref<1x128xf32, #tpu.memory_space<vmem>>, %arg17: memref<1x8x128xf32, #tpu.memory_space<vmem>>, %arg18: memref<8x768xbf16, #tpu.memory_space<vmem>>, %arg19: memref<8x768xbf16, #tpu.memory_space<vmem>>) attributes {dimension_semantics = [#tpu.dimension_semantics<parallel>, #tpu.dimension_semantics<arbitrary>], iteration_bounds = array<i64: 2, 1>, scalar_prefetch = 0 : i64, scratch_operands = 2 : i64, tpu.core_type = #tpu.core_type<tc>, window_params = [{transform_indices = @transform_0, window_bounds = array<i64: 1, 8, 128>}, {pipeline_mode = #tpu.pipeline_mode<synchronous>, transform_indices = @transform_1, window_bounds = array<i64: 1, 128>}, {pipeline_mode = #tpu.pipeline_mode<synchronous>, transform_indices = @transform_2, window_bounds = array<i64: 1, 128>}, {pipeline_mode = #tpu.pipeline_mode<synchronous>, transform_indices = @transform_3, window_bounds = array<i64: 1, 128>}, {pipeline_mode = #tpu.pipeline_mode<synchronous>, transform_indices = @transform_4, window_bounds = array<i64: 128, 768>}, {pipeline_mode = #tpu.pipeline_mode<synchronous>, transform_indices = @transform_5, window_bounds = array<i64: 128, 768>}, {pipeline_mode = #tpu.pipeline_mode<synchronous>, transform_indices = @transform_6, window_bounds = array<i64: 128, 768>}, {pipeline_mode = #tpu.pipeline_mode<synchronous>, transform_indices = @transform_7, window_bounds = array<i64: 768, 128>}, {pipeline_mode = #tpu.pipeline_mode<synchronous>, transform_indices = @transform_8, window_bounds = array<i64: 1, 128>}, {pipeline_mode = #tpu.pipeline_mode<synchronous>, transform_indices = @transform_9, window_bounds = array<i64: 1, 128>}, {pipeline_mode = #tpu.pipeline_mode<synchronous>, transform_indices = @transform_10, window_bounds = array<i64: 1, 128>}, {pipeline_mode = #tpu.pipeline_mode<synchronous>, transform_indices = @transform_11, window_bounds = array<i64: 128, 512>}, {pipeline_mode = #tpu.pipeline_mode<synchronous>, transform_indices = @transform_12, window_bounds = array<i64: 1, 512>}, {pipeline_mode = #tpu.pipeline_mode<synchronous>, transform_indices = @transform_13, window_bounds = array<i64: 512, 128>}, {pipeline_mode = #tpu.pipeline_mode<synchronous>, transform_indices = @transform_14, window_bounds = array<i64: 1, 128>}, {transform_indices = @transform_15, window_bounds = array<i64: 1, 8, 128>}]} {
    %c0 = arith.constant 0 : index
    %c0_0 = arith.constant 0 : index
    %0 = vector.load %arg3[%c0, %c0_0] : memref<1x128xf32, #tpu.memory_space<vmem>>, vector<1x128xf32>
    %c0_1 = arith.constant 0 : index
    %c0_2 = arith.constant 0 : index
    %1 = vector.load %arg4[%c0_1, %c0_2] : memref<1x128xf32, #tpu.memory_space<vmem>>, vector<1x128xf32>
    %c0_3 = arith.constant 0 : index
    %c0_4 = arith.constant 0 : index
    %2 = vector.load %arg5[%c0_3, %c0_4] : memref<1x128xf32, #tpu.memory_space<vmem>>, vector<1x128xf32>
    %c0_i32 = arith.constant 0 : i32
    %3 = arith.cmpi eq, %arg1, %c0_i32 : i32
    %4 = arith.extui %3 : i1 to i32
    %c0_i32_5 = arith.constant 0 : i32
    %5 = arith.cmpi ne, %4, %c0_i32_5 : i32
    scf.if %5 {
      %c0_77 = arith.constant 0 : index
      %c0_78 = arith.constant 0 : index
      %c0_79 = arith.constant 0 : index
      %202 = vector.load %arg2[%c0_77, %c0_78, %c0_79] : memref<1x8x128xf32, #tpu.memory_space<vmem>>, vector<1x8x128xf32>
      %203 = vector.shape_cast %202 : vector<1x8x128xf32> to vector<8x128xf32>
      %cst_80 = arith.constant dense<0.000000e+00> : vector<8xf32>
      %204 = vector.multi_reduction <add>, %203, %cst_80 [1] : vector<8x128xf32> to vector<8xf32>
      %205 = vector.shape_cast %204 : vector<8xf32> to vector<8x1xf32>
      %cst_81 = arith.constant 0.00999999977 : f32
      %206 = vector.broadcast %cst_81 : f32 to vector<8x1xf32>
      %207 = arith.mulf %205, %206 : vector<8x1xf32>
      %208 = vector.broadcast %207 : vector<8x1xf32> to vector<8x128xf32>
      %209 = arith.subf %203, %208 : vector<8x128xf32>
      %210 = vector.broadcast %0 : vector<1x128xf32> to vector<8x128xf32>
      %211 = arith.mulf %209, %210 : vector<8x128xf32>
      %212 = arith.mulf %211, %211 : vector<8x128xf32>
      %cst_82 = arith.constant dense<0.000000e+00> : vector<8xf32>
      %213 = vector.multi_reduction <add>, %212, %cst_82 [1] : vector<8x128xf32> to vector<8xf32>
      %214 = vector.shape_cast %213 : vector<8xf32> to vector<8x1xf32>
      %cst_83 = arith.constant 0.00999999977 : f32
      %215 = vector.broadcast %cst_83 : f32 to vector<8x1xf32>
      %216 = arith.mulf %214, %215 : vector<8x1xf32>
      %cst_84 = arith.constant 9.99999974E-6 : f32
      %217 = vector.broadcast %cst_84 : f32 to vector<8x1xf32>
      %218 = arith.addf %216, %217 : vector<8x1xf32>
      %219 = math.rsqrt %218 : vector<8x1xf32>
      %220 = vector.broadcast %219 : vector<8x1xf32> to vector<8x128xf32>
      %221 = arith.mulf %211, %220 : vector<8x128xf32>
      %222 = vector.broadcast %1 : vector<1x128xf32> to vector<8x128xf32>
      %223 = arith.mulf %221, %222 : vector<8x128xf32>
      %224 = vector.broadcast %2 : vector<1x128xf32> to vector<8x128xf32>
      %225 = arith.addf %223, %224 : vector<8x128xf32>
      %226 = arith.truncf %225 : vector<8x128xf32> to vector<8x128xbf16>
      %c0_85 = arith.constant 0 : index
      %c0_86 = arith.constant 0 : index
      %227 = vector.load %arg7[%c0_85, %c0_86] : memref<128x768xbf16, #tpu.memory_space<vmem>>, vector<128x768xbf16>
      %cst_87 = arith.constant dense<0.000000e+00> : vector<8x768xf32>
      %228 = tpu.matmul %226, %227, %cst_87 {dimension_numbers = #tpu.dot_dimension_numbers<[1], [0], [0], [1], [0, 0, 1, 1], [], []>} : vector<8x128xbf16>, vector<128x768xbf16>, vector<8x768xf32> -> vector<8x768xf32>
      %229 = arith.truncf %228 : vector<8x768xf32> to vector<8x768xbf16>
      %c0_88 = arith.constant 0 : index
      %c0_89 = arith.constant 0 : index
      %230 = vector.load %arg18[%c0_88, %c0_89] : memref<8x768xbf16, #tpu.memory_space<vmem>>, vector<8x768xbf16>
      tpu.vector_store %arg18[%c0_88, %c0_89], %229 {strides = array<i32>} : memref<8x768xbf16, #tpu.memory_space<vmem>>, vector<8x768xbf16>,
      %c0_90 = arith.constant 0 : index
      %c0_91 = arith.constant 0 : index
      %231 = vector.load %arg8[%c0_90, %c0_91] : memref<128x768xbf16, #tpu.memory_space<vmem>>, vector<128x768xbf16>
      %cst_92 = arith.constant dense<0.000000e+00> : vector<8x768xf32>
      %232 = tpu.matmul %226, %231, %cst_92 {dimension_numbers = #tpu.dot_dimension_numbers<[1], [0], [0], [1], [0, 0, 1, 1], [], []>} : vector<8x128xbf16>, vector<128x768xbf16>, vector<8x768xf32> -> vector<8x768xf32>
      %233 = arith.truncf %232 : vector<8x768xf32> to vector<8x768xbf16>
      %c0_93 = arith.constant 0 : index
      %c0_94 = arith.constant 0 : index
      %234 = vector.load %arg19[%c0_93, %c0_94] : memref<8x768xbf16, #tpu.memory_space<vmem>>, vector<8x768xbf16>
      tpu.vector_store %arg19[%c0_93, %c0_94], %233 {strides = array<i32>} : memref<8x768xbf16, #tpu.memory_space<vmem>>, vector<8x768xbf16>,
    } else {
    }
    %c8_i32 = arith.constant 8 : i32
    %6 = arith.muli %arg1, %c8_i32 : i32
    %7 = tpu.assume_multiple %6, 8 : i32
    %c0_6 = arith.constant 0 : index
    %8 = arith.index_cast %7 : i32 to index
    %c0_7 = arith.constant 0 : index
    %9 = vector.load %arg2[%c0_6, %8, %c0_7] : memref<1x8x128xf32, #tpu.memory_space<vmem>>, vector<1x8x128xf32>
    %10 = vector.shape_cast %9 : vector<1x8x128xf32> to vector<8x128xf32>
    %cst = arith.constant dense<0.000000e+00> : vector<8xf32>
    %11 = vector.multi_reduction <add>, %10, %cst [1] : vector<8x128xf32> to vector<8xf32>
    %12 = vector.shape_cast %11 : vector<8xf32> to vector<8x1xf32>
    %cst_8 = arith.constant 0.00999999977 : f32
    %13 = vector.broadcast %cst_8 : f32 to vector<8x1xf32>
    %14 = arith.mulf %12, %13 : vector<8x1xf32>
    %15 = vector.broadcast %14 : vector<8x1xf32> to vector<8x128xf32>
    %16 = arith.subf %10, %15 : vector<8x128xf32>
    %17 = vector.broadcast %0 : vector<1x128xf32> to vector<8x128xf32>
    %18 = arith.mulf %16, %17 : vector<8x128xf32>
    %19 = arith.mulf %18, %18 : vector<8x128xf32>
    %cst_9 = arith.constant dense<0.000000e+00> : vector<8xf32>
    %20 = vector.multi_reduction <add>, %19, %cst_9 [1] : vector<8x128xf32> to vector<8xf32>
    %21 = vector.shape_cast %20 : vector<8xf32> to vector<8x1xf32>
    %cst_10 = arith.constant 0.00999999977 : f32
    %22 = vector.broadcast %cst_10 : f32 to vector<8x1xf32>
    %23 = arith.mulf %21, %22 : vector<8x1xf32>
    %cst_11 = arith.constant 9.99999974E-6 : f32
    %24 = vector.broadcast %cst_11 : f32 to vector<8x1xf32>
    %25 = arith.addf %23, %24 : vector<8x1xf32>
    %26 = math.rsqrt %25 : vector<8x1xf32>
    %27 = vector.broadcast %26 : vector<8x1xf32> to vector<8x128xf32>
    %28 = arith.mulf %18, %27 : vector<8x128xf32>
    %29 = vector.broadcast %1 : vector<1x128xf32> to vector<8x128xf32>
    %30 = arith.mulf %28, %29 : vector<8x128xf32>
    %31 = vector.broadcast %2 : vector<1x128xf32> to vector<8x128xf32>
    %32 = arith.addf %30, %31 : vector<8x128xf32>
    %33 = arith.truncf %32 : vector<8x128xf32> to vector<8x128xbf16>
    %c0_12 = arith.constant 0 : index
    %c0_13 = arith.constant 0 : index
    %34 = vector.load %arg6[%c0_12, %c0_13] : memref<128x768xbf16, #tpu.memory_space<vmem>>, vector<128x768xbf16>
    %cst_14 = arith.constant dense<0.000000e+00> : vector<8x768xf32>
    %35 = tpu.matmul %33, %34, %cst_14 {dimension_numbers = #tpu.dot_dimension_numbers<[1], [0], [0], [1], [0, 0, 1, 1], [], []>} : vector<8x128xbf16>, vector<128x768xbf16>, vector<8x768xf32> -> vector<8x768xf32>
    %c0_15 = arith.constant 0 : index
    %c0_16 = arith.constant 0 : index
    %36 = vector.load %arg18[%c0_15, %c0_16] : memref<8x768xbf16, #tpu.memory_space<vmem>>, vector<8x768xbf16>
    %c0_17 = arith.constant 0 : index
    %c0_18 = arith.constant 0 : index
    %37 = vector.load %arg19[%c0_17, %c0_18] : memref<8x768xbf16, #tpu.memory_space<vmem>>, vector<8x768xbf16>
    %38 = vector.extract_strided_slice %35 {offsets = [0, 0], sizes = [8, 128], strides = [1, 1]} : vector<8x768xf32> to vector<8x128xf32>
    %39 = arith.truncf %38 : vector<8x128xf32> to vector<8x128xbf16>
    %40 = vector.extract_strided_slice %36 {offsets = [0, 0], sizes = [8, 128], strides = [1, 1]} : vector<8x768xbf16> to vector<8x128xbf16>
    %41 = vector.extract_strided_slice %37 {offsets = [0, 0], sizes = [8, 128], strides = [1, 1]} : vector<8x768xbf16> to vector<8x128xbf16>
    %cst_19 = arith.constant dense<0.000000e+00> : vector<8x8xf32>
    %42 = tpu.matmul %39, %40, %cst_19 {dimension_numbers = #tpu.dot_dimension_numbers<[1], [1], [0], [0], [0, 0, 1, 0], [], []>} : vector<8x128xbf16>, vector<8x128xbf16>, vector<8x8xf32> -> vector<8x8xf32>
    %cst_20 = arith.constant 2.500000e-01 : f32
    %43 = vector.broadcast %cst_20 : f32 to vector<8x8xf32>
    %44 = arith.mulf %42, %43 : vector<8x8xf32>
    %cst_21 = arith.constant dense<0xFF800000> : vector<8xf32>
    %45 = vector.multi_reduction <maximumf>, %44, %cst_21 [1] : vector<8x8xf32> to vector<8xf32>
    %46 = vector.shape_cast %45 : vector<8xf32> to vector<8x1xf32>
    %47 = vector.broadcast %46 : vector<8x1xf32> to vector<8x8xf32>
    %48 = arith.subf %44, %47 : vector<8x8xf32>
    %49 = math.exp %48 : vector<8x8xf32>
    %cst_22 = arith.constant dense<0.000000e+00> : vector<8xf32>
    %50 = vector.multi_reduction <add>, %49, %cst_22 [1] : vector<8x8xf32> to vector<8xf32>
    %51 = vector.shape_cast %50 : vector<8xf32> to vector<8x1xf32>
    %52 = tpu.reciprocal %51 {approx = true} : vector<8x1xf32> -> vector<8x1xf32>
    %53 = vector.broadcast %52 : vector<8x1xf32> to vector<8x8xf32>
    %54 = arith.mulf %49, %53 : vector<8x8xf32>
    %55 = arith.truncf %54 : vector<8x8xf32> to vector<8x8xbf16>
    %cst_23 = arith.constant dense<0.000000e+00> : vector<8x128xf32>
    %56 = tpu.matmul %55, %41, %cst_23 {dimension_numbers = #tpu.dot_dimension_numbers<[1], [0], [0], [1], [0, 0, 1, 1], [], []>} : vector<8x8xbf16>, vector<8x128xbf16>, vector<8x128xf32> -> vector<8x128xf32>
    %57 = vector.extract_strided_slice %35 {offsets = [0, 128], sizes = [8, 128], strides = [1, 1]} : vector<8x768xf32> to vector<8x128xf32>
    %58 = arith.truncf %57 : vector<8x128xf32> to vector<8x128xbf16>
    %59 = vector.extract_strided_slice %36 {offsets = [0, 128], sizes = [8, 128], strides = [1, 1]} : vector<8x768xbf16> to vector<8x128xbf16>
    %60 = vector.extract_strided_slice %37 {offsets = [0, 128], sizes = [8, 128], strides = [1, 1]} : vector<8x768xbf16> to vector<8x128xbf16>
    %cst_24 = arith.constant dense<0.000000e+00> : vector<8x8xf32>
    %61 = tpu.matmul %58, %59, %cst_24 {dimension_numbers = #tpu.dot_dimension_numbers<[1], [1], [0], [0], [0, 0, 1, 0], [], []>} : vector<8x128xbf16>, vector<8x128xbf16>, vector<8x8xf32> -> vector<8x8xf32>
    %cst_25 = arith.constant 2.500000e-01 : f32
    %62 = vector.broadcast %cst_25 : f32 to vector<8x8xf32>
    %63 = arith.mulf %61, %62 : vector<8x8xf32>
    %cst_26 = arith.constant dense<0xFF800000> : vector<8xf32>
    %64 = vector.multi_reduction <maximumf>, %63, %cst_26 [1] : vector<8x8xf32> to vector<8xf32>
    %65 = vector.shape_cast %64 : vector<8xf32> to vector<8x1xf32>
    %66 = vector.broadcast %65 : vector<8x1xf32> to vector<8x8xf32>
    %67 = arith.subf %63, %66 : vector<8x8xf32>
    %68 = math.exp %67 : vector<8x8xf32>
    %cst_27 = arith.constant dense<0.000000e+00> : vector<8xf32>
    %69 = vector.multi_reduction <add>, %68, %cst_27 [1] : vector<8x8xf32> to vector<8xf32>
    %70 = vector.shape_cast %69 : vector<8xf32> to vector<8x1xf32>
    %71 = tpu.reciprocal %70 {approx = true} : vector<8x1xf32> -> vector<8x1xf32>
    %72 = vector.broadcast %71 : vector<8x1xf32> to vector<8x8xf32>
    %73 = arith.mulf %68, %72 : vector<8x8xf32>
    %74 = arith.truncf %73 : vector<8x8xf32> to vector<8x8xbf16>
    %cst_28 = arith.constant dense<0.000000e+00> : vector<8x128xf32>
    %75 = tpu.matmul %74, %60, %cst_28 {dimension_numbers = #tpu.dot_dimension_numbers<[1], [0], [0], [1], [0, 0, 1, 1], [], []>} : vector<8x8xbf16>, vector<8x128xbf16>, vector<8x128xf32> -> vector<8x128xf32>
    %76 = vector.extract_strided_slice %35 {offsets = [0, 256], sizes = [8, 128], strides = [1, 1]} : vector<8x768xf32> to vector<8x128xf32>
    %77 = arith.truncf %76 : vector<8x128xf32> to vector<8x128xbf16>
    %78 = vector.extract_strided_slice %36 {offsets = [0, 256], sizes = [8, 128], strides = [1, 1]} : vector<8x768xbf16> to vector<8x128xbf16>
    %79 = vector.extract_strided_slice %37 {offsets = [0, 256], sizes = [8, 128], strides = [1, 1]} : vector<8x768xbf16> to vector<8x128xbf16>
    %cst_29 = arith.constant dense<0.000000e+00> : vector<8x8xf32>
    %80 = tpu.matmul %77, %78, %cst_29 {dimension_numbers = #tpu.dot_dimension_numbers<[1], [1], [0], [0], [0, 0, 1, 0], [], []>} : vector<8x128xbf16>, vector<8x128xbf16>, vector<8x8xf32> -> vector<8x8xf32>
    %cst_30 = arith.constant 2.500000e-01 : f32
    %81 = vector.broadcast %cst_30 : f32 to vector<8x8xf32>
    %82 = arith.mulf %80, %81 : vector<8x8xf32>
    %cst_31 = arith.constant dense<0xFF800000> : vector<8xf32>
    %83 = vector.multi_reduction <maximumf>, %82, %cst_31 [1] : vector<8x8xf32> to vector<8xf32>
    %84 = vector.shape_cast %83 : vector<8xf32> to vector<8x1xf32>
    %85 = vector.broadcast %84 : vector<8x1xf32> to vector<8x8xf32>
    %86 = arith.subf %82, %85 : vector<8x8xf32>
    %87 = math.exp %86 : vector<8x8xf32>
    %cst_32 = arith.constant dense<0.000000e+00> : vector<8xf32>
    %88 = vector.multi_reduction <add>, %87, %cst_32 [1] : vector<8x8xf32> to vector<8xf32>
    %89 = vector.shape_cast %88 : vector<8xf32> to vector<8x1xf32>
    %90 = tpu.reciprocal %89 {approx = true} : vector<8x1xf32> -> vector<8x1xf32>
    %91 = vector.broadcast %90 : vector<8x1xf32> to vector<8x8xf32>
    %92 = arith.mulf %87, %91 : vector<8x8xf32>
    %93 = arith.truncf %92 : vector<8x8xf32> to vector<8x8xbf16>
    %cst_33 = arith.constant dense<0.000000e+00> : vector<8x128xf32>
    %94 = tpu.matmul %93, %79, %cst_33 {dimension_numbers = #tpu.dot_dimension_numbers<[1], [0], [0], [1], [0, 0, 1, 1], [], []>} : vector<8x8xbf16>, vector<8x128xbf16>, vector<8x128xf32> -> vector<8x128xf32>
    %95 = vector.extract_strided_slice %35 {offsets = [0, 384], sizes = [8, 128], strides = [1, 1]} : vector<8x768xf32> to vector<8x128xf32>
    %96 = arith.truncf %95 : vector<8x128xf32> to vector<8x128xbf16>
    %97 = vector.extract_strided_slice %36 {offsets = [0, 384], sizes = [8, 128], strides = [1, 1]} : vector<8x768xbf16> to vector<8x128xbf16>
    %98 = vector.extract_strided_slice %37 {offsets = [0, 384], sizes = [8, 128], strides = [1, 1]} : vector<8x768xbf16> to vector<8x128xbf16>
    %cst_34 = arith.constant dense<0.000000e+00> : vector<8x8xf32>
    %99 = tpu.matmul %96, %97, %cst_34 {dimension_numbers = #tpu.dot_dimension_numbers<[1], [1], [0], [0], [0, 0, 1, 0], [], []>} : vector<8x128xbf16>, vector<8x128xbf16>, vector<8x8xf32> -> vector<8x8xf32>
    %cst_35 = arith.constant 2.500000e-01 : f32
    %100 = vector.broadcast %cst_35 : f32 to vector<8x8xf32>
    %101 = arith.mulf %99, %100 : vector<8x8xf32>
    %cst_36 = arith.constant dense<0xFF800000> : vector<8xf32>
    %102 = vector.multi_reduction <maximumf>, %101, %cst_36 [1] : vector<8x8xf32> to vector<8xf32>
    %103 = vector.shape_cast %102 : vector<8xf32> to vector<8x1xf32>
    %104 = vector.broadcast %103 : vector<8x1xf32> to vector<8x8xf32>
    %105 = arith.subf %101, %104 : vector<8x8xf32>
    %106 = math.exp %105 : vector<8x8xf32>
    %cst_37 = arith.constant dense<0.000000e+00> : vector<8xf32>
    %107 = vector.multi_reduction <add>, %106, %cst_37 [1] : vector<8x8xf32> to vector<8xf32>
    %108 = vector.shape_cast %107 : vector<8xf32> to vector<8x1xf32>
    %109 = tpu.reciprocal %108 {approx = true} : vector<8x1xf32> -> vector<8x1xf32>
    %110 = vector.broadcast %109 : vector<8x1xf32> to vector<8x8xf32>
    %111 = arith.mulf %106, %110 : vector<8x8xf32>
    %112 = arith.truncf %111 : vector<8x8xf32> to vector<8x8xbf16>
    %cst_38 = arith.constant dense<0.000000e+00> : vector<8x128xf32>
    %113 = tpu.matmul %112, %98, %cst_38 {dimension_numbers = #tpu.dot_dimension_numbers<[1], [0], [0], [1], [0, 0, 1, 1], [], []>} : vector<8x8xbf16>, vector<8x128xbf16>, vector<8x128xf32> -> vector<8x128xf32>
    %114 = vector.extract_strided_slice %35 {offsets = [0, 512], sizes = [8, 128], strides = [1, 1]} : vector<8x768xf32> to vector<8x128xf32>
    %115 = arith.truncf %114 : vector<8x128xf32> to vector<8x128xbf16>
    %116 = vector.extract_strided_slice %36 {offsets = [0, 512], sizes = [8, 128], strides = [1, 1]} : vector<8x768xbf16> to vector<8x128xbf16>
    %117 = vector.extract_strided_slice %37 {offsets = [0, 512], sizes = [8, 128], strides = [1, 1]} : vector<8x768xbf16> to vector<8x128xbf16>
    %cst_39 = arith.constant dense<0.000000e+00> : vector<8x8xf32>
    %118 = tpu.matmul %115, %116, %cst_39 {dimension_numbers = #tpu.dot_dimension_numbers<[1], [1], [0], [0], [0, 0, 1, 0], [], []>} : vector<8x128xbf16>, vector<8x128xbf16>, vector<8x8xf32> -> vector<8x8xf32>
    %cst_40 = arith.constant 2.500000e-01 : f32
    %119 = vector.broadcast %cst_40 : f32 to vector<8x8xf32>
    %120 = arith.mulf %118, %119 : vector<8x8xf32>
    %cst_41 = arith.constant dense<0xFF800000> : vector<8xf32>
    %121 = vector.multi_reduction <maximumf>, %120, %cst_41 [1] : vector<8x8xf32> to vector<8xf32>
    %122 = vector.shape_cast %121 : vector<8xf32> to vector<8x1xf32>
    %123 = vector.broadcast %122 : vector<8x1xf32> to vector<8x8xf32>
    %124 = arith.subf %120, %123 : vector<8x8xf32>
    %125 = math.exp %124 : vector<8x8xf32>
    %cst_42 = arith.constant dense<0.000000e+00> : vector<8xf32>
    %126 = vector.multi_reduction <add>, %125, %cst_42 [1] : vector<8x8xf32> to vector<8xf32>
    %127 = vector.shape_cast %126 : vector<8xf32> to vector<8x1xf32>
    %128 = tpu.reciprocal %127 {approx = true} : vector<8x1xf32> -> vector<8x1xf32>
    %129 = vector.broadcast %128 : vector<8x1xf32> to vector<8x8xf32>
    %130 = arith.mulf %125, %129 : vector<8x8xf32>
    %131 = arith.truncf %130 : vector<8x8xf32> to vector<8x8xbf16>
    %cst_43 = arith.constant dense<0.000000e+00> : vector<8x128xf32>
    %132 = tpu.matmul %131, %117, %cst_43 {dimension_numbers = #tpu.dot_dimension_numbers<[1], [0], [0], [1], [0, 0, 1, 1], [], []>} : vector<8x8xbf16>, vector<8x128xbf16>, vector<8x128xf32> -> vector<8x128xf32>
    %133 = vector.extract_strided_slice %35 {offsets = [0, 640], sizes = [8, 128], strides = [1, 1]} : vector<8x768xf32> to vector<8x128xf32>
    %134 = arith.truncf %133 : vector<8x128xf32> to vector<8x128xbf16>
    %135 = vector.extract_strided_slice %36 {offsets = [0, 640], sizes = [8, 128], strides = [1, 1]} : vector<8x768xbf16> to vector<8x128xbf16>
    %136 = vector.extract_strided_slice %37 {offsets = [0, 640], sizes = [8, 128], strides = [1, 1]} : vector<8x768xbf16> to vector<8x128xbf16>
    %cst_44 = arith.constant dense<0.000000e+00> : vector<8x8xf32>
    %137 = tpu.matmul %134, %135, %cst_44 {dimension_numbers = #tpu.dot_dimension_numbers<[1], [1], [0], [0], [0, 0, 1, 0], [], []>} : vector<8x128xbf16>, vector<8x128xbf16>, vector<8x8xf32> -> vector<8x8xf32>
    %cst_45 = arith.constant 2.500000e-01 : f32
    %138 = vector.broadcast %cst_45 : f32 to vector<8x8xf32>
    %139 = arith.mulf %137, %138 : vector<8x8xf32>
    %cst_46 = arith.constant dense<0xFF800000> : vector<8xf32>
    %140 = vector.multi_reduction <maximumf>, %139, %cst_46 [1] : vector<8x8xf32> to vector<8xf32>
    %141 = vector.shape_cast %140 : vector<8xf32> to vector<8x1xf32>
    %142 = vector.broadcast %141 : vector<8x1xf32> to vector<8x8xf32>
    %143 = arith.subf %139, %142 : vector<8x8xf32>
    %144 = math.exp %143 : vector<8x8xf32>
    %cst_47 = arith.constant dense<0.000000e+00> : vector<8xf32>
    %145 = vector.multi_reduction <add>, %144, %cst_47 [1] : vector<8x8xf32> to vector<8xf32>
    %146 = vector.shape_cast %145 : vector<8xf32> to vector<8x1xf32>
    %147 = tpu.reciprocal %146 {approx = true} : vector<8x1xf32> -> vector<8x1xf32>
    %148 = vector.broadcast %147 : vector<8x1xf32> to vector<8x8xf32>
    %149 = arith.mulf %144, %148 : vector<8x8xf32>
    %150 = arith.truncf %149 : vector<8x8xf32> to vector<8x8xbf16>
    %cst_48 = arith.constant dense<0.000000e+00> : vector<8x128xf32>
    %151 = tpu.matmul %150, %136, %cst_48 {dimension_numbers = #tpu.dot_dimension_numbers<[1], [0], [0], [1], [0, 0, 1, 1], [], []>} : vector<8x8xbf16>, vector<8x128xbf16>, vector<8x128xf32> -> vector<8x128xf32>
    %152 = tpu.concatenate %56, %75, %94, %113, %132, %151 in 1 : vector<8x128xf32>, vector<8x128xf32>, vector<8x128xf32>, vector<8x128xf32>, vector<8x128xf32>, vector<8x128xf32> -> vector<8x768xf32>
    %153 = arith.truncf %152 : vector<8x768xf32> to vector<8x768xbf16>
    %c0_49 = arith.constant 0 : index
    %c0_50 = arith.constant 0 : index
    %154 = vector.load %arg9[%c0_49, %c0_50] : memref<768x128xbf16, #tpu.memory_space<vmem>>, vector<768x128xbf16>
    %cst_51 = arith.constant dense<0.000000e+00> : vector<8x128xf32>
    %155 = tpu.matmul %153, %154, %cst_51 {dimension_numbers = #tpu.dot_dimension_numbers<[1], [0], [0], [1], [0, 0, 1, 1], [], []>} : vector<8x768xbf16>, vector<768x128xbf16>, vector<8x128xf32> -> vector<8x128xf32>
    %c0_52 = arith.constant 0 : index
    %c0_53 = arith.constant 0 : index
    %156 = vector.load %arg10[%c0_52, %c0_53] : memref<1x128xf32, #tpu.memory_space<vmem>>, vector<1x128xf32>
    %157 = vector.broadcast %156 : vector<1x128xf32> to vector<8x128xf32>
    %158 = arith.addf %155, %157 : vector<8x128xf32>
    %159 = arith.addf %10, %158 : vector<8x128xf32>
    %c0_54 = arith.constant 0 : index
    %c0_55 = arith.constant 0 : index
    %160 = vector.load %arg11[%c0_54, %c0_55] : memref<1x128xf32, #tpu.memory_space<vmem>>, vector<1x128xf32>
    %c0_56 = arith.constant 0 : index
    %c0_57 = arith.constant 0 : index
    %161 = vector.load %arg12[%c0_56, %c0_57] : memref<1x128xf32, #tpu.memory_space<vmem>>, vector<1x128xf32>
    %cst_58 = arith.constant dense<0.000000e+00> : vector<8xf32>
    %162 = vector.multi_reduction <add>, %159, %cst_58 [1] : vector<8x128xf32> to vector<8xf32>
    %163 = vector.shape_cast %162 : vector<8xf32> to vector<8x1xf32>
    %cst_59 = arith.constant 0.00999999977 : f32
    %164 = vector.broadcast %cst_59 : f32 to vector<8x1xf32>
    %165 = arith.mulf %163, %164 : vector<8x1xf32>
    %166 = vector.broadcast %165 : vector<8x1xf32> to vector<8x128xf32>
    %167 = arith.subf %159, %166 : vector<8x128xf32>
    %168 = vector.broadcast %0 : vector<1x128xf32> to vector<8x128xf32>
    %169 = arith.mulf %167, %168 : vector<8x128xf32>
    %170 = arith.mulf %169, %169 : vector<8x128xf32>
    %cst_60 = arith.constant dense<0.000000e+00> : vector<8xf32>
    %171 = vector.multi_reduction <add>, %170, %cst_60 [1] : vector<8x128xf32> to vector<8xf32>
    %172 = vector.shape_cast %171 : vector<8xf32> to vector<8x1xf32>
    %cst_61 = arith.constant 0.00999999977 : f32
    %173 = vector.broadcast %cst_61 : f32 to vector<8x1xf32>
    %174 = arith.mulf %172, %173 : vector<8x1xf32>
    %cst_62 = arith.constant 9.99999974E-6 : f32
    %175 = vector.broadcast %cst_62 : f32 to vector<8x1xf32>
    %176 = arith.addf %174, %175 : vector<8x1xf32>
    %177 = math.rsqrt %176 : vector<8x1xf32>
    %178 = vector.broadcast %177 : vector<8x1xf32> to vector<8x128xf32>
    %179 = arith.mulf %169, %178 : vector<8x128xf32>
    %180 = vector.broadcast %160 : vector<1x128xf32> to vector<8x128xf32>
    %181 = arith.mulf %179, %180 : vector<8x128xf32>
    %182 = vector.broadcast %161 : vector<1x128xf32> to vector<8x128xf32>
    %183 = arith.addf %181, %182 : vector<8x128xf32>
    %184 = arith.truncf %183 : vector<8x128xf32> to vector<8x128xbf16>
    %c0_63 = arith.constant 0 : index
    %c0_64 = arith.constant 0 : index
    %185 = vector.load %arg13[%c0_63, %c0_64] : memref<128x512xbf16, #tpu.memory_space<vmem>>, vector<128x512xbf16>
    %cst_65 = arith.constant dense<0.000000e+00> : vector<8x512xf32>
    %186 = tpu.matmul %184, %185, %cst_65 {dimension_numbers = #tpu.dot_dimension_numbers<[1], [0], [0], [1], [0, 0, 1, 1], [], []>} : vector<8x128xbf16>, vector<128x512xbf16>, vector<8x512xf32> -> vector<8x512xf32>
    %c0_66 = arith.constant 0 : index
    %c0_67 = arith.constant 0 : index
    %187 = vector.load %arg14[%c0_66, %c0_67] : memref<1x512xf32, #tpu.memory_space<vmem>>, vector<1x512xf32>
    %188 = vector.broadcast %187 : vector<1x512xf32> to vector<8x512xf32>
    %189 = arith.addf %186, %188 : vector<8x512xf32>
    %cst_68 = arith.constant 0.000000e+00 : f32
    %190 = vector.broadcast %cst_68 : f32 to vector<8x512xf32>
    %191 = arith.maximumf %189, %190 : vector<8x512xf32>
    %192 = arith.truncf %191 : vector<8x512xf32> to vector<8x512xbf16>
    %c0_69 = arith.constant 0 : index
    %c0_70 = arith.constant 0 : index
    %193 = vector.load %arg15[%c0_69, %c0_70] : memref<512x128xbf16, #tpu.memory_space<vmem>>, vector<512x128xbf16>
    %cst_71 = arith.constant dense<0.000000e+00> : vector<8x128xf32>
    %194 = tpu.matmul %192, %193, %cst_71 {dimension_numbers = #tpu.dot_dimension_numbers<[1], [0], [0], [1], [0, 0, 1, 1], [], []>} : vector<8x512xbf16>, vector<512x128xbf16>, vector<8x128xf32> -> vector<8x128xf32>
    %c0_72 = arith.constant 0 : index
    %c0_73 = arith.constant 0 : index
    %195 = vector.load %arg16[%c0_72, %c0_73] : memref<1x128xf32, #tpu.memory_space<vmem>>, vector<1x128xf32>
    %196 = vector.broadcast %195 : vector<1x128xf32> to vector<8x128xf32>
    %197 = arith.addf %194, %196 : vector<8x128xf32>
    %198 = arith.addf %159, %197 : vector<8x128xf32>
    %c0_74 = arith.constant 0 : index
    %c0_75 = arith.constant 0 : index
    %c0_76 = arith.constant 0 : index
    %199 = vector.load %arg17[%c0_74, %c0_75, %c0_76] : memref<1x8x128xf32, #tpu.memory_space<vmem>>, vector<1x8x128xf32>
    %200 = vector.shape_cast %199 : vector<1x8x128xf32> to vector<8x128xf32>
    %201 = vector.shape_cast %198 : vector<8x128xf32> to vector<1x8x128xf32>
    tpu.vector_store %arg17[%c0_74, %c0_75, %c0_76], %201 {strides = array<i32>} : memref<1x8x128xf32, #tpu.memory_space<vmem>>, vector<1x8x128xf32>,
    return
  }
  func.func @transform_0(%arg0: i32, %arg1: i32) -> (i32, i32, i32) {
    %c0_i32 = arith.constant 0 : i32
    %c0_i32_0 = arith.constant 0 : i32
    %c0_i32_1 = arith.constant 0 : i32
    return %arg0, %c0_i32, %c0_i32_0 : i32, i32, i32
  }
  func.func @transform_1(%arg0: i32, %arg1: i32) -> (i32, i32) {
    %c0_i32 = arith.constant 0 : i32
    %c0_i32_0 = arith.constant 0 : i32
    %c0_i32_1 = arith.constant 0 : i32
    return %c0_i32, %c0_i32_0 : i32, i32
  }
  func.func @transform_2(%arg0: i32, %arg1: i32) -> (i32, i32) {
    %c0_i32 = arith.constant 0 : i32
    %c0_i32_0 = arith.constant 0 : i32
    %c0_i32_1 = arith.constant 0 : i32
    return %c0_i32, %c0_i32_0 : i32, i32
  }
  func.func @transform_3(%arg0: i32, %arg1: i32) -> (i32, i32) {
    %c0_i32 = arith.constant 0 : i32
    %c0_i32_0 = arith.constant 0 : i32
    %c0_i32_1 = arith.constant 0 : i32
    return %c0_i32, %c0_i32_0 : i32, i32
  }
  func.func @transform_4(%arg0: i32, %arg1: i32) -> (i32, i32) {
    %c0_i32 = arith.constant 0 : i32
    %c0_i32_0 = arith.constant 0 : i32
    %c0_i32_1 = arith.constant 0 : i32
    return %c0_i32, %c0_i32_0 : i32, i32
  }
  func.func @transform_5(%arg0: i32, %arg1: i32) -> (i32, i32) {
    %c0_i32 = arith.constant 0 : i32
    %c0_i32_0 = arith.constant 0 : i32
    %c0_i32_1 = arith.constant 0 : i32
    return %c0_i32, %c0_i32_0 : i32, i32
  }
  func.func @transform_6(%arg0: i32, %arg1: i32) -> (i32, i32) {
    %c0_i32 = arith.constant 0 : i32
    %c0_i32_0 = arith.constant 0 : i32
    %c0_i32_1 = arith.constant 0 : i32
    return %c0_i32, %c0_i32_0 : i32, i32
  }
  func.func @transform_7(%arg0: i32, %arg1: i32) -> (i32, i32) {
    %c0_i32 = arith.constant 0 : i32
    %c0_i32_0 = arith.constant 0 : i32
    %c0_i32_1 = arith.constant 0 : i32
    return %c0_i32, %c0_i32_0 : i32, i32
  }
  func.func @transform_8(%arg0: i32, %arg1: i32) -> (i32, i32) {
    %c0_i32 = arith.constant 0 : i32
    %c0_i32_0 = arith.constant 0 : i32
    %c0_i32_1 = arith.constant 0 : i32
    return %c0_i32, %c0_i32_0 : i32, i32
  }
  func.func @transform_9(%arg0: i32, %arg1: i32) -> (i32, i32) {
    %c0_i32 = arith.constant 0 : i32
    %c0_i32_0 = arith.constant 0 : i32
    %c0_i32_1 = arith.constant 0 : i32
    return %c0_i32, %c0_i32_0 : i32, i32
  }
  func.func @transform_10(%arg0: i32, %arg1: i32) -> (i32, i32) {
    %c0_i32 = arith.constant 0 : i32
    %c0_i32_0 = arith.constant 0 : i32
    %c0_i32_1 = arith.constant 0 : i32
    return %c0_i32, %c0_i32_0 : i32, i32
  }
  func.func @transform_11(%arg0: i32, %arg1: i32) -> (i32, i32) {
    %c0_i32 = arith.constant 0 : i32
    %c0_i32_0 = arith.constant 0 : i32
    %c0_i32_1 = arith.constant 0 : i32
    return %c0_i32, %c0_i32_0 : i32, i32
  }
  func.func @transform_12(%arg0: i32, %arg1: i32) -> (i32, i32) {
    %c0_i32 = arith.constant 0 : i32
    %c0_i32_0 = arith.constant 0 : i32
    %c0_i32_1 = arith.constant 0 : i32
    return %c0_i32, %c0_i32_0 : i32, i32
  }
  func.func @transform_13(%arg0: i32, %arg1: i32) -> (i32, i32) {
    %c0_i32 = arith.constant 0 : i32
    %c0_i32_0 = arith.constant 0 : i32
    %c0_i32_1 = arith.constant 0 : i32
    return %c0_i32, %c0_i32_0 : i32, i32
  }
  func.func @transform_14(%arg0: i32, %arg1: i32) -> (i32, i32) {
    %c0_i32 = arith.constant 0 : i32
    %c0_i32_0 = arith.constant 0 : i32
    %c0_i32_1 = arith.constant 0 : i32
    return %c0_i32, %c0_i32_0 : i32, i32
  }
  func.func @transform_15(%arg0: i32, %arg1: i32) -> (i32, i32, i32) {
    %c0_i32 = arith.constant 0 : i32
    %c0_i32_0 = arith.constant 0 : i32
    return %arg0, %arg1, %c0_i32 : i32, i32, i32
  }
}

module attributes {stable_mosaic.version = 11 : i64} {
  func.func @kernel(%arg0: i32, %arg1: i32, %arg2: memref<1x8x128xf32, #tpu.memory_space<vmem>>, %arg3: memref<1x128xf32, #tpu.memory_space<vmem>>, %arg4: memref<1x128xf32, #tpu.memory_space<vmem>>, %arg5: memref<1x128xf32, #tpu.memory_space<vmem>>, %arg6: memref<128x768xbf16, #tpu.memory_space<vmem>>, %arg7: memref<128x768xbf16, #tpu.memory_space<vmem>>, %arg8: memref<128x768xbf16, #tpu.memory_space<vmem>>, %arg9: memref<768x128xbf16, #tpu.memory_space<vmem>>, %arg10: memref<1x128xf32, #tpu.memory_space<vmem>>, %arg11: memref<1x128xf32, #tpu.memory_space<vmem>>, %arg12: memref<1x128xf32, #tpu.memory_space<vmem>>, %arg13: memref<128x512xbf16, #tpu.memory_space<vmem>>, %arg14: memref<1x512xf32, #tpu.memory_space<vmem>>, %arg15: memref<512x128xbf16, #tpu.memory_space<vmem>>, %arg16: memref<1x128xf32, #tpu.memory_space<vmem>>, %arg17: memref<1x8x128xf32, #tpu.memory_space<vmem>>, %arg18: memref<8x768xbf16, #tpu.memory_space<vmem>>, %arg19: memref<8x768xbf16, #tpu.memory_space<vmem>>) attributes {dimension_semantics = [#tpu.dimension_semantics<parallel>, #tpu.dimension_semantics<arbitrary>], iteration_bounds = array<i64: 2, 1>, scalar_prefetch = 0 : i64, scratch_operands = 2 : i64, tpu.core_type = #tpu.core_type<tc>, window_params = [{transform_indices = @transform_0, window_bounds = array<i64: 1, 8, 128>}, {pipeline_mode = #tpu.pipeline_mode<synchronous>, transform_indices = @transform_1, window_bounds = array<i64: 1, 128>}, {pipeline_mode = #tpu.pipeline_mode<synchronous>, transform_indices = @transform_2, window_bounds = array<i64: 1, 128>}, {pipeline_mode = #tpu.pipeline_mode<synchronous>, transform_indices = @transform_3, window_bounds = array<i64: 1, 128>}, {pipeline_mode = #tpu.pipeline_mode<synchronous>, transform_indices = @transform_4, window_bounds = array<i64: 128, 768>}, {pipeline_mode = #tpu.pipeline_mode<synchronous>, transform_indices = @transform_5, window_bounds = array<i64: 128, 768>}, {pipeline_mode = #tpu.pipeline_mode<synchronous>, transform_indices = @transform_6, window_bounds = array<i64: 128, 768>}, {pipeline_mode = #tpu.pipeline_mode<synchronous>, transform_indices = @transform_7, window_bounds = array<i64: 768, 128>}, {pipeline_mode = #tpu.pipeline_mode<synchronous>, transform_indices = @transform_8, window_bounds = array<i64: 1, 128>}, {pipeline_mode = #tpu.pipeline_mode<synchronous>, transform_indices = @transform_9, window_bounds = array<i64: 1, 128>}, {pipeline_mode = #tpu.pipeline_mode<synchronous>, transform_indices = @transform_10, window_bounds = array<i64: 1, 128>}, {pipeline_mode = #tpu.pipeline_mode<synchronous>, transform_indices = @transform_11, window_bounds = array<i64: 128, 512>}, {pipeline_mode = #tpu.pipeline_mode<synchronous>, transform_indices = @transform_12, window_bounds = array<i64: 1, 512>}, {pipeline_mode = #tpu.pipeline_mode<synchronous>, transform_indices = @transform_13, window_bounds = array<i64: 512, 128>}, {pipeline_mode = #tpu.pipeline_mode<synchronous>, transform_indices = @transform_14, window_bounds = array<i64: 1, 128>}, {transform_indices = @transform_15, window_bounds = array<i64: 1, 8, 128>}]} {
    %c0 = arith.constant 0 : index
    %c0_0 = arith.constant 0 : index
    %0 = vector.load %arg3[%c0, %c0_0] : memref<1x128xf32, #tpu.memory_space<vmem>>, vector<1x128xf32>
    %c0_1 = arith.constant 0 : index
    %c0_2 = arith.constant 0 : index
    %1 = vector.load %arg4[%c0_1, %c0_2] : memref<1x128xf32, #tpu.memory_space<vmem>>, vector<1x128xf32>
    %c0_3 = arith.constant 0 : index
    %c0_4 = arith.constant 0 : index
    %2 = vector.load %arg5[%c0_3, %c0_4] : memref<1x128xf32, #tpu.memory_space<vmem>>, vector<1x128xf32>
    %c0_i32 = arith.constant 0 : i32
    %3 = arith.cmpi eq, %arg1, %c0_i32 : i32
    %4 = arith.extui %3 : i1 to i32
    %c0_i32_5 = arith.constant 0 : i32
    %5 = arith.cmpi ne, %4, %c0_i32_5 : i32
    scf.if %5 {
      %c0_77 = arith.constant 0 : index
      %c0_78 = arith.constant 0 : index
      %c0_79 = arith.constant 0 : index
      %202 = vector.load %arg2[%c0_77, %c0_78, %c0_79] : memref<1x8x128xf32, #tpu.memory_space<vmem>>, vector<1x8x128xf32>
      %203 = vector.shape_cast %202 : vector<1x8x128xf32> to vector<8x128xf32>
      %cst_80 = arith.constant dense<0.000000e+00> : vector<8xf32>
      %204 = vector.multi_reduction <add>, %203, %cst_80 [1] : vector<8x128xf32> to vector<8xf32>
      %205 = vector.shape_cast %204 : vector<8xf32> to vector<8x1xf32>
      %cst_81 = arith.constant 0.00999999977 : f32
      %206 = vector.broadcast %cst_81 : f32 to vector<8x1xf32>
      %207 = arith.mulf %205, %206 : vector<8x1xf32>
      %208 = vector.broadcast %207 : vector<8x1xf32> to vector<8x128xf32>
      %209 = arith.subf %203, %208 : vector<8x128xf32>
      %210 = vector.broadcast %0 : vector<1x128xf32> to vector<8x128xf32>
      %211 = arith.mulf %209, %210 : vector<8x128xf32>
      %212 = arith.mulf %211, %211 : vector<8x128xf32>
      %cst_82 = arith.constant dense<0.000000e+00> : vector<8xf32>
      %213 = vector.multi_reduction <add>, %212, %cst_82 [1] : vector<8x128xf32> to vector<8xf32>
      %214 = vector.shape_cast %213 : vector<8xf32> to vector<8x1xf32>
      %cst_83 = arith.constant 0.00999999977 : f32
      %215 = vector.broadcast %cst_83 : f32 to vector<8x1xf32>
      %216 = arith.mulf %214, %215 : vector<8x1xf32>
      %cst_84 = arith.constant 9.99999974E-6 : f32
      %217 = vector.broadcast %cst_84 : f32 to vector<8x1xf32>
      %218 = arith.addf %216, %217 : vector<8x1xf32>
      %219 = math.rsqrt %218 : vector<8x1xf32>
      %220 = vector.broadcast %219 : vector<8x1xf32> to vector<8x128xf32>
      %221 = arith.mulf %211, %220 : vector<8x128xf32>
      %222 = vector.broadcast %1 : vector<1x128xf32> to vector<8x128xf32>
      %223 = arith.mulf %221, %222 : vector<8x128xf32>
      %224 = vector.broadcast %2 : vector<1x128xf32> to vector<8x128xf32>
      %225 = arith.addf %223, %224 : vector<8x128xf32>
      %226 = arith.truncf %225 : vector<8x128xf32> to vector<8x128xbf16>
      %c0_85 = arith.constant 0 : index
      %c0_86 = arith.constant 0 : index
      %227 = vector.load %arg7[%c0_85, %c0_86] : memref<128x768xbf16, #tpu.memory_space<vmem>>, vector<128x768xbf16>
      %cst_87 = arith.constant dense<0.000000e+00> : vector<8x768xf32>
      %228 = tpu.matmul %226, %227, %cst_87 {dimension_numbers = #tpu.dot_dimension_numbers<[1], [0], [0], [1], [0, 0, 1, 1], [], []>} : vector<8x128xbf16>, vector<128x768xbf16>, vector<8x768xf32> -> vector<8x768xf32>
      %229 = arith.truncf %228 : vector<8x768xf32> to vector<8x768xbf16>
      %c0_88 = arith.constant 0 : index
      %c0_89 = arith.constant 0 : index
      %230 = vector.load %arg18[%c0_88, %c0_89] : memref<8x768xbf16, #tpu.memory_space<vmem>>, vector<8x768xbf16>
      tpu.vector_store %arg18[%c0_88, %c0_89], %229 {strides = array<i32>} : memref<8x768xbf16, #tpu.memory_space<vmem>>, vector<8x768xbf16>,
      %c0_90 = arith.constant 0 : index
      %c0_91 = arith.constant 0 : index
      %231 = vector.load %arg8[%c0_90, %c0_91] : memref<128x768xbf16, #tpu.memory_space<vmem>>, vector<128x768xbf16>
      %cst_92 = arith.constant dense<0.000000e+00> : vector<8x768xf32>
      %232 = tpu.matmul %226, %231, %cst_92 {dimension_numbers = #tpu.dot_dimension_numbers<[1], [0], [0], [1], [0, 0, 1, 1], [], []>} : vector<8x128xbf16>, vector<128x768xbf16>, vector<8x768xf32> -> vector<8x768xf32>
      %233 = arith.truncf %232 : vector<8x768xf32> to vector<8x768xbf16>
      %c0_93 = arith.constant 0 : index
      %c0_94 = arith.constant 0 : index
      %234 = vector.load %arg19[%c0_93, %c0_94] : memref<8x768xbf16, #tpu.memory_space<vmem>>, vector<8x768xbf16>
      tpu.vector_store %arg19[%c0_93, %c0_94], %233 {strides = array<i32>} : memref<8x768xbf16, #tpu.memory_space<vmem>>, vector<8x768xbf16>,
    } else {
    }
    %c8_i32 = arith.constant 8 : i32
    %6 = arith.muli %arg1, %c8_i32 : i32
    %7 = tpu.assume_multiple %6, 8 : i32
    %c0_6 = arith.constant 0 : index
    %8 = arith.index_cast %7 : i32 to index
    %c0_7 = arith.constant 0 : index
    %9 = vector.load %arg2[%c0_6, %8, %c0_7] : memref<1x8x128xf32, #tpu.memory_space<vmem>>, vector<1x8x128xf32>
    %10 = vector.shape_cast %9 : vector<1x8x128xf32> to vector<8x128xf32>
    %cst = arith.constant dense<0.000000e+00> : vector<8xf32>
    %11 = vector.multi_reduction <add>, %10, %cst [1] : vector<8x128xf32> to vector<8xf32>
    %12 = vector.shape_cast %11 : vector<8xf32> to vector<8x1xf32>
    %cst_8 = arith.constant 0.00999999977 : f32
    %13 = vector.broadcast %cst_8 : f32 to vector<8x1xf32>
    %14 = arith.mulf %12, %13 : vector<8x1xf32>
    %15 = vector.broadcast %14 : vector<8x1xf32> to vector<8x128xf32>
    %16 = arith.subf %10, %15 : vector<8x128xf32>
    %17 = vector.broadcast %0 : vector<1x128xf32> to vector<8x128xf32>
    %18 = arith.mulf %16, %17 : vector<8x128xf32>
    %19 = arith.mulf %18, %18 : vector<8x128xf32>
    %cst_9 = arith.constant dense<0.000000e+00> : vector<8xf32>
    %20 = vector.multi_reduction <add>, %19, %cst_9 [1] : vector<8x128xf32> to vector<8xf32>
    %21 = vector.shape_cast %20 : vector<8xf32> to vector<8x1xf32>
    %cst_10 = arith.constant 0.00999999977 : f32
    %22 = vector.broadcast %cst_10 : f32 to vector<8x1xf32>
    %23 = arith.mulf %21, %22 : vector<8x1xf32>
    %cst_11 = arith.constant 9.99999974E-6 : f32
    %24 = vector.broadcast %cst_11 : f32 to vector<8x1xf32>
    %25 = arith.addf %23, %24 : vector<8x1xf32>
    %26 = math.rsqrt %25 : vector<8x1xf32>
    %27 = vector.broadcast %26 : vector<8x1xf32> to vector<8x128xf32>
    %28 = arith.mulf %18, %27 : vector<8x128xf32>
    %29 = vector.broadcast %1 : vector<1x128xf32> to vector<8x128xf32>
    %30 = arith.mulf %28, %29 : vector<8x128xf32>
    %31 = vector.broadcast %2 : vector<1x128xf32> to vector<8x128xf32>
    %32 = arith.addf %30, %31 : vector<8x128xf32>
    %33 = arith.truncf %32 : vector<8x128xf32> to vector<8x128xbf16>
    %c0_12 = arith.constant 0 : index
    %c0_13 = arith.constant 0 : index
    %34 = vector.load %arg6[%c0_12, %c0_13] : memref<128x768xbf16, #tpu.memory_space<vmem>>, vector<128x768xbf16>
    %cst_14 = arith.constant dense<0.000000e+00> : vector<8x768xf32>
    %35 = tpu.matmul %33, %34, %cst_14 {dimension_numbers = #tpu.dot_dimension_numbers<[1], [0], [0], [1], [0, 0, 1, 1], [], []>} : vector<8x128xbf16>, vector<128x768xbf16>, vector<8x768xf32> -> vector<8x768xf32>
    %c0_15 = arith.constant 0 : index
    %c0_16 = arith.constant 0 : index
    %36 = vector.load %arg18[%c0_15, %c0_16] : memref<8x768xbf16, #tpu.memory_space<vmem>>, vector<8x768xbf16>
    %c0_17 = arith.constant 0 : index
    %c0_18 = arith.constant 0 : index
    %37 = vector.load %arg19[%c0_17, %c0_18] : memref<8x768xbf16, #tpu.memory_space<vmem>>, vector<8x768xbf16>
    %38 = vector.extract_strided_slice %35 {offsets = [0, 0], sizes = [8, 128], strides = [1, 1]} : vector<8x768xf32> to vector<8x128xf32>
    %39 = arith.truncf %38 : vector<8x128xf32> to vector<8x128xbf16>
    %40 = vector.extract_strided_slice %36 {offsets = [0, 0], sizes = [8, 128], strides = [1, 1]} : vector<8x768xbf16> to vector<8x128xbf16>
    %41 = vector.extract_strided_slice %37 {offsets = [0, 0], sizes = [8, 128], strides = [1, 1]} : vector<8x768xbf16> to vector<8x128xbf16>
    %cst_19 = arith.constant dense<0.000000e+00> : vector<8x8xf32>
    %42 = tpu.matmul %39, %40, %cst_19 {dimension_numbers = #tpu.dot_dimension_numbers<[1], [1], [0], [0], [0, 0, 1, 0], [], []>} : vector<8x128xbf16>, vector<8x128xbf16>, vector<8x8xf32> -> vector<8x8xf32>
    %cst_20 = arith.constant 2.500000e-01 : f32
    %43 = vector.broadcast %cst_20 : f32 to vector<8x8xf32>
    %44 = arith.mulf %42, %43 : vector<8x8xf32>
    %cst_21 = arith.constant dense<0xFF800000> : vector<8xf32>
    %45 = vector.multi_reduction <maximumf>, %44, %cst_21 [1] : vector<8x8xf32> to vector<8xf32>
    %46 = vector.shape_cast %45 : vector<8xf32> to vector<8x1xf32>
    %47 = vector.broadcast %46 : vector<8x1xf32> to vector<8x8xf32>
    %48 = arith.subf %44, %47 : vector<8x8xf32>
    %49 = math.exp %48 : vector<8x8xf32>
    %cst_22 = arith.constant dense<0.000000e+00> : vector<8xf32>
    %50 = vector.multi_reduction <add>, %49, %cst_22 [1] : vector<8x8xf32> to vector<8xf32>
    %51 = vector.shape_cast %50 : vector<8xf32> to vector<8x1xf32>
    %52 = tpu.reciprocal %51 {approx = true} : vector<8x1xf32> -> vector<8x1xf32>
    %53 = vector.broadcast %52 : vector<8x1xf32> to vector<8x8xf32>
    %54 = arith.mulf %49, %53 : vector<8x8xf32>
    %55 = arith.truncf %54 : vector<8x8xf32> to vector<8x8xbf16>
    %cst_23 = arith.constant dense<0.000000e+00> : vector<8x128xf32>
    %56 = tpu.matmul %55, %41, %cst_23 {dimension_numbers = #tpu.dot_dimension_numbers<[1], [0], [0], [1], [0, 0, 1, 1], [], []>} : vector<8x8xbf16>, vector<8x128xbf16>, vector<8x128xf32> -> vector<8x128xf32>
    %57 = vector.extract_strided_slice %35 {offsets = [0, 128], sizes = [8, 128], strides = [1, 1]} : vector<8x768xf32> to vector<8x128xf32>
    %58 = arith.truncf %57 : vector<8x128xf32> to vector<8x128xbf16>
    %59 = vector.extract_strided_slice %36 {offsets = [0, 128], sizes = [8, 128], strides = [1, 1]} : vector<8x768xbf16> to vector<8x128xbf16>
    %60 = vector.extract_strided_slice %37 {offsets = [0, 128], sizes = [8, 128], strides = [1, 1]} : vector<8x768xbf16> to vector<8x128xbf16>
    %cst_24 = arith.constant dense<0.000000e+00> : vector<8x8xf32>
    %61 = tpu.matmul %58, %59, %cst_24 {dimension_numbers = #tpu.dot_dimension_numbers<[1], [1], [0], [0], [0, 0, 1, 0], [], []>} : vector<8x128xbf16>, vector<8x128xbf16>, vector<8x8xf32> -> vector<8x8xf32>
    %cst_25 = arith.constant 2.500000e-01 : f32
    %62 = vector.broadcast %cst_25 : f32 to vector<8x8xf32>
    %63 = arith.mulf %61, %62 : vector<8x8xf32>
    %cst_26 = arith.constant dense<0xFF800000> : vector<8xf32>
    %64 = vector.multi_reduction <maximumf>, %63, %cst_26 [1] : vector<8x8xf32> to vector<8xf32>
    %65 = vector.shape_cast %64 : vector<8xf32> to vector<8x1xf32>
    %66 = vector.broadcast %65 : vector<8x1xf32> to vector<8x8xf32>
    %67 = arith.subf %63, %66 : vector<8x8xf32>
    %68 = math.exp %67 : vector<8x8xf32>
    %cst_27 = arith.constant dense<0.000000e+00> : vector<8xf32>
    %69 = vector.multi_reduction <add>, %68, %cst_27 [1] : vector<8x8xf32> to vector<8xf32>
    %70 = vector.shape_cast %69 : vector<8xf32> to vector<8x1xf32>
    %71 = tpu.reciprocal %70 {approx = true} : vector<8x1xf32> -> vector<8x1xf32>
    %72 = vector.broadcast %71 : vector<8x1xf32> to vector<8x8xf32>
    %73 = arith.mulf %68, %72 : vector<8x8xf32>
    %74 = arith.truncf %73 : vector<8x8xf32> to vector<8x8xbf16>
    %cst_28 = arith.constant dense<0.000000e+00> : vector<8x128xf32>
    %75 = tpu.matmul %74, %60, %cst_28 {dimension_numbers = #tpu.dot_dimension_numbers<[1], [0], [0], [1], [0, 0, 1, 1], [], []>} : vector<8x8xbf16>, vector<8x128xbf16>, vector<8x128xf32> -> vector<8x128xf32>
    %76 = vector.extract_strided_slice %35 {offsets = [0, 256], sizes = [8, 128], strides = [1, 1]} : vector<8x768xf32> to vector<8x128xf32>
    %77 = arith.truncf %76 : vector<8x128xf32> to vector<8x128xbf16>
    %78 = vector.extract_strided_slice %36 {offsets = [0, 256], sizes = [8, 128], strides = [1, 1]} : vector<8x768xbf16> to vector<8x128xbf16>
    %79 = vector.extract_strided_slice %37 {offsets = [0, 256], sizes = [8, 128], strides = [1, 1]} : vector<8x768xbf16> to vector<8x128xbf16>
    %cst_29 = arith.constant dense<0.000000e+00> : vector<8x8xf32>
    %80 = tpu.matmul %77, %78, %cst_29 {dimension_numbers = #tpu.dot_dimension_numbers<[1], [1], [0], [0], [0, 0, 1, 0], [], []>} : vector<8x128xbf16>, vector<8x128xbf16>, vector<8x8xf32> -> vector<8x8xf32>
    %cst_30 = arith.constant 2.500000e-01 : f32
    %81 = vector.broadcast %cst_30 : f32 to vector<8x8xf32>
    %82 = arith.mulf %80, %81 : vector<8x8xf32>
    %cst_31 = arith.constant dense<0xFF800000> : vector<8xf32>
    %83 = vector.multi_reduction <maximumf>, %82, %cst_31 [1] : vector<8x8xf32> to vector<8xf32>
    %84 = vector.shape_cast %83 : vector<8xf32> to vector<8x1xf32>
    %85 = vector.broadcast %84 : vector<8x1xf32> to vector<8x8xf32>
    %86 = arith.subf %82, %85 : vector<8x8xf32>
    %87 = math.exp %86 : vector<8x8xf32>
    %cst_32 = arith.constant dense<0.000000e+00> : vector<8xf32>
    %88 = vector.multi_reduction <add>, %87, %cst_32 [1] : vector<8x8xf32> to vector<8xf32>
    %89 = vector.shape_cast %88 : vector<8xf32> to vector<8x1xf32>
    %90 = tpu.reciprocal %89 {approx = true} : vector<8x1xf32> -> vector<8x1xf32>
    %91 = vector.broadcast %90 : vector<8x1xf32> to vector<8x8xf32>
    %92 = arith.mulf %87, %91 : vector<8x8xf32>
    %93 = arith.truncf %92 : vector<8x8xf32> to vector<8x8xbf16>
    %cst_33 = arith.constant dense<0.000000e+00> : vector<8x128xf32>
    %94 = tpu.matmul %93, %79, %cst_33 {dimension_numbers = #tpu.dot_dimension_numbers<[1], [0], [0], [1], [0, 0, 1, 1], [], []>} : vector<8x8xbf16>, vector<8x128xbf16>, vector<8x128xf32> -> vector<8x128xf32>
    %95 = vector.extract_strided_slice %35 {offsets = [0, 384], sizes = [8, 128], strides = [1, 1]} : vector<8x768xf32> to vector<8x128xf32>
    %96 = arith.truncf %95 : vector<8x128xf32> to vector<8x128xbf16>
    %97 = vector.extract_strided_slice %36 {offsets = [0, 384], sizes = [8, 128], strides = [1, 1]} : vector<8x768xbf16> to vector<8x128xbf16>
    %98 = vector.extract_strided_slice %37 {offsets = [0, 384], sizes = [8, 128], strides = [1, 1]} : vector<8x768xbf16> to vector<8x128xbf16>
    %cst_34 = arith.constant dense<0.000000e+00> : vector<8x8xf32>
    %99 = tpu.matmul %96, %97, %cst_34 {dimension_numbers = #tpu.dot_dimension_numbers<[1], [1], [0], [0], [0, 0, 1, 0], [], []>} : vector<8x128xbf16>, vector<8x128xbf16>, vector<8x8xf32> -> vector<8x8xf32>
    %cst_35 = arith.constant 2.500000e-01 : f32
    %100 = vector.broadcast %cst_35 : f32 to vector<8x8xf32>
    %101 = arith.mulf %99, %100 : vector<8x8xf32>
    %cst_36 = arith.constant dense<0xFF800000> : vector<8xf32>
    %102 = vector.multi_reduction <maximumf>, %101, %cst_36 [1] : vector<8x8xf32> to vector<8xf32>
    %103 = vector.shape_cast %102 : vector<8xf32> to vector<8x1xf32>
    %104 = vector.broadcast %103 : vector<8x1xf32> to vector<8x8xf32>
    %105 = arith.subf %101, %104 : vector<8x8xf32>
    %106 = math.exp %105 : vector<8x8xf32>
    %cst_37 = arith.constant dense<0.000000e+00> : vector<8xf32>
    %107 = vector.multi_reduction <add>, %106, %cst_37 [1] : vector<8x8xf32> to vector<8xf32>
    %108 = vector.shape_cast %107 : vector<8xf32> to vector<8x1xf32>
    %109 = tpu.reciprocal %108 {approx = true} : vector<8x1xf32> -> vector<8x1xf32>
    %110 = vector.broadcast %109 : vector<8x1xf32> to vector<8x8xf32>
    %111 = arith.mulf %106, %110 : vector<8x8xf32>
    %112 = arith.truncf %111 : vector<8x8xf32> to vector<8x8xbf16>
    %cst_38 = arith.constant dense<0.000000e+00> : vector<8x128xf32>
    %113 = tpu.matmul %112, %98, %cst_38 {dimension_numbers = #tpu.dot_dimension_numbers<[1], [0], [0], [1], [0, 0, 1, 1], [], []>} : vector<8x8xbf16>, vector<8x128xbf16>, vector<8x128xf32> -> vector<8x128xf32>
    %114 = vector.extract_strided_slice %35 {offsets = [0, 512], sizes = [8, 128], strides = [1, 1]} : vector<8x768xf32> to vector<8x128xf32>
    %115 = arith.truncf %114 : vector<8x128xf32> to vector<8x128xbf16>
    %116 = vector.extract_strided_slice %36 {offsets = [0, 512], sizes = [8, 128], strides = [1, 1]} : vector<8x768xbf16> to vector<8x128xbf16>
    %117 = vector.extract_strided_slice %37 {offsets = [0, 512], sizes = [8, 128], strides = [1, 1]} : vector<8x768xbf16> to vector<8x128xbf16>
    %cst_39 = arith.constant dense<0.000000e+00> : vector<8x8xf32>
    %118 = tpu.matmul %115, %116, %cst_39 {dimension_numbers = #tpu.dot_dimension_numbers<[1], [1], [0], [0], [0, 0, 1, 0], [], []>} : vector<8x128xbf16>, vector<8x128xbf16>, vector<8x8xf32> -> vector<8x8xf32>
    %cst_40 = arith.constant 2.500000e-01 : f32
    %119 = vector.broadcast %cst_40 : f32 to vector<8x8xf32>
    %120 = arith.mulf %118, %119 : vector<8x8xf32>
    %cst_41 = arith.constant dense<0xFF800000> : vector<8xf32>
    %121 = vector.multi_reduction <maximumf>, %120, %cst_41 [1] : vector<8x8xf32> to vector<8xf32>
    %122 = vector.shape_cast %121 : vector<8xf32> to vector<8x1xf32>
    %123 = vector.broadcast %122 : vector<8x1xf32> to vector<8x8xf32>
    %124 = arith.subf %120, %123 : vector<8x8xf32>
    %125 = math.exp %124 : vector<8x8xf32>
    %cst_42 = arith.constant dense<0.000000e+00> : vector<8xf32>
    %126 = vector.multi_reduction <add>, %125, %cst_42 [1] : vector<8x8xf32> to vector<8xf32>
    %127 = vector.shape_cast %126 : vector<8xf32> to vector<8x1xf32>
    %128 = tpu.reciprocal %127 {approx = true} : vector<8x1xf32> -> vector<8x1xf32>
    %129 = vector.broadcast %128 : vector<8x1xf32> to vector<8x8xf32>
    %130 = arith.mulf %125, %129 : vector<8x8xf32>
    %131 = arith.truncf %130 : vector<8x8xf32> to vector<8x8xbf16>
    %cst_43 = arith.constant dense<0.000000e+00> : vector<8x128xf32>
    %132 = tpu.matmul %131, %117, %cst_43 {dimension_numbers = #tpu.dot_dimension_numbers<[1], [0], [0], [1], [0, 0, 1, 1], [], []>} : vector<8x8xbf16>, vector<8x128xbf16>, vector<8x128xf32> -> vector<8x128xf32>
    %133 = vector.extract_strided_slice %35 {offsets = [0, 640], sizes = [8, 128], strides = [1, 1]} : vector<8x768xf32> to vector<8x128xf32>
    %134 = arith.truncf %133 : vector<8x128xf32> to vector<8x128xbf16>
    %135 = vector.extract_strided_slice %36 {offsets = [0, 640], sizes = [8, 128], strides = [1, 1]} : vector<8x768xbf16> to vector<8x128xbf16>
    %136 = vector.extract_strided_slice %37 {offsets = [0, 640], sizes = [8, 128], strides = [1, 1]} : vector<8x768xbf16> to vector<8x128xbf16>
    %cst_44 = arith.constant dense<0.000000e+00> : vector<8x8xf32>
    %137 = tpu.matmul %134, %135, %cst_44 {dimension_numbers = #tpu.dot_dimension_numbers<[1], [1], [0], [0], [0, 0, 1, 0], [], []>} : vector<8x128xbf16>, vector<8x128xbf16>, vector<8x8xf32> -> vector<8x8xf32>
    %cst_45 = arith.constant 2.500000e-01 : f32
    %138 = vector.broadcast %cst_45 : f32 to vector<8x8xf32>
    %139 = arith.mulf %137, %138 : vector<8x8xf32>
    %cst_46 = arith.constant dense<0xFF800000> : vector<8xf32>
    %140 = vector.multi_reduction <maximumf>, %139, %cst_46 [1] : vector<8x8xf32> to vector<8xf32>
    %141 = vector.shape_cast %140 : vector<8xf32> to vector<8x1xf32>
    %142 = vector.broadcast %141 : vector<8x1xf32> to vector<8x8xf32>
    %143 = arith.subf %139, %142 : vector<8x8xf32>
    %144 = math.exp %143 : vector<8x8xf32>
    %cst_47 = arith.constant dense<0.000000e+00> : vector<8xf32>
    %145 = vector.multi_reduction <add>, %144, %cst_47 [1] : vector<8x8xf32> to vector<8xf32>
    %146 = vector.shape_cast %145 : vector<8xf32> to vector<8x1xf32>
    %147 = tpu.reciprocal %146 {approx = true} : vector<8x1xf32> -> vector<8x1xf32>
    %148 = vector.broadcast %147 : vector<8x1xf32> to vector<8x8xf32>
    %149 = arith.mulf %144, %148 : vector<8x8xf32>
    %150 = arith.truncf %149 : vector<8x8xf32> to vector<8x8xbf16>
    %cst_48 = arith.constant dense<0.000000e+00> : vector<8x128xf32>
    %151 = tpu.matmul %150, %136, %cst_48 {dimension_numbers = #tpu.dot_dimension_numbers<[1], [0], [0], [1], [0, 0, 1, 1], [], []>} : vector<8x8xbf16>, vector<8x128xbf16>, vector<8x128xf32> -> vector<8x128xf32>
    %152 = tpu.concatenate %56, %75, %94, %113, %132, %151 in 1 : vector<8x128xf32>, vector<8x128xf32>, vector<8x128xf32>, vector<8x128xf32>, vector<8x128xf32>, vector<8x128xf32> -> vector<8x768xf32>
    %153 = arith.truncf %152 : vector<8x768xf32> to vector<8x768xbf16>
    %c0_49 = arith.constant 0 : index
    %c0_50 = arith.constant 0 : index
    %154 = vector.load %arg9[%c0_49, %c0_50] : memref<768x128xbf16, #tpu.memory_space<vmem>>, vector<768x128xbf16>
    %cst_51 = arith.constant dense<0.000000e+00> : vector<8x128xf32>
    %155 = tpu.matmul %153, %154, %cst_51 {dimension_numbers = #tpu.dot_dimension_numbers<[1], [0], [0], [1], [0, 0, 1, 1], [], []>} : vector<8x768xbf16>, vector<768x128xbf16>, vector<8x128xf32> -> vector<8x128xf32>
    %c0_52 = arith.constant 0 : index
    %c0_53 = arith.constant 0 : index
    %156 = vector.load %arg10[%c0_52, %c0_53] : memref<1x128xf32, #tpu.memory_space<vmem>>, vector<1x128xf32>
    %157 = vector.broadcast %156 : vector<1x128xf32> to vector<8x128xf32>
    %158 = arith.addf %155, %157 : vector<8x128xf32>
    %159 = arith.addf %10, %158 : vector<8x128xf32>
    %c0_54 = arith.constant 0 : index
    %c0_55 = arith.constant 0 : index
    %160 = vector.load %arg11[%c0_54, %c0_55] : memref<1x128xf32, #tpu.memory_space<vmem>>, vector<1x128xf32>
    %c0_56 = arith.constant 0 : index
    %c0_57 = arith.constant 0 : index
    %161 = vector.load %arg12[%c0_56, %c0_57] : memref<1x128xf32, #tpu.memory_space<vmem>>, vector<1x128xf32>
    %cst_58 = arith.constant dense<0.000000e+00> : vector<8xf32>
    %162 = vector.multi_reduction <add>, %159, %cst_58 [1] : vector<8x128xf32> to vector<8xf32>
    %163 = vector.shape_cast %162 : vector<8xf32> to vector<8x1xf32>
    %cst_59 = arith.constant 0.00999999977 : f32
    %164 = vector.broadcast %cst_59 : f32 to vector<8x1xf32>
    %165 = arith.mulf %163, %164 : vector<8x1xf32>
    %166 = vector.broadcast %165 : vector<8x1xf32> to vector<8x128xf32>
    %167 = arith.subf %159, %166 : vector<8x128xf32>
    %168 = vector.broadcast %0 : vector<1x128xf32> to vector<8x128xf32>
    %169 = arith.mulf %167, %168 : vector<8x128xf32>
    %170 = arith.mulf %169, %169 : vector<8x128xf32>
    %cst_60 = arith.constant dense<0.000000e+00> : vector<8xf32>
    %171 = vector.multi_reduction <add>, %170, %cst_60 [1] : vector<8x128xf32> to vector<8xf32>
    %172 = vector.shape_cast %171 : vector<8xf32> to vector<8x1xf32>
    %cst_61 = arith.constant 0.00999999977 : f32
    %173 = vector.broadcast %cst_61 : f32 to vector<8x1xf32>
    %174 = arith.mulf %172, %173 : vector<8x1xf32>
    %cst_62 = arith.constant 9.99999974E-6 : f32
    %175 = vector.broadcast %cst_62 : f32 to vector<8x1xf32>
    %176 = arith.addf %174, %175 : vector<8x1xf32>
    %177 = math.rsqrt %176 : vector<8x1xf32>
    %178 = vector.broadcast %177 : vector<8x1xf32> to vector<8x128xf32>
    %179 = arith.mulf %169, %178 : vector<8x128xf32>
    %180 = vector.broadcast %160 : vector<1x128xf32> to vector<8x128xf32>
    %181 = arith.mulf %179, %180 : vector<8x128xf32>
    %182 = vector.broadcast %161 : vector<1x128xf32> to vector<8x128xf32>
    %183 = arith.addf %181, %182 : vector<8x128xf32>
    %184 = arith.truncf %183 : vector<8x128xf32> to vector<8x128xbf16>
    %c0_63 = arith.constant 0 : index
    %c0_64 = arith.constant 0 : index
    %185 = vector.load %arg13[%c0_63, %c0_64] : memref<128x512xbf16, #tpu.memory_space<vmem>>, vector<128x512xbf16>
    %cst_65 = arith.constant dense<0.000000e+00> : vector<8x512xf32>
    %186 = tpu.matmul %184, %185, %cst_65 {dimension_numbers = #tpu.dot_dimension_numbers<[1], [0], [0], [1], [0, 0, 1, 1], [], []>} : vector<8x128xbf16>, vector<128x512xbf16>, vector<8x512xf32> -> vector<8x512xf32>
    %c0_66 = arith.constant 0 : index
    %c0_67 = arith.constant 0 : index
    %187 = vector.load %arg14[%c0_66, %c0_67] : memref<1x512xf32, #tpu.memory_space<vmem>>, vector<1x512xf32>
    %188 = vector.broadcast %187 : vector<1x512xf32> to vector<8x512xf32>
    %189 = arith.addf %186, %188 : vector<8x512xf32>
    %cst_68 = arith.constant 0.000000e+00 : f32
    %190 = vector.broadcast %cst_68 : f32 to vector<8x512xf32>
    %191 = arith.maximumf %189, %190 : vector<8x512xf32>
    %192 = arith.truncf %191 : vector<8x512xf32> to vector<8x512xbf16>
    %c0_69 = arith.constant 0 : index
    %c0_70 = arith.constant 0 : index
    %193 = vector.load %arg15[%c0_69, %c0_70] : memref<512x128xbf16, #tpu.memory_space<vmem>>, vector<512x128xbf16>
    %cst_71 = arith.constant dense<0.000000e+00> : vector<8x128xf32>
    %194 = tpu.matmul %192, %193, %cst_71 {dimension_numbers = #tpu.dot_dimension_numbers<[1], [0], [0], [1], [0, 0, 1, 1], [], []>} : vector<8x512xbf16>, vector<512x128xbf16>, vector<8x128xf32> -> vector<8x128xf32>
    %c0_72 = arith.constant 0 : index
    %c0_73 = arith.constant 0 : index
    %195 = vector.load %arg16[%c0_72, %c0_73] : memref<1x128xf32, #tpu.memory_space<vmem>>, vector<1x128xf32>
    %196 = vector.broadcast %195 : vector<1x128xf32> to vector<8x128xf32>
    %197 = arith.addf %194, %196 : vector<8x128xf32>
    %198 = arith.addf %159, %197 : vector<8x128xf32>
    %c0_74 = arith.constant 0 : index
    %c0_75 = arith.constant 0 : index
    %c0_76 = arith.constant 0 : index
    %199 = vector.load %arg17[%c0_74, %c0_75, %c0_76] : memref<1x8x128xf32, #tpu.memory_space<vmem>>, vector<1x8x128xf32>
    %200 = vector.shape_cast %199 : vector<1x8x128xf32> to vector<8x128xf32>
    %201 = vector.shape_cast %198 : vector<8x128xf32> to vector<1x8x128xf32>
    tpu.vector_store %arg17[%c0_74, %c0_75, %c0_76], %201 {strides = array<i32>} : memref<1x8x128xf32, #tpu.memory_space<vmem>>, vector<1x8x128xf32>,
    return
  }
  func.func @transform_0(%arg0: i32, %arg1: i32) -> (i32, i32, i32) {
    %c0_i32 = arith.constant 0 : i32
    %c0_i32_0 = arith.constant 0 : i32
    %c0_i32_1 = arith.constant 0 : i32
    return %arg0, %c0_i32, %c0_i32_0 : i32, i32, i32
  }
  func.func @transform_1(%arg0: i32, %arg1: i32) -> (i32, i32) {
    %c0_i32 = arith.constant 0 : i32
    %c0_i32_0 = arith.constant 0 : i32
    %c0_i32_1 = arith.constant 0 : i32
    return %c0_i32, %c0_i32_0 : i32, i32
  }
  func.func @transform_2(%arg0: i32, %arg1: i32) -> (i32, i32) {
    %c0_i32 = arith.constant 0 : i32
    %c0_i32_0 = arith.constant 0 : i32
    %c0_i32_1 = arith.constant 0 : i32
    return %c0_i32, %c0_i32_0 : i32, i32
  }
  func.func @transform_3(%arg0: i32, %arg1: i32) -> (i32, i32) {
    %c0_i32 = arith.constant 0 : i32
    %c0_i32_0 = arith.constant 0 : i32
    %c0_i32_1 = arith.constant 0 : i32
    return %c0_i32, %c0_i32_0 : i32, i32
  }
  func.func @transform_4(%arg0: i32, %arg1: i32) -> (i32, i32) {
    %c0_i32 = arith.constant 0 : i32
    %c0_i32_0 = arith.constant 0 : i32
    %c0_i32_1 = arith.constant 0 : i32
    return %c0_i32, %c0_i32_0 : i32, i32
  }
  func.func @transform_5(%arg0: i32, %arg1: i32) -> (i32, i32) {
    %c0_i32 = arith.constant 0 : i32
    %c0_i32_0 = arith.constant 0 : i32
    %c0_i32_1 = arith.constant 0 : i32
    return %c0_i32, %c0_i32_0 : i32, i32
  }
  func.func @transform_6(%arg0: i32, %arg1: i32) -> (i32, i32) {
    %c0_i32 = arith.constant 0 : i32
    %c0_i32_0 = arith.constant 0 : i32
    %c0_i32_1 = arith.constant 0 : i32
    return %c0_i32, %c0_i32_0 : i32, i32
  }
  func.func @transform_7(%arg0: i32, %arg1: i32) -> (i32, i32) {
    %c0_i32 = arith.constant 0 : i32
    %c0_i32_0 = arith.constant 0 : i32
    %c0_i32_1 = arith.constant 0 : i32
    return %c0_i32, %c0_i32_0 : i32, i32
  }
  func.func @transform_8(%arg0: i32, %arg1: i32) -> (i32, i32) {
    %c0_i32 = arith.constant 0 : i32
    %c0_i32_0 = arith.constant 0 : i32
    %c0_i32_1 = arith.constant 0 : i32
    return %c0_i32, %c0_i32_0 : i32, i32
  }
  func.func @transform_9(%arg0: i32, %arg1: i32) -> (i32, i32) {
    %c0_i32 = arith.constant 0 : i32
    %c0_i32_0 = arith.constant 0 : i32
    %c0_i32_1 = arith.constant 0 : i32
    return %c0_i32, %c0_i32_0 : i32, i32
  }
  func.func @transform_10(%arg0: i32, %arg1: i32) -> (i32, i32) {
    %c0_i32 = arith.constant 0 : i32
    %c0_i32_0 = arith.constant 0 : i32
    %c0_i32_1 = arith.constant 0 : i32
    return %c0_i32, %c0_i32_0 : i32, i32
  }
  func.func @transform_11(%arg0: i32, %arg1: i32) -> (i32, i32) {
    %c0_i32 = arith.constant 0 : i32
    %c0_i32_0 = arith.constant 0 : i32
    %c0_i32_1 = arith.constant 0 : i32
    return %c0_i32, %c0_i32_0 : i32, i32
  }
  func.func @transform_12(%arg0: i32, %arg1: i32) -> (i32, i32) {
    %c0_i32 = arith.constant 0 : i32
    %c0_i32_0 = arith.constant 0 : i32
    %c0_i32_1 = arith.constant 0 : i32
    return %c0_i32, %c0_i32_0 : i32, i32
  }
  func.func @transform_13(%arg0: i32, %arg1: i32) -> (i32, i32) {
    %c0_i32 = arith.constant 0 : i32
    %c0_i32_0 = arith.constant 0 : i32
    %c0_i32_1 = arith.constant 0 : i32
    return %c0_i32, %c0_i32_0 : i32, i32
  }
  func.func @transform_14(%arg0: i32, %arg1: i32) -> (i32, i32) {
    %c0_i32 = arith.constant 0 : i32
    %c0_i32_0 = arith.constant 0 : i32
    %c0_i32_1 = arith.constant 0 : i32
    return %c0_i32, %c0_i32_0 : i32, i32
  }
  func.func @transform_15(%arg0: i32, %arg1: i32) -> (i32, i32, i32) {
    %c0_i32 = arith.constant 0 : i32
    %c0_i32_0 = arith.constant 0 : i32
    return %arg0, %arg1, %c0_i32 : i32, i32, i32
  }
}

</mosaic_0001>

<llo_original>
// kernel: tpu_custom_call.1
$region0: #{tpu_custom_call.1}
  #allocation0 [shape = 'u32[]', space=smem, size = 0x4, offset = 0x4, fixed_abs, tag = 'smem constant byte address 0x4 - core index']
  #allocation1 [shape = 'u32[144,128]{1,0:T(1,128)}', space=vmem, size = 0x12000, scoped, tag = 'internal scratch']
  #allocation2 [shape = 'bf16[8,768]{1,0:T(8,128)(2,1)}', space=vmem, size = 0x3000, scoped, tag = 'scratch operand']
  #allocation3 [shape = 'bf16[8,768]{1,0:T(8,128)(2,1)}', space=vmem, size = 0x3000, scoped, tag = 'scratch operand']
  %s0 = inlined_call_operand.hbm [shape: f32[2,8,128], index: 0, kind: input, shape index: {}]
  %s1 = inlined_call_operand.vmem [shape: f32[1,128], index: 1, kind: input, shape index: {}]
  %s2 = inlined_call_operand.vmem [shape: f32[1,128], index: 2, kind: input, shape index: {}]
  %s3 = inlined_call_operand.vmem [shape: f32[1,128], index: 3, kind: input, shape index: {}]
  %s4 = inlined_call_operand.hbm [shape: bf16[128,768], index: 4, kind: input, shape index: {}]
  %s5 = inlined_call_operand.hbm [shape: bf16[128,768], index: 5, kind: input, shape index: {}]
  %s6 = inlined_call_operand.hbm [shape: bf16[128,768], index: 6, kind: input, shape index: {}]
  %s7 = inlined_call_operand.hbm [shape: bf16[768,128], index: 7, kind: input, shape index: {}]
  %s8 = inlined_call_operand.vmem [shape: f32[1,128], index: 8, kind: input, shape index: {}]
  %s9 = inlined_call_operand.vmem [shape: f32[1,128], index: 9, kind: input, shape index: {}]
  %s10 = inlined_call_operand.vmem [shape: f32[1,128], index: 10, kind: input, shape index: {}]
  %s11 = inlined_call_operand.hbm [shape: bf16[128,512], index: 11, kind: input, shape index: {}]
  %s12 = inlined_call_operand.vmem [shape: f32[1,512], index: 12, kind: input, shape index: {}]
  %s13 = inlined_call_operand.hbm [shape: bf16[512,128], index: 13, kind: input, shape index: {}]
  %s14 = inlined_call_operand.vmem [shape: f32[1,128], index: 14, kind: input, shape index: {}]
  %s15 = inlined_call_operand.hbm [shape: f32[2,8,128], index: 15, kind: output, shape index: {}]
  %s16 = sld [smem:[#allocation0]]
  $region125: #{tpu_custom_call.1} parent=0
    _
  %s18 = ssub.s32 1, %s16
  %s19 = scalar_select 0, %s18, %s16
  $region1: #{tpu_custom_call.1} parent=0
    #allocation4 [shape = 'u8[8192]{0}', space=vmem, size = 0x2000, scoped, tag = 'input window, operand 0']
    #allocation5 [shape = 's32[2]{0}', space=sflag, size = 0x8, scoped, tag = 'scoped memory for tpu_custom_call.1']
    #allocation6 [shape = 's32[2]{0}', space=sflag, size = 0x8, scoped, tag = 'scoped memory for tpu_custom_call.1']
    #allocation7 [shape = 'u8[196608]{0}', space=vmem, size = 0x30000, scoped, tag = 'input window, operand 4, single buffered']
    #allocation8 [shape = 's32[1]{0}', space=sflag, size = 0x4, scoped, tag = 'scoped memory for tpu_custom_call.1']
    #allocation9 [shape = 'u8[196608]{0}', space=vmem, size = 0x30000, scoped, tag = 'input window, operand 5, single buffered']
    #allocation10 [shape = 'u8[196608]{0}', space=vmem, size = 0x30000, scoped, tag = 'input window, operand 6, single buffered']
    #allocation11 [shape = 's32[1]{0}', space=sflag, size = 0x4, scoped, tag = 'scoped memory for tpu_custom_call.1']
    #allocation12 [shape = 'u8[196608]{0}', space=vmem, size = 0x30000, scoped, tag = 'input window, operand 7, single buffered']
    #allocation13 [shape = 'u8[131072]{0}', space=vmem, size = 0x20000, scoped, tag = 'input window, operand 11, single buffered']
    #allocation14 [shape = 's32[1]{0}', space=sflag, size = 0x4, scoped, tag = 'scoped memory for tpu_custom_call.1']
    #allocation15 [shape = 'u8[131072]{0}', space=vmem, size = 0x20000, scoped, tag = 'input window, operand 13, single buffered']
    #allocation16 [shape = 'u8[8192]{0}', space=vmem, size = 0x2000, scoped, tag = 'output window, operand 0']
    %20 = vsyncpa [#allocation5], 0
    %s21 = scalar_lea.sflag [#allocation5], 1
    %22 = vsyncpa %s21, 0
    %23 = vsyncpa [#allocation8], 0
    %24 = vsyncpa [#allocation11], 0
    %25 = vsyncpa [#allocation14], 0
    %26 = vsyncpa [#allocation6], 0
    %s27 = scalar_lea.sflag [#allocation6], 1
    %28 = vsyncpa %s27, 0
    loop: start=0, step=1, limit=4
    $region2: #{tpu_custom_call.1} parent=1 // loop_pre_header
      _
    $region3: #{tpu_custom_call.1} parent=1 // loop_header
      %s30 = sphi 0, %s34
      %p31 = scmp.ge.s32.totalorder %s30, 4
      %s37 = sphi 0, %s49
      %s38 = sphi 0, %s45
      %s39 = sphi 0, %s37
      %s40 = sphi 0, %s38
      %s41 = sphi 0, %s39
      %s42 = sphi 0, %s40
      %s52 = sphi 0, %s54
      %s55 = sphi 0, %s52
      %s56 = sphi 0, %s55
      %s72 = sphi 0, %s56
      %s76 = sphi 0, %s76
      %s78 = sphi 0, %s76
      %s79 = sphi 0, %s78
      %s93 = sphi 0, %s79
      %s97 = sphi 0, %s97
      %s99 = sphi 0, %s97
      %s100 = sphi 0, %s99
      %s114 = sphi 0, %s100
      %s118 = sphi 0, %s118
      %s120 = sphi 0, %s118
      %s121 = sphi 0, %s120
      %s135 = sphi 0, %s121
      %s139 = sphi 0, %s139
      %s141 = sphi 0, %s139
      %s142 = sphi 0, %s141
      %s156 = sphi 0, %s142
      %s160 = sphi 0, %s160
      %s162 = sphi 0, %s160
      %s163 = sphi 0, %s162
      %s177 = sphi 0, %s163
      %s181 = sphi 0, %s181
      %s183 = sphi 0, %s181
      %s184 = sphi 0, %s183
      %s198 = sphi 0, %s184
      %s202 = sphi 0, %s202
      %s204 = sphi 0, %s202
      %s205 = sphi 0, %s204
      %s219 = sphi 0, %s205
      %s223 = sphi 0, %s223
      %s225 = sphi 0, %s223
      %s226 = sphi 0, %s225
      %s240 = sphi 0, %s226
      %s244 = sphi 0, %s244
      %s246 = sphi 0, %s244
      %s247 = sphi 0, %s246
      %s261 = sphi 0, %s247
      %s265 = sphi 0, %s265
      %s267 = sphi 0, %s265
      %s268 = sphi 0, %s267
      %s282 = sphi 0, %s268
      %s286 = sphi 0, %s286
      %s288 = sphi 0, %s286
      %s289 = sphi 0, %s288
      %s303 = sphi 0, %s289
      %s307 = sphi 0, %s307
      %s309 = sphi 0, %s307
      %s310 = sphi 0, %s309
      %s324 = sphi 0, %s310
      %s328 = sphi 0, %s328
      %s330 = sphi 0, %s328
      %s331 = sphi 0, %s330
      %s345 = sphi 0, %s331
      %s349 = sphi 0, %s349
      %s351 = sphi 0, %s349
      %s352 = sphi 0, %s351
      %s366 = sphi 0, %s352
      %s374 = sphi 0, %s376
      %s377 = sphi 0, %s374
      %s378 = sphi 0, %s377
      %s394 = sphi 0, %s378
    $region4: #{tpu_custom_call.1} parent=1 // loop_header_branch
      %33 = sbr.rel (%p31) target = $region8
    $region5: #{tpu_custom_call.1} parent=1 // loop_body
      %s35 = ssub.s32 %s30, 1
      %s36 = ssub.s32 %s30, 2
      %s43 = sadd.s32 1, %s38
      %p44 = scmp.ge.s32.totalorder %s43, 1
      %s45 = scalar_select %p44, 0, %s43
      %s46 = sadd.s32 1, %s37
      %s47 = scalar_select %p44, %s46, %s37
      %p48 = scmp.ge.s32.totalorder %s47, 2
      %s49 = scalar_select %p48, 0, %s47
      %s50 = ssub.s32 %s37, %s49
      %p51 = scmp.eq.s32.totalorder %s50, 0
      %s53 = sadd.s32 %s52, 1
      %s54 = scalar_select %p51, %s52, %s53
      %p57 = pneg %p51
      %p58 = scmp.eq.s32.totalorder %s30, 1
      %p59 = por %p57, %p58
      %p60 = scmp.ne.s32.totalorder %s52, %s55
      %p61 = scmp.eq.s32.totalorder %s30, 0
      %p62 = por %p60, %p61
      %p63 = scmp.ne.s32.totalorder %s52, %s55
      %p64 = scmp.eq.s32.totalorder %s35, 1
      %p65 = por %p63, %p64
      %p66 = scmp.ne.s32.totalorder %s55, %s56
      %p67 = scmp.eq.s32.totalorder %s35, 0
      %p68 = por %p66, %p67
      %p69 = scmp.ne.s32.totalorder %s55, %s56
      %p70 = scmp.eq.s32.totalorder %s36, 1
      %p71 = por %p69, %p70
      %p73 = scmp.ne.s32.totalorder %s56, %s72
      %p74 = scmp.eq.s32.totalorder %s36, 0
      %p75 = por %p73, %p74
      %s77 = sadd.s32 %s76, 1
      %p80 = scmp.eq.s32.totalorder %s30, 1
      %p81 = scmp.ne.s32.totalorder %s76, %s78
      %p82 = scmp.eq.s32.totalorder %s30, 0
      %p83 = por %p81, %p82
      %p84 = scmp.ne.s32.totalorder %s76, %s78
      %p85 = scmp.eq.s32.totalorder %s35, 1
      %p86 = por %p84, %p85
      %p87 = scmp.ne.s32.totalorder %s78, %s79
      %p88 = scmp.eq.s32.totalorder %s35, 0
      %p89 = por %p87, %p88
      %p90 = scmp.ne.s32.totalorder %s78, %s79
      %p91 = scmp.eq.s32.totalorder %s36, 1
      %p92 = por %p90, %p91
      %p94 = scmp.ne.s32.totalorder %s79, %s93
      %p95 = scmp.eq.s32.totalorder %s36, 0
      %p96 = por %p94, %p95
      %s98 = sadd.s32 %s97, 1
      %p101 = scmp.eq.s32.totalorder %s30, 1
      %p102 = scmp.ne.s32.totalorder %s97, %s99
      %p103 = scmp.eq.s32.totalorder %s30, 0
      %p104 = por %p102, %p103
      %p105 = scmp.ne.s32.totalorder %s97, %s99
      %p106 = scmp.eq.s32.totalorder %s35, 1
      %p107 = por %p105, %p106
      %p108 = scmp.ne.s32.totalorder %s99, %s100
      %p109 = scmp.eq.s32.totalorder %s35, 0
      %p110 = por %p108, %p109
      %p111 = scmp.ne.s32.totalorder %s99, %s100
      %p112 = scmp.eq.s32.totalorder %s36, 1
      %p113 = por %p111, %p112
      %p115 = scmp.ne.s32.totalorder %s100, %s114
      %p116 = scmp.eq.s32.totalorder %s36, 0
      %p117 = por %p115, %p116
      %s119 = sadd.s32 %s118, 1
      %p122 = scmp.eq.s32.totalorder %s30, 1
      %p123 = scmp.ne.s32.totalorder %s118, %s120
      %p124 = scmp.eq.s32.totalorder %s30, 0
      %p125 = por %p123, %p124
      %p126 = scmp.ne.s32.totalorder %s118, %s120
      %p127 = scmp.eq.s32.totalorder %s35, 1
      %p128 = por %p126, %p127
      %p129 = scmp.ne.s32.totalorder %s120, %s121
      %p130 = scmp.eq.s32.totalorder %s35, 0
      %p131 = por %p129, %p130
      %p132 = scmp.ne.s32.totalorder %s120, %s121
      %p133 = scmp.eq.s32.totalorder %s36, 1
      %p134 = por %p132, %p133
      %p136 = scmp.ne.s32.totalorder %s121, %s135
      %p137 = scmp.eq.s32.totalorder %s36, 0
      %p138 = por %p136, %p137
      %s140 = sadd.s32 %s139, 1
      %p143 = scmp.eq.s32.totalorder %s30, 1
      %p144 = scmp.ne.s32.totalorder %s139, %s141
      %p145 = scmp.eq.s32.totalorder %s30, 0
      %p146 = por %p144, %p145
      %p147 = scmp.ne.s32.totalorder %s139, %s141
      %p148 = scmp.eq.s32.totalorder %s35, 1
      %p149 = por %p147, %p148
      %p150 = scmp.ne.s32.totalorder %s141, %s142
      %p151 = scmp.eq.s32.totalorder %s35, 0
      %p152 = por %p150, %p151
      %p153 = scmp.ne.s32.totalorder %s141, %s142
      %p154 = scmp.eq.s32.totalorder %s36, 1
      %p155 = por %p153, %p154
      %p157 = scmp.ne.s32.totalorder %s142, %s156
      %p158 = scmp.eq.s32.totalorder %s36, 0
      %p159 = por %p157, %p158
      %s161 = sadd.s32 %s160, 1
      %p164 = scmp.eq.s32.totalorder %s30, 1
      %p165 = scmp.ne.s32.totalorder %s160, %s162
      %p166 = scmp.eq.s32.totalorder %s30, 0
      %p167 = por %p165, %p166
      %p168 = scmp.ne.s32.totalorder %s160, %s162
      %p169 = scmp.eq.s32.totalorder %s35, 1
      %p170 = por %p168, %p169
      %p171 = scmp.ne.s32.totalorder %s162, %s163
      %p172 = scmp.eq.s32.totalorder %s35, 0
      %p173 = por %p171, %p172
      %p174 = scmp.ne.s32.totalorder %s162, %s163
      %p175 = scmp.eq.s32.totalorder %s36, 1
      %p176 = por %p174, %p175
      %p178 = scmp.ne.s32.totalorder %s163, %s177
      %p179 = scmp.eq.s32.totalorder %s36, 0
      %p180 = por %p178, %p179
      %s182 = sadd.s32 %s181, 1
      %p185 = scmp.eq.s32.totalorder %s30, 1
      %p186 = scmp.ne.s32.totalorder %s181, %s183
      %p187 = scmp.eq.s32.totalorder %s30, 0
      %p188 = por %p186, %p187
      %p189 = scmp.ne.s32.totalorder %s181, %s183
      %p190 = scmp.eq.s32.totalorder %s35, 1
      %p191 = por %p189, %p190
      %p192 = scmp.ne.s32.totalorder %s183, %s184
      %p193 = scmp.eq.s32.totalorder %s35, 0
      %p194 = por %p192, %p193
      %p195 = scmp.ne.s32.totalorder %s183, %s184
      %p196 = scmp.eq.s32.totalorder %s36, 1
      %p197 = por %p195, %p196
      %p199 = scmp.ne.s32.totalorder %s184, %s198
      %p200 = scmp.eq.s32.totalorder %s36, 0
      %p201 = por %p199, %p200
      %s203 = sadd.s32 %s202, 1
      %p206 = scmp.eq.s32.totalorder %s30, 1
      %p207 = scmp.ne.s32.totalorder %s202, %s204
      %p208 = scmp.eq.s32.totalorder %s30, 0
      %p209 = por %p207, %p208
      %p210 = scmp.ne.s32.totalorder %s202, %s204
      %p211 = scmp.eq.s32.totalorder %s35, 1
      %p212 = por %p210, %p211
      %p213 = scmp.ne.s32.totalorder %s204, %s205
      %p214 = scmp.eq.s32.totalorder %s35, 0
      %p215 = por %p213, %p214
      %p216 = scmp.ne.s32.totalorder %s204, %s205
      %p217 = scmp.eq.s32.totalorder %s36, 1
      %p218 = por %p216, %p217
      %p220 = scmp.ne.s32.totalorder %s205, %s219
      %p221 = scmp.eq.s32.totalorder %s36, 0
      %p222 = por %p220, %p221
      %s224 = sadd.s32 %s223, 1
      %p227 = scmp.eq.s32.totalorder %s30, 1
      %p228 = scmp.ne.s32.totalorder %s223, %s225
      %p229 = scmp.eq.s32.totalorder %s30, 0
      %p230 = por %p228, %p229
      %p231 = scmp.ne.s32.totalorder %s223, %s225
      %p232 = scmp.eq.s32.totalorder %s35, 1
      %p233 = por %p231, %p232
      %p234 = scmp.ne.s32.totalorder %s225, %s226
      %p235 = scmp.eq.s32.totalorder %s35, 0
      %p236 = por %p234, %p235
      %p237 = scmp.ne.s32.totalorder %s225, %s226
      %p238 = scmp.eq.s32.totalorder %s36, 1
      %p239 = por %p237, %p238
      %p241 = scmp.ne.s32.totalorder %s226, %s240
      %p242 = scmp.eq.s32.totalorder %s36, 0
      %p243 = por %p241, %p242
      %s245 = sadd.s32 %s244, 1
      %p248 = scmp.eq.s32.totalorder %s30, 1
      %p249 = scmp.ne.s32.totalorder %s244, %s246
      %p250 = scmp.eq.s32.totalorder %s30, 0
      %p251 = por %p249, %p250
      %p252 = scmp.ne.s32.totalorder %s244, %s246
      %p253 = scmp.eq.s32.totalorder %s35, 1
      %p254 = por %p252, %p253
      %p255 = scmp.ne.s32.totalorder %s246, %s247
      %p256 = scmp.eq.s32.totalorder %s35, 0
      %p257 = por %p255, %p256
      %p258 = scmp.ne.s32.totalorder %s246, %s247
      %p259 = scmp.eq.s32.totalorder %s36, 1
      %p260 = por %p258, %p259
      %p262 = scmp.ne.s32.totalorder %s247, %s261
      %p263 = scmp.eq.s32.totalorder %s36, 0
      %p264 = por %p262, %p263
      %s266 = sadd.s32 %s265, 1
      %p269 = scmp.eq.s32.totalorder %s30, 1
      %p270 = scmp.ne.s32.totalorder %s265, %s267
      %p271 = scmp.eq.s32.totalorder %s30, 0
      %p272 = por %p270, %p271
      %p273 = scmp.ne.s32.totalorder %s265, %s267
      %p274 = scmp.eq.s32.totalorder %s35, 1
      %p275 = por %p273, %p274
      %p276 = scmp.ne.s32.totalorder %s267, %s268
      %p277 = scmp.eq.s32.totalorder %s35, 0
      %p278 = por %p276, %p277
      %p279 = scmp.ne.s32.totalorder %s267, %s268
      %p280 = scmp.eq.s32.totalorder %s36, 1
      %p281 = por %p279, %p280
      %p283 = scmp.ne.s32.totalorder %s268, %s282
      %p284 = scmp.eq.s32.totalorder %s36, 0
      %p285 = por %p283, %p284
      %s287 = sadd.s32 %s286, 1
      %p290 = scmp.eq.s32.totalorder %s30, 1
      %p291 = scmp.ne.s32.totalorder %s286, %s288
      %p292 = scmp.eq.s32.totalorder %s30, 0
      %p293 = por %p291, %p292
      %p294 = scmp.ne.s32.totalorder %s286, %s288
      %p295 = scmp.eq.s32.totalorder %s35, 1
      %p296 = por %p294, %p295
      %p297 = scmp.ne.s32.totalorder %s288, %s289
      %p298 = scmp.eq.s32.totalorder %s35, 0
      %p299 = por %p297, %p298
      %p300 = scmp.ne.s32.totalorder %s288, %s289
      %p301 = scmp.eq.s32.totalorder %s36, 1
      %p302 = por %p300, %p301
      %p304 = scmp.ne.s32.totalorder %s289, %s303
      %p305 = scmp.eq.s32.totalorder %s36, 0
      %p306 = por %p304, %p305
      %s308 = sadd.s32 %s307, 1
      %p311 = scmp.eq.s32.totalorder %s30, 1
      %p312 = scmp.ne.s32.totalorder %s307, %s309
      %p313 = scmp.eq.s32.totalorder %s30, 0
      %p314 = por %p312, %p313
      %p315 = scmp.ne.s32.totalorder %s307, %s309
      %p316 = scmp.eq.s32.totalorder %s35, 1
      %p317 = por %p315, %p316
      %p318 = scmp.ne.s32.totalorder %s309, %s310
      %p319 = scmp.eq.s32.totalorder %s35, 0
      %p320 = por %p318, %p319
      %p321 = scmp.ne.s32.totalorder %s309, %s310
      %p322 = scmp.eq.s32.totalorder %s36, 1
      %p323 = por %p321, %p322
      %p325 = scmp.ne.s32.totalorder %s310, %s324
      %p326 = scmp.eq.s32.totalorder %s36, 0
      %p327 = por %p325, %p326
      %s329 = sadd.s32 %s328, 1
      %p332 = scmp.eq.s32.totalorder %s30, 1
      %p333 = scmp.ne.s32.totalorder %s328, %s330
      %p334 = scmp.eq.s32.totalorder %s30, 0
      %p335 = por %p333, %p334
      %p336 = scmp.ne.s32.totalorder %s328, %s330
      %p337 = scmp.eq.s32.totalorder %s35, 1
      %p338 = por %p336, %p337
      %p339 = scmp.ne.s32.totalorder %s330, %s331
      %p340 = scmp.eq.s32.totalorder %s35, 0
      %p341 = por %p339, %p340
      %p342 = scmp.ne.s32.totalorder %s330, %s331
      %p343 = scmp.eq.s32.totalorder %s36, 1
      %p344 = por %p342, %p343
      %p346 = scmp.ne.s32.totalorder %s331, %s345
      %p347 = scmp.eq.s32.totalorder %s36, 0
      %p348 = por %p346, %p347
      %s350 = sadd.s32 %s349, 1
      %p353 = scmp.eq.s32.totalorder %s30, 1
      %p354 = scmp.ne.s32.totalorder %s349, %s351
      %p355 = scmp.eq.s32.totalorder %s30, 0
      %p356 = por %p354, %p355
      %p357 = scmp.ne.s32.totalorder %s349, %s351
      %p358 = scmp.eq.s32.totalorder %s35, 1
      %p359 = por %p357, %p358
      %p360 = scmp.ne.s32.totalorder %s351, %s352
      %p361 = scmp.eq.s32.totalorder %s35, 0
      %p362 = por %p360, %p361
      %p363 = scmp.ne.s32.totalorder %s351, %s352
      %p364 = scmp.eq.s32.totalorder %s36, 1
      %p365 = por %p363, %p364
      %p367 = scmp.ne.s32.totalorder %s352, %s366
      %p368 = scmp.eq.s32.totalorder %s36, 0
      %p369 = por %p367, %p368
      %s370 = ssub.s32 %s37, %s49
      %s371 = ssub.s32 %s38, %s45
      %s372 = sor.u32 %s370, %s371
      %p373 = scmp.eq.s32.totalorder %s372, 0
      %s375 = sadd.s32 %s374, 1
      %s376 = scalar_select %p373, %s374, %s375
      %p379 = pneg %p373
      %p380 = scmp.eq.s32.totalorder %s30, 1
      %p381 = por %p379, %p380
      %p382 = scmp.ne.s32.totalorder %s374, %s377
      %p383 = scmp.eq.s32.totalorder %s30, 0
      %p384 = por %p382, %p383
      %p385 = scmp.ne.s32.totalorder %s374, %s377
      %p386 = scmp.eq.s32.totalorder %s35, 1
      %p387 = por %p385, %p386
      %p388 = scmp.ne.s32.totalorder %s377, %s378
      %p389 = scmp.eq.s32.totalorder %s35, 0
      %p390 = por %p388, %p389
      %p391 = scmp.ne.s32.totalorder %s377, %s378
      %p392 = scmp.eq.s32.totalorder %s36, 1
      %p393 = por %p391, %p392
      %p395 = scmp.ne.s32.totalorder %s378, %s394
      %p396 = scmp.eq.s32.totalorder %s36, 0
      %p397 = por %p395, %p396
      %p398 = scmp.le.s32.totalorder 1, %s30
      %p399 = scmp.lt.s32.totalorder %s30, 3
      %p400 = pnand %p398, %p399
      %p401 = pneg %p400
      // Predicated region
      $region9: #{tpu_custom_call.1} parent=5 // pred_check
        _
      $region10: #{tpu_custom_call.1} parent=5 // pred_check_branch
        %403 = sbr.rel (%p400) target = $region12
      $region11: #{tpu_custom_call.1} parent=5 // pred_region
        %s404 = ssub.s32 %s30, 1
        // Predicated region
        $region13: #{tpu_custom_call.1} parent=11 // pred_check
          %p405 = pneg %p89
        $region14: #{tpu_custom_call.1} parent=11 // pred_check_branch
          %407 = sbr.rel (%p405) target = $region16
        $region15: #{tpu_custom_call.1} parent=11 // pred_region
          _
        $region16: #{tpu_custom_call.1} parent=11 // pred_fallthru
          _
        // Predicated region
        $region17: #{tpu_custom_call.1} parent=11 // pred_check
          %p408 = pneg %p110
        $region18: #{tpu_custom_call.1} parent=11 // pred_check_branch
          %410 = sbr.rel (%p408) target = $region20
        $region19: #{tpu_custom_call.1} parent=11 // pred_region
          _
        $region20: #{tpu_custom_call.1} parent=11 // pred_fallthru
          _
        // Predicated region
        $region21: #{tpu_custom_call.1} parent=11 // pred_check
          %p411 = pneg %p131
        $region22: #{tpu_custom_call.1} parent=11 // pred_check_branch
          %413 = sbr.rel (%p411) target = $region24
        $region23: #{tpu_custom_call.1} parent=11 // pred_region
          _
        $region24: #{tpu_custom_call.1} parent=11 // pred_fallthru
          _
        // Predicated region
        $region25: #{tpu_custom_call.1} parent=11 // pred_check
          %p414 = pneg %p152
        $region26: #{tpu_custom_call.1} parent=11 // pred_check_branch
          %416 = sbr.rel (%p414) target = $region28
        $region27: #{tpu_custom_call.1} parent=11 // pred_region
          %s418 = ssub.s32 6144, 6144
          %419 = vsyncadd [#allocation8], %s418
          %s420 = sshll.u32 [#allocation7], 4
          %s421 = int_to_ptr.vmem [resolvable:$true] %s420
          %426 = dma.hbm_to_vmem [thread:$0]  %s4, 6144, %s421, [#allocation8], 384, 384, 24
        $region28: #{tpu_custom_call.1} parent=11 // pred_fallthru
          _
        // Predicated region
        $region29: #{tpu_custom_call.1} parent=11 // pred_check
          %p427 = pneg %p173
        $region30: #{tpu_custom_call.1} parent=11 // pred_check_branch
          %429 = sbr.rel (%p427) target = $region32
        $region31: #{tpu_custom_call.1} parent=11 // pred_region
          %s431 = ssub.s32 6144, 6144
          %432 = vsyncadd [#allocation8], %s431
          %s433 = sshll.u32 [#allocation9], 4
          %s434 = int_to_ptr.vmem [resolvable:$true] %s433
          %439 = dma.hbm_to_vmem [thread:$0]  %s5, 6144, %s434, [#allocation8], 384, 384, 24
        $region32: #{tpu_custom_call.1} parent=11 // pred_fallthru
          _
        // Predicated region
        $region33: #{tpu_custom_call.1} parent=11 // pred_check
          %p440 = pneg %p194
        $region34: #{tpu_custom_call.1} parent=11 // pred_check_branch
          %442 = sbr.rel (%p440) target = $region36
        $region35: #{tpu_custom_call.1} parent=11 // pred_region
          %s444 = ssub.s32 6144, 6144
          %445 = vsyncadd [#allocation11], %s444
          %s446 = sshll.u32 [#allocation10], 4
          %s447 = int_to_ptr.vmem [resolvable:$true] %s446
          %452 = dma.hbm_to_vmem [thread:$0]  %s6, 6144, %s447, [#allocation11], 384, 384, 24
        $region36: #{tpu_custom_call.1} parent=11 // pred_fallthru
          _
        // Predicated region
        $region37: #{tpu_custom_call.1} parent=11 // pred_check
          %p453 = pneg %p215
        $region38: #{tpu_custom_call.1} parent=11 // pred_check_branch
          %455 = sbr.rel (%p453) target = $region40
        $region39: #{tpu_custom_call.1} parent=11 // pred_region
          %s457 = ssub.s32 6144, 6144
          %458 = vsyncadd [#allocation11], %s457
          %s459 = sshll.u32 [#allocation12], 4
          %s460 = int_to_ptr.vmem [resolvable:$true] %s459
          %465 = dma.hbm_to_vmem [thread:$0]  %s7, 6144, %s460, [#allocation11], 64, 64, 4
        $region40: #{tpu_custom_call.1} parent=11 // pred_fallthru
          _
        // Predicated region
        $region41: #{tpu_custom_call.1} parent=11 // pred_check
          %p466 = pneg %p236
        $region42: #{tpu_custom_call.1} parent=11 // pred_check_branch
          %468 = sbr.rel (%p466) target = $region44
        $region43: #{tpu_custom_call.1} parent=11 // pred_region
          _
        $region44: #{tpu_custom_call.1} parent=11 // pred_fallthru
          _
        // Predicated region
        $region45: #{tpu_custom_call.1} parent=11 // pred_check
          %p469 = pneg %p257
        $region46: #{tpu_custom_call.1} parent=11 // pred_check_branch
          %471 = sbr.rel (%p469) target = $region48
        $region47: #{tpu_custom_call.1} parent=11 // pred_region
          _
        $region48: #{tpu_custom_call.1} parent=11 // pred_fallthru
          _
        // Predicated region
        $region49: #{tpu_custom_call.1} parent=11 // pred_check
          %p472 = pneg %p278
        $region50: #{tpu_custom_call.1} parent=11 // pred_check_branch
          %474 = sbr.rel (%p472) target = $region52
        $region51: #{tpu_custom_call.1} parent=11 // pred_region
          _
        $region52: #{tpu_custom_call.1} parent=11 // pred_fallthru
          _
        // Predicated region
        $region53: #{tpu_custom_call.1} parent=11 // pred_check
          %p475 = pneg %p299
        $region54: #{tpu_custom_call.1} parent=11 // pred_check_branch
          %477 = sbr.rel (%p475) target = $region56
        $region55: #{tpu_custom_call.1} parent=11 // pred_region
          %s479 = ssub.s32 4096, 4096
          %480 = vsyncadd [#allocation14], %s479
          %s481 = sshll.u32 [#allocation13], 4
          %s482 = int_to_ptr.vmem [resolvable:$true] %s481
          %487 = dma.hbm_to_vmem [thread:$0]  %s11, 4096, %s482, [#allocation14], 256, 256, 16
        $region56: #{tpu_custom_call.1} parent=11 // pred_fallthru
          _
        // Predicated region
        $region57: #{tpu_custom_call.1} parent=11 // pred_check
          %p488 = pneg %p320
        $region58: #{tpu_custom_call.1} parent=11 // pred_check_branch
          %490 = sbr.rel (%p488) target = $region60
        $region59: #{tpu_custom_call.1} parent=11 // pred_region
          _
        $region60: #{tpu_custom_call.1} parent=11 // pred_fallthru
          _
        // Predicated region
        $region61: #{tpu_custom_call.1} parent=11 // pred_check
          %p491 = pneg %p341
        $region62: #{tpu_custom_call.1} parent=11 // pred_check_branch
          %493 = sbr.rel (%p491) target = $region64
        $region63: #{tpu_custom_call.1} parent=11 // pred_region
          %s495 = ssub.s32 4096, 4096
          %496 = vsyncadd [#allocation14], %s495
          %s497 = sshll.u32 [#allocation15], 4
          %s498 = int_to_ptr.vmem [resolvable:$true] %s497
          %503 = dma.hbm_to_vmem [thread:$0]  %s13, 4096, %s498, [#allocation14], 64, 64, 4
        $region64: #{tpu_custom_call.1} parent=11 // pred_fallthru
          _
        // Predicated region
        $region65: #{tpu_custom_call.1} parent=11 // pred_check
          %p504 = pneg %p362
        $region66: #{tpu_custom_call.1} parent=11 // pred_check_branch
          %506 = sbr.rel (%p504) target = $region68
        $region67: #{tpu_custom_call.1} parent=11 // pred_region
          _
        $region68: #{tpu_custom_call.1} parent=11 // pred_fallthru
          _
      $region12: #{tpu_custom_call.1} parent=5 // pred_fallthru
        _
      %p507 = scmp.lt.s32.totalorder %s30, 2
      // Predicated region
      $region69: #{tpu_custom_call.1} parent=5 // pred_check
        %p508 = pneg %p507
      $region70: #{tpu_custom_call.1} parent=5 // pred_check_branch
        %510 = sbr.rel (%p508) target = $region72
      $region71: #{tpu_custom_call.1} parent=5 // pred_region
        // Predicated region
        $region73: #{tpu_custom_call.1} parent=71 // pred_check
          %p511 = pneg %p62
        $region74: #{tpu_custom_call.1} parent=71 // pred_check_branch
          %513 = sbr.rel (%p511) target = $region76
        $region75: #{tpu_custom_call.1} parent=71 // pred_region
          %s514 = sand.u32 %s52, 1
          %s515 = scalar_lea.sflag [#allocation5], %s514
          %s516 = sand.u32 %s52, 1
          %s517 = smul.addr %s516, 8
          %s518 = scalar_lea.vmem [#allocation4], %s517
          %s520 = ssub.s32 128, 128
          %521 = vsyncadd %s515, %s520
          %s522 = smul.addr %s37, 128
          %s523 = scalar_lea.hbm %s0, %s522
          %s525 = sshll.u32 %s518, 4
          %s526 = int_to_ptr.vmem [resolvable:$true] %s525
          %528 = dma.hbm_to_vmem [thread:$0]  %s523, 128, %s526, %s515
        $region76: #{tpu_custom_call.1} parent=71 // pred_fallthru
          _
      $region72: #{tpu_custom_call.1} parent=5 // pred_fallthru
        _
      %p529 = scmp.le.s32.totalorder 1, %s30
      %p530 = scmp.lt.s32.totalorder %s30, 3
      %p531 = pnand %p529, %p530
      %p532 = pneg %p531
      // Predicated region
      $region77: #{tpu_custom_call.1} parent=5 // pred_check
        _
      $region78: #{tpu_custom_call.1} parent=5 // pred_check_branch
        %534 = sbr.rel (%p531) target = $region80
      $region79: #{tpu_custom_call.1} parent=5 // pred_region
        %s535 = ssub.s32 %s30, 1
        %s536 = sand.u32 %s55, 1
        %s537 = scalar_lea.sflag [#allocation5], %s536
        %s538 = sand.u32 %s55, 1
        %s539 = smul.addr %s538, 8
        %s540 = scalar_lea.vmem [#allocation4], %s539
        // Predicated region
        $region81: #{tpu_custom_call.1} parent=79 // pred_check
          %p541 = pneg %p68
        $region82: #{tpu_custom_call.1} parent=79 // pred_check_branch
          %543 = sbr.rel (%p541) target = $region84
        $region83: #{tpu_custom_call.1} parent=79 // pred_region
          %544 = dma.done %s537, 128
        $region84: #{tpu_custom_call.1} parent=79 // pred_fallthru
          _
        // Predicated region
        $region85: #{tpu_custom_call.1} parent=79 // pred_check
          %p545 = pneg %p152
        $region86: #{tpu_custom_call.1} parent=79 // pred_check_branch
          %547 = sbr.rel (%p545) target = $region88
        $region87: #{tpu_custom_call.1} parent=79 // pred_region
          %548 = dma.done [#allocation8], 6144
        $region88: #{tpu_custom_call.1} parent=79 // pred_fallthru
          _
        // Predicated region
        $region89: #{tpu_custom_call.1} parent=79 // pred_check
          %p549 = pneg %p173
        $region90: #{tpu_custom_call.1} parent=79 // pred_check_branch
          %551 = sbr.rel (%p549) target = $region92
        $region91: #{tpu_custom_call.1} parent=79 // pred_region
          %552 = dma.done [#allocation8], 6144
        $region92: #{tpu_custom_call.1} parent=79 // pred_fallthru
          _
        // Predicated region
        $region93: #{tpu_custom_call.1} parent=79 // pred_check
          %p553 = pneg %p194
        $region94: #{tpu_custom_call.1} parent=79 // pred_check_branch
          %555 = sbr.rel (%p553) target = $region96
        $region95: #{tpu_custom_call.1} parent=79 // pred_region
          %556 = dma.done [#allocation11], 6144
        $region96: #{tpu_custom_call.1} parent=79 // pred_fallthru
          _
        // Predicated region
        $region97: #{tpu_custom_call.1} parent=79 // pred_check
          %p557 = pneg %p215
        $region98: #{tpu_custom_call.1} parent=79 // pred_check_branch
          %559 = sbr.rel (%p557) target = $region100
        $region99: #{tpu_custom_call.1} parent=79 // pred_region
          %560 = dma.done [#allocation11], 6144
        $region100: #{tpu_custom_call.1} parent=79 // pred_fallthru
          _
        // Predicated region
        $region101: #{tpu_custom_call.1} parent=79 // pred_check
          %p561 = pneg %p299
        $region102: #{tpu_custom_call.1} parent=79 // pred_check_branch
          %563 = sbr.rel (%p561) target = $region104
        $region103: #{tpu_custom_call.1} parent=79 // pred_region
          %564 = dma.done [#allocation14], 4096
        $region104: #{tpu_custom_call.1} parent=79 // pred_fallthru
          _
        // Predicated region
        $region105: #{tpu_custom_call.1} parent=79 // pred_check
          %p565 = pneg %p341
        $region106: #{tpu_custom_call.1} parent=79 // pred_check_branch
          %567 = sbr.rel (%p565) target = $region108
        $region107: #{tpu_custom_call.1} parent=79 // pred_region
          %568 = dma.done [#allocation14], 4096
        $region108: #{tpu_custom_call.1} parent=79 // pred_fallthru
          _
        %s569 = sand.u32 %s55, 1
        %s570 = scalar_lea.sflag [#allocation5], %s569
        %s571 = sand.u32 %s55, 1
        %s572 = smul.addr %s571, 8
        %s573 = scalar_lea.vmem [#allocation4], %s572
        %p574 = pneg %p68
        %p575 = pneg %p65
        %p576 = pneg %p89
        %p577 = pneg %p86
        %p578 = pneg %p110
        %p579 = pneg %p107
        %p580 = pneg %p131
        %p581 = pneg %p128
        %p582 = pneg %p152
        %p583 = pneg %p149
        %p584 = pneg %p173
        %p585 = pneg %p170
        %p586 = pneg %p194
        %p587 = pneg %p191
        %p588 = pneg %p215
        %p589 = pneg %p212
        %p590 = pneg %p236
        %p591 = pneg %p233
        %p592 = pneg %p257
        %p593 = pneg %p254
        %p594 = pneg %p278
        %p595 = pneg %p275
        %p596 = pneg %p299
        %p597 = pneg %p296
        %p598 = pneg %p320
        %p599 = pneg %p317
        %p600 = pneg %p341
        %p601 = pneg %p338
        %p602 = pneg %p362
        %p603 = pneg %p359
        %p604 = pneg %p390
        %p605 = pneg %p387
        %s606 = sand.u32 %s377, 1
        %s607 = scalar_lea.sflag [#allocation6], %s606
        %s608 = sand.u32 %s377, 1
        %s609 = smul.addr %s608, 8
        %s610 = scalar_lea.vmem [#allocation16], %s609
        %v612 = vld [vmem:[%s1] sm:$0x1]
        %v613 = vld [vmem:[%s2] sm:$0x1]
        %v614 = vld [vmem:[%s3] sm:$0x1]
        %p615 = scmp.eq.s32.totalorder %s40, 0
        // Predicated region
        $region109: #{tpu_custom_call.1} parent=79 // pred_check
          %p616 = pneg %p615
        $region110: #{tpu_custom_call.1} parent=79 // pred_check_branch
          %618 = sbr.rel (%p616) target = $region112
        $region111: #{tpu_custom_call.1} parent=79 // pred_region
          %v619 = vld [vmem:[%s540] sm:$0xff]
          %620 = vadd.xlane.f32.xlu0 %v619
          %v621 = vpop.xlane.xlu0 %620
          %v622 = vmul.f32 %v621, 0.01
          %v623 = vsub.f32 %v619, %v622
          %v625 = vlaneseq
          %v626 = vshrl.u32 %v625, 7
          %v627 = vsub.s32 0, %v626
          %v628 = vrot.slane %v612, %v627
          %v630 = vmul.f32 %v623, %v628
          %v631 = vmul.f32 %v630, %v630
          %632 = vadd.xlane.f32.xlu0 %v631
          %v633 = vpop.xlane.xlu0 %632
          %v634 = vmul.f32 %v633, 0.01
          %v635 = vadd.f32 %v634, 1e-05
          %v636 = vrsqrt.pop %v635
          %v637 = vmul.f32 %v630, %v636
          %v639 = vlaneseq
          %v640 = vshrl.u32 %v639, 7
          %v641 = vsub.s32 0, %v640
          %v642 = vrot.slane %v613, %v641
          %v644 = vmul.f32 %v637, %v642
          %v646 = vlaneseq
          %v647 = vshrl.u32 %v646, 7
          %v648 = vsub.s32 0, %v647
          %v649 = vrot.slane %v614, %v648
          %v651 = vadd.f32 %v644, %v649
          %v652 = vpack.c.bf16 %v651, %v651
          %v653 = vld [vmem:[#allocation9] sm:$0xff]
          %v654 = vld [vmem:[#allocation9 + $0x8] sm:$0xff]
          %v655 = vld [vmem:[#allocation9 + $0x10] sm:$0xff]
          %v656 = vld [vmem:[#allocation9 + $0x18] sm:$0xff]
          %v657 = vld [vmem:[#allocation9 + $0x20] sm:$0xff]
          %v658 = vld [vmem:[#allocation9 + $0x28] sm:$0xff]
          %v659 = vld [vmem:[#allocation9 + $0x30] sm:$0xff]
          %v660 = vld [vmem:[#allocation9 + $0x38] sm:$0xff]
          %v661 = vld [vmem:[#allocation9 + $0x40] sm:$0xff]
          %v662 = vld [vmem:[#allocation9 + $0x48] sm:$0xff]
          %v663 = vld [vmem:[#allocation9 + $0x50] sm:$0xff]
          %v664 = vld [vmem:[#allocation9 + $0x58] sm:$0xff]
          %v665 = vld [vmem:[#allocation9 + $0x60] sm:$0xff]
          %v666 = vld [vmem:[#allocation9 + $0x68] sm:$0xff]
          %v667 = vld [vmem:[#allocation9 + $0x70] sm:$0xff]
          %v668 = vld [vmem:[#allocation9 + $0x78] sm:$0xff]
          %v669 = vld [vmem:[#allocation9 + $0x80] sm:$0xff]
          %v670 = vld [vmem:[#allocation9 + $0x88] sm:$0xff]
          %v671 = vld [vmem:[#allocation9 + $0x90] sm:$0xff]
          %v672 = vld [vmem:[#allocation9 + $0x98] sm:$0xff]
          %v673 = vld [vmem:[#allocation9 + $0xa0] sm:$0xff]
          %v674 = vld [vmem:[#allocation9 + $0xa8] sm:$0xff]
          %v675 = vld [vmem:[#allocation9 + $0xb0] sm:$0xff]
          %v676 = vld [vmem:[#allocation9 + $0xb8] sm:$0xff]
          %v677 = vld [vmem:[#allocation9 + $0xc0] sm:$0xff]
          %v678 = vld [vmem:[#allocation9 + $0xc8] sm:$0xff]
          %v679 = vld [vmem:[#allocation9 + $0xd0] sm:$0xff]
          %v680 = vld [vmem:[#allocation9 + $0xd8] sm:$0xff]
          %v681 = vld [vmem:[#allocation9 + $0xe0] sm:$0xff]
          %v682 = vld [vmem:[#allocation9 + $0xe8] sm:$0xff]
          %v683 = vld [vmem:[#allocation9 + $0xf0] sm:$0xff]
          %v684 = vld [vmem:[#allocation9 + $0xf8] sm:$0xff]
          %v685 = vld [vmem:[#allocation9 + $0x100] sm:$0xff]
          %v686 = vld [vmem:[#allocation9 + $0x108] sm:$0xff]
          %v687 = vld [vmem:[#allocation9 + $0x110] sm:$0xff]
          %v688 = vld [vmem:[#allocation9 + $0x118] sm:$0xff]
          %v689 = vld [vmem:[#allocation9 + $0x120] sm:$0xff]
          %v690 = vld [vmem:[#allocation9 + $0x128] sm:$0xff]
          %v691 = vld [vmem:[#allocation9 + $0x130] sm:$0xff]
          %v692 = vld [vmem:[#allocation9 + $0x138] sm:$0xff]
          %v693 = vld [vmem:[#allocation9 + $0x140] sm:$0xff]
          %v694 = vld [vmem:[#allocation9 + $0x148] sm:$0xff]
          %v695 = vld [vmem:[#allocation9 + $0x150] sm:$0xff]
          %v696 = vld [vmem:[#allocation9 + $0x158] sm:$0xff]
          %v697 = vld [vmem:[#allocation9 + $0x160] sm:$0xff]
          %v698 = vld [vmem:[#allocation9 + $0x168] sm:$0xff]
          %v699 = vld [vmem:[#allocation9 + $0x170] sm:$0xff]
          %v700 = vld [vmem:[#allocation9 + $0x178] sm:$0xff]
          %v749 = vunpack.c.l.b16 %v653
          %v750 = vunpack.c.h.b16 %v653
          %v751 = vunpack.c.l.b16 %v654
          %v752 = vunpack.c.h.b16 %v654
          %v753 = vunpack.c.l.b16 %v655
          %v754 = vunpack.c.h.b16 %v655
          %v755 = vunpack.c.l.b16 %v656
          %v756 = vunpack.c.h.b16 %v656
          %v757 = vunpack.c.l.b16 %v657
          %v758 = vunpack.c.h.b16 %v657
          %v759 = vunpack.c.l.b16 %v658
          %v760 = vunpack.c.h.b16 %v658
          %v761 = vunpack.c.l.b16 %v659
          %v762 = vunpack.c.h.b16 %v659
          %v763 = vunpack.c.l.b16 %v660
          %v764 = vunpack.c.h.b16 %v660
          %v765 = vunpack.c.l.b16 %v661
          %v766 = vunpack.c.h.b16 %v661
          %v767 = vunpack.c.l.b16 %v662
          %v768 = vunpack.c.h.b16 %v662
          %v769 = vunpack.c.l.b16 %v663
          %v770 = vunpack.c.h.b16 %v663
          %v771 = vunpack.c.l.b16 %v664
          %v772 = vunpack.c.h.b16 %v664
          %v773 = vunpack.c.l.b16 %v665
          %v774 = vunpack.c.h.b16 %v665
          %v775 = vunpack.c.l.b16 %v666
          %v776 = vunpack.c.h.b16 %v666
          %v777 = vunpack.c.l.b16 %v667
          %v778 = vunpack.c.h.b16 %v667
          %v779 = vunpack.c.l.b16 %v668
          %v780 = vunpack.c.h.b16 %v668
          %v781 = vunpack.c.l.b16 %v669
          %v782 = vunpack.c.h.b16 %v669
          %v783 = vunpack.c.l.b16 %v670
          %v784 = vunpack.c.h.b16 %v670
          %v785 = vunpack.c.l.b16 %v671
          %v786 = vunpack.c.h.b16 %v671
          %v787 = vunpack.c.l.b16 %v672
          %v788 = vunpack.c.h.b16 %v672
          %v789 = vunpack.c.l.b16 %v673
          %v790 = vunpack.c.h.b16 %v673
          %v791 = vunpack.c.l.b16 %v674
          %v792 = vunpack.c.h.b16 %v674
          %v793 = vunpack.c.l.b16 %v675
          %v794 = vunpack.c.h.b16 %v675
          %v795 = vunpack.c.l.b16 %v676
          %v796 = vunpack.c.h.b16 %v676
          %v797 = vunpack.c.l.b16 %v677
          %v798 = vunpack.c.h.b16 %v677
          %v799 = vunpack.c.l.b16 %v678
          %v800 = vunpack.c.h.b16 %v678
          %v801 = vunpack.c.l.b16 %v679
          %v802 = vunpack.c.h.b16 %v679
          %v803 = vunpack.c.l.b16 %v680
          %v804 = vunpack.c.h.b16 %v680
          %v805 = vunpack.c.l.b16 %v681
          %v806 = vunpack.c.h.b16 %v681
          %v807 = vunpack.c.l.b16 %v682
          %v808 = vunpack.c.h.b16 %v682
          %v809 = vunpack.c.l.b16 %v683
          %v810 = vunpack.c.h.b16 %v683
          %v811 = vunpack.c.l.b16 %v684
          %v812 = vunpack.c.h.b16 %v684
          %v813 = vunpack.c.l.b16 %v685
          %v814 = vunpack.c.h.b16 %v685
          %v815 = vunpack.c.l.b16 %v686
          %v816 = vunpack.c.h.b16 %v686
          %v817 = vunpack.c.l.b16 %v687
          %v818 = vunpack.c.h.b16 %v687
          %v819 = vunpack.c.l.b16 %v688
          %v820 = vunpack.c.h.b16 %v688
          %v821 = vunpack.c.l.b16 %v689
          %v822 = vunpack.c.h.b16 %v689
          %v823 = vunpack.c.l.b16 %v690
          %v824 = vunpack.c.h.b16 %v690
          %v825 = vunpack.c.l.b16 %v691
          %v826 = vunpack.c.h.b16 %v691
          %v827 = vunpack.c.l.b16 %v692
          %v828 = vunpack.c.h.b16 %v692
          %v829 = vunpack.c.l.b16 %v693
          %v830 = vunpack.c.h.b16 %v693
          %v831 = vunpack.c.l.b16 %v694
          %v832 = vunpack.c.h.b16 %v694
          %v833 = vunpack.c.l.b16 %v695
          %v834 = vunpack.c.h.b16 %v695
          %v835 = vunpack.c.l.b16 %v696
          %v836 = vunpack.c.h.b16 %v696
          %v837 = vunpack.c.l.b16 %v697
          %v838 = vunpack.c.h.b16 %v697
          %v839 = vunpack.c.l.b16 %v698
          %v840 = vunpack.c.h.b16 %v698
          %v841 = vunpack.c.l.b16 %v699
          %v842 = vunpack.c.h.b16 %v699
          %v843 = vunpack.c.l.b16 %v700
          %v844 = vunpack.c.h.b16 %v700
          %v845 = vpack.c.b16 %v755, %v749
          %v846 = vpack.c.b16 %v756, %v750
          %v847 = vpack.c.b16 %v757, %v751
          %v848 = vpack.c.b16 %v758, %v752
          %v849 = vpack.c.b16 %v759, %v753
          %v850 = vpack.c.b16 %v760, %v754
          %v851 = vpack.c.b16 %v767, %v761
          %v852 = vpack.c.b16 %v768, %v762
          %v853 = vpack.c.b16 %v769, %v763
          %v854 = vpack.c.b16 %v770, %v764
          %v855 = vpack.c.b16 %v771, %v765
          %v856 = vpack.c.b16 %v772, %v766
          %v857 = vpack.c.b16 %v779, %v773
          %v858 = vpack.c.b16 %v780, %v774
          %v859 = vpack.c.b16 %v781, %v775
          %v860 = vpack.c.b16 %v782, %v776
          %v861 = vpack.c.b16 %v783, %v777
          %v862 = vpack.c.b16 %v784, %v778
          %v863 = vpack.c.b16 %v791, %v785
          %v864 = vpack.c.b16 %v792, %v786
          %v865 = vpack.c.b16 %v793, %v787
          %v866 = vpack.c.b16 %v794, %v788
          %v867 = vpack.c.b16 %v795, %v789
          %v868 = vpack.c.b16 %v796, %v790
          %v869 = vpack.c.b16 %v803, %v797
          %v870 = vpack.c.b16 %v804, %v798
          %v871 = vpack.c.b16 %v805, %v799
          %v872 = vpack.c.b16 %v806, %v800
          %v873 = vpack.c.b16 %v807, %v801
          %v874 = vpack.c.b16 %v808, %v802
          %v875 = vpack.c.b16 %v815, %v809
          %v876 = vpack.c.b16 %v816, %v810
          %v877 = vpack.c.b16 %v817, %v811
          %v878 = vpack.c.b16 %v818, %v812
          %v879 = vpack.c.b16 %v819, %v813
          %v880 = vpack.c.b16 %v820, %v814
          %v881 = vpack.c.b16 %v827, %v821
          %v882 = vpack.c.b16 %v828, %v822
          %v883 = vpack.c.b16 %v829, %v823
          %v884 = vpack.c.b16 %v830, %v824
          %v885 = vpack.c.b16 %v831, %v825
          %v886 = vpack.c.b16 %v832, %v826
          %v887 = vpack.c.b16 %v839, %v833
          %v888 = vpack.c.b16 %v840, %v834
          %v889 = vpack.c.b16 %v841, %v835
          %v890 = vpack.c.b16 %v842, %v836
          %v891 = vpack.c.b16 %v843, %v837
          %v892 = vpack.c.b16 %v844, %v838
          %941 = vmatprep.subr.bf16.mxu0 %v888
          %942 = vmatpush1.bf16.msra.mxu0 %v887
          %943 = vmatprep.subr.bf16.mxu0 %v882
          %944 = vmatpush1.bf16.msra.mxu0 %v881
          %945 = vmatprep.subr.bf16.mxu0 %v876
          %946 = vmatpush1.bf16.msra.mxu0 %v875
          %947 = vmatprep.subr.bf16.mxu0 %v870
          %948 = vmatpush1.bf16.msra.mxu0 %v869
          %949 = vmatprep.subr.bf16.mxu0 %v864
          %950 = vmatpush1.bf16.msra.mxu0 %v863
          %951 = vmatprep.subr.bf16.mxu0 %v858
          %952 = vmatpush1.bf16.msra.mxu0 %v857
          %953 = vmatprep.subr.bf16.mxu0 %v852
          %954 = vmatpush1.bf16.msra.mxu0 %v851
          %955 = vmatprep.subr.bf16.mxu0 %v846
          %956 = vmatpush1.bf16.msra.mxu0 %v845
          %957 = vmatprep.subr.bf16.mxu0 0
          %958 = vmatpush2.bf16.msra.mxu0 0
          %959 = vmatprep.subr.bf16.mxu0 0
          %960 = vmatpush2.bf16.msra.mxu0 0
          %961 = vmatprep.subr.bf16.mxu0 0
          %962 = vmatpush2.bf16.msra.mxu0 0
          %963 = vmatprep.subr.bf16.mxu0 0
          %964 = vmatpush2.bf16.msra.mxu0 0
          %965 = vmatprep.subr.bf16.mxu0 0
          %966 = vmatpush2.bf16.msra.mxu0 0
          %967 = vmatprep.subr.bf16.mxu0 0
          %968 = vmatpush2.bf16.msra.mxu0 0
          %969 = vmatprep.subr.bf16.mxu0 0
          %970 = vmatpush2.bf16.msra.mxu0 0
          %971 = vmatprep.subr.bf16.mxu0 0
          %972 = vmatpush2.bf16.msra.mxu0 0
          %973 = vmatprep.mubr.bf16.mxu0 0
          %974 = vmatmul.mubr.bf16.gmra.mxu0 %v652
          %v975 = vpop.f32.mrf.mxu0
          %v976 = vadd.f32 0.0, %v975
          %v977 = vpop.f32.mrf.mxu0
          %v978 = vadd.f32 0.0, %v977
          %v979 = vpop.f32.mrf.mxu0
          %v980 = vpop.f32.mrf.mxu0
          %981 = vdwg.mxu0
          %982 = vmatprep.subr.bf16.mxu0 %v890
          %983 = vmatpush1.bf16.msra.mxu0 %v889
          %984 = vmatprep.subr.bf16.mxu0 %v884
          %985 = vmatpush1.bf16.msra.mxu0 %v883
          %986 = vmatprep.subr.bf16.mxu0 %v878
          %987 = vmatpush1.bf16.msra.mxu0 %v877
          %988 = vmatprep.subr.bf16.mxu0 %v872
          %989 = vmatpush1.bf16.msra.mxu0 %v871
          %990 = vmatprep.subr.bf16.mxu0 %v866
          %991 = vmatpush1.bf16.msra.mxu0 %v865
          %992 = vmatprep.subr.bf16.mxu0 %v860
          %993 = vmatpush1.bf16.msra.mxu0 %v859
          %994 = vmatprep.subr.bf16.mxu0 %v854
          %995 = vmatpush1.bf16.msra.mxu0 %v853
          %996 = vmatprep.subr.bf16.mxu0 %v848
          %997 = vmatpush1.bf16.msra.mxu0 %v847
          %998 = vmatprep.subr.bf16.mxu0 0
          %999 = vmatpush2.bf16.msra.mxu0 0
          %1000 = vmatprep.subr.bf16.mxu0 0
          %1001 = vmatpush2.bf16.msra.mxu0 0
          %1002 = vmatprep.subr.bf16.mxu0 0
          %1003 = vmatpush2.bf16.msra.mxu0 0
          %1004 = vmatprep.subr.bf16.mxu0 0
          %1005 = vmatpush2.bf16.msra.mxu0 0
          %1006 = vmatprep.subr.bf16.mxu0 0
          %1007 = vmatpush2.bf16.msra.mxu0 0
          %1008 = vmatprep.subr.bf16.mxu0 0
          %1009 = vmatpush2.bf16.msra.mxu0 0
          %1010 = vmatprep.subr.bf16.mxu0 0
          %1011 = vmatpush2.bf16.msra.mxu0 0
          %1012 = vmatprep.subr.bf16.mxu0 0
          %1013 = vmatpush2.bf16.msra.mxu0 0
          %1014 = vmatprep.mubr.bf16.mxu0 0
          %1015 = vmatmul.mubr.bf16.gmra.mxu0 %v652
          %v1016 = vpop.f32.mrf.mxu0
          %v1017 = vadd.f32 0.0, %v1016
          %v1018 = vpop.f32.mrf.mxu0
          %v1019 = vadd.f32 0.0, %v1018
          %v1020 = vpop.f32.mrf.mxu0
          %v1021 = vpop.f32.mrf.mxu0
          %1022 = vdwg.mxu0
          %1023 = vmatprep.subr.bf16.mxu0 %v892
          %1024 = vmatpush1.bf16.msra.mxu0 %v891
          %1025 = vmatprep.subr.bf16.mxu0 %v886
          %1026 = vmatpush1.bf16.msra.mxu0 %v885
          %1027 = vmatprep.subr.bf16.mxu0 %v880
          %1028 = vmatpush1.bf16.msra.mxu0 %v879
          %1029 = vmatprep.subr.bf16.mxu0 %v874
          %1030 = vmatpush1.bf16.msra.mxu0 %v873
          %1031 = vmatprep.subr.bf16.mxu0 %v868
          %1032 = vmatpush1.bf16.msra.mxu0 %v867
          %1033 = vmatprep.subr.bf16.mxu0 %v862
          %1034 = vmatpush1.bf16.msra.mxu0 %v861
          %1035 = vmatprep.subr.bf16.mxu0 %v856
          %1036 = vmatpush1.bf16.msra.mxu0 %v855
          %1037 = vmatprep.subr.bf16.mxu0 %v850
          %1038 = vmatpush1.bf16.msra.mxu0 %v849
          %1039 = vmatprep.subr.bf16.mxu0 0
          %1040 = vmatpush2.bf16.msra.mxu0 0
          %1041 = vmatprep.subr.bf16.mxu0 0
          %1042 = vmatpush2.bf16.msra.mxu0 0
          %1043 = vmatprep.subr.bf16.mxu0 0
          %1044 = vmatpush2.bf16.msra.mxu0 0
          %1045 = vmatprep.subr.bf16.mxu0 0
          %1046 = vmatpush2.bf16.msra.mxu0 0
          %1047 = vmatprep.subr.bf16.mxu0 0
          %1048 = vmatpush2.bf16.msra.mxu0 0
          %1049 = vmatprep.subr.bf16.mxu0 0
          %1050 = vmatpush2.bf16.msra.mxu0 0
          %1051 = vmatprep.subr.bf16.mxu0 0
          %1052 = vmatpush2.bf16.msra.mxu0 0
          %1053 = vmatprep.subr.bf16.mxu0 0
          %1054 = vmatpush2.bf16.msra.mxu0 0
          %1055 = vmatprep.mubr.bf16.mxu0 0
          %1056 = vmatmul.mubr.bf16.gmra.mxu0 %v652
          %v1057 = vpop.f32.mrf.mxu0
          %v1058 = vadd.f32 0.0, %v1057
          %v1059 = vpop.f32.mrf.mxu0
          %v1060 = vadd.f32 0.0, %v1059
          %v1061 = vpop.f32.mrf.mxu0
          %v1062 = vpop.f32.mrf.mxu0
          %1063 = vdwg.mxu0
          %v1064 = vpack.c.bf16 %v976, %v976
          %v1065 = vpack.c.bf16 %v978, %v978
          %v1066 = vpack.c.bf16 %v1017, %v1017
          %v1067 = vpack.c.bf16 %v1019, %v1019
          %v1068 = vpack.c.bf16 %v1058, %v1058
          %v1069 = vpack.c.bf16 %v1060, %v1060
          %v1076 = vunpack.c.l.b16 %v1064
          %v1077 = vunpack.c.l.b16 %v1065
          %v1078 = vunpack.c.l.b16 %v1066
          %v1079 = vunpack.c.l.b16 %v1067
          %v1080 = vunpack.c.l.b16 %v1068
          %v1081 = vunpack.c.l.b16 %v1069
          %v1082 = vpack.c.b16 %v1077, %v1076
          %v1083 = vpack.c.b16 %v1079, %v1078
          %v1084 = vpack.c.b16 %v1081, %v1080
          %1088 = vst [vmem:[#allocation2] sm:$0xff] %v1082
          %1089 = vst [vmem:[#allocation2 + $0x8] sm:$0xff] %v1083
          %1090 = vst [vmem:[#allocation2 + $0x10] sm:$0xff] %v1084
          %v1091 = vld [vmem:[#allocation10] sm:$0xff]
          %v1092 = vld [vmem:[#allocation10 + $0x8] sm:$0xff]
          %v1093 = vld [vmem:[#allocation10 + $0x10] sm:$0xff]
          %v1094 = vld [vmem:[#allocation10 + $0x18] sm:$0xff]
          %v1095 = vld [vmem:[#allocation10 + $0x20] sm:$0xff]
          %v1096 = vld [vmem:[#allocation10 + $0x28] sm:$0xff]
          %v1097 = vld [vmem:[#allocation10 + $0x30] sm:$0xff]
          %v1098 = vld [vmem:[#allocation10 + $0x38] sm:$0xff]
          %v1099 = vld [vmem:[#allocation10 + $0x40] sm:$0xff]
          %v1100 = vld [vmem:[#allocation10 + $0x48] sm:$0xff]
          %v1101 = vld [vmem:[#allocation10 + $0x50] sm:$0xff]
          %v1102 = vld [vmem:[#allocation10 + $0x58] sm:$0xff]
          %v1103 = vld [vmem:[#allocation10 + $0x60] sm:$0xff]
          %v1104 = vld [vmem:[#allocation10 + $0x68] sm:$0xff]
          %v1105 = vld [vmem:[#allocation10 + $0x70] sm:$0xff]
          %v1106 = vld [vmem:[#allocation10 + $0x78] sm:$0xff]
          %v1107 = vld [vmem:[#allocation10 + $0x80] sm:$0xff]
          %v1108 = vld [vmem:[#allocation10 + $0x88] sm:$0xff]
          %v1109 = vld [vmem:[#allocation10 + $0x90] sm:$0xff]
          %v1110 = vld [vmem:[#allocation10 + $0x98] sm:$0xff]
          %v1111 = vld [vmem:[#allocation10 + $0xa0] sm:$0xff]
          %v1112 = vld [vmem:[#allocation10 + $0xa8] sm:$0xff]
          %v1113 = vld [vmem:[#allocation10 + $0xb0] sm:$0xff]
          %v1114 = vld [vmem:[#allocation10 + $0xb8] sm:$0xff]
          %v1115 = vld [vmem:[#allocation10 + $0xc0] sm:$0xff]
          %v1116 = vld [vmem:[#allocation10 + $0xc8] sm:$0xff]
          %v1117 = vld [vmem:[#allocation10 + $0xd0] sm:$0xff]
          %v1118 = vld [vmem:[#allocation10 + $0xd8] sm:$0xff]
          %v1119 = vld [vmem:[#allocation10 + $0xe0] sm:$0xff]
          %v1120 = vld [vmem:[#allocation10 + $0xe8] sm:$0xff]
          %v1121 = vld [vmem:[#allocation10 + $0xf0] sm:$0xff]
          %v1122 = vld [vmem:[#allocation10 + $0xf8] sm:$0xff]
          %v1123 = vld [vmem:[#allocation10 + $0x100] sm:$0xff]
          %v1124 = vld [vmem:[#allocation10 + $0x108] sm:$0xff]
          %v1125 = vld [vmem:[#allocation10 + $0x110] sm:$0xff]
          %v1126 = vld [vmem:[#allocation10 + $0x118] sm:$0xff]
          %v1127 = vld [vmem:[#allocation10 + $0x120] sm:$0xff]
          %v1128 = vld [vmem:[#allocation10 + $0x128] sm:$0xff]
          %v1129 = vld [vmem:[#allocation10 + $0x130] sm:$0xff]
          %v1130 = vld [vmem:[#allocation10 + $0x138] sm:$0xff]
          %v1131 = vld [vmem:[#allocation10 + $0x140] sm:$0xff]
          %v1132 = vld [vmem:[#allocation10 + $0x148] sm:$0xff]
          %v1133 = vld [vmem:[#allocation10 + $0x150] sm:$0xff]
          %v1134 = vld [vmem:[#allocation10 + $0x158] sm:$0xff]
          %v1135 = vld [vmem:[#allocation10 + $0x160] sm:$0xff]
          %v1136 = vld [vmem:[#allocation10 + $0x168] sm:$0xff]
          %v1137 = vld [vmem:[#allocation10 + $0x170] sm:$0xff]
          %v1138 = vld [vmem:[#allocation10 + $0x178] sm:$0xff]
          %v1187 = vunpack.c.l.b16 %v1091
          %v1188 = vunpack.c.h.b16 %v1091
          %v1189 = vunpack.c.l.b16 %v1092
          %v1190 = vunpack.c.h.b16 %v1092
          %v1191 = vunpack.c.l.b16 %v1093
          %v1192 = vunpack.c.h.b16 %v1093
          %v1193 = vunpack.c.l.b16 %v1094
          %v1194 = vunpack.c.h.b16 %v1094
          %v1195 = vunpack.c.l.b16 %v1095
          %v1196 = vunpack.c.h.b16 %v1095
          %v1197 = vunpack.c.l.b16 %v1096
          %v1198 = vunpack.c.h.b16 %v1096
          %v1199 = vunpack.c.l.b16 %v1097
          %v1200 = vunpack.c.h.b16 %v1097
          %v1201 = vunpack.c.l.b16 %v1098
          %v1202 = vunpack.c.h.b16 %v1098
          %v1203 = vunpack.c.l.b16 %v1099
          %v1204 = vunpack.c.h.b16 %v1099
          %v1205 = vunpack.c.l.b16 %v1100
          %v1206 = vunpack.c.h.b16 %v1100
          %v1207 = vunpack.c.l.b16 %v1101
          %v1208 = vunpack.c.h.b16 %v1101
          %v1209 = vunpack.c.l.b16 %v1102
          %v1210 = vunpack.c.h.b16 %v1102
          %v1211 = vunpack.c.l.b16 %v1103
          %v1212 = vunpack.c.h.b16 %v1103
          %v1213 = vunpack.c.l.b16 %v1104
          %v1214 = vunpack.c.h.b16 %v1104
          %v1215 = vunpack.c.l.b16 %v1105
          %v1216 = vunpack.c.h.b16 %v1105
          %v1217 = vunpack.c.l.b16 %v1106
          %v1218 = vunpack.c.h.b16 %v1106
          %v1219 = vunpack.c.l.b16 %v1107
          %v1220 = vunpack.c.h.b16 %v1107
          %v1221 = vunpack.c.l.b16 %v1108
          %v1222 = vunpack.c.h.b16 %v1108
          %v1223 = vunpack.c.l.b16 %v1109
          %v1224 = vunpack.c.h.b16 %v1109
          %v1225 = vunpack.c.l.b16 %v1110
          %v1226 = vunpack.c.h.b16 %v1110
          %v1227 = vunpack.c.l.b16 %v1111
          %v1228 = vunpack.c.h.b16 %v1111
          %v1229 = vunpack.c.l.b16 %v1112
          %v1230 = vunpack.c.h.b16 %v1112
          %v1231 = vunpack.c.l.b16 %v1113
          %v1232 = vunpack.c.h.b16 %v1113
          %v1233 = vunpack.c.l.b16 %v1114
          %v1234 = vunpack.c.h.b16 %v1114
          %v1235 = vunpack.c.l.b16 %v1115
          %v1236 = vunpack.c.h.b16 %v1115
          %v1237 = vunpack.c.l.b16 %v1116
          %v1238 = vunpack.c.h.b16 %v1116
          %v1239 = vunpack.c.l.b16 %v1117
          %v1240 = vunpack.c.h.b16 %v1117
          %v1241 = vunpack.c.l.b16 %v1118
          %v1242 = vunpack.c.h.b16 %v1118
          %v1243 = vunpack.c.l.b16 %v1119
          %v1244 = vunpack.c.h.b16 %v1119
          %v1245 = vunpack.c.l.b16 %v1120
          %v1246 = vunpack.c.h.b16 %v1120
          %v1247 = vunpack.c.l.b16 %v1121
          %v1248 = vunpack.c.h.b16 %v1121
          %v1249 = vunpack.c.l.b16 %v1122
          %v1250 = vunpack.c.h.b16 %v1122
          %v1251 = vunpack.c.l.b16 %v1123
          %v1252 = vunpack.c.h.b16 %v1123
          %v1253 = vunpack.c.l.b16 %v1124
          %v1254 = vunpack.c.h.b16 %v1124
          %v1255 = vunpack.c.l.b16 %v1125
          %v1256 = vunpack.c.h.b16 %v1125
          %v1257 = vunpack.c.l.b16 %v1126
          %v1258 = vunpack.c.h.b16 %v1126
          %v1259 = vunpack.c.l.b16 %v1127
          %v1260 = vunpack.c.h.b16 %v1127
          %v1261 = vunpack.c.l.b16 %v1128
          %v1262 = vunpack.c.h.b16 %v1128
          %v1263 = vunpack.c.l.b16 %v1129
          %v1264 = vunpack.c.h.b16 %v1129
          %v1265 = vunpack.c.l.b16 %v1130
          %v1266 = vunpack.c.h.b16 %v1130
          %v1267 = vunpack.c.l.b16 %v1131
          %v1268 = vunpack.c.h.b16 %v1131
          %v1269 = vunpack.c.l.b16 %v1132
          %v1270 = vunpack.c.h.b16 %v1132
          %v1271 = vunpack.c.l.b16 %v1133
          %v1272 = vunpack.c.h.b16 %v1133
          %v1273 = vunpack.c.l.b16 %v1134
          %v1274 = vunpack.c.h.b16 %v1134
          %v1275 = vunpack.c.l.b16 %v1135
          %v1276 = vunpack.c.h.b16 %v1135
          %v1277 = vunpack.c.l.b16 %v1136
          %v1278 = vunpack.c.h.b16 %v1136
          %v1279 = vunpack.c.l.b16 %v1137
          %v1280 = vunpack.c.h.b16 %v1137
          %v1281 = vunpack.c.l.b16 %v1138
          %v1282 = vunpack.c.h.b16 %v1138
          %v1283 = vpack.c.b16 %v1193, %v1187
          %v1284 = vpack.c.b16 %v1194, %v1188
          %v1285 = vpack.c.b16 %v1195, %v1189
          %v1286 = vpack.c.b16 %v1196, %v1190
          %v1287 = vpack.c.b16 %v1197, %v1191
          %v1288 = vpack.c.b16 %v1198, %v1192
          %v1289 = vpack.c.b16 %v1205, %v1199
          %v1290 = vpack.c.b16 %v1206, %v1200
          %v1291 = vpack.c.b16 %v1207, %v1201
          %v1292 = vpack.c.b16 %v1208, %v1202
          %v1293 = vpack.c.b16 %v1209, %v1203
          %v1294 = vpack.c.b16 %v1210, %v1204
          %v1295 = vpack.c.b16 %v1217, %v1211
          %v1296 = vpack.c.b16 %v1218, %v1212
          %v1297 = vpack.c.b16 %v1219, %v1213
          %v1298 = vpack.c.b16 %v1220, %v1214
          %v1299 = vpack.c.b16 %v1221, %v1215
          %v1300 = vpack.c.b16 %v1222, %v1216
          %v1301 = vpack.c.b16 %v1229, %v1223
          %v1302 = vpack.c.b16 %v1230, %v1224
          %v1303 = vpack.c.b16 %v1231, %v1225
          %v1304 = vpack.c.b16 %v1232, %v1226
          %v1305 = vpack.c.b16 %v1233, %v1227
          %v1306 = vpack.c.b16 %v1234, %v1228
          %v1307 = vpack.c.b16 %v1241, %v1235
          %v1308 = vpack.c.b16 %v1242, %v1236
          %v1309 = vpack.c.b16 %v1243, %v1237
          %v1310 = vpack.c.b16 %v1244, %v1238
          %v1311 = vpack.c.b16 %v1245, %v1239
          %v1312 = vpack.c.b16 %v1246, %v1240
          %v1313 = vpack.c.b16 %v1253, %v1247
          %v1314 = vpack.c.b16 %v1254, %v1248
          %v1315 = vpack.c.b16 %v1255, %v1249
          %v1316 = vpack.c.b16 %v1256, %v1250
          %v1317 = vpack.c.b16 %v1257, %v1251
          %v1318 = vpack.c.b16 %v1258, %v1252
          %v1319 = vpack.c.b16 %v1265, %v1259
          %v1320 = vpack.c.b16 %v1266, %v1260
          %v1321 = vpack.c.b16 %v1267, %v1261
          %v1322 = vpack.c.b16 %v1268, %v1262
          %v1323 = vpack.c.b16 %v1269, %v1263
          %v1324 = vpack.c.b16 %v1270, %v1264
          %v1325 = vpack.c.b16 %v1277, %v1271
          %v1326 = vpack.c.b16 %v1278, %v1272
          %v1327 = vpack.c.b16 %v1279, %v1273
          %v1328 = vpack.c.b16 %v1280, %v1274
          %v1329 = vpack.c.b16 %v1281, %v1275
          %v1330 = vpack.c.b16 %v1282, %v1276
          %1379 = vmatprep.subr.bf16.mxu0 %v1326
          %1380 = vmatpush1.bf16.msra.mxu0 %v1325
          %1381 = vmatprep.subr.bf16.mxu0 %v1320
          %1382 = vmatpush1.bf16.msra.mxu0 %v1319
          %1383 = vmatprep.subr.bf16.mxu0 %v1314
          %1384 = vmatpush1.bf16.msra.mxu0 %v1313
          %1385 = vmatprep.subr.bf16.mxu0 %v1308
          %1386 = vmatpush1.bf16.msra.mxu0 %v1307
          %1387 = vmatprep.subr.bf16.mxu0 %v1302
          %1388 = vmatpush1.bf16.msra.mxu0 %v1301
          %1389 = vmatprep.subr.bf16.mxu0 %v1296
          %1390 = vmatpush1.bf16.msra.mxu0 %v1295
          %1391 = vmatprep.subr.bf16.mxu0 %v1290
          %1392 = vmatpush1.bf16.msra.mxu0 %v1289
          %1393 = vmatprep.subr.bf16.mxu0 %v1284
          %1394 = vmatpush1.bf16.msra.mxu0 %v1283
          %1395 = vmatprep.subr.bf16.mxu0 0
          %1396 = vmatpush2.bf16.msra.mxu0 0
          %1397 = vmatprep.subr.bf16.mxu0 0
          %1398 = vmatpush2.bf16.msra.mxu0 0
          %1399 = vmatprep.subr.bf16.mxu0 0
          %1400 = vmatpush2.bf16.msra.mxu0 0
          %1401 = vmatprep.subr.bf16.mxu0 0
          %1402 = vmatpush2.bf16.msra.mxu0 0
          %1403 = vmatprep.subr.bf16.mxu0 0
          %1404 = vmatpush2.bf16.msra.mxu0 0
          %1405 = vmatprep.subr.bf16.mxu0 0
          %1406 = vmatpush2.bf16.msra.mxu0 0
          %1407 = vmatprep.subr.bf16.mxu0 0
          %1408 = vmatpush2.bf16.msra.mxu0 0
          %1409 = vmatprep.subr.bf16.mxu0 0
          %1410 = vmatpush2.bf16.msra.mxu0 0
          %1411 = vmatprep.mubr.bf16.mxu0 0
          %1412 = vmatmul.mubr.bf16.gmra.mxu0 %v652
          %v1413 = vpop.f32.mrf.mxu0
          %v1414 = vadd.f32 0.0, %v1413
          %v1415 = vpop.f32.mrf.mxu0
          %v1416 = vadd.f32 0.0, %v1415
          %v1417 = vpop.f32.mrf.mxu0
          %v1418 = vpop.f32.mrf.mxu0
          %1419 = vdwg.mxu0
          %1420 = vmatprep.subr.bf16.mxu0 %v1328
          %1421 = vmatpush1.bf16.msra.mxu0 %v1327
          %1422 = vmatprep.subr.bf16.mxu0 %v1322
          %1423 = vmatpush1.bf16.msra.mxu0 %v1321
          %1424 = vmatprep.subr.bf16.mxu0 %v1316
          %1425 = vmatpush1.bf16.msra.mxu0 %v1315
          %1426 = vmatprep.subr.bf16.mxu0 %v1310
          %1427 = vmatpush1.bf16.msra.mxu0 %v1309
          %1428 = vmatprep.subr.bf16.mxu0 %v1304
          %1429 = vmatpush1.bf16.msra.mxu0 %v1303
          %1430 = vmatprep.subr.bf16.mxu0 %v1298
          %1431 = vmatpush1.bf16.msra.mxu0 %v1297
          %1432 = vmatprep.subr.bf16.mxu0 %v1292
          %1433 = vmatpush1.bf16.msra.mxu0 %v1291
          %1434 = vmatprep.subr.bf16.mxu0 %v1286
          %1435 = vmatpush1.bf16.msra.mxu0 %v1285
          %1436 = vmatprep.subr.bf16.mxu0 0
          %1437 = vmatpush2.bf16.msra.mxu0 0
          %1438 = vmatprep.subr.bf16.mxu0 0
          %1439 = vmatpush2.bf16.msra.mxu0 0
          %1440 = vmatprep.subr.bf16.mxu0 0
          %1441 = vmatpush2.bf16.msra.mxu0 0
          %1442 = vmatprep.subr.bf16.mxu0 0
          %1443 = vmatpush2.bf16.msra.mxu0 0
          %1444 = vmatprep.subr.bf16.mxu0 0
          %1445 = vmatpush2.bf16.msra.mxu0 0
          %1446 = vmatprep.subr.bf16.mxu0 0
          %1447 = vmatpush2.bf16.msra.mxu0 0
          %1448 = vmatprep.subr.bf16.mxu0 0
          %1449 = vmatpush2.bf16.msra.mxu0 0
          %1450 = vmatprep.subr.bf16.mxu0 0
          %1451 = vmatpush2.bf16.msra.mxu0 0
          %1452 = vmatprep.mubr.bf16.mxu0 0
          %1453 = vmatmul.mubr.bf16.gmra.mxu0 %v652
          %v1454 = vpop.f32.mrf.mxu0
          %v1455 = vadd.f32 0.0, %v1454
          %v1456 = vpop.f32.mrf.mxu0
          %v1457 = vadd.f32 0.0, %v1456
          %v1458 = vpop.f32.mrf.mxu0
          %v1459 = vpop.f32.mrf.mxu0
          %1460 = vdwg.mxu0
          %1461 = vmatprep.subr.bf16.mxu0 %v1330
          %1462 = vmatpush1.bf16.msra.mxu0 %v1329
          %1463 = vmatprep.subr.bf16.mxu0 %v1324
          %1464 = vmatpush1.bf16.msra.mxu0 %v1323
          %1465 = vmatprep.subr.bf16.mxu0 %v1318
          %1466 = vmatpush1.bf16.msra.mxu0 %v1317
          %1467 = vmatprep.subr.bf16.mxu0 %v1312
          %1468 = vmatpush1.bf16.msra.mxu0 %v1311
          %1469 = vmatprep.subr.bf16.mxu0 %v1306
          %1470 = vmatpush1.bf16.msra.mxu0 %v1305
          %1471 = vmatprep.subr.bf16.mxu0 %v1300
          %1472 = vmatpush1.bf16.msra.mxu0 %v1299
          %1473 = vmatprep.subr.bf16.mxu0 %v1294
          %1474 = vmatpush1.bf16.msra.mxu0 %v1293
          %1475 = vmatprep.subr.bf16.mxu0 %v1288
          %1476 = vmatpush1.bf16.msra.mxu0 %v1287
          %1477 = vmatprep.subr.bf16.mxu0 0
          %1478 = vmatpush2.bf16.msra.mxu0 0
          %1479 = vmatprep.subr.bf16.mxu0 0
          %1480 = vmatpush2.bf16.msra.mxu0 0
          %1481 = vmatprep.subr.bf16.mxu0 0
          %1482 = vmatpush2.bf16.msra.mxu0 0
          %1483 = vmatprep.subr.bf16.mxu0 0
          %1484 = vmatpush2.bf16.msra.mxu0 0
          %1485 = vmatprep.subr.bf16.mxu0 0
          %1486 = vmatpush2.bf16.msra.mxu0 0
          %1487 = vmatprep.subr.bf16.mxu0 0
          %1488 = vmatpush2.bf16.msra.mxu0 0
          %1489 = vmatprep.subr.bf16.mxu0 0
          %1490 = vmatpush2.bf16.msra.mxu0 0
          %1491 = vmatprep.subr.bf16.mxu0 0
          %1492 = vmatpush2.bf16.msra.mxu0 0
          %1493 = vmatprep.mubr.bf16.mxu0 0
          %1494 = vmatmul.mubr.bf16.gmra.mxu0 %v652
          %v1495 = vpop.f32.mrf.mxu0
          %v1496 = vadd.f32 0.0, %v1495
          %v1497 = vpop.f32.mrf.mxu0
          %v1498 = vadd.f32 0.0, %v1497
          %v1499 = vpop.f32.mrf.mxu0
          %v1500 = vpop.f32.mrf.mxu0
          %1501 = vdwg.mxu0
          %v1502 = vpack.c.bf16 %v1414, %v1414
          %v1503 = vpack.c.bf16 %v1416, %v1416
          %v1504 = vpack.c.bf16 %v1455, %v1455
          %v1505 = vpack.c.bf16 %v1457, %v1457
          %v1506 = vpack.c.bf16 %v1496, %v1496
          %v1507 = vpack.c.bf16 %v1498, %v1498
          %v1514 = vunpack.c.l.b16 %v1502
          %v1515 = vunpack.c.l.b16 %v1503
          %v1516 = vunpack.c.l.b16 %v1504
          %v1517 = vunpack.c.l.b16 %v1505
          %v1518 = vunpack.c.l.b16 %v1506
          %v1519 = vunpack.c.l.b16 %v1507
          %v1520 = vpack.c.b16 %v1515, %v1514
          %v1521 = vpack.c.b16 %v1517, %v1516
          %v1522 = vpack.c.b16 %v1519, %v1518
          %1526 = vst [vmem:[#allocation3] sm:$0xff] %v1520
          %1527 = vst [vmem:[#allocation3 + $0x8] sm:$0xff] %v1521
          %1528 = vst [vmem:[#allocation3 + $0x10] sm:$0xff] %v1522
        $region112: #{tpu_custom_call.1} parent=79 // pred_fallthru
          _
        %s1529 = smul.u32 %s40, 8
        %s1530 = scalar_lea.vmem %s540, %s1529 [#allocation4]
        %v1531 = vld [vmem:[%s1530] sm:$0xff]
        %1532 = vadd.xlane.f32.xlu0 %v1531
        %v1533 = vpop.xlane.xlu0 %1532
        %v1534 = vmul.f32 %v1533, 0.01
        %v1535 = vsub.f32 %v1531, %v1534
        %v1537 = vlaneseq
        %v1538 = vshrl.u32 %v1537, 7
        %v1539 = vsub.s32 0, %v1538
        %v1540 = vrot.slane %v612, %v1539
        %v1542 = vmul.f32 %v1535, %v1540
        %v1543 = vmul.f32 %v1542, %v1542
        %1544 = vadd.xlane.f32.xlu0 %v1543
        %v1545 = vpop.xlane.xlu0 %1544
        %v1546 = vmul.f32 %v1545, 0.01
        %v1547 = vadd.f32 %v1546, 1e-05
        %v1548 = vrsqrt.pop %v1547
        %v1549 = vmul.f32 %v1542, %v1548
        %v1551 = vlaneseq
        %v1552 = vshrl.u32 %v1551, 7
        %v1553 = vsub.s32 0, %v1552
        %v1554 = vrot.slane %v613, %v1553
        %v1556 = vmul.f32 %v1549, %v1554
        %v1558 = vlaneseq
        %v1559 = vshrl.u32 %v1558, 7
        %v1560 = vsub.s32 0, %v1559
        %v1561 = vrot.slane %v614, %v1560
        %v1563 = vadd.f32 %v1556, %v1561
        %v1564 = vpack.c.bf16 %v1563, %v1563
        %v1565 = vld [vmem:[#allocation7] sm:$0xff]
        %v1566 = vld [vmem:[#allocation7 + $0x8] sm:$0xff]
        %v1567 = vld [vmem:[#allocation7 + $0x10] sm:$0xff]
        %v1568 = vld [vmem:[#allocation7 + $0x18] sm:$0xff]
        %v1569 = vld [vmem:[#allocation7 + $0x20] sm:$0xff]
        %v1570 = vld [vmem:[#allocation7 + $0x28] sm:$0xff]
        %v1571 = vld [vmem:[#allocation7 + $0x30] sm:$0xff]
        %v1572 = vld [vmem:[#allocation7 + $0x38] sm:$0xff]
        %v1573 = vld [vmem:[#allocation7 + $0x40] sm:$0xff]
        %v1574 = vld [vmem:[#allocation7 + $0x48] sm:$0xff]
        %v1575 = vld [vmem:[#allocation7 + $0x50] sm:$0xff]
        %v1576 = vld [vmem:[#allocation7 + $0x58] sm:$0xff]
        %v1577 = vld [vmem:[#allocation7 + $0x60] sm:$0xff]
        %v1578 = vld [vmem:[#allocation7 + $0x68] sm:$0xff]
        %v1579 = vld [vmem:[#allocation7 + $0x70] sm:$0xff]
        %v1580 = vld [vmem:[#allocation7 + $0x78] sm:$0xff]
        %v1581 = vld [vmem:[#allocation7 + $0x80] sm:$0xff]
        %v1582 = vld [vmem:[#allocation7 + $0x88] sm:$0xff]
        %v1583 = vld [vmem:[#allocation7 + $0x90] sm:$0xff]
        %v1584 = vld [vmem:[#allocation7 + $0x98] sm:$0xff]
        %v1585 = vld [vmem:[#allocation7 + $0xa0] sm:$0xff]
        %v1586 = vld [vmem:[#allocation7 + $0xa8] sm:$0xff]
        %v1587 = vld [vmem:[#allocation7 + $0xb0] sm:$0xff]
        %v1588 = vld [vmem:[#allocation7 + $0xb8] sm:$0xff]
        %v1589 = vld [vmem:[#allocation7 + $0xc0] sm:$0xff]
        %v1590 = vld [vmem:[#allocation7 + $0xc8] sm:$0xff]
        %v1591 = vld [vmem:[#allocation7 + $0xd0] sm:$0xff]
        %v1592 = vld [vmem:[#allocation7 + $0xd8] sm:$0xff]
        %v1593 = vld [vmem:[#allocation7 + $0xe0] sm:$0xff]
        %v1594 = vld [vmem:[#allocation7 + $0xe8] sm:$0xff]
        %v1595 = vld [vmem:[#allocation7 + $0xf0] sm:$0xff]
        %v1596 = vld [vmem:[#allocation7 + $0xf8] sm:$0xff]
        %v1597 = vld [vmem:[#allocation7 + $0x100] sm:$0xff]
        %v1598 = vld [vmem:[#allocation7 + $0x108] sm:$0xff]
        %v1599 = vld [vmem:[#allocation7 + $0x110] sm:$0xff]
        %v1600 = vld [vmem:[#allocation7 + $0x118] sm:$0xff]
        %v1601 = vld [vmem:[#allocation7 + $0x120] sm:$0xff]
        %v1602 = vld [vmem:[#allocation7 + $0x128] sm:$0xff]
        %v1603 = vld [vmem:[#allocation7 + $0x130] sm:$0xff]
        %v1604 = vld [vmem:[#allocation7 + $0x138] sm:$0xff]
        %v1605 = vld [vmem:[#allocation7 + $0x140] sm:$0xff]
        %v1606 = vld [vmem:[#allocation7 + $0x148] sm:$0xff]
        %v1607 = vld [vmem:[#allocation7 + $0x150] sm:$0xff]
        %v1608 = vld [vmem:[#allocation7 + $0x158] sm:$0xff]
        %v1609 = vld [vmem:[#allocation7 + $0x160] sm:$0xff]
        %v1610 = vld [vmem:[#allocation7 + $0x168] sm:$0xff]
        %v1611 = vld [vmem:[#allocation7 + $0x170] sm:$0xff]
        %v1612 = vld [vmem:[#allocation7 + $0x178] sm:$0xff]
        %v1661 = vunpack.c.l.b16 %v1565
        %v1662 = vunpack.c.h.b16 %v1565
        %v1663 = vunpack.c.l.b16 %v1566
        %v1664 = vunpack.c.h.b16 %v1566
        %v1665 = vunpack.c.l.b16 %v1567
        %v1666 = vunpack.c.h.b16 %v1567
        %v1667 = vunpack.c.l.b16 %v1568
        %v1668 = vunpack.c.h.b16 %v1568
        %v1669 = vunpack.c.l.b16 %v1569
        %v1670 = vunpack.c.h.b16 %v1569
        %v1671 = vunpack.c.l.b16 %v1570
        %v1672 = vunpack.c.h.b16 %v1570
        %v1673 = vunpack.c.l.b16 %v1571
        %v1674 = vunpack.c.h.b16 %v1571
        %v1675 = vunpack.c.l.b16 %v1572
        %v1676 = vunpack.c.h.b16 %v1572
        %v1677 = vunpack.c.l.b16 %v1573
        %v1678 = vunpack.c.h.b16 %v1573
        %v1679 = vunpack.c.l.b16 %v1574
        %v1680 = vunpack.c.h.b16 %v1574
        %v1681 = vunpack.c.l.b16 %v1575
        %v1682 = vunpack.c.h.b16 %v1575
        %v1683 = vunpack.c.l.b16 %v1576
        %v1684 = vunpack.c.h.b16 %v1576
        %v1685 = vunpack.c.l.b16 %v1577
        %v1686 = vunpack.c.h.b16 %v1577
        %v1687 = vunpack.c.l.b16 %v1578
        %v1688 = vunpack.c.h.b16 %v1578
        %v1689 = vunpack.c.l.b16 %v1579
        %v1690 = vunpack.c.h.b16 %v1579
        %v1691 = vunpack.c.l.b16 %v1580
        %v1692 = vunpack.c.h.b16 %v1580
        %v1693 = vunpack.c.l.b16 %v1581
        %v1694 = vunpack.c.h.b16 %v1581
        %v1695 = vunpack.c.l.b16 %v1582
        %v1696 = vunpack.c.h.b16 %v1582
        %v1697 = vunpack.c.l.b16 %v1583
        %v1698 = vunpack.c.h.b16 %v1583
        %v1699 = vunpack.c.l.b16 %v1584
        %v1700 = vunpack.c.h.b16 %v1584
        %v1701 = vunpack.c.l.b16 %v1585
        %v1702 = vunpack.c.h.b16 %v1585
        %v1703 = vunpack.c.l.b16 %v1586
        %v1704 = vunpack.c.h.b16 %v1586
        %v1705 = vunpack.c.l.b16 %v1587
        %v1706 = vunpack.c.h.b16 %v1587
        %v1707 = vunpack.c.l.b16 %v1588
        %v1708 = vunpack.c.h.b16 %v1588
        %v1709 = vunpack.c.l.b16 %v1589
        %v1710 = vunpack.c.h.b16 %v1589
        %v1711 = vunpack.c.l.b16 %v1590
        %v1712 = vunpack.c.h.b16 %v1590
        %v1713 = vunpack.c.l.b16 %v1591
        %v1714 = vunpack.c.h.b16 %v1591
        %v1715 = vunpack.c.l.b16 %v1592
        %v1716 = vunpack.c.h.b16 %v1592
        %v1717 = vunpack.c.l.b16 %v1593
        %v1718 = vunpack.c.h.b16 %v1593
        %v1719 = vunpack.c.l.b16 %v1594
        %v1720 = vunpack.c.h.b16 %v1594
        %v1721 = vunpack.c.l.b16 %v1595
        %v1722 = vunpack.c.h.b16 %v1595
        %v1723 = vunpack.c.l.b16 %v1596
        %v1724 = vunpack.c.h.b16 %v1596
        %v1725 = vunpack.c.l.b16 %v1597
        %v1726 = vunpack.c.h.b16 %v1597
        %v1727 = vunpack.c.l.b16 %v1598
        %v1728 = vunpack.c.h.b16 %v1598
        %v1729 = vunpack.c.l.b16 %v1599
        %v1730 = vunpack.c.h.b16 %v1599
        %v1731 = vunpack.c.l.b16 %v1600
        %v1732 = vunpack.c.h.b16 %v1600
        %v1733 = vunpack.c.l.b16 %v1601
        %v1734 = vunpack.c.h.b16 %v1601
        %v1735 = vunpack.c.l.b16 %v1602
        %v1736 = vunpack.c.h.b16 %v1602
        %v1737 = vunpack.c.l.b16 %v1603
        %v1738 = vunpack.c.h.b16 %v1603
        %v1739 = vunpack.c.l.b16 %v1604
        %v1740 = vunpack.c.h.b16 %v1604
        %v1741 = vunpack.c.l.b16 %v1605
        %v1742 = vunpack.c.h.b16 %v1605
        %v1743 = vunpack.c.l.b16 %v1606
        %v1744 = vunpack.c.h.b16 %v1606
        %v1745 = vunpack.c.l.b16 %v1607
        %v1746 = vunpack.c.h.b16 %v1607
        %v1747 = vunpack.c.l.b16 %v1608
        %v1748 = vunpack.c.h.b16 %v1608
        %v1749 = vunpack.c.l.b16 %v1609
        %v1750 = vunpack.c.h.b16 %v1609
        %v1751 = vunpack.c.l.b16 %v1610
        %v1752 = vunpack.c.h.b16 %v1610
        %v1753 = vunpack.c.l.b16 %v1611
        %v1754 = vunpack.c.h.b16 %v1611
        %v1755 = vunpack.c.l.b16 %v1612
        %v1756 = vunpack.c.h.b16 %v1612
        %v1757 = vpack.c.b16 %v1667, %v1661
        %v1758 = vpack.c.b16 %v1668, %v1662
        %v1759 = vpack.c.b16 %v1669, %v1663
        %v1760 = vpack.c.b16 %v1670, %v1664
        %v1761 = vpack.c.b16 %v1671, %v1665
        %v1762 = vpack.c.b16 %v1672, %v1666
        %v1763 = vpack.c.b16 %v1679, %v1673
        %v1764 = vpack.c.b16 %v1680, %v1674
        %v1765 = vpack.c.b16 %v1681, %v1675
        %v1766 = vpack.c.b16 %v1682, %v1676
        %v1767 = vpack.c.b16 %v1683, %v1677
        %v1768 = vpack.c.b16 %v1684, %v1678
        %v1769 = vpack.c.b16 %v1691, %v1685
        %v1770 = vpack.c.b16 %v1692, %v1686
        %v1771 = vpack.c.b16 %v1693, %v1687
        %v1772 = vpack.c.b16 %v1694, %v1688
        %v1773 = vpack.c.b16 %v1695, %v1689
        %v1774 = vpack.c.b16 %v1696, %v1690
        %v1775 = vpack.c.b16 %v1703, %v1697
        %v1776 = vpack.c.b16 %v1704, %v1698
        %v1777 = vpack.c.b16 %v1705, %v1699
        %v1778 = vpack.c.b16 %v1706, %v1700
        %v1779 = vpack.c.b16 %v1707, %v1701
        %v1780 = vpack.c.b16 %v1708, %v1702
        %v1781 = vpack.c.b16 %v1715, %v1709
        %v1782 = vpack.c.b16 %v1716, %v1710
        %v1783 = vpack.c.b16 %v1717, %v1711
        %v1784 = vpack.c.b16 %v1718, %v1712
        %v1785 = vpack.c.b16 %v1719, %v1713
        %v1786 = vpack.c.b16 %v1720, %v1714
        %v1787 = vpack.c.b16 %v1727, %v1721
        %v1788 = vpack.c.b16 %v1728, %v1722
        %v1789 = vpack.c.b16 %v1729, %v1723
        %v1790 = vpack.c.b16 %v1730, %v1724
        %v1791 = vpack.c.b16 %v1731, %v1725
        %v1792 = vpack.c.b16 %v1732, %v1726
        %v1793 = vpack.c.b16 %v1739, %v1733
        %v1794 = vpack.c.b16 %v1740, %v1734
        %v1795 = vpack.c.b16 %v1741, %v1735
        %v1796 = vpack.c.b16 %v1742, %v1736
        %v1797 = vpack.c.b16 %v1743, %v1737
        %v1798 = vpack.c.b16 %v1744, %v1738
        %v1799 = vpack.c.b16 %v1751, %v1745
        %v1800 = vpack.c.b16 %v1752, %v1746
        %v1801 = vpack.c.b16 %v1753, %v1747
        %v1802 = vpack.c.b16 %v1754, %v1748
        %v1803 = vpack.c.b16 %v1755, %v1749
        %v1804 = vpack.c.b16 %v1756, %v1750
        %1853 = vmatprep.subr.bf16.mxu0 %v1800
        %1854 = vmatpush1.bf16.msra.mxu0 %v1799
        %1855 = vmatprep.subr.bf16.mxu0 %v1794
        %1856 = vmatpush1.bf16.msra.mxu0 %v1793
        %1857 = vmatprep.subr.bf16.mxu0 %v1788
        %1858 = vmatpush1.bf16.msra.mxu0 %v1787
        %1859 = vmatprep.subr.bf16.mxu0 %v1782
        %1860 = vmatpush1.bf16.msra.mxu0 %v1781
        %1861 = vmatprep.subr.bf16.mxu0 %v1776
        %1862 = vmatpush1.bf16.msra.mxu0 %v1775
        %1863 = vmatprep.subr.bf16.mxu0 %v1770
        %1864 = vmatpush1.bf16.msra.mxu0 %v1769
        %1865 = vmatprep.subr.bf16.mxu0 %v1764
        %1866 = vmatpush1.bf16.msra.mxu0 %v1763
        %1867 = vmatprep.subr.bf16.mxu0 %v1758
        %1868 = vmatpush1.bf16.msra.mxu0 %v1757
        %1869 = vmatprep.subr.bf16.mxu0 0
        %1870 = vmatpush2.bf16.msra.mxu0 0
        %1871 = vmatprep.subr.bf16.mxu0 0
        %1872 = vmatpush2.bf16.msra.mxu0 0
        %1873 = vmatprep.subr.bf16.mxu0 0
        %1874 = vmatpush2.bf16.msra.mxu0 0
        %1875 = vmatprep.subr.bf16.mxu0 0
        %1876 = vmatpush2.bf16.msra.mxu0 0
        %1877 = vmatprep.subr.bf16.mxu0 0
        %1878 = vmatpush2.bf16.msra.mxu0 0
        %1879 = vmatprep.subr.bf16.mxu0 0
        %1880 = vmatpush2.bf16.msra.mxu0 0
        %1881 = vmatprep.subr.bf16.mxu0 0
        %1882 = vmatpush2.bf16.msra.mxu0 0
        %1883 = vmatprep.subr.bf16.mxu0 0
        %1884 = vmatpush2.bf16.msra.mxu0 0
        %1885 = vmatprep.mubr.bf16.mxu0 0
        %1886 = vmatmul.mubr.bf16.gmra.mxu0 %v1564
        %v1887 = vpop.f32.mrf.mxu0
        %v1888 = vadd.f32 0.0, %v1887
        %v1889 = vpop.f32.mrf.mxu0
        %v1890 = vadd.f32 0.0, %v1889
        %v1891 = vpop.f32.mrf.mxu0
        %v1892 = vpop.f32.mrf.mxu0
        %1893 = vdwg.mxu0
        %1894 = vmatprep.subr.bf16.mxu0 %v1802
        %1895 = vmatpush1.bf16.msra.mxu0 %v1801
        %1896 = vmatprep.subr.bf16.mxu0 %v1796
        %1897 = vmatpush1.bf16.msra.mxu0 %v1795
        %1898 = vmatprep.subr.bf16.mxu0 %v1790
        %1899 = vmatpush1.bf16.msra.mxu0 %v1789
        %1900 = vmatprep.subr.bf16.mxu0 %v1784
        %1901 = vmatpush1.bf16.msra.mxu0 %v1783
        %1902 = vmatprep.subr.bf16.mxu0 %v1778
        %1903 = vmatpush1.bf16.msra.mxu0 %v1777
        %1904 = vmatprep.subr.bf16.mxu0 %v1772
        %1905 = vmatpush1.bf16.msra.mxu0 %v1771
        %1906 = vmatprep.subr.bf16.mxu0 %v1766
        %1907 = vmatpush1.bf16.msra.mxu0 %v1765
        %1908 = vmatprep.subr.bf16.mxu0 %v1760
        %1909 = vmatpush1.bf16.msra.mxu0 %v1759
        %1910 = vmatprep.subr.bf16.mxu0 0
        %1911 = vmatpush2.bf16.msra.mxu0 0
        %1912 = vmatprep.subr.bf16.mxu0 0
        %1913 = vmatpush2.bf16.msra.mxu0 0
        %1914 = vmatprep.subr.bf16.mxu0 0
        %1915 = vmatpush2.bf16.msra.mxu0 0
        %1916 = vmatprep.subr.bf16.mxu0 0
        %1917 = vmatpush2.bf16.msra.mxu0 0
        %1918 = vmatprep.subr.bf16.mxu0 0
        %1919 = vmatpush2.bf16.msra.mxu0 0
        %1920 = vmatprep.subr.bf16.mxu0 0
        %1921 = vmatpush2.bf16.msra.mxu0 0
        %1922 = vmatprep.subr.bf16.mxu0 0
        %1923 = vmatpush2.bf16.msra.mxu0 0
        %1924 = vmatprep.subr.bf16.mxu0 0
        %1925 = vmatpush2.bf16.msra.mxu0 0
        %1926 = vmatprep.mubr.bf16.mxu0 0
        %1927 = vmatmul.mubr.bf16.gmra.mxu0 %v1564
        %v1928 = vpop.f32.mrf.mxu0
        %v1929 = vadd.f32 0.0, %v1928
        %v1930 = vpop.f32.mrf.mxu0
        %v1931 = vadd.f32 0.0, %v1930
        %v1932 = vpop.f32.mrf.mxu0
        %v1933 = vpop.f32.mrf.mxu0
        %1934 = vdwg.mxu0
        %1935 = vmatprep.subr.bf16.mxu0 %v1804
        %1936 = vmatpush1.bf16.msra.mxu0 %v1803
        %1937 = vmatprep.subr.bf16.mxu0 %v1798
        %1938 = vmatpush1.bf16.msra.mxu0 %v1797
        %1939 = vmatprep.subr.bf16.mxu0 %v1792
        %1940 = vmatpush1.bf16.msra.mxu0 %v1791
        %1941 = vmatprep.subr.bf16.mxu0 %v1786
        %1942 = vmatpush1.bf16.msra.mxu0 %v1785
        %1943 = vmatprep.subr.bf16.mxu0 %v1780
        %1944 = vmatpush1.bf16.msra.mxu0 %v1779
        %1945 = vmatprep.subr.bf16.mxu0 %v1774
        %1946 = vmatpush1.bf16.msra.mxu0 %v1773
        %1947 = vmatprep.subr.bf16.mxu0 %v1768
        %1948 = vmatpush1.bf16.msra.mxu0 %v1767
        %1949 = vmatprep.subr.bf16.mxu0 %v1762
        %1950 = vmatpush1.bf16.msra.mxu0 %v1761
        %1951 = vmatprep.subr.bf16.mxu0 0
        %1952 = vmatpush2.bf16.msra.mxu0 0
        %1953 = vmatprep.subr.bf16.mxu0 0
        %1954 = vmatpush2.bf16.msra.mxu0 0
        %1955 = vmatprep.subr.bf16.mxu0 0
        %1956 = vmatpush2.bf16.msra.mxu0 0
        %1957 = vmatprep.subr.bf16.mxu0 0
        %1958 = vmatpush2.bf16.msra.mxu0 0
        %1959 = vmatprep.subr.bf16.mxu0 0
        %1960 = vmatpush2.bf16.msra.mxu0 0
        %1961 = vmatprep.subr.bf16.mxu0 0
        %1962 = vmatpush2.bf16.msra.mxu0 0
        %1963 = vmatprep.subr.bf16.mxu0 0
        %1964 = vmatpush2.bf16.msra.mxu0 0
        %1965 = vmatprep.subr.bf16.mxu0 0
        %1966 = vmatpush2.bf16.msra.mxu0 0
        %1967 = vmatprep.mubr.bf16.mxu0 0
        %1968 = vmatmul.mubr.bf16.gmra.mxu0 %v1564
        %v1969 = vpop.f32.mrf.mxu0
        %v1970 = vadd.f32 0.0, %v1969
        %v1971 = vpop.f32.mrf.mxu0
        %v1972 = vadd.f32 0.0, %v1971
        %v1973 = vpop.f32.mrf.mxu0
        %v1974 = vpop.f32.mrf.mxu0
        %1975 = vdwg.mxu0
        %v1976 = vld [vmem:[#allocation2] sm:$0xff]
        %v1977 = vld [vmem:[#allocation2 + $0x8] sm:$0xff]
        %v1978 = vld [vmem:[#allocation2 + $0x10] sm:$0xff]
        %v1979 = vld [vmem:[#allocation3] sm:$0xff]
        %v1980 = vld [vmem:[#allocation3 + $0x8] sm:$0xff]
        %v1981 = vld [vmem:[#allocation3 + $0x10] sm:$0xff]
        %v1982 = vpack.c.bf16 %v1888, %v1888
        %1983 = vmatprep.subr.bf16.mxu0 0
        %1984 = vmatpush1.bf16.xpose.msra.mxu0 0
        %1985 = vmatprep.subr.bf16.mxu0 0
        %1986 = vmatpush1.bf16.xpose.msra.mxu0 0
        %1987 = vmatprep.subr.bf16.mxu0 0
        %1988 = vmatpush1.bf16.xpose.msra.mxu0 0
        %1989 = vmatprep.subr.bf16.mxu0 0
        %1990 = vmatpush1.bf16.xpose.msra.mxu0 0
        %1991 = vmatprep.subr.bf16.mxu0 0
        %1992 = vmatpush1.bf16.xpose.msra.mxu0 0
        %1993 = vmatprep.subr.bf16.mxu0 0
        %1994 = vmatpush1.bf16.xpose.msra.mxu0 0
        %1995 = vmatprep.subr.bf16.mxu0 0
        %1996 = vmatpush1.bf16.xpose.msra.mxu0 0
        %1997 = vmatprep.subr.bf16.mxu0 0
        %1998 = vmatpush1.bf16.xpose.msra.mxu0 %v1976
        %1999 = vmatprep.subr.bf16.mxu0 0
        %2000 = vmatpush2.bf16.xpose.msra.mxu0 0
        %2001 = vmatprep.subr.bf16.mxu0 0
        %2002 = vmatpush2.bf16.xpose.msra.mxu0 0
        %2003 = vmatprep.subr.bf16.mxu0 0
        %2004 = vmatpush2.bf16.xpose.msra.mxu0 0
        %2005 = vmatprep.subr.bf16.mxu0 0
        %2006 = vmatpush2.bf16.xpose.msra.mxu0 0
        %2007 = vmatprep.subr.bf16.mxu0 0
        %2008 = vmatpush2.bf16.xpose.msra.mxu0 0
        %2009 = vmatprep.subr.bf16.mxu0 0
        %2010 = vmatpush2.bf16.xpose.msra.mxu0 0
        %2011 = vmatprep.subr.bf16.mxu0 0
        %2012 = vmatpush2.bf16.xpose.msra.mxu0 0
        %2013 = vmatprep.subr.bf16.mxu0 0
        %2014 = vmatpush2.bf16.xpose.msra.mxu0 0
        %2015 = vmatprep.mubr.bf16.mxu0 0
        %2016 = vmatmul.mubr.bf16.gmra.mxu0 %v1982
        %v2017 = vpop.f32.mrf.mxu0
        %v2018 = vadd.f32 0.0, %v2017
        %v2019 = vpop.f32.mrf.mxu0
        %v2020 = vpop.f32.mrf.mxu0
        %v2021 = vpop.f32.mrf.mxu0
        %2022 = vdwg.mxu0
        %v2023 = vmul.f32 %v2018, 0.25
        %vm2024 = vcmask 64512
        %v2025 = vsel %vm2024, %v2023, -inf
        %2026 = vmax.xlane.f32.xlu0 %v2025
        %v2027 = vpop.xlane.xlu0 %2026
        %v2028 = vsub.f32 %v2023, %v2027
        %v2029 = vmul.f32 %v2028, 1.442695
        %v2030 = vpow.pop %v2029
        %v2031 = vsel %vm2024, %v2030, 0.0
        %2032 = vadd.xlane.f32.xlu0 %v2031
        %v2033 = vpop.xlane.xlu0 %2032
        %v2034 = vrcp.pop %v2033
        %v2035 = vmul.f32 %v2030, %v2034
        %v2036 = vpack.c.bf16 %v2035, %v2035
        %v2038 = vsel %vm2024, %v2036, 0
        %vm2040 = vcmask 1043456
        %v2042 = vsel %vm2040, %v1979, 0
        %2044 = vmatprep.subr.bf16.mxu0 0
        %2045 = vmatpush1.bf16.msra.mxu0 0
        %2046 = vmatprep.subr.bf16.mxu0 0
        %2047 = vmatpush1.bf16.msra.mxu0 0
        %2048 = vmatprep.subr.bf16.mxu0 0
        %2049 = vmatpush1.bf16.msra.mxu0 0
        %2050 = vmatprep.subr.bf16.mxu0 0
        %2051 = vmatpush1.bf16.msra.mxu0 0
        %2052 = vmatprep.subr.bf16.mxu0 0
        %2053 = vmatpush1.bf16.msra.mxu0 0
        %2054 = vmatprep.subr.bf16.mxu0 0
        %2055 = vmatpush1.bf16.msra.mxu0 0
        %2056 = vmatprep.subr.bf16.mxu0 0
        %2057 = vmatpush1.bf16.msra.mxu0 0
        %2058 = vmatprep.subr.bf16.mxu0 0
        %2059 = vmatpush1.bf16.msra.mxu0 %v2042
        %2060 = vmatprep.subr.bf16.mxu0 0
        %2061 = vmatpush2.bf16.msra.mxu0 0
        %2062 = vmatprep.subr.bf16.mxu0 0
        %2063 = vmatpush2.bf16.msra.mxu0 0
        %2064 = vmatprep.subr.bf16.mxu0 0
        %2065 = vmatpush2.bf16.msra.mxu0 0
        %2066 = vmatprep.subr.bf16.mxu0 0
        %2067 = vmatpush2.bf16.msra.mxu0 0
        %2068 = vmatprep.subr.bf16.mxu0 0
        %2069 = vmatpush2.bf16.msra.mxu0 0
        %2070 = vmatprep.subr.bf16.mxu0 0
        %2071 = vmatpush2.bf16.msra.mxu0 0
        %2072 = vmatprep.subr.bf16.mxu0 0
        %2073 = vmatpush2.bf16.msra.mxu0 0
        %2074 = vmatprep.subr.bf16.mxu0 0
        %2075 = vmatpush2.bf16.msra.mxu0 0
        %2076 = vmatprep.mubr.bf16.mxu0 0
        %2077 = vmatmul.mubr.bf16.gmra.mxu0 %v2038
        %v2078 = vpop.f32.mrf.mxu0
        %v2079 = vadd.f32 0.0, %v2078
        %v2080 = vpop.f32.mrf.mxu0
        %v2081 = vpop.f32.mrf.mxu0
        %v2082 = vpop.f32.mrf.mxu0
        %2083 = vdwg.mxu0
        %v2084 = vpack.c.bf16 %v1890, %v1890
        %v2086 = vunpack.c.h.b16 %v1976
        %v2087 = vpack.c.b16 %v2086, %v2086
        %2089 = vmatprep.subr.bf16.mxu0 0
        %2090 = vmatpush1.bf16.xpose.msra.mxu0 0
        %2091 = vmatprep.subr.bf16.mxu0 0
        %2092 = vmatpush1.bf16.xpose.msra.mxu0 0
        %2093 = vmatprep.subr.bf16.mxu0 0
        %2094 = vmatpush1.bf16.xpose.msra.mxu0 0
        %2095 = vmatprep.subr.bf16.mxu0 0
        %2096 = vmatpush1.bf16.xpose.msra.mxu0 0
        %2097 = vmatprep.subr.bf16.mxu0 0
        %2098 = vmatpush1.bf16.xpose.msra.mxu0 0
        %2099 = vmatprep.subr.bf16.mxu0 0
        %2100 = vmatpush1.bf16.xpose.msra.mxu0 0
        %2101 = vmatprep.subr.bf16.mxu0 0
        %2102 = vmatpush1.bf16.xpose.msra.mxu0 0
        %2103 = vmatprep.subr.bf16.mxu0 0
        %2104 = vmatpush1.bf16.xpose.msra.mxu0 %v2087
        %2105 = vmatprep.subr.bf16.mxu0 0
        %2106 = vmatpush2.bf16.xpose.msra.mxu0 0
        %2107 = vmatprep.subr.bf16.mxu0 0
        %2108 = vmatpush2.bf16.xpose.msra.mxu0 0
        %2109 = vmatprep.subr.bf16.mxu0 0
        %2110 = vmatpush2.bf16.xpose.msra.mxu0 0
        %2111 = vmatprep.subr.bf16.mxu0 0
        %2112 = vmatpush2.bf16.xpose.msra.mxu0 0
        %2113 = vmatprep.subr.bf16.mxu0 0
        %2114 = vmatpush2.bf16.xpose.msra.mxu0 0
        %2115 = vmatprep.subr.bf16.mxu0 0
        %2116 = vmatpush2.bf16.xpose.msra.mxu0 0
        %2117 = vmatprep.subr.bf16.mxu0 0
        %2118 = vmatpush2.bf16.xpose.msra.mxu0 0
        %2119 = vmatprep.subr.bf16.mxu0 0
        %2120 = vmatpush2.bf16.xpose.msra.mxu0 0
        %2121 = vmatprep.mubr.bf16.mxu0 0
        %2122 = vmatmul.mubr.bf16.gmra.mxu0 %v2084
        %v2123 = vpop.f32.mrf.mxu0
        %v2124 = vadd.f32 0.0, %v2123
        %v2125 = vpop.f32.mrf.mxu0
        %v2126 = vpop.f32.mrf.mxu0
        %v2127 = vpop.f32.mrf.mxu0
        %2128 = vdwg.mxu0
        %v2129 = vmul.f32 %v2124, 0.25
        %v2130 = vsel %vm2024, %v2129, -inf
        %2131 = vmax.xlane.f32.xlu0 %v2130
        %v2132 = vpop.xlane.xlu0 %2131
        %v2133 = vsub.f32 %v2129, %v2132
        %v2134 = vmul.f32 %v2133, 1.442695
        %v2135 = vpow.pop %v2134
        %v2136 = vsel %vm2024, %v2135, 0.0
        %2137 = vadd.xlane.f32.xlu0 %v2136
        %v2138 = vpop.xlane.xlu0 %2137
        %v2139 = vrcp.pop %v2138
        %v2140 = vmul.f32 %v2135, %v2139
        %v2141 = vpack.c.bf16 %v2140, %v2140
        %v2143 = vunpack.c.h.b16 %v1979
        %v2144 = vpack.c.b16 %v2143, %v2143
        %v2146 = vsel %vm2024, %v2141, 0
        %v2149 = vsel %vm2040, %v2144, 0
        %2151 = vmatprep.subr.bf16.mxu0 0
        %2152 = vmatpush1.bf16.msra.mxu0 0
        %2153 = vmatprep.subr.bf16.mxu0 0
        %2154 = vmatpush1.bf16.msra.mxu0 0
        %2155 = vmatprep.subr.bf16.mxu0 0
        %2156 = vmatpush1.bf16.msra.mxu0 0
        %2157 = vmatprep.subr.bf16.mxu0 0
        %2158 = vmatpush1.bf16.msra.mxu0 0
        %2159 = vmatprep.subr.bf16.mxu0 0
        %2160 = vmatpush1.bf16.msra.mxu0 0
        %2161 = vmatprep.subr.bf16.mxu0 0
        %2162 = vmatpush1.bf16.msra.mxu0 0
        %2163 = vmatprep.subr.bf16.mxu0 0
        %2164 = vmatpush1.bf16.msra.mxu0 0
        %2165 = vmatprep.subr.bf16.mxu0 0
        %2166 = vmatpush1.bf16.msra.mxu0 %v2149
        %2167 = vmatprep.subr.bf16.mxu0 0
        %2168 = vmatpush2.bf16.msra.mxu0 0
        %2169 = vmatprep.subr.bf16.mxu0 0
        %2170 = vmatpush2.bf16.msra.mxu0 0
        %2171 = vmatprep.subr.bf16.mxu0 0
        %2172 = vmatpush2.bf16.msra.mxu0 0
        %2173 = vmatprep.subr.bf16.mxu0 0
        %2174 = vmatpush2.bf16.msra.mxu0 0
        %2175 = vmatprep.subr.bf16.mxu0 0
        %2176 = vmatpush2.bf16.msra.mxu0 0
        %2177 = vmatprep.subr.bf16.mxu0 0
        %2178 = vmatpush2.bf16.msra.mxu0 0
        %2179 = vmatprep.subr.bf16.mxu0 0
        %2180 = vmatpush2.bf16.msra.mxu0 0
        %2181 = vmatprep.subr.bf16.mxu0 0
        %2182 = vmatpush2.bf16.msra.mxu0 0
        %2183 = vmatprep.mubr.bf16.mxu0 0
        %2184 = vmatmul.mubr.bf16.gmra.mxu0 %v2146
        %v2185 = vpop.f32.mrf.mxu0
        %v2186 = vadd.f32 0.0, %v2185
        %v2187 = vpop.f32.mrf.mxu0
        %v2188 = vpop.f32.mrf.mxu0
        %v2189 = vpop.f32.mrf.mxu0
        %2190 = vdwg.mxu0
        %v2191 = vpack.c.bf16 %v1929, %v1929
        %2192 = vmatprep.subr.bf16.mxu0 0
        %2193 = vmatpush1.bf16.xpose.msra.mxu0 0
        %2194 = vmatprep.subr.bf16.mxu0 0
        %2195 = vmatpush1.bf16.xpose.msra.mxu0 0
        %2196 = vmatprep.subr.bf16.mxu0 0
        %2197 = vmatpush1.bf16.xpose.msra.mxu0 0
        %2198 = vmatprep.subr.bf16.mxu0 0
        %2199 = vmatpush1.bf16.xpose.msra.mxu0 0
        %2200 = vmatprep.subr.bf16.mxu0 0
        %2201 = vmatpush1.bf16.xpose.msra.mxu0 0
        %2202 = vmatprep.subr.bf16.mxu0 0
        %2203 = vmatpush1.bf16.xpose.msra.mxu0 0
        %2204 = vmatprep.subr.bf16.mxu0 0
        %2205 = vmatpush1.bf16.xpose.msra.mxu0 0
        %2206 = vmatprep.subr.bf16.mxu0 0
        %2207 = vmatpush1.bf16.xpose.msra.mxu0 %v1977
        %2208 = vmatprep.subr.bf16.mxu0 0
        %2209 = vmatpush2.bf16.xpose.msra.mxu0 0
        %2210 = vmatprep.subr.bf16.mxu0 0
        %2211 = vmatpush2.bf16.xpose.msra.mxu0 0
        %2212 = vmatprep.subr.bf16.mxu0 0
        %2213 = vmatpush2.bf16.xpose.msra.mxu0 0
        %2214 = vmatprep.subr.bf16.mxu0 0
        %2215 = vmatpush2.bf16.xpose.msra.mxu0 0
        %2216 = vmatprep.subr.bf16.mxu0 0
        %2217 = vmatpush2.bf16.xpose.msra.mxu0 0
        %2218 = vmatprep.subr.bf16.mxu0 0
        %2219 = vmatpush2.bf16.xpose.msra.mxu0 0
        %2220 = vmatprep.subr.bf16.mxu0 0
        %2221 = vmatpush2.bf16.xpose.msra.mxu0 0
        %2222 = vmatprep.subr.bf16.mxu0 0
        %2223 = vmatpush2.bf16.xpose.msra.mxu0 0
        %2224 = vmatprep.mubr.bf16.mxu0 0
        %2225 = vmatmul.mubr.bf16.gmra.mxu0 %v2191
        %v2226 = vpop.f32.mrf.mxu0
        %v2227 = vadd.f32 0.0, %v2226
        %v2228 = vpop.f32.mrf.mxu0
        %v2229 = vpop.f32.mrf.mxu0
        %v2230 = vpop.f32.mrf.mxu0
        %2231 = vdwg.mxu0
        %v2232 = vmul.f32 %v2227, 0.25
        %v2233 = vsel %vm2024, %v2232, -inf
        %2234 = vmax.xlane.f32.xlu0 %v2233
        %v2235 = vpop.xlane.xlu0 %2234
        %v2236 = vsub.f32 %v2232, %v2235
        %v2237 = vmul.f32 %v2236, 1.442695
        %v2238 = vpow.pop %v2237
        %v2239 = vsel %vm2024, %v2238, 0.0
        %2240 = vadd.xlane.f32.xlu0 %v2239
        %v2241 = vpop.xlane.xlu0 %2240
        %v2242 = vrcp.pop %v2241
        %v2243 = vmul.f32 %v2238, %v2242
        %v2244 = vpack.c.bf16 %v2243, %v2243
        %v2246 = vsel %vm2024, %v2244, 0
        %v2249 = vsel %vm2040, %v1980, 0
        %2251 = vmatprep.subr.bf16.mxu0 0
        %2252 = vmatpush1.bf16.msra.mxu0 0
        %2253 = vmatprep.subr.bf16.mxu0 0
        %2254 = vmatpush1.bf16.msra.mxu0 0
        %2255 = vmatprep.subr.bf16.mxu0 0
        %2256 = vmatpush1.bf16.msra.mxu0 0
        %2257 = vmatprep.subr.bf16.mxu0 0
        %2258 = vmatpush1.bf16.msra.mxu0 0
        %2259 = vmatprep.subr.bf16.mxu0 0
        %2260 = vmatpush1.bf16.msra.mxu0 0
        %2261 = vmatprep.subr.bf16.mxu0 0
        %2262 = vmatpush1.bf16.msra.mxu0 0
        %2263 = vmatprep.subr.bf16.mxu0 0
        %2264 = vmatpush1.bf16.msra.mxu0 0
        %2265 = vmatprep.subr.bf16.mxu0 0
        %2266 = vmatpush1.bf16.msra.mxu0 %v2249
        %2267 = vmatprep.subr.bf16.mxu0 0
        %2268 = vmatpush2.bf16.msra.mxu0 0
        %2269 = vmatprep.subr.bf16.mxu0 0
        %2270 = vmatpush2.bf16.msra.mxu0 0
        %2271 = vmatprep.subr.bf16.mxu0 0
        %2272 = vmatpush2.bf16.msra.mxu0 0
        %2273 = vmatprep.subr.bf16.mxu0 0
        %2274 = vmatpush2.bf16.msra.mxu0 0
        %2275 = vmatprep.subr.bf16.mxu0 0
        %2276 = vmatpush2.bf16.msra.mxu0 0
        %2277 = vmatprep.subr.bf16.mxu0 0
        %2278 = vmatpush2.bf16.msra.mxu0 0
        %2279 = vmatprep.subr.bf16.mxu0 0
        %2280 = vmatpush2.bf16.msra.mxu0 0
        %2281 = vmatprep.subr.bf16.mxu0 0
        %2282 = vmatpush2.bf16.msra.mxu0 0
        %2283 = vmatprep.mubr.bf16.mxu0 0
        %2284 = vmatmul.mubr.bf16.gmra.mxu0 %v2246
        %v2285 = vpop.f32.mrf.mxu0
        %v2286 = vadd.f32 0.0, %v2285
        %v2287 = vpop.f32.mrf.mxu0
        %v2288 = vpop.f32.mrf.mxu0
        %v2289 = vpop.f32.mrf.mxu0
        %2290 = vdwg.mxu0
        %v2291 = vpack.c.bf16 %v1931, %v1931
        %v2293 = vunpack.c.h.b16 %v1977
        %v2294 = vpack.c.b16 %v2293, %v2293
        %2296 = vmatprep.subr.bf16.mxu0 0
        %2297 = vmatpush1.bf16.xpose.msra.mxu0 0
        %2298 = vmatprep.subr.bf16.mxu0 0
        %2299 = vmatpush1.bf16.xpose.msra.mxu0 0
        %2300 = vmatprep.subr.bf16.mxu0 0
        %2301 = vmatpush1.bf16.xpose.msra.mxu0 0
        %2302 = vmatprep.subr.bf16.mxu0 0
        %2303 = vmatpush1.bf16.xpose.msra.mxu0 0
        %2304 = vmatprep.subr.bf16.mxu0 0
        %2305 = vmatpush1.bf16.xpose.msra.mxu0 0
        %2306 = vmatprep.subr.bf16.mxu0 0
        %2307 = vmatpush1.bf16.xpose.msra.mxu0 0
        %2308 = vmatprep.subr.bf16.mxu0 0
        %2309 = vmatpush1.bf16.xpose.msra.mxu0 0
        %2310 = vmatprep.subr.bf16.mxu0 0
        %2311 = vmatpush1.bf16.xpose.msra.mxu0 %v2294
        %2312 = vmatprep.subr.bf16.mxu0 0
        %2313 = vmatpush2.bf16.xpose.msra.mxu0 0
        %2314 = vmatprep.subr.bf16.mxu0 0
        %2315 = vmatpush2.bf16.xpose.msra.mxu0 0
        %2316 = vmatprep.subr.bf16.mxu0 0
        %2317 = vmatpush2.bf16.xpose.msra.mxu0 0
        %2318 = vmatprep.subr.bf16.mxu0 0
        %2319 = vmatpush2.bf16.xpose.msra.mxu0 0
        %2320 = vmatprep.subr.bf16.mxu0 0
        %2321 = vmatpush2.bf16.xpose.msra.mxu0 0
        %2322 = vmatprep.subr.bf16.mxu0 0
        %2323 = vmatpush2.bf16.xpose.msra.mxu0 0
        %2324 = vmatprep.subr.bf16.mxu0 0
        %2325 = vmatpush2.bf16.xpose.msra.mxu0 0
        %2326 = vmatprep.subr.bf16.mxu0 0
        %2327 = vmatpush2.bf16.xpose.msra.mxu0 0
        %2328 = vmatprep.mubr.bf16.mxu0 0
        %2329 = vmatmul.mubr.bf16.gmra.mxu0 %v2291
        %v2330 = vpop.f32.mrf.mxu0
        %v2331 = vadd.f32 0.0, %v2330
        %v2332 = vpop.f32.mrf.mxu0
        %v2333 = vpop.f32.mrf.mxu0
        %v2334 = vpop.f32.mrf.mxu0
        %2335 = vdwg.mxu0
        %v2336 = vmul.f32 %v2331, 0.25
        %v2337 = vsel %vm2024, %v2336, -inf
        %2338 = vmax.xlane.f32.xlu0 %v2337
        %v2339 = vpop.xlane.xlu0 %2338
        %v2340 = vsub.f32 %v2336, %v2339
        %v2341 = vmul.f32 %v2340, 1.442695
        %v2342 = vpow.pop %v2341
        %v2343 = vsel %vm2024, %v2342, 0.0
        %2344 = vadd.xlane.f32.xlu0 %v2343
        %v2345 = vpop.xlane.xlu0 %2344
        %v2346 = vrcp.pop %v2345
        %v2347 = vmul.f32 %v2342, %v2346
        %v2348 = vpack.c.bf16 %v2347, %v2347
        %v2350 = vunpack.c.h.b16 %v1980
        %v2351 = vpack.c.b16 %v2350, %v2350
        %v2353 = vsel %vm2024, %v2348, 0
        %v2356 = vsel %vm2040, %v2351, 0
        %2358 = vmatprep.subr.bf16.mxu0 0
        %2359 = vmatpush1.bf16.msra.mxu0 0
        %2360 = vmatprep.subr.bf16.mxu0 0
        %2361 = vmatpush1.bf16.msra.mxu0 0
        %2362 = vmatprep.subr.bf16.mxu0 0
        %2363 = vmatpush1.bf16.msra.mxu0 0
        %2364 = vmatprep.subr.bf16.mxu0 0
        %2365 = vmatpush1.bf16.msra.mxu0 0
        %2366 = vmatprep.subr.bf16.mxu0 0
        %2367 = vmatpush1.bf16.msra.mxu0 0
        %2368 = vmatprep.subr.bf16.mxu0 0
        %2369 = vmatpush1.bf16.msra.mxu0 0
        %2370 = vmatprep.subr.bf16.mxu0 0
        %2371 = vmatpush1.bf16.msra.mxu0 0
        %2372 = vmatprep.subr.bf16.mxu0 0
        %2373 = vmatpush1.bf16.msra.mxu0 %v2356
        %2374 = vmatprep.subr.bf16.mxu0 0
        %2375 = vmatpush2.bf16.msra.mxu0 0
        %2376 = vmatprep.subr.bf16.mxu0 0
        %2377 = vmatpush2.bf16.msra.mxu0 0
        %2378 = vmatprep.subr.bf16.mxu0 0
        %2379 = vmatpush2.bf16.msra.mxu0 0
        %2380 = vmatprep.subr.bf16.mxu0 0
        %2381 = vmatpush2.bf16.msra.mxu0 0
        %2382 = vmatprep.subr.bf16.mxu0 0
        %2383 = vmatpush2.bf16.msra.mxu0 0
        %2384 = vmatprep.subr.bf16.mxu0 0
        %2385 = vmatpush2.bf16.msra.mxu0 0
        %2386 = vmatprep.subr.bf16.mxu0 0
        %2387 = vmatpush2.bf16.msra.mxu0 0
        %2388 = vmatprep.subr.bf16.mxu0 0
        %2389 = vmatpush2.bf16.msra.mxu0 0
        %2390 = vmatprep.mubr.bf16.mxu0 0
        %2391 = vmatmul.mubr.bf16.gmra.mxu0 %v2353
        %v2392 = vpop.f32.mrf.mxu0
        %v2393 = vadd.f32 0.0, %v2392
        %v2394 = vpop.f32.mrf.mxu0
        %v2395 = vpop.f32.mrf.mxu0
        %v2396 = vpop.f32.mrf.mxu0
        %2397 = vdwg.mxu0
        %v2398 = vpack.c.bf16 %v1970, %v1970
        %2399 = vmatprep.subr.bf16.mxu0 0
        %2400 = vmatpush1.bf16.xpose.msra.mxu0 0
        %2401 = vmatprep.subr.bf16.mxu0 0
        %2402 = vmatpush1.bf16.xpose.msra.mxu0 0
        %2403 = vmatprep.subr.bf16.mxu0 0
        %2404 = vmatpush1.bf16.xpose.msra.mxu0 0
        %2405 = vmatprep.subr.bf16.mxu0 0
        %2406 = vmatpush1.bf16.xpose.msra.mxu0 0
        %2407 = vmatprep.subr.bf16.mxu0 0
        %2408 = vmatpush1.bf16.xpose.msra.mxu0 0
        %2409 = vmatprep.subr.bf16.mxu0 0
        %2410 = vmatpush1.bf16.xpose.msra.mxu0 0
        %2411 = vmatprep.subr.bf16.mxu0 0
        %2412 = vmatpush1.bf16.xpose.msra.mxu0 0
        %2413 = vmatprep.subr.bf16.mxu0 0
        %2414 = vmatpush1.bf16.xpose.msra.mxu0 %v1978
        %2415 = vmatprep.subr.bf16.mxu0 0
        %2416 = vmatpush2.bf16.xpose.msra.mxu0 0
        %2417 = vmatprep.subr.bf16.mxu0 0
        %2418 = vmatpush2.bf16.xpose.msra.mxu0 0
        %2419 = vmatprep.subr.bf16.mxu0 0
        %2420 = vmatpush2.bf16.xpose.msra.mxu0 0
        %2421 = vmatprep.subr.bf16.mxu0 0
        %2422 = vmatpush2.bf16.xpose.msra.mxu0 0
        %2423 = vmatprep.subr.bf16.mxu0 0
        %2424 = vmatpush2.bf16.xpose.msra.mxu0 0
        %2425 = vmatprep.subr.bf16.mxu0 0
        %2426 = vmatpush2.bf16.xpose.msra.mxu0 0
        %2427 = vmatprep.subr.bf16.mxu0 0
        %2428 = vmatpush2.bf16.xpose.msra.mxu0 0
        %2429 = vmatprep.subr.bf16.mxu0 0
        %2430 = vmatpush2.bf16.xpose.msra.mxu0 0
        %2431 = vmatprep.mubr.bf16.mxu0 0
        %2432 = vmatmul.mubr.bf16.gmra.mxu0 %v2398
        %v2433 = vpop.f32.mrf.mxu0
        %v2434 = vadd.f32 0.0, %v2433
        %v2435 = vpop.f32.mrf.mxu0
        %v2436 = vpop.f32.mrf.mxu0
        %v2437 = vpop.f32.mrf.mxu0
        %2438 = vdwg.mxu0
        %v2439 = vmul.f32 %v2434, 0.25
        %v2440 = vsel %vm2024, %v2439, -inf
        %2441 = vmax.xlane.f32.xlu0 %v2440
        %v2442 = vpop.xlane.xlu0 %2441
        %v2443 = vsub.f32 %v2439, %v2442
        %v2444 = vmul.f32 %v2443, 1.442695
        %v2445 = vpow.pop %v2444
        %v2446 = vsel %vm2024, %v2445, 0.0
        %2447 = vadd.xlane.f32.xlu0 %v2446
        %v2448 = vpop.xlane.xlu0 %2447
        %v2449 = vrcp.pop %v2448
        %v2450 = vmul.f32 %v2445, %v2449
        %v2451 = vpack.c.bf16 %v2450, %v2450
        %v2453 = vsel %vm2024, %v2451, 0
        %v2456 = vsel %vm2040, %v1981, 0
        %2458 = vmatprep.subr.bf16.mxu0 0
        %2459 = vmatpush1.bf16.msra.mxu0 0
        %2460 = vmatprep.subr.bf16.mxu0 0
        %2461 = vmatpush1.bf16.msra.mxu0 0
        %2462 = vmatprep.subr.bf16.mxu0 0
        %2463 = vmatpush1.bf16.msra.mxu0 0
        %2464 = vmatprep.subr.bf16.mxu0 0
        %2465 = vmatpush1.bf16.msra.mxu0 0
        %2466 = vmatprep.subr.bf16.mxu0 0
        %2467 = vmatpush1.bf16.msra.mxu0 0
        %2468 = vmatprep.subr.bf16.mxu0 0
        %2469 = vmatpush1.bf16.msra.mxu0 0
        %2470 = vmatprep.subr.bf16.mxu0 0
        %2471 = vmatpush1.bf16.msra.mxu0 0
        %2472 = vmatprep.subr.bf16.mxu0 0
        %2473 = vmatpush1.bf16.msra.mxu0 %v2456
        %2474 = vmatprep.subr.bf16.mxu0 0
        %2475 = vmatpush2.bf16.msra.mxu0 0
        %2476 = vmatprep.subr.bf16.mxu0 0
        %2477 = vmatpush2.bf16.msra.mxu0 0
        %2478 = vmatprep.subr.bf16.mxu0 0
        %2479 = vmatpush2.bf16.msra.mxu0 0
        %2480 = vmatprep.subr.bf16.mxu0 0
        %2481 = vmatpush2.bf16.msra.mxu0 0
        %2482 = vmatprep.subr.bf16.mxu0 0
        %2483 = vmatpush2.bf16.msra.mxu0 0
        %2484 = vmatprep.subr.bf16.mxu0 0
        %2485 = vmatpush2.bf16.msra.mxu0 0
        %2486 = vmatprep.subr.bf16.mxu0 0
        %2487 = vmatpush2.bf16.msra.mxu0 0
        %2488 = vmatprep.subr.bf16.mxu0 0
        %2489 = vmatpush2.bf16.msra.mxu0 0
        %2490 = vmatprep.mubr.bf16.mxu0 0
        %2491 = vmatmul.mubr.bf16.gmra.mxu0 %v2453
        %v2492 = vpop.f32.mrf.mxu0
        %v2493 = vadd.f32 0.0, %v2492
        %v2494 = vpop.f32.mrf.mxu0
        %v2495 = vpop.f32.mrf.mxu0
        %v2496 = vpop.f32.mrf.mxu0
        %2497 = vdwg.mxu0
        %v2498 = vpack.c.bf16 %v1972, %v1972
        %v2500 = vunpack.c.h.b16 %v1978
        %v2501 = vpack.c.b16 %v2500, %v2500
        %2503 = vmatprep.subr.bf16.mxu0 0
        %2504 = vmatpush1.bf16.xpose.msra.mxu0 0
        %2505 = vmatprep.subr.bf16.mxu0 0
        %2506 = vmatpush1.bf16.xpose.msra.mxu0 0
        %2507 = vmatprep.subr.bf16.mxu0 0
        %2508 = vmatpush1.bf16.xpose.msra.mxu0 0
        %2509 = vmatprep.subr.bf16.mxu0 0
        %2510 = vmatpush1.bf16.xpose.msra.mxu0 0
        %2511 = vmatprep.subr.bf16.mxu0 0
        %2512 = vmatpush1.bf16.xpose.msra.mxu0 0
        %2513 = vmatprep.subr.bf16.mxu0 0
        %2514 = vmatpush1.bf16.xpose.msra.mxu0 0
        %2515 = vmatprep.subr.bf16.mxu0 0
        %2516 = vmatpush1.bf16.xpose.msra.mxu0 0
        %2517 = vmatprep.subr.bf16.mxu0 0
        %2518 = vmatpush1.bf16.xpose.msra.mxu0 %v2501
        %2519 = vmatprep.subr.bf16.mxu0 0
        %2520 = vmatpush2.bf16.xpose.msra.mxu0 0
        %2521 = vmatprep.subr.bf16.mxu0 0
        %2522 = vmatpush2.bf16.xpose.msra.mxu0 0
        %2523 = vmatprep.subr.bf16.mxu0 0
        %2524 = vmatpush2.bf16.xpose.msra.mxu0 0
        %2525 = vmatprep.subr.bf16.mxu0 0
        %2526 = vmatpush2.bf16.xpose.msra.mxu0 0
        %2527 = vmatprep.subr.bf16.mxu0 0
        %2528 = vmatpush2.bf16.xpose.msra.mxu0 0
        %2529 = vmatprep.subr.bf16.mxu0 0
        %2530 = vmatpush2.bf16.xpose.msra.mxu0 0
        %2531 = vmatprep.subr.bf16.mxu0 0
        %2532 = vmatpush2.bf16.xpose.msra.mxu0 0
        %2533 = vmatprep.subr.bf16.mxu0 0
        %2534 = vmatpush2.bf16.xpose.msra.mxu0 0
        %2535 = vmatprep.mubr.bf16.mxu0 0
        %2536 = vmatmul.mubr.bf16.gmra.mxu0 %v2498
        %v2537 = vpop.f32.mrf.mxu0
        %v2538 = vadd.f32 0.0, %v2537
        %v2539 = vpop.f32.mrf.mxu0
        %v2540 = vpop.f32.mrf.mxu0
        %v2541 = vpop.f32.mrf.mxu0
        %2542 = vdwg.mxu0
        %v2543 = vmul.f32 %v2538, 0.25
        %v2544 = vsel %vm2024, %v2543, -inf
        %2545 = vmax.xlane.f32.xlu0 %v2544
        %v2546 = vpop.xlane.xlu0 %2545
        %v2547 = vsub.f32 %v2543, %v2546
        %v2548 = vmul.f32 %v2547, 1.442695
        %v2549 = vpow.pop %v2548
        %v2550 = vsel %vm2024, %v2549, 0.0
        %2551 = vadd.xlane.f32.xlu0 %v2550
        %v2552 = vpop.xlane.xlu0 %2551
        %v2553 = vrcp.pop %v2552
        %v2554 = vmul.f32 %v2549, %v2553
        %v2555 = vpack.c.bf16 %v2554, %v2554
        %v2557 = vunpack.c.h.b16 %v1981
        %v2558 = vpack.c.b16 %v2557, %v2557
        %v2560 = vsel %vm2024, %v2555, 0
        %v2563 = vsel %vm2040, %v2558, 0
        %2565 = vmatprep.subr.bf16.mxu0 0
        %2566 = vmatpush1.bf16.msra.mxu0 0
        %2567 = vmatprep.subr.bf16.mxu0 0
        %2568 = vmatpush1.bf16.msra.mxu0 0
        %2569 = vmatprep.subr.bf16.mxu0 0
        %2570 = vmatpush1.bf16.msra.mxu0 0
        %2571 = vmatprep.subr.bf16.mxu0 0
        %2572 = vmatpush1.bf16.msra.mxu0 0
        %2573 = vmatprep.subr.bf16.mxu0 0
        %2574 = vmatpush1.bf16.msra.mxu0 0
        %2575 = vmatprep.subr.bf16.mxu0 0
        %2576 = vmatpush1.bf16.msra.mxu0 0
        %2577 = vmatprep.subr.bf16.mxu0 0
        %2578 = vmatpush1.bf16.msra.mxu0 0
        %2579 = vmatprep.subr.bf16.mxu0 0
        %2580 = vmatpush1.bf16.msra.mxu0 %v2563
        %2581 = vmatprep.subr.bf16.mxu0 0
        %2582 = vmatpush2.bf16.msra.mxu0 0
        %2583 = vmatprep.subr.bf16.mxu0 0
        %2584 = vmatpush2.bf16.msra.mxu0 0
        %2585 = vmatprep.subr.bf16.mxu0 0
        %2586 = vmatpush2.bf16.msra.mxu0 0
        %2587 = vmatprep.subr.bf16.mxu0 0
        %2588 = vmatpush2.bf16.msra.mxu0 0
        %2589 = vmatprep.subr.bf16.mxu0 0
        %2590 = vmatpush2.bf16.msra.mxu0 0
        %2591 = vmatprep.subr.bf16.mxu0 0
        %2592 = vmatpush2.bf16.msra.mxu0 0
        %2593 = vmatprep.subr.bf16.mxu0 0
        %2594 = vmatpush2.bf16.msra.mxu0 0
        %2595 = vmatprep.subr.bf16.mxu0 0
        %2596 = vmatpush2.bf16.msra.mxu0 0
        %2597 = vmatprep.mubr.bf16.mxu0 0
        %2598 = vmatmul.mubr.bf16.gmra.mxu0 %v2560
        %v2599 = vpop.f32.mrf.mxu0
        %v2600 = vadd.f32 0.0, %v2599
        %v2601 = vpop.f32.mrf.mxu0
        %v2602 = vpop.f32.mrf.mxu0
        %v2603 = vpop.f32.mrf.mxu0
        %2604 = vdwg.mxu0
        %v2605 = vpack.c.bf16 %v2079, %v2079
        %v2606 = vpack.c.bf16 %v2186, %v2186
        %v2607 = vpack.c.bf16 %v2286, %v2286
        %v2608 = vpack.c.bf16 %v2393, %v2393
        %v2609 = vpack.c.bf16 %v2493, %v2493
        %v2610 = vpack.c.bf16 %v2600, %v2600
        %v2611 = vld [vmem:[#allocation12] sm:$0xf]
        %v2612 = vld [vmem:[#allocation12 + $0x4] sm:$0xf]
        %v2613 = vld [vmem:[#allocation12 + $0x8] sm:$0xf]
        %v2614 = vld [vmem:[#allocation12 + $0xc] sm:$0xf]
        %v2615 = vld [vmem:[#allocation12 + $0x10] sm:$0xf]
        %v2616 = vld [vmem:[#allocation12 + $0x14] sm:$0xf]
        %v2617 = vld [vmem:[#allocation12 + $0x18] sm:$0xf]
        %v2618 = vld [vmem:[#allocation12 + $0x1c] sm:$0xf]
        %v2619 = vld [vmem:[#allocation12 + $0x20] sm:$0xf]
        %v2620 = vld [vmem:[#allocation12 + $0x24] sm:$0xf]
        %v2621 = vld [vmem:[#allocation12 + $0x28] sm:$0xf]
        %v2622 = vld [vmem:[#allocation12 + $0x2c] sm:$0xf]
        %v2623 = vld [vmem:[#allocation12 + $0x30] sm:$0xf]
        %v2624 = vld [vmem:[#allocation12 + $0x34] sm:$0xf]
        %v2625 = vld [vmem:[#allocation12 + $0x38] sm:$0xf]
        %v2626 = vld [vmem:[#allocation12 + $0x3c] sm:$0xf]
        %v2627 = vld [vmem:[#allocation12 + $0x40] sm:$0xf]
        %v2628 = vld [vmem:[#allocation12 + $0x44] sm:$0xf]
        %v2629 = vld [vmem:[#allocation12 + $0x48] sm:$0xf]
        %v2630 = vld [vmem:[#allocation12 + $0x4c] sm:$0xf]
        %v2631 = vld [vmem:[#allocation12 + $0x50] sm:$0xf]
        %v2632 = vld [vmem:[#allocation12 + $0x54] sm:$0xf]
        %v2633 = vld [vmem:[#allocation12 + $0x58] sm:$0xf]
        %v2634 = vld [vmem:[#allocation12 + $0x5c] sm:$0xf]
        %v2635 = vld [vmem:[#allocation12 + $0x60] sm:$0xf]
        %v2636 = vld [vmem:[#allocation12 + $0x64] sm:$0xf]
        %v2637 = vld [vmem:[#allocation12 + $0x68] sm:$0xf]
        %v2638 = vld [vmem:[#allocation12 + $0x6c] sm:$0xf]
        %v2639 = vld [vmem:[#allocation12 + $0x70] sm:$0xf]
        %v2640 = vld [vmem:[#allocation12 + $0x74] sm:$0xf]
        %v2641 = vld [vmem:[#allocation12 + $0x78] sm:$0xf]
        %v2642 = vld [vmem:[#allocation12 + $0x7c] sm:$0xf]
        %v2643 = vld [vmem:[#allocation12 + $0x80] sm:$0xf]
        %v2644 = vld [vmem:[#allocation12 + $0x84] sm:$0xf]
        %v2645 = vld [vmem:[#allocation12 + $0x88] sm:$0xf]
        %v2646 = vld [vmem:[#allocation12 + $0x8c] sm:$0xf]
        %v2647 = vld [vmem:[#allocation12 + $0x90] sm:$0xf]
        %v2648 = vld [vmem:[#allocation12 + $0x94] sm:$0xf]
        %v2649 = vld [vmem:[#allocation12 + $0x98] sm:$0xf]
        %v2650 = vld [vmem:[#allocation12 + $0x9c] sm:$0xf]
        %v2651 = vld [vmem:[#allocation12 + $0xa0] sm:$0xf]
        %v2652 = vld [vmem:[#allocation12 + $0xa4] sm:$0xf]
        %v2653 = vld [vmem:[#allocation12 + $0xa8] sm:$0xf]
        %v2654 = vld [vmem:[#allocation12 + $0xac] sm:$0xf]
        %v2655 = vld [vmem:[#allocation12 + $0xb0] sm:$0xf]
        %v2656 = vld [vmem:[#allocation12 + $0xb4] sm:$0xf]
        %v2657 = vld [vmem:[#allocation12 + $0xb8] sm:$0xf]
        %v2658 = vld [vmem:[#allocation12 + $0xbc] sm:$0xf]
        %v2659 = vld [vmem:[#allocation12 + $0xc0] sm:$0xf]
        %v2660 = vld [vmem:[#allocation12 + $0xc4] sm:$0xf]
        %v2661 = vld [vmem:[#allocation12 + $0xc8] sm:$0xf]
        %v2662 = vld [vmem:[#allocation12 + $0xcc] sm:$0xf]
        %v2663 = vld [vmem:[#allocation12 + $0xd0] sm:$0xf]
        %v2664 = vld [vmem:[#allocation12 + $0xd4] sm:$0xf]
        %v2665 = vld [vmem:[#allocation12 + $0xd8] sm:$0xf]
        %v2666 = vld [vmem:[#allocation12 + $0xdc] sm:$0xf]
        %v2667 = vld [vmem:[#allocation12 + $0xe0] sm:$0xf]
        %v2668 = vld [vmem:[#allocation12 + $0xe4] sm:$0xf]
        %v2669 = vld [vmem:[#allocation12 + $0xe8] sm:$0xf]
        %v2670 = vld [vmem:[#allocation12 + $0xec] sm:$0xf]
        %v2671 = vld [vmem:[#allocation12 + $0xf0] sm:$0xf]
        %v2672 = vld [vmem:[#allocation12 + $0xf4] sm:$0xf]
        %v2673 = vld [vmem:[#allocation12 + $0xf8] sm:$0xf]
        %v2674 = vld [vmem:[#allocation12 + $0xfc] sm:$0xf]
        %v2675 = vld [vmem:[#allocation12 + $0x100] sm:$0xf]
        %v2676 = vld [vmem:[#allocation12 + $0x104] sm:$0xf]
        %v2677 = vld [vmem:[#allocation12 + $0x108] sm:$0xf]
        %v2678 = vld [vmem:[#allocation12 + $0x10c] sm:$0xf]
        %v2679 = vld [vmem:[#allocation12 + $0x110] sm:$0xf]
        %v2680 = vld [vmem:[#allocation12 + $0x114] sm:$0xf]
        %v2681 = vld [vmem:[#allocation12 + $0x118] sm:$0xf]
        %v2682 = vld [vmem:[#allocation12 + $0x11c] sm:$0xf]
        %v2683 = vld [vmem:[#allocation12 + $0x120] sm:$0xf]
        %v2684 = vld [vmem:[#allocation12 + $0x124] sm:$0xf]
        %v2685 = vld [vmem:[#allocation12 + $0x128] sm:$0xf]
        %v2686 = vld [vmem:[#allocation12 + $0x12c] sm:$0xf]
        %v2687 = vld [vmem:[#allocation12 + $0x130] sm:$0xf]
        %v2688 = vld [vmem:[#allocation12 + $0x134] sm:$0xf]
        %v2689 = vld [vmem:[#allocation12 + $0x138] sm:$0xf]
        %v2690 = vld [vmem:[#allocation12 + $0x13c] sm:$0xf]
        %v2691 = vld [vmem:[#allocation12 + $0x140] sm:$0xf]
        %v2692 = vld [vmem:[#allocation12 + $0x144] sm:$0xf]
        %v2693 = vld [vmem:[#allocation12 + $0x148] sm:$0xf]
        %v2694 = vld [vmem:[#allocation12 + $0x14c] sm:$0xf]
        %v2695 = vld [vmem:[#allocation12 + $0x150] sm:$0xf]
        %v2696 = vld [vmem:[#allocation12 + $0x154] sm:$0xf]
        %v2697 = vld [vmem:[#allocation12 + $0x158] sm:$0xf]
        %v2698 = vld [vmem:[#allocation12 + $0x15c] sm:$0xf]
        %v2699 = vld [vmem:[#allocation12 + $0x160] sm:$0xf]
        %v2700 = vld [vmem:[#allocation12 + $0x164] sm:$0xf]
        %v2701 = vld [vmem:[#allocation12 + $0x168] sm:$0xf]
        %v2702 = vld [vmem:[#allocation12 + $0x16c] sm:$0xf]
        %v2703 = vld [vmem:[#allocation12 + $0x170] sm:$0xf]
        %v2704 = vld [vmem:[#allocation12 + $0x174] sm:$0xf]
        %v2705 = vld [vmem:[#allocation12 + $0x178] sm:$0xf]
        %v2706 = vld [vmem:[#allocation12 + $0x17c] sm:$0xf]
        %v2707 = vld [vmem:[%s8] sm:$0x1]
        %v2709 = vlaneseq
        %v2710 = vshrl.u32 %v2709, 7
        %v2711 = vsub.s32 0, %v2710
        %v2712 = vrot.slane %v2707, %v2711
        %v2810 = vunpack.c.l.b16 %v2611
        %v2811 = vunpack.c.l.b16 %v2612
        %v2812 = vunpack.c.l.b16 %v2613
        %v2813 = vunpack.c.l.b16 %v2614
        %v2814 = vunpack.c.l.b16 %v2615
        %v2815 = vunpack.c.l.b16 %v2616
        %v2816 = vunpack.c.l.b16 %v2617
        %v2817 = vunpack.c.l.b16 %v2618
        %v2818 = vunpack.c.l.b16 %v2619
        %v2819 = vunpack.c.l.b16 %v2620
        %v2820 = vunpack.c.l.b16 %v2621
        %v2821 = vunpack.c.l.b16 %v2622
        %v2822 = vunpack.c.l.b16 %v2623
        %v2823 = vunpack.c.l.b16 %v2624
        %v2824 = vunpack.c.l.b16 %v2625
        %v2825 = vunpack.c.l.b16 %v2626
        %v2826 = vunpack.c.l.b16 %v2627
        %v2827 = vunpack.c.l.b16 %v2628
        %v2828 = vunpack.c.l.b16 %v2629
        %v2829 = vunpack.c.l.b16 %v2630
        %v2830 = vunpack.c.l.b16 %v2631
        %v2831 = vunpack.c.l.b16 %v2632
        %v2832 = vunpack.c.l.b16 %v2633
        %v2833 = vunpack.c.l.b16 %v2634
        %v2834 = vunpack.c.l.b16 %v2635
        %v2835 = vunpack.c.l.b16 %v2636
        %v2836 = vunpack.c.l.b16 %v2637
        %v2837 = vunpack.c.l.b16 %v2638
        %v2838 = vunpack.c.l.b16 %v2639
        %v2839 = vunpack.c.l.b16 %v2640
        %v2840 = vunpack.c.l.b16 %v2641
        %v2841 = vunpack.c.l.b16 %v2642
        %v2842 = vunpack.c.l.b16 %v2643
        %v2843 = vunpack.c.l.b16 %v2644
        %v2844 = vunpack.c.l.b16 %v2645
        %v2845 = vunpack.c.l.b16 %v2646
        %v2846 = vunpack.c.l.b16 %v2647
        %v2847 = vunpack.c.l.b16 %v2648
        %v2848 = vunpack.c.l.b16 %v2649
        %v2849 = vunpack.c.l.b16 %v2650
        %v2850 = vunpack.c.l.b16 %v2651
        %v2851 = vunpack.c.l.b16 %v2652
        %v2852 = vunpack.c.l.b16 %v2653
        %v2853 = vunpack.c.l.b16 %v2654
        %v2854 = vunpack.c.l.b16 %v2655
        %v2855 = vunpack.c.l.b16 %v2656
        %v2856 = vunpack.c.l.b16 %v2657
        %v2857 = vunpack.c.l.b16 %v2658
        %v2858 = vunpack.c.l.b16 %v2659
        %v2859 = vunpack.c.l.b16 %v2660
        %v2860 = vunpack.c.l.b16 %v2661
        %v2861 = vunpack.c.l.b16 %v2662
        %v2862 = vunpack.c.l.b16 %v2663
        %v2863 = vunpack.c.l.b16 %v2664
        %v2864 = vunpack.c.l.b16 %v2665
        %v2865 = vunpack.c.l.b16 %v2666
        %v2866 = vunpack.c.l.b16 %v2667
        %v2867 = vunpack.c.l.b16 %v2668
        %v2868 = vunpack.c.l.b16 %v2669
        %v2869 = vunpack.c.l.b16 %v2670
        %v2870 = vunpack.c.l.b16 %v2671
        %v2871 = vunpack.c.l.b16 %v2672
        %v2872 = vunpack.c.l.b16 %v2673
        %v2873 = vunpack.c.l.b16 %v2674
        %v2874 = vunpack.c.l.b16 %v2675
        %v2875 = vunpack.c.l.b16 %v2676
        %v2876 = vunpack.c.l.b16 %v2677
        %v2877 = vunpack.c.l.b16 %v2678
        %v2878 = vunpack.c.l.b16 %v2679
        %v2879 = vunpack.c.l.b16 %v2680
        %v2880 = vunpack.c.l.b16 %v2681
        %v2881 = vunpack.c.l.b16 %v2682
        %v2882 = vunpack.c.l.b16 %v2683
        %v2883 = vunpack.c.l.b16 %v2684
        %v2884 = vunpack.c.l.b16 %v2685
        %v2885 = vunpack.c.l.b16 %v2686
        %v2886 = vunpack.c.l.b16 %v2687
        %v2887 = vunpack.c.l.b16 %v2688
        %v2888 = vunpack.c.l.b16 %v2689
        %v2889 = vunpack.c.l.b16 %v2690
        %v2890 = vunpack.c.l.b16 %v2691
        %v2891 = vunpack.c.l.b16 %v2692
        %v2892 = vunpack.c.l.b16 %v2693
        %v2893 = vunpack.c.l.b16 %v2694
        %v2894 = vunpack.c.l.b16 %v2695
        %v2895 = vunpack.c.l.b16 %v2696
        %v2896 = vunpack.c.l.b16 %v2697
        %v2897 = vunpack.c.l.b16 %v2698
        %v2898 = vunpack.c.l.b16 %v2699
        %v2899 = vunpack.c.l.b16 %v2700
        %v2900 = vunpack.c.l.b16 %v2701
        %v2901 = vunpack.c.l.b16 %v2702
        %v2902 = vunpack.c.l.b16 %v2703
        %v2903 = vunpack.c.l.b16 %v2704
        %v2904 = vunpack.c.l.b16 %v2705
        %v2905 = vunpack.c.l.b16 %v2706
        %v2906 = vpack.c.b16 %v2811, %v2810
        %v2907 = vpack.c.b16 %v2813, %v2812
        %v2908 = vpack.c.b16 %v2815, %v2814
        %v2909 = vpack.c.b16 %v2817, %v2816
        %v2910 = vpack.c.b16 %v2819, %v2818
        %v2911 = vpack.c.b16 %v2821, %v2820
        %v2912 = vpack.c.b16 %v2823, %v2822
        %v2913 = vpack.c.b16 %v2825, %v2824
        %v2914 = vpack.c.b16 %v2827, %v2826
        %v2915 = vpack.c.b16 %v2829, %v2828
        %v2916 = vpack.c.b16 %v2831, %v2830
        %v2917 = vpack.c.b16 %v2833, %v2832
        %v2918 = vpack.c.b16 %v2835, %v2834
        %v2919 = vpack.c.b16 %v2837, %v2836
        %v2920 = vpack.c.b16 %v2839, %v2838
        %v2921 = vpack.c.b16 %v2841, %v2840
        %v2922 = vpack.c.b16 %v2843, %v2842
        %v2923 = vpack.c.b16 %v2845, %v2844
        %v2924 = vpack.c.b16 %v2847, %v2846
        %v2925 = vpack.c.b16 %v2849, %v2848
        %v2926 = vpack.c.b16 %v2851, %v2850
        %v2927 = vpack.c.b16 %v2853, %v2852
        %v2928 = vpack.c.b16 %v2855, %v2854
        %v2929 = vpack.c.b16 %v2857, %v2856
        %v2930 = vpack.c.b16 %v2859, %v2858
        %v2931 = vpack.c.b16 %v2861, %v2860
        %v2932 = vpack.c.b16 %v2863, %v2862
        %v2933 = vpack.c.b16 %v2865, %v2864
        %v2934 = vpack.c.b16 %v2867, %v2866
        %v2935 = vpack.c.b16 %v2869, %v2868
        %v2936 = vpack.c.b16 %v2871, %v2870
        %v2937 = vpack.c.b16 %v2873, %v2872
        %v2938 = vpack.c.b16 %v2875, %v2874
        %v2939 = vpack.c.b16 %v2877, %v2876
        %v2940 = vpack.c.b16 %v2879, %v2878
        %v2941 = vpack.c.b16 %v2881, %v2880
        %v2942 = vpack.c.b16 %v2883, %v2882
        %v2943 = vpack.c.b16 %v2885, %v2884
        %v2944 = vpack.c.b16 %v2887, %v2886
        %v2945 = vpack.c.b16 %v2889, %v2888
        %v2946 = vpack.c.b16 %v2891, %v2890
        %v2947 = vpack.c.b16 %v2893, %v2892
        %v2948 = vpack.c.b16 %v2895, %v2894
        %v2949 = vpack.c.b16 %v2897, %v2896
        %v2950 = vpack.c.b16 %v2899, %v2898
        %v2951 = vpack.c.b16 %v2901, %v2900
        %v2952 = vpack.c.b16 %v2903, %v2902
        %v2953 = vpack.c.b16 %v2905, %v2904
        %3002 = vmatprep.subr.bf16.mxu0 0
        %3003 = vmatpush1.bf16.msra.mxu0 %v2913
        %3004 = vmatprep.subr.bf16.mxu0 0
        %3005 = vmatpush1.bf16.msra.mxu0 %v2912
        %3006 = vmatprep.subr.bf16.mxu0 0
        %3007 = vmatpush1.bf16.msra.mxu0 %v2911
        %3008 = vmatprep.subr.bf16.mxu0 0
        %3009 = vmatpush1.bf16.msra.mxu0 %v2910
        %3010 = vmatprep.subr.bf16.mxu0 0
        %3011 = vmatpush1.bf16.msra.mxu0 %v2909
        %3012 = vmatprep.subr.bf16.mxu0 0
        %3013 = vmatpush1.bf16.msra.mxu0 %v2908
        %3014 = vmatprep.subr.bf16.mxu0 0
        %3015 = vmatpush1.bf16.msra.mxu0 %v2907
        %3016 = vmatprep.subr.bf16.mxu0 0
        %3017 = vmatpush1.bf16.msra.mxu0 %v2906
        %3018 = vmatprep.subr.bf16.mxu0 0
        %3019 = vmatpush2.bf16.msra.mxu0 %v2921
        %3020 = vmatprep.subr.bf16.mxu0 0
        %3021 = vmatpush2.bf16.msra.mxu0 %v2920
        %3022 = vmatprep.subr.bf16.mxu0 0
        %3023 = vmatpush2.bf16.msra.mxu0 %v2919
        %3024 = vmatprep.subr.bf16.mxu0 0
        %3025 = vmatpush2.bf16.msra.mxu0 %v2918
        %3026 = vmatprep.subr.bf16.mxu0 0
        %3027 = vmatpush2.bf16.msra.mxu0 %v2917
        %3028 = vmatprep.subr.bf16.mxu0 0
        %3029 = vmatpush2.bf16.msra.mxu0 %v2916
        %3030 = vmatprep.subr.bf16.mxu0 0
        %3031 = vmatpush2.bf16.msra.mxu0 %v2915
        %3032 = vmatprep.subr.bf16.mxu0 0
        %3033 = vmatpush2.bf16.msra.mxu0 %v2914
        %3034 = vmatprep.mubr.bf16.mxu0 %v2606
        %3035 = vmatmul.mubr.bf16.gmra.mxu0 %v2605
        %v3036 = vpop.f32.mrf.mxu0
        %v3037 = vadd.f32 %v2712, %v3036
        %v3038 = vpop.f32.mrf.mxu0
        %v3039 = vpop.f32.mrf.mxu0
        %v3040 = vpop.f32.mrf.mxu0
        %3041 = vdwg.mxu0
        %3042 = vmatprep.subr.bf16.mxu0 0
        %3043 = vmatpush1.bf16.msra.mxu0 %v2929
        %3044 = vmatprep.subr.bf16.mxu0 0
        %3045 = vmatpush1.bf16.msra.mxu0 %v2928
        %3046 = vmatprep.subr.bf16.mxu0 0
        %3047 = vmatpush1.bf16.msra.mxu0 %v2927
        %3048 = vmatprep.subr.bf16.mxu0 0
        %3049 = vmatpush1.bf16.msra.mxu0 %v2926
        %3050 = vmatprep.subr.bf16.mxu0 0
        %3051 = vmatpush1.bf16.msra.mxu0 %v2925
        %3052 = vmatprep.subr.bf16.mxu0 0
        %3053 = vmatpush1.bf16.msra.mxu0 %v2924
        %3054 = vmatprep.subr.bf16.mxu0 0
        %3055 = vmatpush1.bf16.msra.mxu0 %v2923
        %3056 = vmatprep.subr.bf16.mxu0 0
        %3057 = vmatpush1.bf16.msra.mxu0 %v2922
        %3058 = vmatprep.subr.bf16.mxu0 0
        %3059 = vmatpush2.bf16.msra.mxu0 %v2937
        %3060 = vmatprep.subr.bf16.mxu0 0
        %3061 = vmatpush2.bf16.msra.mxu0 %v2936
        %3062 = vmatprep.subr.bf16.mxu0 0
        %3063 = vmatpush2.bf16.msra.mxu0 %v2935
        %3064 = vmatprep.subr.bf16.mxu0 0
        %3065 = vmatpush2.bf16.msra.mxu0 %v2934
        %3066 = vmatprep.subr.bf16.mxu0 0
        %3067 = vmatpush2.bf16.msra.mxu0 %v2933
        %3068 = vmatprep.subr.bf16.mxu0 0
        %3069 = vmatpush2.bf16.msra.mxu0 %v2932
        %3070 = vmatprep.subr.bf16.mxu0 0
        %3071 = vmatpush2.bf16.msra.mxu0 %v2931
        %3072 = vmatprep.subr.bf16.mxu0 0
        %3073 = vmatpush2.bf16.msra.mxu0 %v2930
        %3074 = vmatprep.mubr.bf16.mxu0 %v2608
        %3075 = vmatmul.mubr.bf16.gmra.mxu0 %v2607
        %v3076 = vpop.f32.mrf.mxu0
        %v3077 = vadd.f32 %v3037, %v3076
        %v3078 = vpop.f32.mrf.mxu0
        %v3079 = vpop.f32.mrf.mxu0
        %v3080 = vpop.f32.mrf.mxu0
        %3081 = vdwg.mxu0
        %3082 = vmatprep.subr.bf16.mxu0 0
        %3083 = vmatpush1.bf16.msra.mxu0 %v2945
        %3084 = vmatprep.subr.bf16.mxu0 0
        %3085 = vmatpush1.bf16.msra.mxu0 %v2944
        %3086 = vmatprep.subr.bf16.mxu0 0
        %3087 = vmatpush1.bf16.msra.mxu0 %v2943
        %3088 = vmatprep.subr.bf16.mxu0 0
        %3089 = vmatpush1.bf16.msra.mxu0 %v2942
        %3090 = vmatprep.subr.bf16.mxu0 0
        %3091 = vmatpush1.bf16.msra.mxu0 %v2941
        %3092 = vmatprep.subr.bf16.mxu0 0
        %3093 = vmatpush1.bf16.msra.mxu0 %v2940
        %3094 = vmatprep.subr.bf16.mxu0 0
        %3095 = vmatpush1.bf16.msra.mxu0 %v2939
        %3096 = vmatprep.subr.bf16.mxu0 0
        %3097 = vmatpush1.bf16.msra.mxu0 %v2938
        %3098 = vmatprep.subr.bf16.mxu0 0
        %3099 = vmatpush2.bf16.msra.mxu0 %v2953
        %3100 = vmatprep.subr.bf16.mxu0 0
        %3101 = vmatpush2.bf16.msra.mxu0 %v2952
        %3102 = vmatprep.subr.bf16.mxu0 0
        %3103 = vmatpush2.bf16.msra.mxu0 %v2951
        %3104 = vmatprep.subr.bf16.mxu0 0
        %3105 = vmatpush2.bf16.msra.mxu0 %v2950
        %3106 = vmatprep.subr.bf16.mxu0 0
        %3107 = vmatpush2.bf16.msra.mxu0 %v2949
        %3108 = vmatprep.subr.bf16.mxu0 0
        %3109 = vmatpush2.bf16.msra.mxu0 %v2948
        %3110 = vmatprep.subr.bf16.mxu0 0
        %3111 = vmatpush2.bf16.msra.mxu0 %v2947
        %3112 = vmatprep.subr.bf16.mxu0 0
        %3113 = vmatpush2.bf16.msra.mxu0 %v2946
        %3114 = vmatprep.mubr.bf16.mxu0 %v2610
        %3115 = vmatmul.mubr.bf16.gmra.mxu0 %v2609
        %v3116 = vpop.f32.mrf.mxu0
        %v3117 = vadd.f32 %v3077, %v3116
        %v3118 = vpop.f32.mrf.mxu0
        %v3119 = vpop.f32.mrf.mxu0
        %v3120 = vpop.f32.mrf.mxu0
        %3121 = vdwg.mxu0
        %v3122 = vadd.f32 %v1531, %v3117
        %v3123 = vld [vmem:[%s9] sm:$0x1]
        %v3124 = vld [vmem:[%s10] sm:$0x1]
        %3125 = vadd.xlane.f32.xlu0 %v3122
        %v3126 = vpop.xlane.xlu0 %3125
        %v3127 = vmul.f32 %v3126, 0.01
        %v3128 = vsub.f32 %v3122, %v3127
        %v3129 = vmul.f32 %v3128, %v1540
        %v3130 = vmul.f32 %v3129, %v3129
        %3131 = vadd.xlane.f32.xlu0 %v3130
        %v3132 = vpop.xlane.xlu0 %3131
        %v3133 = vmul.f32 %v3132, 0.01
        %v3134 = vadd.f32 %v3133, 1e-05
        %v3135 = vrsqrt.pop %v3134
        %v3136 = vmul.f32 %v3129, %v3135
        %v3138 = vlaneseq
        %v3139 = vshrl.u32 %v3138, 7
        %v3140 = vsub.s32 0, %v3139
        %v3141 = vrot.slane %v3123, %v3140
        %v3143 = vmul.f32 %v3136, %v3141
        %v3145 = vlaneseq
        %v3146 = vshrl.u32 %v3145, 7
        %v3147 = vsub.s32 0, %v3146
        %v3148 = vrot.slane %v3124, %v3147
        %v3150 = vadd.f32 %v3143, %v3148
        %v3151 = vpack.c.bf16 %v3150, %v3150
        %v3152 = vld [vmem:[#allocation13] sm:$0xff]
        %v3153 = vld [vmem:[#allocation13 + $0x8] sm:$0xff]
        %v3154 = vld [vmem:[#allocation13 + $0x10] sm:$0xff]
        %v3155 = vld [vmem:[#allocation13 + $0x18] sm:$0xff]
        %v3156 = vld [vmem:[#allocation13 + $0x20] sm:$0xff]
        %v3157 = vld [vmem:[#allocation13 + $0x28] sm:$0xff]
        %v3158 = vld [vmem:[#allocation13 + $0x30] sm:$0xff]
        %v3159 = vld [vmem:[#allocation13 + $0x38] sm:$0xff]
        %v3160 = vld [vmem:[#allocation13 + $0x40] sm:$0xff]
        %v3161 = vld [vmem:[#allocation13 + $0x48] sm:$0xff]
        %v3162 = vld [vmem:[#allocation13 + $0x50] sm:$0xff]
        %v3163 = vld [vmem:[#allocation13 + $0x58] sm:$0xff]
        %v3164 = vld [vmem:[#allocation13 + $0x60] sm:$0xff]
        %v3165 = vld [vmem:[#allocation13 + $0x68] sm:$0xff]
        %v3166 = vld [vmem:[#allocation13 + $0x70] sm:$0xff]
        %v3167 = vld [vmem:[#allocation13 + $0x78] sm:$0xff]
        %v3168 = vld [vmem:[#allocation13 + $0x80] sm:$0xff]
        %v3169 = vld [vmem:[#allocation13 + $0x88] sm:$0xff]
        %v3170 = vld [vmem:[#allocation13 + $0x90] sm:$0xff]
        %v3171 = vld [vmem:[#allocation13 + $0x98] sm:$0xff]
        %v3172 = vld [vmem:[#allocation13 + $0xa0] sm:$0xff]
        %v3173 = vld [vmem:[#allocation13 + $0xa8] sm:$0xff]
        %v3174 = vld [vmem:[#allocation13 + $0xb0] sm:$0xff]
        %v3175 = vld [vmem:[#allocation13 + $0xb8] sm:$0xff]
        %v3176 = vld [vmem:[#allocation13 + $0xc0] sm:$0xff]
        %v3177 = vld [vmem:[#allocation13 + $0xc8] sm:$0xff]
        %v3178 = vld [vmem:[#allocation13 + $0xd0] sm:$0xff]
        %v3179 = vld [vmem:[#allocation13 + $0xd8] sm:$0xff]
        %v3180 = vld [vmem:[#allocation13 + $0xe0] sm:$0xff]
        %v3181 = vld [vmem:[#allocation13 + $0xe8] sm:$0xff]
        %v3182 = vld [vmem:[#allocation13 + $0xf0] sm:$0xff]
        %v3183 = vld [vmem:[#allocation13 + $0xf8] sm:$0xff]
        %v3184 = vld [vmem:[%s12] sm:$0xf]
        %v3186 = vlaneseq
        %v3187 = vshrl.u32 %v3186, 7
        %v3188 = vsub.s32 0, %v3187
        %v3189 = vrot.slane %v3184, %v3188
        %v3190 = vlaneseq
        %v3191 = vshrl.u32 %v3190, 7
        %v3192 = vsub.s32 1, %v3191
        %v3193 = vrot.slane %v3184, %v3192
        %v3194 = vlaneseq
        %v3195 = vshrl.u32 %v3194, 7
        %v3196 = vsub.s32 2, %v3195
        %v3197 = vrot.slane %v3184, %v3196
        %v3198 = vlaneseq
        %v3199 = vshrl.u32 %v3198, 7
        %v3200 = vsub.s32 3, %v3199
        %v3201 = vrot.slane %v3184, %v3200
        %v3238 = vunpack.c.l.b16 %v3152
        %v3239 = vunpack.c.h.b16 %v3152
        %v3240 = vunpack.c.l.b16 %v3153
        %v3241 = vunpack.c.h.b16 %v3153
        %v3242 = vunpack.c.l.b16 %v3154
        %v3243 = vunpack.c.h.b16 %v3154
        %v3244 = vunpack.c.l.b16 %v3155
        %v3245 = vunpack.c.h.b16 %v3155
        %v3246 = vunpack.c.l.b16 %v3156
        %v3247 = vunpack.c.h.b16 %v3156
        %v3248 = vunpack.c.l.b16 %v3157
        %v3249 = vunpack.c.h.b16 %v3157
        %v3250 = vunpack.c.l.b16 %v3158
        %v3251 = vunpack.c.h.b16 %v3158
        %v3252 = vunpack.c.l.b16 %v3159
        %v3253 = vunpack.c.h.b16 %v3159
        %v3254 = vunpack.c.l.b16 %v3160
        %v3255 = vunpack.c.h.b16 %v3160
        %v3256 = vunpack.c.l.b16 %v3161
        %v3257 = vunpack.c.h.b16 %v3161
        %v3258 = vunpack.c.l.b16 %v3162
        %v3259 = vunpack.c.h.b16 %v3162
        %v3260 = vunpack.c.l.b16 %v3163
        %v3261 = vunpack.c.h.b16 %v3163
        %v3262 = vunpack.c.l.b16 %v3164
        %v3263 = vunpack.c.h.b16 %v3164
        %v3264 = vunpack.c.l.b16 %v3165
        %v3265 = vunpack.c.h.b16 %v3165
        %v3266 = vunpack.c.l.b16 %v3166
        %v3267 = vunpack.c.h.b16 %v3166
        %v3268 = vunpack.c.l.b16 %v3167
        %v3269 = vunpack.c.h.b16 %v3167
        %v3270 = vunpack.c.l.b16 %v3168
        %v3271 = vunpack.c.h.b16 %v3168
        %v3272 = vunpack.c.l.b16 %v3169
        %v3273 = vunpack.c.h.b16 %v3169
        %v3274 = vunpack.c.l.b16 %v3170
        %v3275 = vunpack.c.h.b16 %v3170
        %v3276 = vunpack.c.l.b16 %v3171
        %v3277 = vunpack.c.h.b16 %v3171
        %v3278 = vunpack.c.l.b16 %v3172
        %v3279 = vunpack.c.h.b16 %v3172
        %v3280 = vunpack.c.l.b16 %v3173
        %v3281 = vunpack.c.h.b16 %v3173
        %v3282 = vunpack.c.l.b16 %v3174
        %v3283 = vunpack.c.h.b16 %v3174
        %v3284 = vunpack.c.l.b16 %v3175
        %v3285 = vunpack.c.h.b16 %v3175
        %v3286 = vunpack.c.l.b16 %v3176
        %v3287 = vunpack.c.h.b16 %v3176
        %v3288 = vunpack.c.l.b16 %v3177
        %v3289 = vunpack.c.h.b16 %v3177
        %v3290 = vunpack.c.l.b16 %v3178
        %v3291 = vunpack.c.h.b16 %v3178
        %v3292 = vunpack.c.l.b16 %v3179
        %v3293 = vunpack.c.h.b16 %v3179
        %v3294 = vunpack.c.l.b16 %v3180
        %v3295 = vunpack.c.h.b16 %v3180
        %v3296 = vunpack.c.l.b16 %v3181
        %v3297 = vunpack.c.h.b16 %v3181
        %v3298 = vunpack.c.l.b16 %v3182
        %v3299 = vunpack.c.h.b16 %v3182
        %v3300 = vunpack.c.l.b16 %v3183
        %v3301 = vunpack.c.h.b16 %v3183
        %v3302 = vpack.c.b16 %v3242, %v3238
        %v3303 = vpack.c.b16 %v3243, %v3239
        %v3304 = vpack.c.b16 %v3244, %v3240
        %v3305 = vpack.c.b16 %v3245, %v3241
        %v3306 = vpack.c.b16 %v3250, %v3246
        %v3307 = vpack.c.b16 %v3251, %v3247
        %v3308 = vpack.c.b16 %v3252, %v3248
        %v3309 = vpack.c.b16 %v3253, %v3249
        %v3310 = vpack.c.b16 %v3258, %v3254
        %v3311 = vpack.c.b16 %v3259, %v3255
        %v3312 = vpack.c.b16 %v3260, %v3256
        %v3313 = vpack.c.b16 %v3261, %v3257
        %v3314 = vpack.c.b16 %v3266, %v3262
        %v3315 = vpack.c.b16 %v3267, %v3263
        %v3316 = vpack.c.b16 %v3268, %v3264
        %v3317 = vpack.c.b16 %v3269, %v3265
        %v3318 = vpack.c.b16 %v3274, %v3270
        %v3319 = vpack.c.b16 %v3275, %v3271
        %v3320 = vpack.c.b16 %v3276, %v3272
        %v3321 = vpack.c.b16 %v3277, %v3273
        %v3322 = vpack.c.b16 %v3282, %v3278
        %v3323 = vpack.c.b16 %v3283, %v3279
        %v3324 = vpack.c.b16 %v3284, %v3280
        %v3325 = vpack.c.b16 %v3285, %v3281
        %v3326 = vpack.c.b16 %v3290, %v3286
        %v3327 = vpack.c.b16 %v3291, %v3287
        %v3328 = vpack.c.b16 %v3292, %v3288
        %v3329 = vpack.c.b16 %v3293, %v3289
        %v3330 = vpack.c.b16 %v3298, %v3294
        %v3331 = vpack.c.b16 %v3299, %v3295
        %v3332 = vpack.c.b16 %v3300, %v3296
        %v3333 = vpack.c.b16 %v3301, %v3297
        %3366 = vmatprep.subr.bf16.mxu0 %v3331
        %3367 = vmatpush1.bf16.msra.mxu0 %v3330
        %3368 = vmatprep.subr.bf16.mxu0 %v3327
        %3369 = vmatpush1.bf16.msra.mxu0 %v3326
        %3370 = vmatprep.subr.bf16.mxu0 %v3323
        %3371 = vmatpush1.bf16.msra.mxu0 %v3322
        %3372 = vmatprep.subr.bf16.mxu0 %v3319
        %3373 = vmatpush1.bf16.msra.mxu0 %v3318
        %3374 = vmatprep.subr.bf16.mxu0 %v3315
        %3375 = vmatpush1.bf16.msra.mxu0 %v3314
        %3376 = vmatprep.subr.bf16.mxu0 %v3311
        %3377 = vmatpush1.bf16.msra.mxu0 %v3310
        %3378 = vmatprep.subr.bf16.mxu0 %v3307
        %3379 = vmatpush1.bf16.msra.mxu0 %v3306
        %3380 = vmatprep.subr.bf16.mxu0 %v3303
        %3381 = vmatpush1.bf16.msra.mxu0 %v3302
        %3382 = vmatprep.subr.bf16.mxu0 0
        %3383 = vmatpush2.bf16.msra.mxu0 0
        %3384 = vmatprep.subr.bf16.mxu0 0
        %3385 = vmatpush2.bf16.msra.mxu0 0
        %3386 = vmatprep.subr.bf16.mxu0 0
        %3387 = vmatpush2.bf16.msra.mxu0 0
        %3388 = vmatprep.subr.bf16.mxu0 0
        %3389 = vmatpush2.bf16.msra.mxu0 0
        %3390 = vmatprep.subr.bf16.mxu0 0
        %3391 = vmatpush2.bf16.msra.mxu0 0
        %3392 = vmatprep.subr.bf16.mxu0 0
        %3393 = vmatpush2.bf16.msra.mxu0 0
        %3394 = vmatprep.subr.bf16.mxu0 0
        %3395 = vmatpush2.bf16.msra.mxu0 0
        %3396 = vmatprep.subr.bf16.mxu0 0
        %3397 = vmatpush2.bf16.msra.mxu0 0
        %3398 = vmatprep.mubr.bf16.mxu0 0
        %3399 = vmatmul.mubr.bf16.gmra.mxu0 %v3151
        %v3400 = vpop.f32.mrf.mxu0
        %v3401 = vadd.f32 %v3189, %v3400
        %v3402 = vpop.f32.mrf.mxu0
        %v3403 = vadd.f32 %v3193, %v3402
        %v3404 = vpop.f32.mrf.mxu0
        %v3405 = vpop.f32.mrf.mxu0
        %3406 = vdwg.mxu0
        %3407 = vmatprep.subr.bf16.mxu0 %v3333
        %3408 = vmatpush1.bf16.msra.mxu0 %v3332
        %3409 = vmatprep.subr.bf16.mxu0 %v3329
        %3410 = vmatpush1.bf16.msra.mxu0 %v3328
        %3411 = vmatprep.subr.bf16.mxu0 %v3325
        %3412 = vmatpush1.bf16.msra.mxu0 %v3324
        %3413 = vmatprep.subr.bf16.mxu0 %v3321
        %3414 = vmatpush1.bf16.msra.mxu0 %v3320
        %3415 = vmatprep.subr.bf16.mxu0 %v3317
        %3416 = vmatpush1.bf16.msra.mxu0 %v3316
        %3417 = vmatprep.subr.bf16.mxu0 %v3313
        %3418 = vmatpush1.bf16.msra.mxu0 %v3312
        %3419 = vmatprep.subr.bf16.mxu0 %v3309
        %3420 = vmatpush1.bf16.msra.mxu0 %v3308
        %3421 = vmatprep.subr.bf16.mxu0 %v3305
        %3422 = vmatpush1.bf16.msra.mxu0 %v3304
        %3423 = vmatprep.subr.bf16.mxu0 0
        %3424 = vmatpush2.bf16.msra.mxu0 0
        %3425 = vmatprep.subr.bf16.mxu0 0
        %3426 = vmatpush2.bf16.msra.mxu0 0
        %3427 = vmatprep.subr.bf16.mxu0 0
        %3428 = vmatpush2.bf16.msra.mxu0 0
        %3429 = vmatprep.subr.bf16.mxu0 0
        %3430 = vmatpush2.bf16.msra.mxu0 0
        %3431 = vmatprep.subr.bf16.mxu0 0
        %3432 = vmatpush2.bf16.msra.mxu0 0
        %3433 = vmatprep.subr.bf16.mxu0 0
        %3434 = vmatpush2.bf16.msra.mxu0 0
        %3435 = vmatprep.subr.bf16.mxu0 0
        %3436 = vmatpush2.bf16.msra.mxu0 0
        %3437 = vmatprep.subr.bf16.mxu0 0
        %3438 = vmatpush2.bf16.msra.mxu0 0
        %3439 = vmatprep.mubr.bf16.mxu0 0
        %3440 = vmatmul.mubr.bf16.gmra.mxu0 %v3151
        %v3441 = vpop.f32.mrf.mxu0
        %v3442 = vadd.f32 %v3197, %v3441
        %v3443 = vpop.f32.mrf.mxu0
        %v3444 = vadd.f32 %v3201, %v3443
        %v3445 = vpop.f32.mrf.mxu0
        %v3446 = vpop.f32.mrf.mxu0
        %3447 = vdwg.mxu0
        %v3448 = vmax.f32 %v3401, 0.0
        %v3449 = vmax.f32 %v3403, 0.0
        %v3450 = vmax.f32 %v3442, 0.0
        %v3451 = vmax.f32 %v3444, 0.0
        %v3452 = vpack.c.bf16 %v3448, %v3448
        %v3453 = vpack.c.bf16 %v3449, %v3449
        %v3454 = vpack.c.bf16 %v3450, %v3450
        %v3455 = vpack.c.bf16 %v3451, %v3451
        %v3456 = vld [vmem:[#allocation15] sm:$0xf]
        %v3457 = vld [vmem:[#allocation15 + $0x4] sm:$0xf]
        %v3458 = vld [vmem:[#allocation15 + $0x8] sm:$0xf]
        %v3459 = vld [vmem:[#allocation15 + $0xc] sm:$0xf]
        %v3460 = vld [vmem:[#allocation15 + $0x10] sm:$0xf]
        %v3461 = vld [vmem:[#allocation15 + $0x14] sm:$0xf]
        %v3462 = vld [vmem:[#allocation15 + $0x18] sm:$0xf]
        %v3463 = vld [vmem:[#allocation15 + $0x1c] sm:$0xf]
        %v3464 = vld [vmem:[#allocation15 + $0x20] sm:$0xf]
        %v3465 = vld [vmem:[#allocation15 + $0x24] sm:$0xf]
        %v3466 = vld [vmem:[#allocation15 + $0x28] sm:$0xf]
        %v3467 = vld [vmem:[#allocation15 + $0x2c] sm:$0xf]
        %v3468 = vld [vmem:[#allocation15 + $0x30] sm:$0xf]
        %v3469 = vld [vmem:[#allocation15 + $0x34] sm:$0xf]
        %v3470 = vld [vmem:[#allocation15 + $0x38] sm:$0xf]
        %v3471 = vld [vmem:[#allocation15 + $0x3c] sm:$0xf]
        %v3472 = vld [vmem:[#allocation15 + $0x40] sm:$0xf]
        %v3473 = vld [vmem:[#allocation15 + $0x44] sm:$0xf]
        %v3474 = vld [vmem:[#allocation15 + $0x48] sm:$0xf]
        %v3475 = vld [vmem:[#allocation15 + $0x4c] sm:$0xf]
        %v3476 = vld [vmem:[#allocation15 + $0x50] sm:$0xf]
        %v3477 = vld [vmem:[#allocation15 + $0x54] sm:$0xf]
        %v3478 = vld [vmem:[#allocation15 + $0x58] sm:$0xf]
        %v3479 = vld [vmem:[#allocation15 + $0x5c] sm:$0xf]
        %v3480 = vld [vmem:[#allocation15 + $0x60] sm:$0xf]
        %v3481 = vld [vmem:[#allocation15 + $0x64] sm:$0xf]
        %v3482 = vld [vmem:[#allocation15 + $0x68] sm:$0xf]
        %v3483 = vld [vmem:[#allocation15 + $0x6c] sm:$0xf]
        %v3484 = vld [vmem:[#allocation15 + $0x70] sm:$0xf]
        %v3485 = vld [vmem:[#allocation15 + $0x74] sm:$0xf]
        %v3486 = vld [vmem:[#allocation15 + $0x78] sm:$0xf]
        %v3487 = vld [vmem:[#allocation15 + $0x7c] sm:$0xf]
        %v3488 = vld [vmem:[#allocation15 + $0x80] sm:$0xf]
        %v3489 = vld [vmem:[#allocation15 + $0x84] sm:$0xf]
        %v3490 = vld [vmem:[#allocation15 + $0x88] sm:$0xf]
        %v3491 = vld [vmem:[#allocation15 + $0x8c] sm:$0xf]
        %v3492 = vld [vmem:[#allocation15 + $0x90] sm:$0xf]
        %v3493 = vld [vmem:[#allocation15 + $0x94] sm:$0xf]
        %v3494 = vld [vmem:[#allocation15 + $0x98] sm:$0xf]
        %v3495 = vld [vmem:[#allocation15 + $0x9c] sm:$0xf]
        %v3496 = vld [vmem:[#allocation15 + $0xa0] sm:$0xf]
        %v3497 = vld [vmem:[#allocation15 + $0xa4] sm:$0xf]
        %v3498 = vld [vmem:[#allocation15 + $0xa8] sm:$0xf]
        %v3499 = vld [vmem:[#allocation15 + $0xac] sm:$0xf]
        %v3500 = vld [vmem:[#allocation15 + $0xb0] sm:$0xf]
        %v3501 = vld [vmem:[#allocation15 + $0xb4] sm:$0xf]
        %v3502 = vld [vmem:[#allocation15 + $0xb8] sm:$0xf]
        %v3503 = vld [vmem:[#allocation15 + $0xbc] sm:$0xf]
        %v3504 = vld [vmem:[#allocation15 + $0xc0] sm:$0xf]
        %v3505 = vld [vmem:[#allocation15 + $0xc4] sm:$0xf]
        %v3506 = vld [vmem:[#allocation15 + $0xc8] sm:$0xf]
        %v3507 = vld [vmem:[#allocation15 + $0xcc] sm:$0xf]
        %v3508 = vld [vmem:[#allocation15 + $0xd0] sm:$0xf]
        %v3509 = vld [vmem:[#allocation15 + $0xd4] sm:$0xf]
        %v3510 = vld [vmem:[#allocation15 + $0xd8] sm:$0xf]
        %v3511 = vld [vmem:[#allocation15 + $0xdc] sm:$0xf]
        %v3512 = vld [vmem:[#allocation15 + $0xe0] sm:$0xf]
        %v3513 = vld [vmem:[#allocation15 + $0xe4] sm:$0xf]
        %v3514 = vld [vmem:[#allocation15 + $0xe8] sm:$0xf]
        %v3515 = vld [vmem:[#allocation15 + $0xec] sm:$0xf]
        %v3516 = vld [vmem:[#allocation15 + $0xf0] sm:$0xf]
        %v3517 = vld [vmem:[#allocation15 + $0xf4] sm:$0xf]
        %v3518 = vld [vmem:[#allocation15 + $0xf8] sm:$0xf]
        %v3519 = vld [vmem:[#allocation15 + $0xfc] sm:$0xf]
        %v3520 = vld [vmem:[%s14] sm:$0x1]
        %v3522 = vlaneseq
        %v3523 = vshrl.u32 %v3522, 7
        %v3524 = vsub.s32 0, %v3523
        %v3525 = vrot.slane %v3520, %v3524
        %v3591 = vunpack.c.l.b16 %v3456
        %v3592 = vunpack.c.l.b16 %v3457
        %v3593 = vunpack.c.l.b16 %v3458
        %v3594 = vunpack.c.l.b16 %v3459
        %v3595 = vunpack.c.l.b16 %v3460
        %v3596 = vunpack.c.l.b16 %v3461
        %v3597 = vunpack.c.l.b16 %v3462
        %v3598 = vunpack.c.l.b16 %v3463
        %v3599 = vunpack.c.l.b16 %v3464
        %v3600 = vunpack.c.l.b16 %v3465
        %v3601 = vunpack.c.l.b16 %v3466
        %v3602 = vunpack.c.l.b16 %v3467
        %v3603 = vunpack.c.l.b16 %v3468
        %v3604 = vunpack.c.l.b16 %v3469
        %v3605 = vunpack.c.l.b16 %v3470
        %v3606 = vunpack.c.l.b16 %v3471
        %v3607 = vunpack.c.l.b16 %v3472
        %v3608 = vunpack.c.l.b16 %v3473
        %v3609 = vunpack.c.l.b16 %v3474
        %v3610 = vunpack.c.l.b16 %v3475
        %v3611 = vunpack.c.l.b16 %v3476
        %v3612 = vunpack.c.l.b16 %v3477
        %v3613 = vunpack.c.l.b16 %v3478
        %v3614 = vunpack.c.l.b16 %v3479
        %v3615 = vunpack.c.l.b16 %v3480
        %v3616 = vunpack.c.l.b16 %v3481
        %v3617 = vunpack.c.l.b16 %v3482
        %v3618 = vunpack.c.l.b16 %v3483
        %v3619 = vunpack.c.l.b16 %v3484
        %v3620 = vunpack.c.l.b16 %v3485
        %v3621 = vunpack.c.l.b16 %v3486
        %v3622 = vunpack.c.l.b16 %v3487
        %v3623 = vunpack.c.l.b16 %v3488
        %v3624 = vunpack.c.l.b16 %v3489
        %v3625 = vunpack.c.l.b16 %v3490
        %v3626 = vunpack.c.l.b16 %v3491
        %v3627 = vunpack.c.l.b16 %v3492
        %v3628 = vunpack.c.l.b16 %v3493
        %v3629 = vunpack.c.l.b16 %v3494
        %v3630 = vunpack.c.l.b16 %v3495
        %v3631 = vunpack.c.l.b16 %v3496
        %v3632 = vunpack.c.l.b16 %v3497
        %v3633 = vunpack.c.l.b16 %v3498
        %v3634 = vunpack.c.l.b16 %v3499
        %v3635 = vunpack.c.l.b16 %v3500
        %v3636 = vunpack.c.l.b16 %v3501
        %v3637 = vunpack.c.l.b16 %v3502
        %v3638 = vunpack.c.l.b16 %v3503
        %v3639 = vunpack.c.l.b16 %v3504
        %v3640 = vunpack.c.l.b16 %v3505
        %v3641 = vunpack.c.l.b16 %v3506
        %v3642 = vunpack.c.l.b16 %v3507
        %v3643 = vunpack.c.l.b16 %v3508
        %v3644 = vunpack.c.l.b16 %v3509
        %v3645 = vunpack.c.l.b16 %v3510
        %v3646 = vunpack.c.l.b16 %v3511
        %v3647 = vunpack.c.l.b16 %v3512
        %v3648 = vunpack.c.l.b16 %v3513
        %v3649 = vunpack.c.l.b16 %v3514
        %v3650 = vunpack.c.l.b16 %v3515
        %v3651 = vunpack.c.l.b16 %v3516
        %v3652 = vunpack.c.l.b16 %v3517
        %v3653 = vunpack.c.l.b16 %v3518
        %v3654 = vunpack.c.l.b16 %v3519
        %v3655 = vpack.c.b16 %v3592, %v3591
        %v3656 = vpack.c.b16 %v3594, %v3593
        %v3657 = vpack.c.b16 %v3596, %v3595
        %v3658 = vpack.c.b16 %v3598, %v3597
        %v3659 = vpack.c.b16 %v3600, %v3599
        %v3660 = vpack.c.b16 %v3602, %v3601
        %v3661 = vpack.c.b16 %v3604, %v3603
        %v3662 = vpack.c.b16 %v3606, %v3605
        %v3663 = vpack.c.b16 %v3608, %v3607
        %v3664 = vpack.c.b16 %v3610, %v3609
        %v3665 = vpack.c.b16 %v3612, %v3611
        %v3666 = vpack.c.b16 %v3614, %v3613
        %v3667 = vpack.c.b16 %v3616, %v3615
        %v3668 = vpack.c.b16 %v3618, %v3617
        %v3669 = vpack.c.b16 %v3620, %v3619
        %v3670 = vpack.c.b16 %v3622, %v3621
        %v3671 = vpack.c.b16 %v3624, %v3623
        %v3672 = vpack.c.b16 %v3626, %v3625
        %v3673 = vpack.c.b16 %v3628, %v3627
        %v3674 = vpack.c.b16 %v3630, %v3629
        %v3675 = vpack.c.b16 %v3632, %v3631
        %v3676 = vpack.c.b16 %v3634, %v3633
        %v3677 = vpack.c.b16 %v3636, %v3635
        %v3678 = vpack.c.b16 %v3638, %v3637
        %v3679 = vpack.c.b16 %v3640, %v3639
        %v3680 = vpack.c.b16 %v3642, %v3641
        %v3681 = vpack.c.b16 %v3644, %v3643
        %v3682 = vpack.c.b16 %v3646, %v3645
        %v3683 = vpack.c.b16 %v3648, %v3647
        %v3684 = vpack.c.b16 %v3650, %v3649
        %v3685 = vpack.c.b16 %v3652, %v3651
        %v3686 = vpack.c.b16 %v3654, %v3653
        %3719 = vmatprep.subr.bf16.mxu0 0
        %3720 = vmatpush1.bf16.msra.mxu0 %v3662
        %3721 = vmatprep.subr.bf16.mxu0 0
        %3722 = vmatpush1.bf16.msra.mxu0 %v3661
        %3723 = vmatprep.subr.bf16.mxu0 0
        %3724 = vmatpush1.bf16.msra.mxu0 %v3660
        %3725 = vmatprep.subr.bf16.mxu0 0
        %3726 = vmatpush1.bf16.msra.mxu0 %v3659
        %3727 = vmatprep.subr.bf16.mxu0 0
        %3728 = vmatpush1.bf16.msra.mxu0 %v3658
        %3729 = vmatprep.subr.bf16.mxu0 0
        %3730 = vmatpush1.bf16.msra.mxu0 %v3657
        %3731 = vmatprep.subr.bf16.mxu0 0
        %3732 = vmatpush1.bf16.msra.mxu0 %v3656
        %3733 = vmatprep.subr.bf16.mxu0 0
        %3734 = vmatpush1.bf16.msra.mxu0 %v3655
        %3735 = vmatprep.subr.bf16.mxu0 0
        %3736 = vmatpush2.bf16.msra.mxu0 %v3670
        %3737 = vmatprep.subr.bf16.mxu0 0
        %3738 = vmatpush2.bf16.msra.mxu0 %v3669
        %3739 = vmatprep.subr.bf16.mxu0 0
        %3740 = vmatpush2.bf16.msra.mxu0 %v3668
        %3741 = vmatprep.subr.bf16.mxu0 0
        %3742 = vmatpush2.bf16.msra.mxu0 %v3667
        %3743 = vmatprep.subr.bf16.mxu0 0
        %3744 = vmatpush2.bf16.msra.mxu0 %v3666
        %3745 = vmatprep.subr.bf16.mxu0 0
        %3746 = vmatpush2.bf16.msra.mxu0 %v3665
        %3747 = vmatprep.subr.bf16.mxu0 0
        %3748 = vmatpush2.bf16.msra.mxu0 %v3664
        %3749 = vmatprep.subr.bf16.mxu0 0
        %3750 = vmatpush2.bf16.msra.mxu0 %v3663
        %3751 = vmatprep.mubr.bf16.mxu0 %v3453
        %3752 = vmatmul.mubr.bf16.gmra.mxu0 %v3452
        %v3753 = vpop.f32.mrf.mxu0
        %v3754 = vadd.f32 %v3525, %v3753
        %v3755 = vpop.f32.mrf.mxu0
        %v3756 = vpop.f32.mrf.mxu0
        %v3757 = vpop.f32.mrf.mxu0
        %3758 = vdwg.mxu0
        %3759 = vmatprep.subr.bf16.mxu0 0
        %3760 = vmatpush1.bf16.msra.mxu0 %v3678
        %3761 = vmatprep.subr.bf16.mxu0 0
        %3762 = vmatpush1.bf16.msra.mxu0 %v3677
        %3763 = vmatprep.subr.bf16.mxu0 0
        %3764 = vmatpush1.bf16.msra.mxu0 %v3676
        %3765 = vmatprep.subr.bf16.mxu0 0
        %3766 = vmatpush1.bf16.msra.mxu0 %v3675
        %3767 = vmatprep.subr.bf16.mxu0 0
        %3768 = vmatpush1.bf16.msra.mxu0 %v3674
        %3769 = vmatprep.subr.bf16.mxu0 0
        %3770 = vmatpush1.bf16.msra.mxu0 %v3673
        %3771 = vmatprep.subr.bf16.mxu0 0
        %3772 = vmatpush1.bf16.msra.mxu0 %v3672
        %3773 = vmatprep.subr.bf16.mxu0 0
        %3774 = vmatpush1.bf16.msra.mxu0 %v3671
        %3775 = vmatprep.subr.bf16.mxu0 0
        %3776 = vmatpush2.bf16.msra.mxu0 %v3686
        %3777 = vmatprep.subr.bf16.mxu0 0
        %3778 = vmatpush2.bf16.msra.mxu0 %v3685
        %3779 = vmatprep.subr.bf16.mxu0 0
        %3780 = vmatpush2.bf16.msra.mxu0 %v3684
        %3781 = vmatprep.subr.bf16.mxu0 0
        %3782 = vmatpush2.bf16.msra.mxu0 %v3683
        %3783 = vmatprep.subr.bf16.mxu0 0
        %3784 = vmatpush2.bf16.msra.mxu0 %v3682
        %3785 = vmatprep.subr.bf16.mxu0 0
        %3786 = vmatpush2.bf16.msra.mxu0 %v3681
        %3787 = vmatprep.subr.bf16.mxu0 0
        %3788 = vmatpush2.bf16.msra.mxu0 %v3680
        %3789 = vmatprep.subr.bf16.mxu0 0
        %3790 = vmatpush2.bf16.msra.mxu0 %v3679
        %3791 = vmatprep.mubr.bf16.mxu0 %v3455
        %3792 = vmatmul.mubr.bf16.gmra.mxu0 %v3454
        %v3793 = vpop.f32.mrf.mxu0
        %v3794 = vadd.f32 %v3754, %v3793
        %v3795 = vpop.f32.mrf.mxu0
        %v3796 = vpop.f32.mrf.mxu0
        %v3797 = vpop.f32.mrf.mxu0
        %3798 = vdwg.mxu0
        %v3799 = vadd.f32 %v3122, %v3794
        %3800 = vst [vmem:[%s610] sm:$0xff] %v3799
        %s3801 = sand.u32 %s377, 1
        %s3802 = scalar_lea.sflag [#allocation6], %s3801
        %s3803 = sand.u32 %s377, 1
        %s3804 = smul.addr %s3803, 8
        %s3805 = scalar_lea.vmem [#allocation16], %s3804
        // Predicated region
        $region113: #{tpu_custom_call.1} parent=79 // pred_check
          %p3806 = pneg %p387
        $region114: #{tpu_custom_call.1} parent=79 // pred_check_branch
          %3808 = sbr.rel (%p3806) target = $region116
        $region115: #{tpu_custom_call.1} parent=79 // pred_region
          %s3810 = ssub.s32 128, 128
          %3811 = vsyncadd %s3802, %s3810
          %s3812 = sadd.s32 %s40, %s39
          %s3813 = smul.addr %s3812, 128
          %s3814 = scalar_lea.hbm %s15, %s3813
          %s3816 = sshll.u32 %s3805, 4
          %s3817 = int_to_ptr.vmem [resolvable:$true] %s3816
          %3819 = dma.vmem_to_hbm [thread:$0]  %s3817, 128, %s3814, %s3802
        $region116: #{tpu_custom_call.1} parent=79 // pred_fallthru
          _
      $region80: #{tpu_custom_call.1} parent=5 // pred_fallthru
        _
      %p3820 = scmp.le.s32.totalorder 2, %s30
      // Predicated region
      $region117: #{tpu_custom_call.1} parent=5 // pred_check
        %p3821 = pneg %p3820
      $region118: #{tpu_custom_call.1} parent=5 // pred_check_branch
        %3823 = sbr.rel (%p3821) target = $region120
      $region119: #{tpu_custom_call.1} parent=5 // pred_region
        %s3824 = ssub.s32 %s30, 2
        // Predicated region
        $region121: #{tpu_custom_call.1} parent=119 // pred_check
          %p3825 = pneg %p393
        $region122: #{tpu_custom_call.1} parent=119 // pred_check_branch
          %3827 = sbr.rel (%p3825) target = $region124
        $region123: #{tpu_custom_call.1} parent=119 // pred_region
          %s3828 = sand.u32 %s378, 1
          %s3829 = scalar_lea.sflag [#allocation6], %s3828
          %s3830 = sand.u32 %s378, 1
          %s3831 = smul.addr %s3830, 8
          %s3832 = scalar_lea.vmem [#allocation16], %s3831
          %3833 = dma.done %s3829, 128
        $region124: #{tpu_custom_call.1} parent=119 // pred_fallthru
          _
      $region120: #{tpu_custom_call.1} parent=5 // pred_fallthru
        _
    $region6: #{tpu_custom_call.1} parent=1 // loop_footer
      %s34 = sadd.s32 1, %s30
    $region7: #{tpu_custom_call.1} parent=1 // loop_footer_branch
      %29 = sbr.rel target = $region3
    $region8: #{tpu_custom_call.1} parent=1 // loop_exit
      _
    %3834 = vsyncpa [#allocation5], 1
    %s3835 = scalar_lea.sflag [#allocation5], 1
    %3836 = vsyncpa %s3835, 1
    %3837 = vsyncpa [#allocation8], 1
    %3838 = vsyncpa [#allocation11], 1
    %3839 = vsyncpa [#allocation14], 1
    %3840 = vsyncpa [#allocation6], 1
    %s3841 = scalar_lea.sflag [#allocation6], 1
    %3842 = vsyncpa %s3841, 1

// kernel: tpu_custom_call.1
$region0: #{tpu_custom_call.1}
  #allocation0 [shape = 'u32[]', space=smem, size = 0x4, offset = 0x4, fixed_abs, tag = 'smem constant byte address 0x4 - core index']
  #allocation1 [shape = 'u32[144,128]{1,0:T(1,128)}', space=vmem, size = 0x12000, scoped, tag = 'internal scratch']
  #allocation2 [shape = 'bf16[8,768]{1,0:T(8,128)(2,1)}', space=vmem, size = 0x3000, scoped, tag = 'scratch operand']
  #allocation3 [shape = 'bf16[8,768]{1,0:T(8,128)(2,1)}', space=vmem, size = 0x3000, scoped, tag = 'scratch operand']
  %s0 = inlined_call_operand.hbm [shape: f32[2,8,128], index: 0, kind: input, shape index: {}]
  %s1 = inlined_call_operand.vmem [shape: f32[1,128], index: 1, kind: input, shape index: {}]
  %s2 = inlined_call_operand.vmem [shape: f32[1,128], index: 2, kind: input, shape index: {}]
  %s3 = inlined_call_operand.vmem [shape: f32[1,128], index: 3, kind: input, shape index: {}]
  %s4 = inlined_call_operand.hbm [shape: bf16[128,768], index: 4, kind: input, shape index: {}]
  %s5 = inlined_call_operand.hbm [shape: bf16[128,768], index: 5, kind: input, shape index: {}]
  %s6 = inlined_call_operand.hbm [shape: bf16[128,768], index: 6, kind: input, shape index: {}]
  %s7 = inlined_call_operand.hbm [shape: bf16[768,128], index: 7, kind: input, shape index: {}]
  %s8 = inlined_call_operand.vmem [shape: f32[1,128], index: 8, kind: input, shape index: {}]
  %s9 = inlined_call_operand.vmem [shape: f32[1,128], index: 9, kind: input, shape index: {}]
  %s10 = inlined_call_operand.vmem [shape: f32[1,128], index: 10, kind: input, shape index: {}]
  %s11 = inlined_call_operand.hbm [shape: bf16[128,512], index: 11, kind: input, shape index: {}]
  %s12 = inlined_call_operand.vmem [shape: f32[1,512], index: 12, kind: input, shape index: {}]
  %s13 = inlined_call_operand.hbm [shape: bf16[512,128], index: 13, kind: input, shape index: {}]
  %s14 = inlined_call_operand.vmem [shape: f32[1,128], index: 14, kind: input, shape index: {}]
  %s15 = inlined_call_operand.hbm [shape: f32[2,8,128], index: 15, kind: output, shape index: {}]
  %s16 = sld [smem:[#allocation0]]
  $region125: #{tpu_custom_call.1} parent=0
    _
  %s18 = ssub.s32 1, %s16
  %s19 = scalar_select 0, %s18, %s16
  $region1: #{tpu_custom_call.1} parent=0
    #allocation4 [shape = 'u8[8192]{0}', space=vmem, size = 0x2000, scoped, tag = 'input window, operand 0']
    #allocation5 [shape = 's32[2]{0}', space=sflag, size = 0x8, scoped, tag = 'scoped memory for tpu_custom_call.1']
    #allocation6 [shape = 's32[2]{0}', space=sflag, size = 0x8, scoped, tag = 'scoped memory for tpu_custom_call.1']
    #allocation7 [shape = 'u8[196608]{0}', space=vmem, size = 0x30000, scoped, tag = 'input window, operand 4, single buffered']
    #allocation8 [shape = 's32[1]{0}', space=sflag, size = 0x4, scoped, tag = 'scoped memory for tpu_custom_call.1']
    #allocation9 [shape = 'u8[196608]{0}', space=vmem, size = 0x30000, scoped, tag = 'input window, operand 5, single buffered']
    #allocation10 [shape = 'u8[196608]{0}', space=vmem, size = 0x30000, scoped, tag = 'input window, operand 6, single buffered']
    #allocation11 [shape = 's32[1]{0}', space=sflag, size = 0x4, scoped, tag = 'scoped memory for tpu_custom_call.1']
    #allocation12 [shape = 'u8[196608]{0}', space=vmem, size = 0x30000, scoped, tag = 'input window, operand 7, single buffered']
    #allocation13 [shape = 'u8[131072]{0}', space=vmem, size = 0x20000, scoped, tag = 'input window, operand 11, single buffered']
    #allocation14 [shape = 's32[1]{0}', space=sflag, size = 0x4, scoped, tag = 'scoped memory for tpu_custom_call.1']
    #allocation15 [shape = 'u8[131072]{0}', space=vmem, size = 0x20000, scoped, tag = 'input window, operand 13, single buffered']
    #allocation16 [shape = 'u8[8192]{0}', space=vmem, size = 0x2000, scoped, tag = 'output window, operand 0']
    %20 = vsyncpa [#allocation5], 0
    %s21 = scalar_lea.sflag [#allocation5], 1
    %22 = vsyncpa %s21, 0
    %23 = vsyncpa [#allocation8], 0
    %24 = vsyncpa [#allocation11], 0
    %25 = vsyncpa [#allocation14], 0
    %26 = vsyncpa [#allocation6], 0
    %s27 = scalar_lea.sflag [#allocation6], 1
    %28 = vsyncpa %s27, 0
    loop: start=0, step=1, limit=4
    $region2: #{tpu_custom_call.1} parent=1 // loop_pre_header
      _
    $region3: #{tpu_custom_call.1} parent=1 // loop_header
      %s30 = sphi 0, %s34
      %p31 = scmp.ge.s32.totalorder %s30, 4
      %s37 = sphi 0, %s49
      %s38 = sphi 0, %s45
      %s39 = sphi 0, %s37
      %s40 = sphi 0, %s38
      %s41 = sphi 0, %s39
      %s42 = sphi 0, %s40
      %s52 = sphi 0, %s54
      %s55 = sphi 0, %s52
      %s56 = sphi 0, %s55
      %s72 = sphi 0, %s56
      %s76 = sphi 0, %s76
      %s78 = sphi 0, %s76
      %s79 = sphi 0, %s78
      %s93 = sphi 0, %s79
      %s97 = sphi 0, %s97
      %s99 = sphi 0, %s97
      %s100 = sphi 0, %s99
      %s114 = sphi 0, %s100
      %s118 = sphi 0, %s118
      %s120 = sphi 0, %s118
      %s121 = sphi 0, %s120
      %s135 = sphi 0, %s121
      %s139 = sphi 0, %s139
      %s141 = sphi 0, %s139
      %s142 = sphi 0, %s141
      %s156 = sphi 0, %s142
      %s160 = sphi 0, %s160
      %s162 = sphi 0, %s160
      %s163 = sphi 0, %s162
      %s177 = sphi 0, %s163
      %s181 = sphi 0, %s181
      %s183 = sphi 0, %s181
      %s184 = sphi 0, %s183
      %s198 = sphi 0, %s184
      %s202 = sphi 0, %s202
      %s204 = sphi 0, %s202
      %s205 = sphi 0, %s204
      %s219 = sphi 0, %s205
      %s223 = sphi 0, %s223
      %s225 = sphi 0, %s223
      %s226 = sphi 0, %s225
      %s240 = sphi 0, %s226
      %s244 = sphi 0, %s244
      %s246 = sphi 0, %s244
      %s247 = sphi 0, %s246
      %s261 = sphi 0, %s247
      %s265 = sphi 0, %s265
      %s267 = sphi 0, %s265
      %s268 = sphi 0, %s267
      %s282 = sphi 0, %s268
      %s286 = sphi 0, %s286
      %s288 = sphi 0, %s286
      %s289 = sphi 0, %s288
      %s303 = sphi 0, %s289
      %s307 = sphi 0, %s307
      %s309 = sphi 0, %s307
      %s310 = sphi 0, %s309
      %s324 = sphi 0, %s310
      %s328 = sphi 0, %s328
      %s330 = sphi 0, %s328
      %s331 = sphi 0, %s330
      %s345 = sphi 0, %s331
      %s349 = sphi 0, %s349
      %s351 = sphi 0, %s349
      %s352 = sphi 0, %s351
      %s366 = sphi 0, %s352
      %s374 = sphi 0, %s376
      %s377 = sphi 0, %s374
      %s378 = sphi 0, %s377
      %s394 = sphi 0, %s378
    $region4: #{tpu_custom_call.1} parent=1 // loop_header_branch
      %33 = sbr.rel (%p31) target = $region8
    $region5: #{tpu_custom_call.1} parent=1 // loop_body
      %s35 = ssub.s32 %s30, 1
      %s36 = ssub.s32 %s30, 2
      %s43 = sadd.s32 1, %s38
      %p44 = scmp.ge.s32.totalorder %s43, 1
      %s45 = scalar_select %p44, 0, %s43
      %s46 = sadd.s32 1, %s37
      %s47 = scalar_select %p44, %s46, %s37
      %p48 = scmp.ge.s32.totalorder %s47, 2
      %s49 = scalar_select %p48, 0, %s47
      %s50 = ssub.s32 %s37, %s49
      %p51 = scmp.eq.s32.totalorder %s50, 0
      %s53 = sadd.s32 %s52, 1
      %s54 = scalar_select %p51, %s52, %s53
      %p57 = pneg %p51
      %p58 = scmp.eq.s32.totalorder %s30, 1
      %p59 = por %p57, %p58
      %p60 = scmp.ne.s32.totalorder %s52, %s55
      %p61 = scmp.eq.s32.totalorder %s30, 0
      %p62 = por %p60, %p61
      %p63 = scmp.ne.s32.totalorder %s52, %s55
      %p64 = scmp.eq.s32.totalorder %s35, 1
      %p65 = por %p63, %p64
      %p66 = scmp.ne.s32.totalorder %s55, %s56
      %p67 = scmp.eq.s32.totalorder %s35, 0
      %p68 = por %p66, %p67
      %p69 = scmp.ne.s32.totalorder %s55, %s56
      %p70 = scmp.eq.s32.totalorder %s36, 1
      %p71 = por %p69, %p70
      %p73 = scmp.ne.s32.totalorder %s56, %s72
      %p74 = scmp.eq.s32.totalorder %s36, 0
      %p75 = por %p73, %p74
      %s77 = sadd.s32 %s76, 1
      %p80 = scmp.eq.s32.totalorder %s30, 1
      %p81 = scmp.ne.s32.totalorder %s76, %s78
      %p82 = scmp.eq.s32.totalorder %s30, 0
      %p83 = por %p81, %p82
      %p84 = scmp.ne.s32.totalorder %s76, %s78
      %p85 = scmp.eq.s32.totalorder %s35, 1
      %p86 = por %p84, %p85
      %p87 = scmp.ne.s32.totalorder %s78, %s79
      %p88 = scmp.eq.s32.totalorder %s35, 0
      %p89 = por %p87, %p88
      %p90 = scmp.ne.s32.totalorder %s78, %s79
      %p91 = scmp.eq.s32.totalorder %s36, 1
      %p92 = por %p90, %p91
      %p94 = scmp.ne.s32.totalorder %s79, %s93
      %p95 = scmp.eq.s32.totalorder %s36, 0
      %p96 = por %p94, %p95
      %s98 = sadd.s32 %s97, 1
      %p101 = scmp.eq.s32.totalorder %s30, 1
      %p102 = scmp.ne.s32.totalorder %s97, %s99
      %p103 = scmp.eq.s32.totalorder %s30, 0
      %p104 = por %p102, %p103
      %p105 = scmp.ne.s32.totalorder %s97, %s99
      %p106 = scmp.eq.s32.totalorder %s35, 1
      %p107 = por %p105, %p106
      %p108 = scmp.ne.s32.totalorder %s99, %s100
      %p109 = scmp.eq.s32.totalorder %s35, 0
      %p110 = por %p108, %p109
      %p111 = scmp.ne.s32.totalorder %s99, %s100
      %p112 = scmp.eq.s32.totalorder %s36, 1
      %p113 = por %p111, %p112
      %p115 = scmp.ne.s32.totalorder %s100, %s114
      %p116 = scmp.eq.s32.totalorder %s36, 0
      %p117 = por %p115, %p116
      %s119 = sadd.s32 %s118, 1
      %p122 = scmp.eq.s32.totalorder %s30, 1
      %p123 = scmp.ne.s32.totalorder %s118, %s120
      %p124 = scmp.eq.s32.totalorder %s30, 0
      %p125 = por %p123, %p124
      %p126 = scmp.ne.s32.totalorder %s118, %s120
      %p127 = scmp.eq.s32.totalorder %s35, 1
      %p128 = por %p126, %p127
      %p129 = scmp.ne.s32.totalorder %s120, %s121
      %p130 = scmp.eq.s32.totalorder %s35, 0
      %p131 = por %p129, %p130
      %p132 = scmp.ne.s32.totalorder %s120, %s121
      %p133 = scmp.eq.s32.totalorder %s36, 1
      %p134 = por %p132, %p133
      %p136 = scmp.ne.s32.totalorder %s121, %s135
      %p137 = scmp.eq.s32.totalorder %s36, 0
      %p138 = por %p136, %p137
      %s140 = sadd.s32 %s139, 1
      %p143 = scmp.eq.s32.totalorder %s30, 1
      %p144 = scmp.ne.s32.totalorder %s139, %s141
      %p145 = scmp.eq.s32.totalorder %s30, 0
      %p146 = por %p144, %p145
      %p147 = scmp.ne.s32.totalorder %s139, %s141
      %p148 = scmp.eq.s32.totalorder %s35, 1
      %p149 = por %p147, %p148
      %p150 = scmp.ne.s32.totalorder %s141, %s142
      %p151 = scmp.eq.s32.totalorder %s35, 0
      %p152 = por %p150, %p151
      %p153 = scmp.ne.s32.totalorder %s141, %s142
      %p154 = scmp.eq.s32.totalorder %s36, 1
      %p155 = por %p153, %p154
      %p157 = scmp.ne.s32.totalorder %s142, %s156
      %p158 = scmp.eq.s32.totalorder %s36, 0
      %p159 = por %p157, %p158
      %s161 = sadd.s32 %s160, 1
      %p164 = scmp.eq.s32.totalorder %s30, 1
      %p165 = scmp.ne.s32.totalorder %s160, %s162
      %p166 = scmp.eq.s32.totalorder %s30, 0
      %p167 = por %p165, %p166
      %p168 = scmp.ne.s32.totalorder %s160, %s162
      %p169 = scmp.eq.s32.totalorder %s35, 1
      %p170 = por %p168, %p169
      %p171 = scmp.ne.s32.totalorder %s162, %s163
      %p172 = scmp.eq.s32.totalorder %s35, 0
      %p173 = por %p171, %p172
      %p174 = scmp.ne.s32.totalorder %s162, %s163
      %p175 = scmp.eq.s32.totalorder %s36, 1
      %p176 = por %p174, %p175
      %p178 = scmp.ne.s32.totalorder %s163, %s177
      %p179 = scmp.eq.s32.totalorder %s36, 0
      %p180 = por %p178, %p179
      %s182 = sadd.s32 %s181, 1
      %p185 = scmp.eq.s32.totalorder %s30, 1
      %p186 = scmp.ne.s32.totalorder %s181, %s183
      %p187 = scmp.eq.s32.totalorder %s30, 0
      %p188 = por %p186, %p187
      %p189 = scmp.ne.s32.totalorder %s181, %s183
      %p190 = scmp.eq.s32.totalorder %s35, 1
      %p191 = por %p189, %p190
      %p192 = scmp.ne.s32.totalorder %s183, %s184
      %p193 = scmp.eq.s32.totalorder %s35, 0
      %p194 = por %p192, %p193
      %p195 = scmp.ne.s32.totalorder %s183, %s184
      %p196 = scmp.eq.s32.totalorder %s36, 1
      %p197 = por %p195, %p196
      %p199 = scmp.ne.s32.totalorder %s184, %s198
      %p200 = scmp.eq.s32.totalorder %s36, 0
      %p201 = por %p199, %p200
      %s203 = sadd.s32 %s202, 1
      %p206 = scmp.eq.s32.totalorder %s30, 1
      %p207 = scmp.ne.s32.totalorder %s202, %s204
      %p208 = scmp.eq.s32.totalorder %s30, 0
      %p209 = por %p207, %p208
      %p210 = scmp.ne.s32.totalorder %s202, %s204
      %p211 = scmp.eq.s32.totalorder %s35, 1
      %p212 = por %p210, %p211
      %p213 = scmp.ne.s32.totalorder %s204, %s205
      %p214 = scmp.eq.s32.totalorder %s35, 0
      %p215 = por %p213, %p214
      %p216 = scmp.ne.s32.totalorder %s204, %s205
      %p217 = scmp.eq.s32.totalorder %s36, 1
      %p218 = por %p216, %p217
      %p220 = scmp.ne.s32.totalorder %s205, %s219
      %p221 = scmp.eq.s32.totalorder %s36, 0
      %p222 = por %p220, %p221
      %s224 = sadd.s32 %s223, 1
      %p227 = scmp.eq.s32.totalorder %s30, 1
      %p228 = scmp.ne.s32.totalorder %s223, %s225
      %p229 = scmp.eq.s32.totalorder %s30, 0
      %p230 = por %p228, %p229
      %p231 = scmp.ne.s32.totalorder %s223, %s225
      %p232 = scmp.eq.s32.totalorder %s35, 1
      %p233 = por %p231, %p232
      %p234 = scmp.ne.s32.totalorder %s225, %s226
      %p235 = scmp.eq.s32.totalorder %s35, 0
      %p236 = por %p234, %p235
      %p237 = scmp.ne.s32.totalorder %s225, %s226
      %p238 = scmp.eq.s32.totalorder %s36, 1
      %p239 = por %p237, %p238
      %p241 = scmp.ne.s32.totalorder %s226, %s240
      %p242 = scmp.eq.s32.totalorder %s36, 0
      %p243 = por %p241, %p242
      %s245 = sadd.s32 %s244, 1
      %p248 = scmp.eq.s32.totalorder %s30, 1
      %p249 = scmp.ne.s32.totalorder %s244, %s246
      %p250 = scmp.eq.s32.totalorder %s30, 0
      %p251 = por %p249, %p250
      %p252 = scmp.ne.s32.totalorder %s244, %s246
      %p253 = scmp.eq.s32.totalorder %s35, 1
      %p254 = por %p252, %p253
      %p255 = scmp.ne.s32.totalorder %s246, %s247
      %p256 = scmp.eq.s32.totalorder %s35, 0
      %p257 = por %p255, %p256
      %p258 = scmp.ne.s32.totalorder %s246, %s247
      %p259 = scmp.eq.s32.totalorder %s36, 1
      %p260 = por %p258, %p259
      %p262 = scmp.ne.s32.totalorder %s247, %s261
      %p263 = scmp.eq.s32.totalorder %s36, 0
      %p264 = por %p262, %p263
      %s266 = sadd.s32 %s265, 1
      %p269 = scmp.eq.s32.totalorder %s30, 1
      %p270 = scmp.ne.s32.totalorder %s265, %s267
      %p271 = scmp.eq.s32.totalorder %s30, 0
      %p272 = por %p270, %p271
      %p273 = scmp.ne.s32.totalorder %s265, %s267
      %p274 = scmp.eq.s32.totalorder %s35, 1
      %p275 = por %p273, %p274
      %p276 = scmp.ne.s32.totalorder %s267, %s268
      %p277 = scmp.eq.s32.totalorder %s35, 0
      %p278 = por %p276, %p277
      %p279 = scmp.ne.s32.totalorder %s267, %s268
      %p280 = scmp.eq.s32.totalorder %s36, 1
      %p281 = por %p279, %p280
      %p283 = scmp.ne.s32.totalorder %s268, %s282
      %p284 = scmp.eq.s32.totalorder %s36, 0
      %p285 = por %p283, %p284
      %s287 = sadd.s32 %s286, 1
      %p290 = scmp.eq.s32.totalorder %s30, 1
      %p291 = scmp.ne.s32.totalorder %s286, %s288
      %p292 = scmp.eq.s32.totalorder %s30, 0
      %p293 = por %p291, %p292
      %p294 = scmp.ne.s32.totalorder %s286, %s288
      %p295 = scmp.eq.s32.totalorder %s35, 1
      %p296 = por %p294, %p295
      %p297 = scmp.ne.s32.totalorder %s288, %s289
      %p298 = scmp.eq.s32.totalorder %s35, 0
      %p299 = por %p297, %p298
      %p300 = scmp.ne.s32.totalorder %s288, %s289
      %p301 = scmp.eq.s32.totalorder %s36, 1
      %p302 = por %p300, %p301
      %p304 = scmp.ne.s32.totalorder %s289, %s303
      %p305 = scmp.eq.s32.totalorder %s36, 0
      %p306 = por %p304, %p305
      %s308 = sadd.s32 %s307, 1
      %p311 = scmp.eq.s32.totalorder %s30, 1
      %p312 = scmp.ne.s32.totalorder %s307, %s309
      %p313 = scmp.eq.s32.totalorder %s30, 0
      %p314 = por %p312, %p313
      %p315 = scmp.ne.s32.totalorder %s307, %s309
      %p316 = scmp.eq.s32.totalorder %s35, 1
      %p317 = por %p315, %p316
      %p318 = scmp.ne.s32.totalorder %s309, %s310
      %p319 = scmp.eq.s32.totalorder %s35, 0
      %p320 = por %p318, %p319
      %p321 = scmp.ne.s32.totalorder %s309, %s310
      %p322 = scmp.eq.s32.totalorder %s36, 1
      %p323 = por %p321, %p322
      %p325 = scmp.ne.s32.totalorder %s310, %s324
      %p326 = scmp.eq.s32.totalorder %s36, 0
      %p327 = por %p325, %p326
      %s329 = sadd.s32 %s328, 1
      %p332 = scmp.eq.s32.totalorder %s30, 1
      %p333 = scmp.ne.s32.totalorder %s328, %s330
      %p334 = scmp.eq.s32.totalorder %s30, 0
      %p335 = por %p333, %p334
      %p336 = scmp.ne.s32.totalorder %s328, %s330
      %p337 = scmp.eq.s32.totalorder %s35, 1
      %p338 = por %p336, %p337
      %p339 = scmp.ne.s32.totalorder %s330, %s331
      %p340 = scmp.eq.s32.totalorder %s35, 0
      %p341 = por %p339, %p340
      %p342 = scmp.ne.s32.totalorder %s330, %s331
      %p343 = scmp.eq.s32.totalorder %s36, 1
      %p344 = por %p342, %p343
      %p346 = scmp.ne.s32.totalorder %s331, %s345
      %p347 = scmp.eq.s32.totalorder %s36, 0
      %p348 = por %p346, %p347
      %s350 = sadd.s32 %s349, 1
      %p353 = scmp.eq.s32.totalorder %s30, 1
      %p354 = scmp.ne.s32.totalorder %s349, %s351
      %p355 = scmp.eq.s32.totalorder %s30, 0
      %p356 = por %p354, %p355
      %p357 = scmp.ne.s32.totalorder %s349, %s351
      %p358 = scmp.eq.s32.totalorder %s35, 1
      %p359 = por %p357, %p358
      %p360 = scmp.ne.s32.totalorder %s351, %s352
      %p361 = scmp.eq.s32.totalorder %s35, 0
      %p362 = por %p360, %p361
      %p363 = scmp.ne.s32.totalorder %s351, %s352
      %p364 = scmp.eq.s32.totalorder %s36, 1
      %p365 = por %p363, %p364
      %p367 = scmp.ne.s32.totalorder %s352, %s366
      %p368 = scmp.eq.s32.totalorder %s36, 0
      %p369 = por %p367, %p368
      %s370 = ssub.s32 %s37, %s49
      %s371 = ssub.s32 %s38, %s45
      %s372 = sor.u32 %s370, %s371
      %p373 = scmp.eq.s32.totalorder %s372, 0
      %s375 = sadd.s32 %s374, 1
      %s376 = scalar_select %p373, %s374, %s375
      %p379 = pneg %p373
      %p380 = scmp.eq.s32.totalorder %s30, 1
      %p381 = por %p379, %p380
      %p382 = scmp.ne.s32.totalorder %s374, %s377
      %p383 = scmp.eq.s32.totalorder %s30, 0
      %p384 = por %p382, %p383
      %p385 = scmp.ne.s32.totalorder %s374, %s377
      %p386 = scmp.eq.s32.totalorder %s35, 1
      %p387 = por %p385, %p386
      %p388 = scmp.ne.s32.totalorder %s377, %s378
      %p389 = scmp.eq.s32.totalorder %s35, 0
      %p390 = por %p388, %p389
      %p391 = scmp.ne.s32.totalorder %s377, %s378
      %p392 = scmp.eq.s32.totalorder %s36, 1
      %p393 = por %p391, %p392
      %p395 = scmp.ne.s32.totalorder %s378, %s394
      %p396 = scmp.eq.s32.totalorder %s36, 0
      %p397 = por %p395, %p396
      %p398 = scmp.le.s32.totalorder 1, %s30
      %p399 = scmp.lt.s32.totalorder %s30, 3
      %p400 = pnand %p398, %p399
      %p401 = pneg %p400
      // Predicated region
      $region9: #{tpu_custom_call.1} parent=5 // pred_check
        _
      $region10: #{tpu_custom_call.1} parent=5 // pred_check_branch
        %403 = sbr.rel (%p400) target = $region12
      $region11: #{tpu_custom_call.1} parent=5 // pred_region
        %s404 = ssub.s32 %s30, 1
        // Predicated region
        $region13: #{tpu_custom_call.1} parent=11 // pred_check
          %p405 = pneg %p89
        $region14: #{tpu_custom_call.1} parent=11 // pred_check_branch
          %407 = sbr.rel (%p405) target = $region16
        $region15: #{tpu_custom_call.1} parent=11 // pred_region
          _
        $region16: #{tpu_custom_call.1} parent=11 // pred_fallthru
          _
        // Predicated region
        $region17: #{tpu_custom_call.1} parent=11 // pred_check
          %p408 = pneg %p110
        $region18: #{tpu_custom_call.1} parent=11 // pred_check_branch
          %410 = sbr.rel (%p408) target = $region20
        $region19: #{tpu_custom_call.1} parent=11 // pred_region
          _
        $region20: #{tpu_custom_call.1} parent=11 // pred_fallthru
          _
        // Predicated region
        $region21: #{tpu_custom_call.1} parent=11 // pred_check
          %p411 = pneg %p131
        $region22: #{tpu_custom_call.1} parent=11 // pred_check_branch
          %413 = sbr.rel (%p411) target = $region24
        $region23: #{tpu_custom_call.1} parent=11 // pred_region
          _
        $region24: #{tpu_custom_call.1} parent=11 // pred_fallthru
          _
        // Predicated region
        $region25: #{tpu_custom_call.1} parent=11 // pred_check
          %p414 = pneg %p152
        $region26: #{tpu_custom_call.1} parent=11 // pred_check_branch
          %416 = sbr.rel (%p414) target = $region28
        $region27: #{tpu_custom_call.1} parent=11 // pred_region
          %s418 = ssub.s32 6144, 6144
          %419 = vsyncadd [#allocation8], %s418
          %s420 = sshll.u32 [#allocation7], 4
          %s421 = int_to_ptr.vmem [resolvable:$true] %s420
          %426 = dma.hbm_to_vmem [thread:$0]  %s4, 6144, %s421, [#allocation8], 384, 384, 24
        $region28: #{tpu_custom_call.1} parent=11 // pred_fallthru
          _
        // Predicated region
        $region29: #{tpu_custom_call.1} parent=11 // pred_check
          %p427 = pneg %p173
        $region30: #{tpu_custom_call.1} parent=11 // pred_check_branch
          %429 = sbr.rel (%p427) target = $region32
        $region31: #{tpu_custom_call.1} parent=11 // pred_region
          %s431 = ssub.s32 6144, 6144
          %432 = vsyncadd [#allocation8], %s431
          %s433 = sshll.u32 [#allocation9], 4
          %s434 = int_to_ptr.vmem [resolvable:$true] %s433
          %439 = dma.hbm_to_vmem [thread:$0]  %s5, 6144, %s434, [#allocation8], 384, 384, 24
        $region32: #{tpu_custom_call.1} parent=11 // pred_fallthru
          _
        // Predicated region
        $region33: #{tpu_custom_call.1} parent=11 // pred_check
          %p440 = pneg %p194
        $region34: #{tpu_custom_call.1} parent=11 // pred_check_branch
          %442 = sbr.rel (%p440) target = $region36
        $region35: #{tpu_custom_call.1} parent=11 // pred_region
          %s444 = ssub.s32 6144, 6144
          %445 = vsyncadd [#allocation11], %s444
          %s446 = sshll.u32 [#allocation10], 4
          %s447 = int_to_ptr.vmem [resolvable:$true] %s446
          %452 = dma.hbm_to_vmem [thread:$0]  %s6, 6144, %s447, [#allocation11], 384, 384, 24
        $region36: #{tpu_custom_call.1} parent=11 // pred_fallthru
          _
        // Predicated region
        $region37: #{tpu_custom_call.1} parent=11 // pred_check
          %p453 = pneg %p215
        $region38: #{tpu_custom_call.1} parent=11 // pred_check_branch
          %455 = sbr.rel (%p453) target = $region40
        $region39: #{tpu_custom_call.1} parent=11 // pred_region
          %s457 = ssub.s32 6144, 6144
          %458 = vsyncadd [#allocation11], %s457
          %s459 = sshll.u32 [#allocation12], 4
          %s460 = int_to_ptr.vmem [resolvable:$true] %s459
          %465 = dma.hbm_to_vmem [thread:$0]  %s7, 6144, %s460, [#allocation11], 64, 64, 4
        $region40: #{tpu_custom_call.1} parent=11 // pred_fallthru
          _
        // Predicated region
        $region41: #{tpu_custom_call.1} parent=11 // pred_check
          %p466 = pneg %p236
        $region42: #{tpu_custom_call.1} parent=11 // pred_check_branch
          %468 = sbr.rel (%p466) target = $region44
        $region43: #{tpu_custom_call.1} parent=11 // pred_region
          _
        $region44: #{tpu_custom_call.1} parent=11 // pred_fallthru
          _
        // Predicated region
        $region45: #{tpu_custom_call.1} parent=11 // pred_check
          %p469 = pneg %p257
        $region46: #{tpu_custom_call.1} parent=11 // pred_check_branch
          %471 = sbr.rel (%p469) target = $region48
        $region47: #{tpu_custom_call.1} parent=11 // pred_region
          _
        $region48: #{tpu_custom_call.1} parent=11 // pred_fallthru
          _
        // Predicated region
        $region49: #{tpu_custom_call.1} parent=11 // pred_check
          %p472 = pneg %p278
        $region50: #{tpu_custom_call.1} parent=11 // pred_check_branch
          %474 = sbr.rel (%p472) target = $region52
        $region51: #{tpu_custom_call.1} parent=11 // pred_region
          _
        $region52: #{tpu_custom_call.1} parent=11 // pred_fallthru
          _
        // Predicated region
        $region53: #{tpu_custom_call.1} parent=11 // pred_check
          %p475 = pneg %p299
        $region54: #{tpu_custom_call.1} parent=11 // pred_check_branch
          %477 = sbr.rel (%p475) target = $region56
        $region55: #{tpu_custom_call.1} parent=11 // pred_region
          %s479 = ssub.s32 4096, 4096
          %480 = vsyncadd [#allocation14], %s479
          %s481 = sshll.u32 [#allocation13], 4
          %s482 = int_to_ptr.vmem [resolvable:$true] %s481
          %487 = dma.hbm_to_vmem [thread:$0]  %s11, 4096, %s482, [#allocation14], 256, 256, 16
        $region56: #{tpu_custom_call.1} parent=11 // pred_fallthru
          _
        // Predicated region
        $region57: #{tpu_custom_call.1} parent=11 // pred_check
          %p488 = pneg %p320
        $region58: #{tpu_custom_call.1} parent=11 // pred_check_branch
          %490 = sbr.rel (%p488) target = $region60
        $region59: #{tpu_custom_call.1} parent=11 // pred_region
          _
        $region60: #{tpu_custom_call.1} parent=11 // pred_fallthru
          _
        // Predicated region
        $region61: #{tpu_custom_call.1} parent=11 // pred_check
          %p491 = pneg %p341
        $region62: #{tpu_custom_call.1} parent=11 // pred_check_branch
          %493 = sbr.rel (%p491) target = $region64
        $region63: #{tpu_custom_call.1} parent=11 // pred_region
          %s495 = ssub.s32 4096, 4096
          %496 = vsyncadd [#allocation14], %s495
          %s497 = sshll.u32 [#allocation15], 4
          %s498 = int_to_ptr.vmem [resolvable:$true] %s497
          %503 = dma.hbm_to_vmem [thread:$0]  %s13, 4096, %s498, [#allocation14], 64, 64, 4
        $region64: #{tpu_custom_call.1} parent=11 // pred_fallthru
          _
        // Predicated region
        $region65: #{tpu_custom_call.1} parent=11 // pred_check
          %p504 = pneg %p362
        $region66: #{tpu_custom_call.1} parent=11 // pred_check_branch
          %506 = sbr.rel (%p504) target = $region68
        $region67: #{tpu_custom_call.1} parent=11 // pred_region
          _
        $region68: #{tpu_custom_call.1} parent=11 // pred_fallthru
          _
      $region12: #{tpu_custom_call.1} parent=5 // pred_fallthru
        _
      %p507 = scmp.lt.s32.totalorder %s30, 2
      // Predicated region
      $region69: #{tpu_custom_call.1} parent=5 // pred_check
        %p508 = pneg %p507
      $region70: #{tpu_custom_call.1} parent=5 // pred_check_branch
        %510 = sbr.rel (%p508) target = $region72
      $region71: #{tpu_custom_call.1} parent=5 // pred_region
        // Predicated region
        $region73: #{tpu_custom_call.1} parent=71 // pred_check
          %p511 = pneg %p62
        $region74: #{tpu_custom_call.1} parent=71 // pred_check_branch
          %513 = sbr.rel (%p511) target = $region76
        $region75: #{tpu_custom_call.1} parent=71 // pred_region
          %s514 = sand.u32 %s52, 1
          %s515 = scalar_lea.sflag [#allocation5], %s514
          %s516 = sand.u32 %s52, 1
          %s517 = smul.addr %s516, 8
          %s518 = scalar_lea.vmem [#allocation4], %s517
          %s520 = ssub.s32 128, 128
          %521 = vsyncadd %s515, %s520
          %s522 = smul.addr %s37, 128
          %s523 = scalar_lea.hbm %s0, %s522
          %s525 = sshll.u32 %s518, 4
          %s526 = int_to_ptr.vmem [resolvable:$true] %s525
          %528 = dma.hbm_to_vmem [thread:$0]  %s523, 128, %s526, %s515
        $region76: #{tpu_custom_call.1} parent=71 // pred_fallthru
          _
      $region72: #{tpu_custom_call.1} parent=5 // pred_fallthru
        _
      %p529 = scmp.le.s32.totalorder 1, %s30
      %p530 = scmp.lt.s32.totalorder %s30, 3
      %p531 = pnand %p529, %p530
      %p532 = pneg %p531
      // Predicated region
      $region77: #{tpu_custom_call.1} parent=5 // pred_check
        _
      $region78: #{tpu_custom_call.1} parent=5 // pred_check_branch
        %534 = sbr.rel (%p531) target = $region80
      $region79: #{tpu_custom_call.1} parent=5 // pred_region
        %s535 = ssub.s32 %s30, 1
        %s536 = sand.u32 %s55, 1
        %s537 = scalar_lea.sflag [#allocation5], %s536
        %s538 = sand.u32 %s55, 1
        %s539 = smul.addr %s538, 8
        %s540 = scalar_lea.vmem [#allocation4], %s539
        // Predicated region
        $region81: #{tpu_custom_call.1} parent=79 // pred_check
          %p541 = pneg %p68
        $region82: #{tpu_custom_call.1} parent=79 // pred_check_branch
          %543 = sbr.rel (%p541) target = $region84
        $region83: #{tpu_custom_call.1} parent=79 // pred_region
          %544 = dma.done %s537, 128
        $region84: #{tpu_custom_call.1} parent=79 // pred_fallthru
          _
        // Predicated region
        $region85: #{tpu_custom_call.1} parent=79 // pred_check
          %p545 = pneg %p152
        $region86: #{tpu_custom_call.1} parent=79 // pred_check_branch
          %547 = sbr.rel (%p545) target = $region88
        $region87: #{tpu_custom_call.1} parent=79 // pred_region
          %548 = dma.done [#allocation8], 6144
        $region88: #{tpu_custom_call.1} parent=79 // pred_fallthru
          _
        // Predicated region
        $region89: #{tpu_custom_call.1} parent=79 // pred_check
          %p549 = pneg %p173
        $region90: #{tpu_custom_call.1} parent=79 // pred_check_branch
          %551 = sbr.rel (%p549) target = $region92
        $region91: #{tpu_custom_call.1} parent=79 // pred_region
          %552 = dma.done [#allocation8], 6144
        $region92: #{tpu_custom_call.1} parent=79 // pred_fallthru
          _
        // Predicated region
        $region93: #{tpu_custom_call.1} parent=79 // pred_check
          %p553 = pneg %p194
        $region94: #{tpu_custom_call.1} parent=79 // pred_check_branch
          %555 = sbr.rel (%p553) target = $region96
        $region95: #{tpu_custom_call.1} parent=79 // pred_region
          %556 = dma.done [#allocation11], 6144
        $region96: #{tpu_custom_call.1} parent=79 // pred_fallthru
          _
        // Predicated region
        $region97: #{tpu_custom_call.1} parent=79 // pred_check
          %p557 = pneg %p215
        $region98: #{tpu_custom_call.1} parent=79 // pred_check_branch
          %559 = sbr.rel (%p557) target = $region100
        $region99: #{tpu_custom_call.1} parent=79 // pred_region
          %560 = dma.done [#allocation11], 6144
        $region100: #{tpu_custom_call.1} parent=79 // pred_fallthru
          _
        // Predicated region
        $region101: #{tpu_custom_call.1} parent=79 // pred_check
          %p561 = pneg %p299
        $region102: #{tpu_custom_call.1} parent=79 // pred_check_branch
          %563 = sbr.rel (%p561) target = $region104
        $region103: #{tpu_custom_call.1} parent=79 // pred_region
          %564 = dma.done [#allocation14], 4096
        $region104: #{tpu_custom_call.1} parent=79 // pred_fallthru
          _
        // Predicated region
        $region105: #{tpu_custom_call.1} parent=79 // pred_check
          %p565 = pneg %p341
        $region106: #{tpu_custom_call.1} parent=79 // pred_check_branch
          %567 = sbr.rel (%p565) target = $region108
        $region107: #{tpu_custom_call.1} parent=79 // pred_region
          %568 = dma.done [#allocation14], 4096
        $region108: #{tpu_custom_call.1} parent=79 // pred_fallthru
          _
        %s569 = sand.u32 %s55, 1
        %s570 = scalar_lea.sflag [#allocation5], %s569
        %s571 = sand.u32 %s55, 1
        %s572 = smul.addr %s571, 8
        %s573 = scalar_lea.vmem [#allocation4], %s572
        %p574 = pneg %p68
        %p575 = pneg %p65
        %p576 = pneg %p89
        %p577 = pneg %p86
        %p578 = pneg %p110
        %p579 = pneg %p107
        %p580 = pneg %p131
        %p581 = pneg %p128
        %p582 = pneg %p152
        %p583 = pneg %p149
        %p584 = pneg %p173
        %p585 = pneg %p170
        %p586 = pneg %p194
        %p587 = pneg %p191
        %p588 = pneg %p215
        %p589 = pneg %p212
        %p590 = pneg %p236
        %p591 = pneg %p233
        %p592 = pneg %p257
        %p593 = pneg %p254
        %p594 = pneg %p278
        %p595 = pneg %p275
        %p596 = pneg %p299
        %p597 = pneg %p296
        %p598 = pneg %p320
        %p599 = pneg %p317
        %p600 = pneg %p341
        %p601 = pneg %p338
        %p602 = pneg %p362
        %p603 = pneg %p359
        %p604 = pneg %p390
        %p605 = pneg %p387
        %s606 = sand.u32 %s377, 1
        %s607 = scalar_lea.sflag [#allocation6], %s606
        %s608 = sand.u32 %s377, 1
        %s609 = smul.addr %s608, 8
        %s610 = scalar_lea.vmem [#allocation16], %s609
        %v612 = vld [vmem:[%s1] sm:$0x1]
        %v613 = vld [vmem:[%s2] sm:$0x1]
        %v614 = vld [vmem:[%s3] sm:$0x1]
        %p615 = scmp.eq.s32.totalorder %s40, 0
        // Predicated region
        $region109: #{tpu_custom_call.1} parent=79 // pred_check
          %p616 = pneg %p615
        $region110: #{tpu_custom_call.1} parent=79 // pred_check_branch
          %618 = sbr.rel (%p616) target = $region112
        $region111: #{tpu_custom_call.1} parent=79 // pred_region
          %v619 = vld [vmem:[%s540] sm:$0xff]
          %620 = vadd.xlane.f32.xlu0 %v619
          %v621 = vpop.xlane.xlu0 %620
          %v622 = vmul.f32 %v621, 0.01
          %v623 = vsub.f32 %v619, %v622
          %v625 = vlaneseq
          %v626 = vshrl.u32 %v625, 7
          %v627 = vsub.s32 0, %v626
          %v628 = vrot.slane %v612, %v627
          %v630 = vmul.f32 %v623, %v628
          %v631 = vmul.f32 %v630, %v630
          %632 = vadd.xlane.f32.xlu0 %v631
          %v633 = vpop.xlane.xlu0 %632
          %v634 = vmul.f32 %v633, 0.01
          %v635 = vadd.f32 %v634, 1e-05
          %v636 = vrsqrt.pop %v635
          %v637 = vmul.f32 %v630, %v636
          %v639 = vlaneseq
          %v640 = vshrl.u32 %v639, 7
          %v641 = vsub.s32 0, %v640
          %v642 = vrot.slane %v613, %v641
          %v644 = vmul.f32 %v637, %v642
          %v646 = vlaneseq
          %v647 = vshrl.u32 %v646, 7
          %v648 = vsub.s32 0, %v647
          %v649 = vrot.slane %v614, %v648
          %v651 = vadd.f32 %v644, %v649
          %v652 = vpack.c.bf16 %v651, %v651
          %v653 = vld [vmem:[#allocation9] sm:$0xff]
          %v654 = vld [vmem:[#allocation9 + $0x8] sm:$0xff]
          %v655 = vld [vmem:[#allocation9 + $0x10] sm:$0xff]
          %v656 = vld [vmem:[#allocation9 + $0x18] sm:$0xff]
          %v657 = vld [vmem:[#allocation9 + $0x20] sm:$0xff]
          %v658 = vld [vmem:[#allocation9 + $0x28] sm:$0xff]
          %v659 = vld [vmem:[#allocation9 + $0x30] sm:$0xff]
          %v660 = vld [vmem:[#allocation9 + $0x38] sm:$0xff]
          %v661 = vld [vmem:[#allocation9 + $0x40] sm:$0xff]
          %v662 = vld [vmem:[#allocation9 + $0x48] sm:$0xff]
          %v663 = vld [vmem:[#allocation9 + $0x50] sm:$0xff]
          %v664 = vld [vmem:[#allocation9 + $0x58] sm:$0xff]
          %v665 = vld [vmem:[#allocation9 + $0x60] sm:$0xff]
          %v666 = vld [vmem:[#allocation9 + $0x68] sm:$0xff]
          %v667 = vld [vmem:[#allocation9 + $0x70] sm:$0xff]
          %v668 = vld [vmem:[#allocation9 + $0x78] sm:$0xff]
          %v669 = vld [vmem:[#allocation9 + $0x80] sm:$0xff]
          %v670 = vld [vmem:[#allocation9 + $0x88] sm:$0xff]
          %v671 = vld [vmem:[#allocation9 + $0x90] sm:$0xff]
          %v672 = vld [vmem:[#allocation9 + $0x98] sm:$0xff]
          %v673 = vld [vmem:[#allocation9 + $0xa0] sm:$0xff]
          %v674 = vld [vmem:[#allocation9 + $0xa8] sm:$0xff]
          %v675 = vld [vmem:[#allocation9 + $0xb0] sm:$0xff]
          %v676 = vld [vmem:[#allocation9 + $0xb8] sm:$0xff]
          %v677 = vld [vmem:[#allocation9 + $0xc0] sm:$0xff]
          %v678 = vld [vmem:[#allocation9 + $0xc8] sm:$0xff]
          %v679 = vld [vmem:[#allocation9 + $0xd0] sm:$0xff]
          %v680 = vld [vmem:[#allocation9 + $0xd8] sm:$0xff]
          %v681 = vld [vmem:[#allocation9 + $0xe0] sm:$0xff]
          %v682 = vld [vmem:[#allocation9 + $0xe8] sm:$0xff]
          %v683 = vld [vmem:[#allocation9 + $0xf0] sm:$0xff]
          %v684 = vld [vmem:[#allocation9 + $0xf8] sm:$0xff]
          %v685 = vld [vmem:[#allocation9 + $0x100] sm:$0xff]
          %v686 = vld [vmem:[#allocation9 + $0x108] sm:$0xff]
          %v687 = vld [vmem:[#allocation9 + $0x110] sm:$0xff]
          %v688 = vld [vmem:[#allocation9 + $0x118] sm:$0xff]
          %v689 = vld [vmem:[#allocation9 + $0x120] sm:$0xff]
          %v690 = vld [vmem:[#allocation9 + $0x128] sm:$0xff]
          %v691 = vld [vmem:[#allocation9 + $0x130] sm:$0xff]
          %v692 = vld [vmem:[#allocation9 + $0x138] sm:$0xff]
          %v693 = vld [vmem:[#allocation9 + $0x140] sm:$0xff]
          %v694 = vld [vmem:[#allocation9 + $0x148] sm:$0xff]
          %v695 = vld [vmem:[#allocation9 + $0x150] sm:$0xff]
          %v696 = vld [vmem:[#allocation9 + $0x158] sm:$0xff]
          %v697 = vld [vmem:[#allocation9 + $0x160] sm:$0xff]
          %v698 = vld [vmem:[#allocation9 + $0x168] sm:$0xff]
          %v699 = vld [vmem:[#allocation9 + $0x170] sm:$0xff]
          %v700 = vld [vmem:[#allocation9 + $0x178] sm:$0xff]
          %v749 = vunpack.c.l.b16 %v653
          %v750 = vunpack.c.h.b16 %v653
          %v751 = vunpack.c.l.b16 %v654
          %v752 = vunpack.c.h.b16 %v654
          %v753 = vunpack.c.l.b16 %v655
          %v754 = vunpack.c.h.b16 %v655
          %v755 = vunpack.c.l.b16 %v656
          %v756 = vunpack.c.h.b16 %v656
          %v757 = vunpack.c.l.b16 %v657
          %v758 = vunpack.c.h.b16 %v657
          %v759 = vunpack.c.l.b16 %v658
          %v760 = vunpack.c.h.b16 %v658
          %v761 = vunpack.c.l.b16 %v659
          %v762 = vunpack.c.h.b16 %v659
          %v763 = vunpack.c.l.b16 %v660
          %v764 = vunpack.c.h.b16 %v660
          %v765 = vunpack.c.l.b16 %v661
          %v766 = vunpack.c.h.b16 %v661
          %v767 = vunpack.c.l.b16 %v662
          %v768 = vunpack.c.h.b16 %v662
          %v769 = vunpack.c.l.b16 %v663
          %v770 = vunpack.c.h.b16 %v663
          %v771 = vunpack.c.l.b16 %v664
          %v772 = vunpack.c.h.b16 %v664
          %v773 = vunpack.c.l.b16 %v665
          %v774 = vunpack.c.h.b16 %v665
          %v775 = vunpack.c.l.b16 %v666
          %v776 = vunpack.c.h.b16 %v666
          %v777 = vunpack.c.l.b16 %v667
          %v778 = vunpack.c.h.b16 %v667
          %v779 = vunpack.c.l.b16 %v668
          %v780 = vunpack.c.h.b16 %v668
          %v781 = vunpack.c.l.b16 %v669
          %v782 = vunpack.c.h.b16 %v669
          %v783 = vunpack.c.l.b16 %v670
          %v784 = vunpack.c.h.b16 %v670
          %v785 = vunpack.c.l.b16 %v671
          %v786 = vunpack.c.h.b16 %v671
          %v787 = vunpack.c.l.b16 %v672
          %v788 = vunpack.c.h.b16 %v672
          %v789 = vunpack.c.l.b16 %v673
          %v790 = vunpack.c.h.b16 %v673
          %v791 = vunpack.c.l.b16 %v674
          %v792 = vunpack.c.h.b16 %v674
          %v793 = vunpack.c.l.b16 %v675
          %v794 = vunpack.c.h.b16 %v675
          %v795 = vunpack.c.l.b16 %v676
          %v796 = vunpack.c.h.b16 %v676
          %v797 = vunpack.c.l.b16 %v677
          %v798 = vunpack.c.h.b16 %v677
          %v799 = vunpack.c.l.b16 %v678
          %v800 = vunpack.c.h.b16 %v678
          %v801 = vunpack.c.l.b16 %v679
          %v802 = vunpack.c.h.b16 %v679
          %v803 = vunpack.c.l.b16 %v680
          %v804 = vunpack.c.h.b16 %v680
          %v805 = vunpack.c.l.b16 %v681
          %v806 = vunpack.c.h.b16 %v681
          %v807 = vunpack.c.l.b16 %v682
          %v808 = vunpack.c.h.b16 %v682
          %v809 = vunpack.c.l.b16 %v683
          %v810 = vunpack.c.h.b16 %v683
          %v811 = vunpack.c.l.b16 %v684
          %v812 = vunpack.c.h.b16 %v684
          %v813 = vunpack.c.l.b16 %v685
          %v814 = vunpack.c.h.b16 %v685
          %v815 = vunpack.c.l.b16 %v686
          %v816 = vunpack.c.h.b16 %v686
          %v817 = vunpack.c.l.b16 %v687
          %v818 = vunpack.c.h.b16 %v687
          %v819 = vunpack.c.l.b16 %v688
          %v820 = vunpack.c.h.b16 %v688
          %v821 = vunpack.c.l.b16 %v689
          %v822 = vunpack.c.h.b16 %v689
          %v823 = vunpack.c.l.b16 %v690
          %v824 = vunpack.c.h.b16 %v690
          %v825 = vunpack.c.l.b16 %v691
          %v826 = vunpack.c.h.b16 %v691
          %v827 = vunpack.c.l.b16 %v692
          %v828 = vunpack.c.h.b16 %v692
          %v829 = vunpack.c.l.b16 %v693
          %v830 = vunpack.c.h.b16 %v693
          %v831 = vunpack.c.l.b16 %v694
          %v832 = vunpack.c.h.b16 %v694
          %v833 = vunpack.c.l.b16 %v695
          %v834 = vunpack.c.h.b16 %v695
          %v835 = vunpack.c.l.b16 %v696
          %v836 = vunpack.c.h.b16 %v696
          %v837 = vunpack.c.l.b16 %v697
          %v838 = vunpack.c.h.b16 %v697
          %v839 = vunpack.c.l.b16 %v698
          %v840 = vunpack.c.h.b16 %v698
          %v841 = vunpack.c.l.b16 %v699
          %v842 = vunpack.c.h.b16 %v699
          %v843 = vunpack.c.l.b16 %v700
          %v844 = vunpack.c.h.b16 %v700
          %v845 = vpack.c.b16 %v755, %v749
          %v846 = vpack.c.b16 %v756, %v750
          %v847 = vpack.c.b16 %v757, %v751
          %v848 = vpack.c.b16 %v758, %v752
          %v849 = vpack.c.b16 %v759, %v753
          %v850 = vpack.c.b16 %v760, %v754
          %v851 = vpack.c.b16 %v767, %v761
          %v852 = vpack.c.b16 %v768, %v762
          %v853 = vpack.c.b16 %v769, %v763
          %v854 = vpack.c.b16 %v770, %v764
          %v855 = vpack.c.b16 %v771, %v765
          %v856 = vpack.c.b16 %v772, %v766
          %v857 = vpack.c.b16 %v779, %v773
          %v858 = vpack.c.b16 %v780, %v774
          %v859 = vpack.c.b16 %v781, %v775
          %v860 = vpack.c.b16 %v782, %v776
          %v861 = vpack.c.b16 %v783, %v777
          %v862 = vpack.c.b16 %v784, %v778
          %v863 = vpack.c.b16 %v791, %v785
          %v864 = vpack.c.b16 %v792, %v786
          %v865 = vpack.c.b16 %v793, %v787
          %v866 = vpack.c.b16 %v794, %v788
          %v867 = vpack.c.b16 %v795, %v789
          %v868 = vpack.c.b16 %v796, %v790
          %v869 = vpack.c.b16 %v803, %v797
          %v870 = vpack.c.b16 %v804, %v798
          %v871 = vpack.c.b16 %v805, %v799
          %v872 = vpack.c.b16 %v806, %v800
          %v873 = vpack.c.b16 %v807, %v801
          %v874 = vpack.c.b16 %v808, %v802
          %v875 = vpack.c.b16 %v815, %v809
          %v876 = vpack.c.b16 %v816, %v810
          %v877 = vpack.c.b16 %v817, %v811
          %v878 = vpack.c.b16 %v818, %v812
          %v879 = vpack.c.b16 %v819, %v813
          %v880 = vpack.c.b16 %v820, %v814
          %v881 = vpack.c.b16 %v827, %v821
          %v882 = vpack.c.b16 %v828, %v822
          %v883 = vpack.c.b16 %v829, %v823
          %v884 = vpack.c.b16 %v830, %v824
          %v885 = vpack.c.b16 %v831, %v825
          %v886 = vpack.c.b16 %v832, %v826
          %v887 = vpack.c.b16 %v839, %v833
          %v888 = vpack.c.b16 %v840, %v834
          %v889 = vpack.c.b16 %v841, %v835
          %v890 = vpack.c.b16 %v842, %v836
          %v891 = vpack.c.b16 %v843, %v837
          %v892 = vpack.c.b16 %v844, %v838
          %941 = vmatprep.subr.bf16.mxu0 %v888
          %942 = vmatpush1.bf16.msra.mxu0 %v887
          %943 = vmatprep.subr.bf16.mxu0 %v882
          %944 = vmatpush1.bf16.msra.mxu0 %v881
          %945 = vmatprep.subr.bf16.mxu0 %v876
          %946 = vmatpush1.bf16.msra.mxu0 %v875
          %947 = vmatprep.subr.bf16.mxu0 %v870
          %948 = vmatpush1.bf16.msra.mxu0 %v869
          %949 = vmatprep.subr.bf16.mxu0 %v864
          %950 = vmatpush1.bf16.msra.mxu0 %v863
          %951 = vmatprep.subr.bf16.mxu0 %v858
          %952 = vmatpush1.bf16.msra.mxu0 %v857
          %953 = vmatprep.subr.bf16.mxu0 %v852
          %954 = vmatpush1.bf16.msra.mxu0 %v851
          %955 = vmatprep.subr.bf16.mxu0 %v846
          %956 = vmatpush1.bf16.msra.mxu0 %v845
          %957 = vmatprep.subr.bf16.mxu0 0
          %958 = vmatpush2.bf16.msra.mxu0 0
          %959 = vmatprep.subr.bf16.mxu0 0
          %960 = vmatpush2.bf16.msra.mxu0 0
          %961 = vmatprep.subr.bf16.mxu0 0
          %962 = vmatpush2.bf16.msra.mxu0 0
          %963 = vmatprep.subr.bf16.mxu0 0
          %964 = vmatpush2.bf16.msra.mxu0 0
          %965 = vmatprep.subr.bf16.mxu0 0
          %966 = vmatpush2.bf16.msra.mxu0 0
          %967 = vmatprep.subr.bf16.mxu0 0
          %968 = vmatpush2.bf16.msra.mxu0 0
          %969 = vmatprep.subr.bf16.mxu0 0
          %970 = vmatpush2.bf16.msra.mxu0 0
          %971 = vmatprep.subr.bf16.mxu0 0
          %972 = vmatpush2.bf16.msra.mxu0 0
          %973 = vmatprep.mubr.bf16.mxu0 0
          %974 = vmatmul.mubr.bf16.gmra.mxu0 %v652
          %v975 = vpop.f32.mrf.mxu0
          %v976 = vadd.f32 0.0, %v975
          %v977 = vpop.f32.mrf.mxu0
          %v978 = vadd.f32 0.0, %v977
          %v979 = vpop.f32.mrf.mxu0
          %v980 = vpop.f32.mrf.mxu0
          %981 = vdwg.mxu0
          %982 = vmatprep.subr.bf16.mxu0 %v890
          %983 = vmatpush1.bf16.msra.mxu0 %v889
          %984 = vmatprep.subr.bf16.mxu0 %v884
          %985 = vmatpush1.bf16.msra.mxu0 %v883
          %986 = vmatprep.subr.bf16.mxu0 %v878
          %987 = vmatpush1.bf16.msra.mxu0 %v877
          %988 = vmatprep.subr.bf16.mxu0 %v872
          %989 = vmatpush1.bf16.msra.mxu0 %v871
          %990 = vmatprep.subr.bf16.mxu0 %v866
          %991 = vmatpush1.bf16.msra.mxu0 %v865
          %992 = vmatprep.subr.bf16.mxu0 %v860
          %993 = vmatpush1.bf16.msra.mxu0 %v859
          %994 = vmatprep.subr.bf16.mxu0 %v854
          %995 = vmatpush1.bf16.msra.mxu0 %v853
          %996 = vmatprep.subr.bf16.mxu0 %v848
          %997 = vmatpush1.bf16.msra.mxu0 %v847
          %998 = vmatprep.subr.bf16.mxu0 0
          %999 = vmatpush2.bf16.msra.mxu0 0
          %1000 = vmatprep.subr.bf16.mxu0 0
          %1001 = vmatpush2.bf16.msra.mxu0 0
          %1002 = vmatprep.subr.bf16.mxu0 0
          %1003 = vmatpush2.bf16.msra.mxu0 0
          %1004 = vmatprep.subr.bf16.mxu0 0
          %1005 = vmatpush2.bf16.msra.mxu0 0
          %1006 = vmatprep.subr.bf16.mxu0 0
          %1007 = vmatpush2.bf16.msra.mxu0 0
          %1008 = vmatprep.subr.bf16.mxu0 0
          %1009 = vmatpush2.bf16.msra.mxu0 0
          %1010 = vmatprep.subr.bf16.mxu0 0
          %1011 = vmatpush2.bf16.msra.mxu0 0
          %1012 = vmatprep.subr.bf16.mxu0 0
          %1013 = vmatpush2.bf16.msra.mxu0 0
          %1014 = vmatprep.mubr.bf16.mxu0 0
          %1015 = vmatmul.mubr.bf16.gmra.mxu0 %v652
          %v1016 = vpop.f32.mrf.mxu0
          %v1017 = vadd.f32 0.0, %v1016
          %v1018 = vpop.f32.mrf.mxu0
          %v1019 = vadd.f32 0.0, %v1018
          %v1020 = vpop.f32.mrf.mxu0
          %v1021 = vpop.f32.mrf.mxu0
          %1022 = vdwg.mxu0
          %1023 = vmatprep.subr.bf16.mxu0 %v892
          %1024 = vmatpush1.bf16.msra.mxu0 %v891
          %1025 = vmatprep.subr.bf16.mxu0 %v886
          %1026 = vmatpush1.bf16.msra.mxu0 %v885
          %1027 = vmatprep.subr.bf16.mxu0 %v880
          %1028 = vmatpush1.bf16.msra.mxu0 %v879
          %1029 = vmatprep.subr.bf16.mxu0 %v874
          %1030 = vmatpush1.bf16.msra.mxu0 %v873
          %1031 = vmatprep.subr.bf16.mxu0 %v868
          %1032 = vmatpush1.bf16.msra.mxu0 %v867
          %1033 = vmatprep.subr.bf16.mxu0 %v862
          %1034 = vmatpush1.bf16.msra.mxu0 %v861
          %1035 = vmatprep.subr.bf16.mxu0 %v856
          %1036 = vmatpush1.bf16.msra.mxu0 %v855
          %1037 = vmatprep.subr.bf16.mxu0 %v850
          %1038 = vmatpush1.bf16.msra.mxu0 %v849
          %1039 = vmatprep.subr.bf16.mxu0 0
          %1040 = vmatpush2.bf16.msra.mxu0 0
          %1041 = vmatprep.subr.bf16.mxu0 0
          %1042 = vmatpush2.bf16.msra.mxu0 0
          %1043 = vmatprep.subr.bf16.mxu0 0
          %1044 = vmatpush2.bf16.msra.mxu0 0
          %1045 = vmatprep.subr.bf16.mxu0 0
          %1046 = vmatpush2.bf16.msra.mxu0 0
          %1047 = vmatprep.subr.bf16.mxu0 0
          %1048 = vmatpush2.bf16.msra.mxu0 0
          %1049 = vmatprep.subr.bf16.mxu0 0
          %1050 = vmatpush2.bf16.msra.mxu0 0
          %1051 = vmatprep.subr.bf16.mxu0 0
          %1052 = vmatpush2.bf16.msra.mxu0 0
          %1053 = vmatprep.subr.bf16.mxu0 0
          %1054 = vmatpush2.bf16.msra.mxu0 0
          %1055 = vmatprep.mubr.bf16.mxu0 0
          %1056 = vmatmul.mubr.bf16.gmra.mxu0 %v652
          %v1057 = vpop.f32.mrf.mxu0
          %v1058 = vadd.f32 0.0, %v1057
          %v1059 = vpop.f32.mrf.mxu0
          %v1060 = vadd.f32 0.0, %v1059
          %v1061 = vpop.f32.mrf.mxu0
          %v1062 = vpop.f32.mrf.mxu0
          %1063 = vdwg.mxu0
          %v1064 = vpack.c.bf16 %v976, %v976
          %v1065 = vpack.c.bf16 %v978, %v978
          %v1066 = vpack.c.bf16 %v1017, %v1017
          %v1067 = vpack.c.bf16 %v1019, %v1019
          %v1068 = vpack.c.bf16 %v1058, %v1058
          %v1069 = vpack.c.bf16 %v1060, %v1060
          %v1076 = vunpack.c.l.b16 %v1064
          %v1077 = vunpack.c.l.b16 %v1065
          %v1078 = vunpack.c.l.b16 %v1066
          %v1079 = vunpack.c.l.b16 %v1067
          %v1080 = vunpack.c.l.b16 %v1068
          %v1081 = vunpack.c.l.b16 %v1069
          %v1082 = vpack.c.b16 %v1077, %v1076
          %v1083 = vpack.c.b16 %v1079, %v1078
          %v1084 = vpack.c.b16 %v1081, %v1080
          %1088 = vst [vmem:[#allocation2] sm:$0xff] %v1082
          %1089 = vst [vmem:[#allocation2 + $0x8] sm:$0xff] %v1083
          %1090 = vst [vmem:[#allocation2 + $0x10] sm:$0xff] %v1084
          %v1091 = vld [vmem:[#allocation10] sm:$0xff]
          %v1092 = vld [vmem:[#allocation10 + $0x8] sm:$0xff]
          %v1093 = vld [vmem:[#allocation10 + $0x10] sm:$0xff]
          %v1094 = vld [vmem:[#allocation10 + $0x18] sm:$0xff]
          %v1095 = vld [vmem:[#allocation10 + $0x20] sm:$0xff]
          %v1096 = vld [vmem:[#allocation10 + $0x28] sm:$0xff]
          %v1097 = vld [vmem:[#allocation10 + $0x30] sm:$0xff]
          %v1098 = vld [vmem:[#allocation10 + $0x38] sm:$0xff]
          %v1099 = vld [vmem:[#allocation10 + $0x40] sm:$0xff]
          %v1100 = vld [vmem:[#allocation10 + $0x48] sm:$0xff]
          %v1101 = vld [vmem:[#allocation10 + $0x50] sm:$0xff]
          %v1102 = vld [vmem:[#allocation10 + $0x58] sm:$0xff]
          %v1103 = vld [vmem:[#allocation10 + $0x60] sm:$0xff]
          %v1104 = vld [vmem:[#allocation10 + $0x68] sm:$0xff]
          %v1105 = vld [vmem:[#allocation10 + $0x70] sm:$0xff]
          %v1106 = vld [vmem:[#allocation10 + $0x78] sm:$0xff]
          %v1107 = vld [vmem:[#allocation10 + $0x80] sm:$0xff]
          %v1108 = vld [vmem:[#allocation10 + $0x88] sm:$0xff]
          %v1109 = vld [vmem:[#allocation10 + $0x90] sm:$0xff]
          %v1110 = vld [vmem:[#allocation10 + $0x98] sm:$0xff]
          %v1111 = vld [vmem:[#allocation10 + $0xa0] sm:$0xff]
          %v1112 = vld [vmem:[#allocation10 + $0xa8] sm:$0xff]
          %v1113 = vld [vmem:[#allocation10 + $0xb0] sm:$0xff]
          %v1114 = vld [vmem:[#allocation10 + $0xb8] sm:$0xff]
          %v1115 = vld [vmem:[#allocation10 + $0xc0] sm:$0xff]
          %v1116 = vld [vmem:[#allocation10 + $0xc8] sm:$0xff]
          %v1117 = vld [vmem:[#allocation10 + $0xd0] sm:$0xff]
          %v1118 = vld [vmem:[#allocation10 + $0xd8] sm:$0xff]
          %v1119 = vld [vmem:[#allocation10 + $0xe0] sm:$0xff]
          %v1120 = vld [vmem:[#allocation10 + $0xe8] sm:$0xff]
          %v1121 = vld [vmem:[#allocation10 + $0xf0] sm:$0xff]
          %v1122 = vld [vmem:[#allocation10 + $0xf8] sm:$0xff]
          %v1123 = vld [vmem:[#allocation10 + $0x100] sm:$0xff]
          %v1124 = vld [vmem:[#allocation10 + $0x108] sm:$0xff]
          %v1125 = vld [vmem:[#allocation10 + $0x110] sm:$0xff]
          %v1126 = vld [vmem:[#allocation10 + $0x118] sm:$0xff]
          %v1127 = vld [vmem:[#allocation10 + $0x120] sm:$0xff]
          %v1128 = vld [vmem:[#allocation10 + $0x128] sm:$0xff]
          %v1129 = vld [vmem:[#allocation10 + $0x130] sm:$0xff]
          %v1130 = vld [vmem:[#allocation10 + $0x138] sm:$0xff]
          %v1131 = vld [vmem:[#allocation10 + $0x140] sm:$0xff]
          %v1132 = vld [vmem:[#allocation10 + $0x148] sm:$0xff]
          %v1133 = vld [vmem:[#allocation10 + $0x150] sm:$0xff]
          %v1134 = vld [vmem:[#allocation10 + $0x158] sm:$0xff]
          %v1135 = vld [vmem:[#allocation10 + $0x160] sm:$0xff]
          %v1136 = vld [vmem:[#allocation10 + $0x168] sm:$0xff]
          %v1137 = vld [vmem:[#allocation10 + $0x170] sm:$0xff]
          %v1138 = vld [vmem:[#allocation10 + $0x178] sm:$0xff]
          %v1187 = vunpack.c.l.b16 %v1091
          %v1188 = vunpack.c.h.b16 %v1091
          %v1189 = vunpack.c.l.b16 %v1092
          %v1190 = vunpack.c.h.b16 %v1092
          %v1191 = vunpack.c.l.b16 %v1093
          %v1192 = vunpack.c.h.b16 %v1093
          %v1193 = vunpack.c.l.b16 %v1094
          %v1194 = vunpack.c.h.b16 %v1094
          %v1195 = vunpack.c.l.b16 %v1095
          %v1196 = vunpack.c.h.b16 %v1095
          %v1197 = vunpack.c.l.b16 %v1096
          %v1198 = vunpack.c.h.b16 %v1096
          %v1199 = vunpack.c.l.b16 %v1097
          %v1200 = vunpack.c.h.b16 %v1097
          %v1201 = vunpack.c.l.b16 %v1098
          %v1202 = vunpack.c.h.b16 %v1098
          %v1203 = vunpack.c.l.b16 %v1099
          %v1204 = vunpack.c.h.b16 %v1099
          %v1205 = vunpack.c.l.b16 %v1100
          %v1206 = vunpack.c.h.b16 %v1100
          %v1207 = vunpack.c.l.b16 %v1101
          %v1208 = vunpack.c.h.b16 %v1101
          %v1209 = vunpack.c.l.b16 %v1102
          %v1210 = vunpack.c.h.b16 %v1102
          %v1211 = vunpack.c.l.b16 %v1103
          %v1212 = vunpack.c.h.b16 %v1103
          %v1213 = vunpack.c.l.b16 %v1104
          %v1214 = vunpack.c.h.b16 %v1104
          %v1215 = vunpack.c.l.b16 %v1105
          %v1216 = vunpack.c.h.b16 %v1105
          %v1217 = vunpack.c.l.b16 %v1106
          %v1218 = vunpack.c.h.b16 %v1106
          %v1219 = vunpack.c.l.b16 %v1107
          %v1220 = vunpack.c.h.b16 %v1107
          %v1221 = vunpack.c.l.b16 %v1108
          %v1222 = vunpack.c.h.b16 %v1108
          %v1223 = vunpack.c.l.b16 %v1109
          %v1224 = vunpack.c.h.b16 %v1109
          %v1225 = vunpack.c.l.b16 %v1110
          %v1226 = vunpack.c.h.b16 %v1110
          %v1227 = vunpack.c.l.b16 %v1111
          %v1228 = vunpack.c.h.b16 %v1111
          %v1229 = vunpack.c.l.b16 %v1112
          %v1230 = vunpack.c.h.b16 %v1112
          %v1231 = vunpack.c.l.b16 %v1113
          %v1232 = vunpack.c.h.b16 %v1113
          %v1233 = vunpack.c.l.b16 %v1114
          %v1234 = vunpack.c.h.b16 %v1114
          %v1235 = vunpack.c.l.b16 %v1115
          %v1236 = vunpack.c.h.b16 %v1115
          %v1237 = vunpack.c.l.b16 %v1116
          %v1238 = vunpack.c.h.b16 %v1116
          %v1239 = vunpack.c.l.b16 %v1117
          %v1240 = vunpack.c.h.b16 %v1117
          %v1241 = vunpack.c.l.b16 %v1118
          %v1242 = vunpack.c.h.b16 %v1118
          %v1243 = vunpack.c.l.b16 %v1119
          %v1244 = vunpack.c.h.b16 %v1119
          %v1245 = vunpack.c.l.b16 %v1120
          %v1246 = vunpack.c.h.b16 %v1120
          %v1247 = vunpack.c.l.b16 %v1121
          %v1248 = vunpack.c.h.b16 %v1121
          %v1249 = vunpack.c.l.b16 %v1122
          %v1250 = vunpack.c.h.b16 %v1122
          %v1251 = vunpack.c.l.b16 %v1123
          %v1252 = vunpack.c.h.b16 %v1123
          %v1253 = vunpack.c.l.b16 %v1124
          %v1254 = vunpack.c.h.b16 %v1124
          %v1255 = vunpack.c.l.b16 %v1125
          %v1256 = vunpack.c.h.b16 %v1125
          %v1257 = vunpack.c.l.b16 %v1126
          %v1258 = vunpack.c.h.b16 %v1126
          %v1259 = vunpack.c.l.b16 %v1127
          %v1260 = vunpack.c.h.b16 %v1127
          %v1261 = vunpack.c.l.b16 %v1128
          %v1262 = vunpack.c.h.b16 %v1128
          %v1263 = vunpack.c.l.b16 %v1129
          %v1264 = vunpack.c.h.b16 %v1129
          %v1265 = vunpack.c.l.b16 %v1130
          %v1266 = vunpack.c.h.b16 %v1130
          %v1267 = vunpack.c.l.b16 %v1131
          %v1268 = vunpack.c.h.b16 %v1131
          %v1269 = vunpack.c.l.b16 %v1132
          %v1270 = vunpack.c.h.b16 %v1132
          %v1271 = vunpack.c.l.b16 %v1133
          %v1272 = vunpack.c.h.b16 %v1133
          %v1273 = vunpack.c.l.b16 %v1134
          %v1274 = vunpack.c.h.b16 %v1134
          %v1275 = vunpack.c.l.b16 %v1135
          %v1276 = vunpack.c.h.b16 %v1135
          %v1277 = vunpack.c.l.b16 %v1136
          %v1278 = vunpack.c.h.b16 %v1136
          %v1279 = vunpack.c.l.b16 %v1137
          %v1280 = vunpack.c.h.b16 %v1137
          %v1281 = vunpack.c.l.b16 %v1138
          %v1282 = vunpack.c.h.b16 %v1138
          %v1283 = vpack.c.b16 %v1193, %v1187
          %v1284 = vpack.c.b16 %v1194, %v1188
          %v1285 = vpack.c.b16 %v1195, %v1189
          %v1286 = vpack.c.b16 %v1196, %v1190
          %v1287 = vpack.c.b16 %v1197, %v1191
          %v1288 = vpack.c.b16 %v1198, %v1192
          %v1289 = vpack.c.b16 %v1205, %v1199
          %v1290 = vpack.c.b16 %v1206, %v1200
          %v1291 = vpack.c.b16 %v1207, %v1201
          %v1292 = vpack.c.b16 %v1208, %v1202
          %v1293 = vpack.c.b16 %v1209, %v1203
          %v1294 = vpack.c.b16 %v1210, %v1204
          %v1295 = vpack.c.b16 %v1217, %v1211
          %v1296 = vpack.c.b16 %v1218, %v1212
          %v1297 = vpack.c.b16 %v1219, %v1213
          %v1298 = vpack.c.b16 %v1220, %v1214
          %v1299 = vpack.c.b16 %v1221, %v1215
          %v1300 = vpack.c.b16 %v1222, %v1216
          %v1301 = vpack.c.b16 %v1229, %v1223
          %v1302 = vpack.c.b16 %v1230, %v1224
          %v1303 = vpack.c.b16 %v1231, %v1225
          %v1304 = vpack.c.b16 %v1232, %v1226
          %v1305 = vpack.c.b16 %v1233, %v1227
          %v1306 = vpack.c.b16 %v1234, %v1228
          %v1307 = vpack.c.b16 %v1241, %v1235
          %v1308 = vpack.c.b16 %v1242, %v1236
          %v1309 = vpack.c.b16 %v1243, %v1237
          %v1310 = vpack.c.b16 %v1244, %v1238
          %v1311 = vpack.c.b16 %v1245, %v1239
          %v1312 = vpack.c.b16 %v1246, %v1240
          %v1313 = vpack.c.b16 %v1253, %v1247
          %v1314 = vpack.c.b16 %v1254, %v1248
          %v1315 = vpack.c.b16 %v1255, %v1249
          %v1316 = vpack.c.b16 %v1256, %v1250
          %v1317 = vpack.c.b16 %v1257, %v1251
          %v1318 = vpack.c.b16 %v1258, %v1252
          %v1319 = vpack.c.b16 %v1265, %v1259
          %v1320 = vpack.c.b16 %v1266, %v1260
          %v1321 = vpack.c.b16 %v1267, %v1261
          %v1322 = vpack.c.b16 %v1268, %v1262
          %v1323 = vpack.c.b16 %v1269, %v1263
          %v1324 = vpack.c.b16 %v1270, %v1264
          %v1325 = vpack.c.b16 %v1277, %v1271
          %v1326 = vpack.c.b16 %v1278, %v1272
          %v1327 = vpack.c.b16 %v1279, %v1273
          %v1328 = vpack.c.b16 %v1280, %v1274
          %v1329 = vpack.c.b16 %v1281, %v1275
          %v1330 = vpack.c.b16 %v1282, %v1276
          %1379 = vmatprep.subr.bf16.mxu0 %v1326
          %1380 = vmatpush1.bf16.msra.mxu0 %v1325
          %1381 = vmatprep.subr.bf16.mxu0 %v1320
          %1382 = vmatpush1.bf16.msra.mxu0 %v1319
          %1383 = vmatprep.subr.bf16.mxu0 %v1314
          %1384 = vmatpush1.bf16.msra.mxu0 %v1313
          %1385 = vmatprep.subr.bf16.mxu0 %v1308
          %1386 = vmatpush1.bf16.msra.mxu0 %v1307
          %1387 = vmatprep.subr.bf16.mxu0 %v1302
          %1388 = vmatpush1.bf16.msra.mxu0 %v1301
          %1389 = vmatprep.subr.bf16.mxu0 %v1296
          %1390 = vmatpush1.bf16.msra.mxu0 %v1295
          %1391 = vmatprep.subr.bf16.mxu0 %v1290
          %1392 = vmatpush1.bf16.msra.mxu0 %v1289
          %1393 = vmatprep.subr.bf16.mxu0 %v1284
          %1394 = vmatpush1.bf16.msra.mxu0 %v1283
          %1395 = vmatprep.subr.bf16.mxu0 0
          %1396 = vmatpush2.bf16.msra.mxu0 0
          %1397 = vmatprep.subr.bf16.mxu0 0
          %1398 = vmatpush2.bf16.msra.mxu0 0
          %1399 = vmatprep.subr.bf16.mxu0 0
          %1400 = vmatpush2.bf16.msra.mxu0 0
          %1401 = vmatprep.subr.bf16.mxu0 0
          %1402 = vmatpush2.bf16.msra.mxu0 0
          %1403 = vmatprep.subr.bf16.mxu0 0
          %1404 = vmatpush2.bf16.msra.mxu0 0
          %1405 = vmatprep.subr.bf16.mxu0 0
          %1406 = vmatpush2.bf16.msra.mxu0 0
          %1407 = vmatprep.subr.bf16.mxu0 0
          %1408 = vmatpush2.bf16.msra.mxu0 0
          %1409 = vmatprep.subr.bf16.mxu0 0
          %1410 = vmatpush2.bf16.msra.mxu0 0
          %1411 = vmatprep.mubr.bf16.mxu0 0
          %1412 = vmatmul.mubr.bf16.gmra.mxu0 %v652
          %v1413 = vpop.f32.mrf.mxu0
          %v1414 = vadd.f32 0.0, %v1413
          %v1415 = vpop.f32.mrf.mxu0
          %v1416 = vadd.f32 0.0, %v1415
          %v1417 = vpop.f32.mrf.mxu0
          %v1418 = vpop.f32.mrf.mxu0
          %1419 = vdwg.mxu0
          %1420 = vmatprep.subr.bf16.mxu0 %v1328
          %1421 = vmatpush1.bf16.msra.mxu0 %v1327
          %1422 = vmatprep.subr.bf16.mxu0 %v1322
          %1423 = vmatpush1.bf16.msra.mxu0 %v1321
          %1424 = vmatprep.subr.bf16.mxu0 %v1316
          %1425 = vmatpush1.bf16.msra.mxu0 %v1315
          %1426 = vmatprep.subr.bf16.mxu0 %v1310
          %1427 = vmatpush1.bf16.msra.mxu0 %v1309
          %1428 = vmatprep.subr.bf16.mxu0 %v1304
          %1429 = vmatpush1.bf16.msra.mxu0 %v1303
          %1430 = vmatprep.subr.bf16.mxu0 %v1298
          %1431 = vmatpush1.bf16.msra.mxu0 %v1297
          %1432 = vmatprep.subr.bf16.mxu0 %v1292
          %1433 = vmatpush1.bf16.msra.mxu0 %v1291
          %1434 = vmatprep.subr.bf16.mxu0 %v1286
          %1435 = vmatpush1.bf16.msra.mxu0 %v1285
          %1436 = vmatprep.subr.bf16.mxu0 0
          %1437 = vmatpush2.bf16.msra.mxu0 0
          %1438 = vmatprep.subr.bf16.mxu0 0
          %1439 = vmatpush2.bf16.msra.mxu0 0
          %1440 = vmatprep.subr.bf16.mxu0 0
          %1441 = vmatpush2.bf16.msra.mxu0 0
          %1442 = vmatprep.subr.bf16.mxu0 0
          %1443 = vmatpush2.bf16.msra.mxu0 0
          %1444 = vmatprep.subr.bf16.mxu0 0
          %1445 = vmatpush2.bf16.msra.mxu0 0
          %1446 = vmatprep.subr.bf16.mxu0 0
          %1447 = vmatpush2.bf16.msra.mxu0 0
          %1448 = vmatprep.subr.bf16.mxu0 0
          %1449 = vmatpush2.bf16.msra.mxu0 0
          %1450 = vmatprep.subr.bf16.mxu0 0
          %1451 = vmatpush2.bf16.msra.mxu0 0
          %1452 = vmatprep.mubr.bf16.mxu0 0
          %1453 = vmatmul.mubr.bf16.gmra.mxu0 %v652
          %v1454 = vpop.f32.mrf.mxu0
          %v1455 = vadd.f32 0.0, %v1454
          %v1456 = vpop.f32.mrf.mxu0
          %v1457 = vadd.f32 0.0, %v1456
          %v1458 = vpop.f32.mrf.mxu0
          %v1459 = vpop.f32.mrf.mxu0
          %1460 = vdwg.mxu0
          %1461 = vmatprep.subr.bf16.mxu0 %v1330
          %1462 = vmatpush1.bf16.msra.mxu0 %v1329
          %1463 = vmatprep.subr.bf16.mxu0 %v1324
          %1464 = vmatpush1.bf16.msra.mxu0 %v1323
          %1465 = vmatprep.subr.bf16.mxu0 %v1318
          %1466 = vmatpush1.bf16.msra.mxu0 %v1317
          %1467 = vmatprep.subr.bf16.mxu0 %v1312
          %1468 = vmatpush1.bf16.msra.mxu0 %v1311
          %1469 = vmatprep.subr.bf16.mxu0 %v1306
          %1470 = vmatpush1.bf16.msra.mxu0 %v1305
          %1471 = vmatprep.subr.bf16.mxu0 %v1300
          %1472 = vmatpush1.bf16.msra.mxu0 %v1299
          %1473 = vmatprep.subr.bf16.mxu0 %v1294
          %1474 = vmatpush1.bf16.msra.mxu0 %v1293
          %1475 = vmatprep.subr.bf16.mxu0 %v1288
          %1476 = vmatpush1.bf16.msra.mxu0 %v1287
          %1477 = vmatprep.subr.bf16.mxu0 0
          %1478 = vmatpush2.bf16.msra.mxu0 0
          %1479 = vmatprep.subr.bf16.mxu0 0
          %1480 = vmatpush2.bf16.msra.mxu0 0
          %1481 = vmatprep.subr.bf16.mxu0 0
          %1482 = vmatpush2.bf16.msra.mxu0 0
          %1483 = vmatprep.subr.bf16.mxu0 0
          %1484 = vmatpush2.bf16.msra.mxu0 0
          %1485 = vmatprep.subr.bf16.mxu0 0
          %1486 = vmatpush2.bf16.msra.mxu0 0
          %1487 = vmatprep.subr.bf16.mxu0 0
          %1488 = vmatpush2.bf16.msra.mxu0 0
          %1489 = vmatprep.subr.bf16.mxu0 0
          %1490 = vmatpush2.bf16.msra.mxu0 0
          %1491 = vmatprep.subr.bf16.mxu0 0
          %1492 = vmatpush2.bf16.msra.mxu0 0
          %1493 = vmatprep.mubr.bf16.mxu0 0
          %1494 = vmatmul.mubr.bf16.gmra.mxu0 %v652
          %v1495 = vpop.f32.mrf.mxu0
          %v1496 = vadd.f32 0.0, %v1495
          %v1497 = vpop.f32.mrf.mxu0
          %v1498 = vadd.f32 0.0, %v1497
          %v1499 = vpop.f32.mrf.mxu0
          %v1500 = vpop.f32.mrf.mxu0
          %1501 = vdwg.mxu0
          %v1502 = vpack.c.bf16 %v1414, %v1414
          %v1503 = vpack.c.bf16 %v1416, %v1416
          %v1504 = vpack.c.bf16 %v1455, %v1455
          %v1505 = vpack.c.bf16 %v1457, %v1457
          %v1506 = vpack.c.bf16 %v1496, %v1496
          %v1507 = vpack.c.bf16 %v1498, %v1498
          %v1514 = vunpack.c.l.b16 %v1502
          %v1515 = vunpack.c.l.b16 %v1503
          %v1516 = vunpack.c.l.b16 %v1504
          %v1517 = vunpack.c.l.b16 %v1505
          %v1518 = vunpack.c.l.b16 %v1506
          %v1519 = vunpack.c.l.b16 %v1507
          %v1520 = vpack.c.b16 %v1515, %v1514
          %v1521 = vpack.c.b16 %v1517, %v1516
          %v1522 = vpack.c.b16 %v1519, %v1518
          %1526 = vst [vmem:[#allocation3] sm:$0xff] %v1520
          %1527 = vst [vmem:[#allocation3 + $0x8] sm:$0xff] %v1521
          %1528 = vst [vmem:[#allocation3 + $0x10] sm:$0xff] %v1522
        $region112: #{tpu_custom_call.1} parent=79 // pred_fallthru
          _
        %s1529 = smul.u32 %s40, 8
        %s1530 = scalar_lea.vmem %s540, %s1529 [#allocation4]
        %v1531 = vld [vmem:[%s1530] sm:$0xff]
        %1532 = vadd.xlane.f32.xlu0 %v1531
        %v1533 = vpop.xlane.xlu0 %1532
        %v1534 = vmul.f32 %v1533, 0.01
        %v1535 = vsub.f32 %v1531, %v1534
        %v1537 = vlaneseq
        %v1538 = vshrl.u32 %v1537, 7
        %v1539 = vsub.s32 0, %v1538
        %v1540 = vrot.slane %v612, %v1539
        %v1542 = vmul.f32 %v1535, %v1540
        %v1543 = vmul.f32 %v1542, %v1542
        %1544 = vadd.xlane.f32.xlu0 %v1543
        %v1545 = vpop.xlane.xlu0 %1544
        %v1546 = vmul.f32 %v1545, 0.01
        %v1547 = vadd.f32 %v1546, 1e-05
        %v1548 = vrsqrt.pop %v1547
        %v1549 = vmul.f32 %v1542, %v1548
        %v1551 = vlaneseq
        %v1552 = vshrl.u32 %v1551, 7
        %v1553 = vsub.s32 0, %v1552
        %v1554 = vrot.slane %v613, %v1553
        %v1556 = vmul.f32 %v1549, %v1554
        %v1558 = vlaneseq
        %v1559 = vshrl.u32 %v1558, 7
        %v1560 = vsub.s32 0, %v1559
        %v1561 = vrot.slane %v614, %v1560
        %v1563 = vadd.f32 %v1556, %v1561
        %v1564 = vpack.c.bf16 %v1563, %v1563
        %v1565 = vld [vmem:[#allocation7] sm:$0xff]
        %v1566 = vld [vmem:[#allocation7 + $0x8] sm:$0xff]
        %v1567 = vld [vmem:[#allocation7 + $0x10] sm:$0xff]
        %v1568 = vld [vmem:[#allocation7 + $0x18] sm:$0xff]
        %v1569 = vld [vmem:[#allocation7 + $0x20] sm:$0xff]
        %v1570 = vld [vmem:[#allocation7 + $0x28] sm:$0xff]
        %v1571 = vld [vmem:[#allocation7 + $0x30] sm:$0xff]
        %v1572 = vld [vmem:[#allocation7 + $0x38] sm:$0xff]
        %v1573 = vld [vmem:[#allocation7 + $0x40] sm:$0xff]
        %v1574 = vld [vmem:[#allocation7 + $0x48] sm:$0xff]
        %v1575 = vld [vmem:[#allocation7 + $0x50] sm:$0xff]
        %v1576 = vld [vmem:[#allocation7 + $0x58] sm:$0xff]
        %v1577 = vld [vmem:[#allocation7 + $0x60] sm:$0xff]
        %v1578 = vld [vmem:[#allocation7 + $0x68] sm:$0xff]
        %v1579 = vld [vmem:[#allocation7 + $0x70] sm:$0xff]
        %v1580 = vld [vmem:[#allocation7 + $0x78] sm:$0xff]
        %v1581 = vld [vmem:[#allocation7 + $0x80] sm:$0xff]
        %v1582 = vld [vmem:[#allocation7 + $0x88] sm:$0xff]
        %v1583 = vld [vmem:[#allocation7 + $0x90] sm:$0xff]
        %v1584 = vld [vmem:[#allocation7 + $0x98] sm:$0xff]
        %v1585 = vld [vmem:[#allocation7 + $0xa0] sm:$0xff]
        %v1586 = vld [vmem:[#allocation7 + $0xa8] sm:$0xff]
        %v1587 = vld [vmem:[#allocation7 + $0xb0] sm:$0xff]
        %v1588 = vld [vmem:[#allocation7 + $0xb8] sm:$0xff]
        %v1589 = vld [vmem:[#allocation7 + $0xc0] sm:$0xff]
        %v1590 = vld [vmem:[#allocation7 + $0xc8] sm:$0xff]
        %v1591 = vld [vmem:[#allocation7 + $0xd0] sm:$0xff]
        %v1592 = vld [vmem:[#allocation7 + $0xd8] sm:$0xff]
        %v1593 = vld [vmem:[#allocation7 + $0xe0] sm:$0xff]
        %v1594 = vld [vmem:[#allocation7 + $0xe8] sm:$0xff]
        %v1595 = vld [vmem:[#allocation7 + $0xf0] sm:$0xff]
        %v1596 = vld [vmem:[#allocation7 + $0xf8] sm:$0xff]
        %v1597 = vld [vmem:[#allocation7 + $0x100] sm:$0xff]
        %v1598 = vld [vmem:[#allocation7 + $0x108] sm:$0xff]
        %v1599 = vld [vmem:[#allocation7 + $0x110] sm:$0xff]
        %v1600 = vld [vmem:[#allocation7 + $0x118] sm:$0xff]
        %v1601 = vld [vmem:[#allocation7 + $0x120] sm:$0xff]
        %v1602 = vld [vmem:[#allocation7 + $0x128] sm:$0xff]
        %v1603 = vld [vmem:[#allocation7 + $0x130] sm:$0xff]
        %v1604 = vld [vmem:[#allocation7 + $0x138] sm:$0xff]
        %v1605 = vld [vmem:[#allocation7 + $0x140] sm:$0xff]
        %v1606 = vld [vmem:[#allocation7 + $0x148] sm:$0xff]
        %v1607 = vld [vmem:[#allocation7 + $0x150] sm:$0xff]
        %v1608 = vld [vmem:[#allocation7 + $0x158] sm:$0xff]
        %v1609 = vld [vmem:[#allocation7 + $0x160] sm:$0xff]
        %v1610 = vld [vmem:[#allocation7 + $0x168] sm:$0xff]
        %v1611 = vld [vmem:[#allocation7 + $0x170] sm:$0xff]
        %v1612 = vld [vmem:[#allocation7 + $0x178] sm:$0xff]
        %v1661 = vunpack.c.l.b16 %v1565
        %v1662 = vunpack.c.h.b16 %v1565
        %v1663 = vunpack.c.l.b16 %v1566
        %v1664 = vunpack.c.h.b16 %v1566
        %v1665 = vunpack.c.l.b16 %v1567
        %v1666 = vunpack.c.h.b16 %v1567
        %v1667 = vunpack.c.l.b16 %v1568
        %v1668 = vunpack.c.h.b16 %v1568
        %v1669 = vunpack.c.l.b16 %v1569
        %v1670 = vunpack.c.h.b16 %v1569
        %v1671 = vunpack.c.l.b16 %v1570
        %v1672 = vunpack.c.h.b16 %v1570
        %v1673 = vunpack.c.l.b16 %v1571
        %v1674 = vunpack.c.h.b16 %v1571
        %v1675 = vunpack.c.l.b16 %v1572
        %v1676 = vunpack.c.h.b16 %v1572
        %v1677 = vunpack.c.l.b16 %v1573
        %v1678 = vunpack.c.h.b16 %v1573
        %v1679 = vunpack.c.l.b16 %v1574
        %v1680 = vunpack.c.h.b16 %v1574
        %v1681 = vunpack.c.l.b16 %v1575
        %v1682 = vunpack.c.h.b16 %v1575
        %v1683 = vunpack.c.l.b16 %v1576
        %v1684 = vunpack.c.h.b16 %v1576
        %v1685 = vunpack.c.l.b16 %v1577
        %v1686 = vunpack.c.h.b16 %v1577
        %v1687 = vunpack.c.l.b16 %v1578
        %v1688 = vunpack.c.h.b16 %v1578
        %v1689 = vunpack.c.l.b16 %v1579
        %v1690 = vunpack.c.h.b16 %v1579
        %v1691 = vunpack.c.l.b16 %v1580
        %v1692 = vunpack.c.h.b16 %v1580
        %v1693 = vunpack.c.l.b16 %v1581
        %v1694 = vunpack.c.h.b16 %v1581
        %v1695 = vunpack.c.l.b16 %v1582
        %v1696 = vunpack.c.h.b16 %v1582
        %v1697 = vunpack.c.l.b16 %v1583
        %v1698 = vunpack.c.h.b16 %v1583
        %v1699 = vunpack.c.l.b16 %v1584
        %v1700 = vunpack.c.h.b16 %v1584
        %v1701 = vunpack.c.l.b16 %v1585
        %v1702 = vunpack.c.h.b16 %v1585
        %v1703 = vunpack.c.l.b16 %v1586
        %v1704 = vunpack.c.h.b16 %v1586
        %v1705 = vunpack.c.l.b16 %v1587
        %v1706 = vunpack.c.h.b16 %v1587
        %v1707 = vunpack.c.l.b16 %v1588
        %v1708 = vunpack.c.h.b16 %v1588
        %v1709 = vunpack.c.l.b16 %v1589
        %v1710 = vunpack.c.h.b16 %v1589
        %v1711 = vunpack.c.l.b16 %v1590
        %v1712 = vunpack.c.h.b16 %v1590
        %v1713 = vunpack.c.l.b16 %v1591
        %v1714 = vunpack.c.h.b16 %v1591
        %v1715 = vunpack.c.l.b16 %v1592
        %v1716 = vunpack.c.h.b16 %v1592
        %v1717 = vunpack.c.l.b16 %v1593
        %v1718 = vunpack.c.h.b16 %v1593
        %v1719 = vunpack.c.l.b16 %v1594
        %v1720 = vunpack.c.h.b16 %v1594
        %v1721 = vunpack.c.l.b16 %v1595
        %v1722 = vunpack.c.h.b16 %v1595
        %v1723 = vunpack.c.l.b16 %v1596
        %v1724 = vunpack.c.h.b16 %v1596
        %v1725 = vunpack.c.l.b16 %v1597
        %v1726 = vunpack.c.h.b16 %v1597
        %v1727 = vunpack.c.l.b16 %v1598
        %v1728 = vunpack.c.h.b16 %v1598
        %v1729 = vunpack.c.l.b16 %v1599
        %v1730 = vunpack.c.h.b16 %v1599
        %v1731 = vunpack.c.l.b16 %v1600
        %v1732 = vunpack.c.h.b16 %v1600
        %v1733 = vunpack.c.l.b16 %v1601
        %v1734 = vunpack.c.h.b16 %v1601
        %v1735 = vunpack.c.l.b16 %v1602
        %v1736 = vunpack.c.h.b16 %v1602
        %v1737 = vunpack.c.l.b16 %v1603
        %v1738 = vunpack.c.h.b16 %v1603
        %v1739 = vunpack.c.l.b16 %v1604
        %v1740 = vunpack.c.h.b16 %v1604
        %v1741 = vunpack.c.l.b16 %v1605
        %v1742 = vunpack.c.h.b16 %v1605
        %v1743 = vunpack.c.l.b16 %v1606
        %v1744 = vunpack.c.h.b16 %v1606
        %v1745 = vunpack.c.l.b16 %v1607
        %v1746 = vunpack.c.h.b16 %v1607
        %v1747 = vunpack.c.l.b16 %v1608
        %v1748 = vunpack.c.h.b16 %v1608
        %v1749 = vunpack.c.l.b16 %v1609
        %v1750 = vunpack.c.h.b16 %v1609
        %v1751 = vunpack.c.l.b16 %v1610
        %v1752 = vunpack.c.h.b16 %v1610
        %v1753 = vunpack.c.l.b16 %v1611
        %v1754 = vunpack.c.h.b16 %v1611
        %v1755 = vunpack.c.l.b16 %v1612
        %v1756 = vunpack.c.h.b16 %v1612
        %v1757 = vpack.c.b16 %v1667, %v1661
        %v1758 = vpack.c.b16 %v1668, %v1662
        %v1759 = vpack.c.b16 %v1669, %v1663
        %v1760 = vpack.c.b16 %v1670, %v1664
        %v1761 = vpack.c.b16 %v1671, %v1665
        %v1762 = vpack.c.b16 %v1672, %v1666
        %v1763 = vpack.c.b16 %v1679, %v1673
        %v1764 = vpack.c.b16 %v1680, %v1674
        %v1765 = vpack.c.b16 %v1681, %v1675
        %v1766 = vpack.c.b16 %v1682, %v1676
        %v1767 = vpack.c.b16 %v1683, %v1677
        %v1768 = vpack.c.b16 %v1684, %v1678
        %v1769 = vpack.c.b16 %v1691, %v1685
        %v1770 = vpack.c.b16 %v1692, %v1686
        %v1771 = vpack.c.b16 %v1693, %v1687
        %v1772 = vpack.c.b16 %v1694, %v1688
        %v1773 = vpack.c.b16 %v1695, %v1689
        %v1774 = vpack.c.b16 %v1696, %v1690
        %v1775 = vpack.c.b16 %v1703, %v1697
        %v1776 = vpack.c.b16 %v1704, %v1698
        %v1777 = vpack.c.b16 %v1705, %v1699
        %v1778 = vpack.c.b16 %v1706, %v1700
        %v1779 = vpack.c.b16 %v1707, %v1701
        %v1780 = vpack.c.b16 %v1708, %v1702
        %v1781 = vpack.c.b16 %v1715, %v1709
        %v1782 = vpack.c.b16 %v1716, %v1710
        %v1783 = vpack.c.b16 %v1717, %v1711
        %v1784 = vpack.c.b16 %v1718, %v1712
        %v1785 = vpack.c.b16 %v1719, %v1713
        %v1786 = vpack.c.b16 %v1720, %v1714
        %v1787 = vpack.c.b16 %v1727, %v1721
        %v1788 = vpack.c.b16 %v1728, %v1722
        %v1789 = vpack.c.b16 %v1729, %v1723
        %v1790 = vpack.c.b16 %v1730, %v1724
        %v1791 = vpack.c.b16 %v1731, %v1725
        %v1792 = vpack.c.b16 %v1732, %v1726
        %v1793 = vpack.c.b16 %v1739, %v1733
        %v1794 = vpack.c.b16 %v1740, %v1734
        %v1795 = vpack.c.b16 %v1741, %v1735
        %v1796 = vpack.c.b16 %v1742, %v1736
        %v1797 = vpack.c.b16 %v1743, %v1737
        %v1798 = vpack.c.b16 %v1744, %v1738
        %v1799 = vpack.c.b16 %v1751, %v1745
        %v1800 = vpack.c.b16 %v1752, %v1746
        %v1801 = vpack.c.b16 %v1753, %v1747
        %v1802 = vpack.c.b16 %v1754, %v1748
        %v1803 = vpack.c.b16 %v1755, %v1749
        %v1804 = vpack.c.b16 %v1756, %v1750
        %1853 = vmatprep.subr.bf16.mxu0 %v1800
        %1854 = vmatpush1.bf16.msra.mxu0 %v1799
        %1855 = vmatprep.subr.bf16.mxu0 %v1794
        %1856 = vmatpush1.bf16.msra.mxu0 %v1793
        %1857 = vmatprep.subr.bf16.mxu0 %v1788
        %1858 = vmatpush1.bf16.msra.mxu0 %v1787
        %1859 = vmatprep.subr.bf16.mxu0 %v1782
        %1860 = vmatpush1.bf16.msra.mxu0 %v1781
        %1861 = vmatprep.subr.bf16.mxu0 %v1776
        %1862 = vmatpush1.bf16.msra.mxu0 %v1775
        %1863 = vmatprep.subr.bf16.mxu0 %v1770
        %1864 = vmatpush1.bf16.msra.mxu0 %v1769
        %1865 = vmatprep.subr.bf16.mxu0 %v1764
        %1866 = vmatpush1.bf16.msra.mxu0 %v1763
        %1867 = vmatprep.subr.bf16.mxu0 %v1758
        %1868 = vmatpush1.bf16.msra.mxu0 %v1757
        %1869 = vmatprep.subr.bf16.mxu0 0
        %1870 = vmatpush2.bf16.msra.mxu0 0
        %1871 = vmatprep.subr.bf16.mxu0 0
        %1872 = vmatpush2.bf16.msra.mxu0 0
        %1873 = vmatprep.subr.bf16.mxu0 0
        %1874 = vmatpush2.bf16.msra.mxu0 0
        %1875 = vmatprep.subr.bf16.mxu0 0
        %1876 = vmatpush2.bf16.msra.mxu0 0
        %1877 = vmatprep.subr.bf16.mxu0 0
        %1878 = vmatpush2.bf16.msra.mxu0 0
        %1879 = vmatprep.subr.bf16.mxu0 0
        %1880 = vmatpush2.bf16.msra.mxu0 0
        %1881 = vmatprep.subr.bf16.mxu0 0
        %1882 = vmatpush2.bf16.msra.mxu0 0
        %1883 = vmatprep.subr.bf16.mxu0 0
        %1884 = vmatpush2.bf16.msra.mxu0 0
        %1885 = vmatprep.mubr.bf16.mxu0 0
        %1886 = vmatmul.mubr.bf16.gmra.mxu0 %v1564
        %v1887 = vpop.f32.mrf.mxu0
        %v1888 = vadd.f32 0.0, %v1887
        %v1889 = vpop.f32.mrf.mxu0
        %v1890 = vadd.f32 0.0, %v1889
        %v1891 = vpop.f32.mrf.mxu0
        %v1892 = vpop.f32.mrf.mxu0
        %1893 = vdwg.mxu0
        %1894 = vmatprep.subr.bf16.mxu0 %v1802
        %1895 = vmatpush1.bf16.msra.mxu0 %v1801
        %1896 = vmatprep.subr.bf16.mxu0 %v1796
        %1897 = vmatpush1.bf16.msra.mxu0 %v1795
        %1898 = vmatprep.subr.bf16.mxu0 %v1790
        %1899 = vmatpush1.bf16.msra.mxu0 %v1789
        %1900 = vmatprep.subr.bf16.mxu0 %v1784
        %1901 = vmatpush1.bf16.msra.mxu0 %v1783
        %1902 = vmatprep.subr.bf16.mxu0 %v1778
        %1903 = vmatpush1.bf16.msra.mxu0 %v1777
        %1904 = vmatprep.subr.bf16.mxu0 %v1772
        %1905 = vmatpush1.bf16.msra.mxu0 %v1771
        %1906 = vmatprep.subr.bf16.mxu0 %v1766
        %1907 = vmatpush1.bf16.msra.mxu0 %v1765
        %1908 = vmatprep.subr.bf16.mxu0 %v1760
        %1909 = vmatpush1.bf16.msra.mxu0 %v1759
        %1910 = vmatprep.subr.bf16.mxu0 0
        %1911 = vmatpush2.bf16.msra.mxu0 0
        %1912 = vmatprep.subr.bf16.mxu0 0
        %1913 = vmatpush2.bf16.msra.mxu0 0
        %1914 = vmatprep.subr.bf16.mxu0 0
        %1915 = vmatpush2.bf16.msra.mxu0 0
        %1916 = vmatprep.subr.bf16.mxu0 0
        %1917 = vmatpush2.bf16.msra.mxu0 0
        %1918 = vmatprep.subr.bf16.mxu0 0
        %1919 = vmatpush2.bf16.msra.mxu0 0
        %1920 = vmatprep.subr.bf16.mxu0 0
        %1921 = vmatpush2.bf16.msra.mxu0 0
        %1922 = vmatprep.subr.bf16.mxu0 0
        %1923 = vmatpush2.bf16.msra.mxu0 0
        %1924 = vmatprep.subr.bf16.mxu0 0
        %1925 = vmatpush2.bf16.msra.mxu0 0
        %1926 = vmatprep.mubr.bf16.mxu0 0
        %1927 = vmatmul.mubr.bf16.gmra.mxu0 %v1564
        %v1928 = vpop.f32.mrf.mxu0
        %v1929 = vadd.f32 0.0, %v1928
        %v1930 = vpop.f32.mrf.mxu0
        %v1931 = vadd.f32 0.0, %v1930
        %v1932 = vpop.f32.mrf.mxu0
        %v1933 = vpop.f32.mrf.mxu0
        %1934 = vdwg.mxu0
        %1935 = vmatprep.subr.bf16.mxu0 %v1804
        %1936 = vmatpush1.bf16.msra.mxu0 %v1803
        %1937 = vmatprep.subr.bf16.mxu0 %v1798
        %1938 = vmatpush1.bf16.msra.mxu0 %v1797
        %1939 = vmatprep.subr.bf16.mxu0 %v1792
        %1940 = vmatpush1.bf16.msra.mxu0 %v1791
        %1941 = vmatprep.subr.bf16.mxu0 %v1786
        %1942 = vmatpush1.bf16.msra.mxu0 %v1785
        %1943 = vmatprep.subr.bf16.mxu0 %v1780
        %1944 = vmatpush1.bf16.msra.mxu0 %v1779
        %1945 = vmatprep.subr.bf16.mxu0 %v1774
        %1946 = vmatpush1.bf16.msra.mxu0 %v1773
        %1947 = vmatprep.subr.bf16.mxu0 %v1768
        %1948 = vmatpush1.bf16.msra.mxu0 %v1767
        %1949 = vmatprep.subr.bf16.mxu0 %v1762
        %1950 = vmatpush1.bf16.msra.mxu0 %v1761
        %1951 = vmatprep.subr.bf16.mxu0 0
        %1952 = vmatpush2.bf16.msra.mxu0 0
        %1953 = vmatprep.subr.bf16.mxu0 0
        %1954 = vmatpush2.bf16.msra.mxu0 0
        %1955 = vmatprep.subr.bf16.mxu0 0
        %1956 = vmatpush2.bf16.msra.mxu0 0
        %1957 = vmatprep.subr.bf16.mxu0 0
        %1958 = vmatpush2.bf16.msra.mxu0 0
        %1959 = vmatprep.subr.bf16.mxu0 0
        %1960 = vmatpush2.bf16.msra.mxu0 0
        %1961 = vmatprep.subr.bf16.mxu0 0
        %1962 = vmatpush2.bf16.msra.mxu0 0
        %1963 = vmatprep.subr.bf16.mxu0 0
        %1964 = vmatpush2.bf16.msra.mxu0 0
        %1965 = vmatprep.subr.bf16.mxu0 0
        %1966 = vmatpush2.bf16.msra.mxu0 0
        %1967 = vmatprep.mubr.bf16.mxu0 0
        %1968 = vmatmul.mubr.bf16.gmra.mxu0 %v1564
        %v1969 = vpop.f32.mrf.mxu0
        %v1970 = vadd.f32 0.0, %v1969
        %v1971 = vpop.f32.mrf.mxu0
        %v1972 = vadd.f32 0.0, %v1971
        %v1973 = vpop.f32.mrf.mxu0
        %v1974 = vpop.f32.mrf.mxu0
        %1975 = vdwg.mxu0
        %v1976 = vld [vmem:[#allocation2] sm:$0xff]
        %v1977 = vld [vmem:[#allocation2 + $0x8] sm:$0xff]
        %v1978 = vld [vmem:[#allocation2 + $0x10] sm:$0xff]
        %v1979 = vld [vmem:[#allocation3] sm:$0xff]
        %v1980 = vld [vmem:[#allocation3 + $0x8] sm:$0xff]
        %v1981 = vld [vmem:[#allocation3 + $0x10] sm:$0xff]
        %v1982 = vpack.c.bf16 %v1888, %v1888
        %1983 = vmatprep.subr.bf16.mxu0 0
        %1984 = vmatpush1.bf16.xpose.msra.mxu0 0
        %1985 = vmatprep.subr.bf16.mxu0 0
        %1986 = vmatpush1.bf16.xpose.msra.mxu0 0
        %1987 = vmatprep.subr.bf16.mxu0 0
        %1988 = vmatpush1.bf16.xpose.msra.mxu0 0
        %1989 = vmatprep.subr.bf16.mxu0 0
        %1990 = vmatpush1.bf16.xpose.msra.mxu0 0
        %1991 = vmatprep.subr.bf16.mxu0 0
        %1992 = vmatpush1.bf16.xpose.msra.mxu0 0
        %1993 = vmatprep.subr.bf16.mxu0 0
        %1994 = vmatpush1.bf16.xpose.msra.mxu0 0
        %1995 = vmatprep.subr.bf16.mxu0 0
        %1996 = vmatpush1.bf16.xpose.msra.mxu0 0
        %1997 = vmatprep.subr.bf16.mxu0 0
        %1998 = vmatpush1.bf16.xpose.msra.mxu0 %v1976
        %1999 = vmatprep.subr.bf16.mxu0 0
        %2000 = vmatpush2.bf16.xpose.msra.mxu0 0
        %2001 = vmatprep.subr.bf16.mxu0 0
        %2002 = vmatpush2.bf16.xpose.msra.mxu0 0
        %2003 = vmatprep.subr.bf16.mxu0 0
        %2004 = vmatpush2.bf16.xpose.msra.mxu0 0
        %2005 = vmatprep.subr.bf16.mxu0 0
        %2006 = vmatpush2.bf16.xpose.msra.mxu0 0
        %2007 = vmatprep.subr.bf16.mxu0 0
        %2008 = vmatpush2.bf16.xpose.msra.mxu0 0
        %2009 = vmatprep.subr.bf16.mxu0 0
        %2010 = vmatpush2.bf16.xpose.msra.mxu0 0
        %2011 = vmatprep.subr.bf16.mxu0 0
        %2012 = vmatpush2.bf16.xpose.msra.mxu0 0
        %2013 = vmatprep.subr.bf16.mxu0 0
        %2014 = vmatpush2.bf16.xpose.msra.mxu0 0
        %2015 = vmatprep.mubr.bf16.mxu0 0
        %2016 = vmatmul.mubr.bf16.gmra.mxu0 %v1982
        %v2017 = vpop.f32.mrf.mxu0
        %v2018 = vadd.f32 0.0, %v2017
        %v2019 = vpop.f32.mrf.mxu0
        %v2020 = vpop.f32.mrf.mxu0
        %v2021 = vpop.f32.mrf.mxu0
        %2022 = vdwg.mxu0
        %v2023 = vmul.f32 %v2018, 0.25
        %vm2024 = vcmask 64512
        %v2025 = vsel %vm2024, %v2023, -inf
        %2026 = vmax.xlane.f32.xlu0 %v2025
        %v2027 = vpop.xlane.xlu0 %2026
        %v2028 = vsub.f32 %v2023, %v2027
        %v2029 = vmul.f32 %v2028, 1.442695
        %v2030 = vpow.pop %v2029
        %v2031 = vsel %vm2024, %v2030, 0.0
        %2032 = vadd.xlane.f32.xlu0 %v2031
        %v2033 = vpop.xlane.xlu0 %2032
        %v2034 = vrcp.pop %v2033
        %v2035 = vmul.f32 %v2030, %v2034
        %v2036 = vpack.c.bf16 %v2035, %v2035
        %v2038 = vsel %vm2024, %v2036, 0
        %vm2040 = vcmask 1043456
        %v2042 = vsel %vm2040, %v1979, 0
        %2044 = vmatprep.subr.bf16.mxu0 0
        %2045 = vmatpush1.bf16.msra.mxu0 0
        %2046 = vmatprep.subr.bf16.mxu0 0
        %2047 = vmatpush1.bf16.msra.mxu0 0
        %2048 = vmatprep.subr.bf16.mxu0 0
        %2049 = vmatpush1.bf16.msra.mxu0 0
        %2050 = vmatprep.subr.bf16.mxu0 0
        %2051 = vmatpush1.bf16.msra.mxu0 0
        %2052 = vmatprep.subr.bf16.mxu0 0
        %2053 = vmatpush1.bf16.msra.mxu0 0
        %2054 = vmatprep.subr.bf16.mxu0 0
        %2055 = vmatpush1.bf16.msra.mxu0 0
        %2056 = vmatprep.subr.bf16.mxu0 0
        %2057 = vmatpush1.bf16.msra.mxu0 0
        %2058 = vmatprep.subr.bf16.mxu0 0
        %2059 = vmatpush1.bf16.msra.mxu0 %v2042
        %2060 = vmatprep.subr.bf16.mxu0 0
        %2061 = vmatpush2.bf16.msra.mxu0 0
        %2062 = vmatprep.subr.bf16.mxu0 0
        %2063 = vmatpush2.bf16.msra.mxu0 0
        %2064 = vmatprep.subr.bf16.mxu0 0
        %2065 = vmatpush2.bf16.msra.mxu0 0
        %2066 = vmatprep.subr.bf16.mxu0 0
        %2067 = vmatpush2.bf16.msra.mxu0 0
        %2068 = vmatprep.subr.bf16.mxu0 0
        %2069 = vmatpush2.bf16.msra.mxu0 0
        %2070 = vmatprep.subr.bf16.mxu0 0
        %2071 = vmatpush2.bf16.msra.mxu0 0
        %2072 = vmatprep.subr.bf16.mxu0 0
        %2073 = vmatpush2.bf16.msra.mxu0 0
        %2074 = vmatprep.subr.bf16.mxu0 0
        %2075 = vmatpush2.bf16.msra.mxu0 0
        %2076 = vmatprep.mubr.bf16.mxu0 0
        %2077 = vmatmul.mubr.bf16.gmra.mxu0 %v2038
        %v2078 = vpop.f32.mrf.mxu0
        %v2079 = vadd.f32 0.0, %v2078
        %v2080 = vpop.f32.mrf.mxu0
        %v2081 = vpop.f32.mrf.mxu0
        %v2082 = vpop.f32.mrf.mxu0
        %2083 = vdwg.mxu0
        %v2084 = vpack.c.bf16 %v1890, %v1890
        %v2086 = vunpack.c.h.b16 %v1976
        %v2087 = vpack.c.b16 %v2086, %v2086
        %2089 = vmatprep.subr.bf16.mxu0 0
        %2090 = vmatpush1.bf16.xpose.msra.mxu0 0
        %2091 = vmatprep.subr.bf16.mxu0 0
        %2092 = vmatpush1.bf16.xpose.msra.mxu0 0
        %2093 = vmatprep.subr.bf16.mxu0 0
        %2094 = vmatpush1.bf16.xpose.msra.mxu0 0
        %2095 = vmatprep.subr.bf16.mxu0 0
        %2096 = vmatpush1.bf16.xpose.msra.mxu0 0
        %2097 = vmatprep.subr.bf16.mxu0 0
        %2098 = vmatpush1.bf16.xpose.msra.mxu0 0
        %2099 = vmatprep.subr.bf16.mxu0 0
        %2100 = vmatpush1.bf16.xpose.msra.mxu0 0
        %2101 = vmatprep.subr.bf16.mxu0 0
        %2102 = vmatpush1.bf16.xpose.msra.mxu0 0
        %2103 = vmatprep.subr.bf16.mxu0 0
        %2104 = vmatpush1.bf16.xpose.msra.mxu0 %v2087
        %2105 = vmatprep.subr.bf16.mxu0 0
        %2106 = vmatpush2.bf16.xpose.msra.mxu0 0
        %2107 = vmatprep.subr.bf16.mxu0 0
        %2108 = vmatpush2.bf16.xpose.msra.mxu0 0
        %2109 = vmatprep.subr.bf16.mxu0 0
        %2110 = vmatpush2.bf16.xpose.msra.mxu0 0
        %2111 = vmatprep.subr.bf16.mxu0 0
        %2112 = vmatpush2.bf16.xpose.msra.mxu0 0
        %2113 = vmatprep.subr.bf16.mxu0 0
        %2114 = vmatpush2.bf16.xpose.msra.mxu0 0
        %2115 = vmatprep.subr.bf16.mxu0 0
        %2116 = vmatpush2.bf16.xpose.msra.mxu0 0
        %2117 = vmatprep.subr.bf16.mxu0 0
        %2118 = vmatpush2.bf16.xpose.msra.mxu0 0
        %2119 = vmatprep.subr.bf16.mxu0 0
        %2120 = vmatpush2.bf16.xpose.msra.mxu0 0
        %2121 = vmatprep.mubr.bf16.mxu0 0
        %2122 = vmatmul.mubr.bf16.gmra.mxu0 %v2084
        %v2123 = vpop.f32.mrf.mxu0
        %v2124 = vadd.f32 0.0, %v2123
        %v2125 = vpop.f32.mrf.mxu0
        %v2126 = vpop.f32.mrf.mxu0
        %v2127 = vpop.f32.mrf.mxu0
        %2128 = vdwg.mxu0
        %v2129 = vmul.f32 %v2124, 0.25
        %v2130 = vsel %vm2024, %v2129, -inf
        %2131 = vmax.xlane.f32.xlu0 %v2130
        %v2132 = vpop.xlane.xlu0 %2131
        %v2133 = vsub.f32 %v2129, %v2132
        %v2134 = vmul.f32 %v2133, 1.442695
        %v2135 = vpow.pop %v2134
        %v2136 = vsel %vm2024, %v2135, 0.0
        %2137 = vadd.xlane.f32.xlu0 %v2136
        %v2138 = vpop.xlane.xlu0 %2137
        %v2139 = vrcp.pop %v2138
        %v2140 = vmul.f32 %v2135, %v2139
        %v2141 = vpack.c.bf16 %v2140, %v2140
        %v2143 = vunpack.c.h.b16 %v1979
        %v2144 = vpack.c.b16 %v2143, %v2143
        %v2146 = vsel %vm2024, %v2141, 0
        %v2149 = vsel %vm2040, %v2144, 0
        %2151 = vmatprep.subr.bf16.mxu0 0
        %2152 = vmatpush1.bf16.msra.mxu0 0
        %2153 = vmatprep.subr.bf16.mxu0 0
        %2154 = vmatpush1.bf16.msra.mxu0 0
        %2155 = vmatprep.subr.bf16.mxu0 0
        %2156 = vmatpush1.bf16.msra.mxu0 0
        %2157 = vmatprep.subr.bf16.mxu0 0
        %2158 = vmatpush1.bf16.msra.mxu0 0
        %2159 = vmatprep.subr.bf16.mxu0 0
        %2160 = vmatpush1.bf16.msra.mxu0 0
        %2161 = vmatprep.subr.bf16.mxu0 0
        %2162 = vmatpush1.bf16.msra.mxu0 0
        %2163 = vmatprep.subr.bf16.mxu0 0
        %2164 = vmatpush1.bf16.msra.mxu0 0
        %2165 = vmatprep.subr.bf16.mxu0 0
        %2166 = vmatpush1.bf16.msra.mxu0 %v2149
        %2167 = vmatprep.subr.bf16.mxu0 0
        %2168 = vmatpush2.bf16.msra.mxu0 0
        %2169 = vmatprep.subr.bf16.mxu0 0
        %2170 = vmatpush2.bf16.msra.mxu0 0
        %2171 = vmatprep.subr.bf16.mxu0 0
        %2172 = vmatpush2.bf16.msra.mxu0 0
        %2173 = vmatprep.subr.bf16.mxu0 0
        %2174 = vmatpush2.bf16.msra.mxu0 0
        %2175 = vmatprep.subr.bf16.mxu0 0
        %2176 = vmatpush2.bf16.msra.mxu0 0
        %2177 = vmatprep.subr.bf16.mxu0 0
        %2178 = vmatpush2.bf16.msra.mxu0 0
        %2179 = vmatprep.subr.bf16.mxu0 0
        %2180 = vmatpush2.bf16.msra.mxu0 0
        %2181 = vmatprep.subr.bf16.mxu0 0
        %2182 = vmatpush2.bf16.msra.mxu0 0
        %2183 = vmatprep.mubr.bf16.mxu0 0
        %2184 = vmatmul.mubr.bf16.gmra.mxu0 %v2146
        %v2185 = vpop.f32.mrf.mxu0
        %v2186 = vadd.f32 0.0, %v2185
        %v2187 = vpop.f32.mrf.mxu0
        %v2188 = vpop.f32.mrf.mxu0
        %v2189 = vpop.f32.mrf.mxu0
        %2190 = vdwg.mxu0
        %v2191 = vpack.c.bf16 %v1929, %v1929
        %2192 = vmatprep.subr.bf16.mxu0 0
        %2193 = vmatpush1.bf16.xpose.msra.mxu0 0
        %2194 = vmatprep.subr.bf16.mxu0 0
        %2195 = vmatpush1.bf16.xpose.msra.mxu0 0
        %2196 = vmatprep.subr.bf16.mxu0 0
        %2197 = vmatpush1.bf16.xpose.msra.mxu0 0
        %2198 = vmatprep.subr.bf16.mxu0 0
        %2199 = vmatpush1.bf16.xpose.msra.mxu0 0
        %2200 = vmatprep.subr.bf16.mxu0 0
        %2201 = vmatpush1.bf16.xpose.msra.mxu0 0
        %2202 = vmatprep.subr.bf16.mxu0 0
        %2203 = vmatpush1.bf16.xpose.msra.mxu0 0
        %2204 = vmatprep.subr.bf16.mxu0 0
        %2205 = vmatpush1.bf16.xpose.msra.mxu0 0
        %2206 = vmatprep.subr.bf16.mxu0 0
        %2207 = vmatpush1.bf16.xpose.msra.mxu0 %v1977
        %2208 = vmatprep.subr.bf16.mxu0 0
        %2209 = vmatpush2.bf16.xpose.msra.mxu0 0
        %2210 = vmatprep.subr.bf16.mxu0 0
        %2211 = vmatpush2.bf16.xpose.msra.mxu0 0
        %2212 = vmatprep.subr.bf16.mxu0 0
        %2213 = vmatpush2.bf16.xpose.msra.mxu0 0
        %2214 = vmatprep.subr.bf16.mxu0 0
        %2215 = vmatpush2.bf16.xpose.msra.mxu0 0
        %2216 = vmatprep.subr.bf16.mxu0 0
        %2217 = vmatpush2.bf16.xpose.msra.mxu0 0
        %2218 = vmatprep.subr.bf16.mxu0 0
        %2219 = vmatpush2.bf16.xpose.msra.mxu0 0
        %2220 = vmatprep.subr.bf16.mxu0 0
        %2221 = vmatpush2.bf16.xpose.msra.mxu0 0
        %2222 = vmatprep.subr.bf16.mxu0 0
        %2223 = vmatpush2.bf16.xpose.msra.mxu0 0
        %2224 = vmatprep.mubr.bf16.mxu0 0
        %2225 = vmatmul.mubr.bf16.gmra.mxu0 %v2191
        %v2226 = vpop.f32.mrf.mxu0
        %v2227 = vadd.f32 0.0, %v2226
        %v2228 = vpop.f32.mrf.mxu0
        %v2229 = vpop.f32.mrf.mxu0
        %v2230 = vpop.f32.mrf.mxu0
        %2231 = vdwg.mxu0
        %v2232 = vmul.f32 %v2227, 0.25
        %v2233 = vsel %vm2024, %v2232, -inf
        %2234 = vmax.xlane.f32.xlu0 %v2233
        %v2235 = vpop.xlane.xlu0 %2234
        %v2236 = vsub.f32 %v2232, %v2235
        %v2237 = vmul.f32 %v2236, 1.442695
        %v2238 = vpow.pop %v2237
        %v2239 = vsel %vm2024, %v2238, 0.0
        %2240 = vadd.xlane.f32.xlu0 %v2239
        %v2241 = vpop.xlane.xlu0 %2240
        %v2242 = vrcp.pop %v2241
        %v2243 = vmul.f32 %v2238, %v2242
        %v2244 = vpack.c.bf16 %v2243, %v2243
        %v2246 = vsel %vm2024, %v2244, 0
        %v2249 = vsel %vm2040, %v1980, 0
        %2251 = vmatprep.subr.bf16.mxu0 0
        %2252 = vmatpush1.bf16.msra.mxu0 0
        %2253 = vmatprep.subr.bf16.mxu0 0
        %2254 = vmatpush1.bf16.msra.mxu0 0
        %2255 = vmatprep.subr.bf16.mxu0 0
        %2256 = vmatpush1.bf16.msra.mxu0 0
        %2257 = vmatprep.subr.bf16.mxu0 0
        %2258 = vmatpush1.bf16.msra.mxu0 0
        %2259 = vmatprep.subr.bf16.mxu0 0
        %2260 = vmatpush1.bf16.msra.mxu0 0
        %2261 = vmatprep.subr.bf16.mxu0 0
        %2262 = vmatpush1.bf16.msra.mxu0 0
        %2263 = vmatprep.subr.bf16.mxu0 0
        %2264 = vmatpush1.bf16.msra.mxu0 0
        %2265 = vmatprep.subr.bf16.mxu0 0
        %2266 = vmatpush1.bf16.msra.mxu0 %v2249
        %2267 = vmatprep.subr.bf16.mxu0 0
        %2268 = vmatpush2.bf16.msra.mxu0 0
        %2269 = vmatprep.subr.bf16.mxu0 0
        %2270 = vmatpush2.bf16.msra.mxu0 0
        %2271 = vmatprep.subr.bf16.mxu0 0
        %2272 = vmatpush2.bf16.msra.mxu0 0
        %2273 = vmatprep.subr.bf16.mxu0 0
        %2274 = vmatpush2.bf16.msra.mxu0 0
        %2275 = vmatprep.subr.bf16.mxu0 0
        %2276 = vmatpush2.bf16.msra.mxu0 0
        %2277 = vmatprep.subr.bf16.mxu0 0
        %2278 = vmatpush2.bf16.msra.mxu0 0
        %2279 = vmatprep.subr.bf16.mxu0 0
        %2280 = vmatpush2.bf16.msra.mxu0 0
        %2281 = vmatprep.subr.bf16.mxu0 0
        %2282 = vmatpush2.bf16.msra.mxu0 0
        %2283 = vmatprep.mubr.bf16.mxu0 0
        %2284 = vmatmul.mubr.bf16.gmra.mxu0 %v2246
        %v2285 = vpop.f32.mrf.mxu0
        %v2286 = vadd.f32 0.0, %v2285
        %v2287 = vpop.f32.mrf.mxu0
        %v2288 = vpop.f32.mrf.mxu0
        %v2289 = vpop.f32.mrf.mxu0
        %2290 = vdwg.mxu0
        %v2291 = vpack.c.bf16 %v1931, %v1931
        %v2293 = vunpack.c.h.b16 %v1977
        %v2294 = vpack.c.b16 %v2293, %v2293
        %2296 = vmatprep.subr.bf16.mxu0 0
        %2297 = vmatpush1.bf16.xpose.msra.mxu0 0
        %2298 = vmatprep.subr.bf16.mxu0 0
        %2299 = vmatpush1.bf16.xpose.msra.mxu0 0
        %2300 = vmatprep.subr.bf16.mxu0 0
        %2301 = vmatpush1.bf16.xpose.msra.mxu0 0
        %2302 = vmatprep.subr.bf16.mxu0 0
        %2303 = vmatpush1.bf16.xpose.msra.mxu0 0
        %2304 = vmatprep.subr.bf16.mxu0 0
        %2305 = vmatpush1.bf16.xpose.msra.mxu0 0
        %2306 = vmatprep.subr.bf16.mxu0 0
        %2307 = vmatpush1.bf16.xpose.msra.mxu0 0
        %2308 = vmatprep.subr.bf16.mxu0 0
        %2309 = vmatpush1.bf16.xpose.msra.mxu0 0
        %2310 = vmatprep.subr.bf16.mxu0 0
        %2311 = vmatpush1.bf16.xpose.msra.mxu0 %v2294
        %2312 = vmatprep.subr.bf16.mxu0 0
        %2313 = vmatpush2.bf16.xpose.msra.mxu0 0
        %2314 = vmatprep.subr.bf16.mxu0 0
        %2315 = vmatpush2.bf16.xpose.msra.mxu0 0
        %2316 = vmatprep.subr.bf16.mxu0 0
        %2317 = vmatpush2.bf16.xpose.msra.mxu0 0
        %2318 = vmatprep.subr.bf16.mxu0 0
        %2319 = vmatpush2.bf16.xpose.msra.mxu0 0
        %2320 = vmatprep.subr.bf16.mxu0 0
        %2321 = vmatpush2.bf16.xpose.msra.mxu0 0
        %2322 = vmatprep.subr.bf16.mxu0 0
        %2323 = vmatpush2.bf16.xpose.msra.mxu0 0
        %2324 = vmatprep.subr.bf16.mxu0 0
        %2325 = vmatpush2.bf16.xpose.msra.mxu0 0
        %2326 = vmatprep.subr.bf16.mxu0 0
        %2327 = vmatpush2.bf16.xpose.msra.mxu0 0
        %2328 = vmatprep.mubr.bf16.mxu0 0
        %2329 = vmatmul.mubr.bf16.gmra.mxu0 %v2291
        %v2330 = vpop.f32.mrf.mxu0
        %v2331 = vadd.f32 0.0, %v2330
        %v2332 = vpop.f32.mrf.mxu0
        %v2333 = vpop.f32.mrf.mxu0
        %v2334 = vpop.f32.mrf.mxu0
        %2335 = vdwg.mxu0
        %v2336 = vmul.f32 %v2331, 0.25
        %v2337 = vsel %vm2024, %v2336, -inf
        %2338 = vmax.xlane.f32.xlu0 %v2337
        %v2339 = vpop.xlane.xlu0 %2338
        %v2340 = vsub.f32 %v2336, %v2339
        %v2341 = vmul.f32 %v2340, 1.442695
        %v2342 = vpow.pop %v2341
        %v2343 = vsel %vm2024, %v2342, 0.0
        %2344 = vadd.xlane.f32.xlu0 %v2343
        %v2345 = vpop.xlane.xlu0 %2344
        %v2346 = vrcp.pop %v2345
        %v2347 = vmul.f32 %v2342, %v2346
        %v2348 = vpack.c.bf16 %v2347, %v2347
        %v2350 = vunpack.c.h.b16 %v1980
        %v2351 = vpack.c.b16 %v2350, %v2350
        %v2353 = vsel %vm2024, %v2348, 0
        %v2356 = vsel %vm2040, %v2351, 0
        %2358 = vmatprep.subr.bf16.mxu0 0
        %2359 = vmatpush1.bf16.msra.mxu0 0
        %2360 = vmatprep.subr.bf16.mxu0 0
        %2361 = vmatpush1.bf16.msra.mxu0 0
        %2362 = vmatprep.subr.bf16.mxu0 0
        %2363 = vmatpush1.bf16.msra.mxu0 0
        %2364 = vmatprep.subr.bf16.mxu0 0
        %2365 = vmatpush1.bf16.msra.mxu0 0
        %2366 = vmatprep.subr.bf16.mxu0 0
        %2367 = vmatpush1.bf16.msra.mxu0 0
        %2368 = vmatprep.subr.bf16.mxu0 0
        %2369 = vmatpush1.bf16.msra.mxu0 0
        %2370 = vmatprep.subr.bf16.mxu0 0
        %2371 = vmatpush1.bf16.msra.mxu0 0
        %2372 = vmatprep.subr.bf16.mxu0 0
        %2373 = vmatpush1.bf16.msra.mxu0 %v2356
        %2374 = vmatprep.subr.bf16.mxu0 0
        %2375 = vmatpush2.bf16.msra.mxu0 0
        %2376 = vmatprep.subr.bf16.mxu0 0
        %2377 = vmatpush2.bf16.msra.mxu0 0
        %2378 = vmatprep.subr.bf16.mxu0 0
        %2379 = vmatpush2.bf16.msra.mxu0 0
        %2380 = vmatprep.subr.bf16.mxu0 0
        %2381 = vmatpush2.bf16.msra.mxu0 0
        %2382 = vmatprep.subr.bf16.mxu0 0
        %2383 = vmatpush2.bf16.msra.mxu0 0
        %2384 = vmatprep.subr.bf16.mxu0 0
        %2385 = vmatpush2.bf16.msra.mxu0 0
        %2386 = vmatprep.subr.bf16.mxu0 0
        %2387 = vmatpush2.bf16.msra.mxu0 0
        %2388 = vmatprep.subr.bf16.mxu0 0
        %2389 = vmatpush2.bf16.msra.mxu0 0
        %2390 = vmatprep.mubr.bf16.mxu0 0
        %2391 = vmatmul.mubr.bf16.gmra.mxu0 %v2353
        %v2392 = vpop.f32.mrf.mxu0
        %v2393 = vadd.f32 0.0, %v2392
        %v2394 = vpop.f32.mrf.mxu0
        %v2395 = vpop.f32.mrf.mxu0
        %v2396 = vpop.f32.mrf.mxu0
        %2397 = vdwg.mxu0
        %v2398 = vpack.c.bf16 %v1970, %v1970
        %2399 = vmatprep.subr.bf16.mxu0 0
        %2400 = vmatpush1.bf16.xpose.msra.mxu0 0
        %2401 = vmatprep.subr.bf16.mxu0 0
        %2402 = vmatpush1.bf16.xpose.msra.mxu0 0
        %2403 = vmatprep.subr.bf16.mxu0 0
        %2404 = vmatpush1.bf16.xpose.msra.mxu0 0
        %2405 = vmatprep.subr.bf16.mxu0 0
        %2406 = vmatpush1.bf16.xpose.msra.mxu0 0
        %2407 = vmatprep.subr.bf16.mxu0 0
        %2408 = vmatpush1.bf16.xpose.msra.mxu0 0
        %2409 = vmatprep.subr.bf16.mxu0 0
        %2410 = vmatpush1.bf16.xpose.msra.mxu0 0
        %2411 = vmatprep.subr.bf16.mxu0 0
        %2412 = vmatpush1.bf16.xpose.msra.mxu0 0
        %2413 = vmatprep.subr.bf16.mxu0 0
        %2414 = vmatpush1.bf16.xpose.msra.mxu0 %v1978
        %2415 = vmatprep.subr.bf16.mxu0 0
        %2416 = vmatpush2.bf16.xpose.msra.mxu0 0
        %2417 = vmatprep.subr.bf16.mxu0 0
        %2418 = vmatpush2.bf16.xpose.msra.mxu0 0
        %2419 = vmatprep.subr.bf16.mxu0 0
        %2420 = vmatpush2.bf16.xpose.msra.mxu0 0
        %2421 = vmatprep.subr.bf16.mxu0 0
        %2422 = vmatpush2.bf16.xpose.msra.mxu0 0
        %2423 = vmatprep.subr.bf16.mxu0 0
        %2424 = vmatpush2.bf16.xpose.msra.mxu0 0
        %2425 = vmatprep.subr.bf16.mxu0 0
        %2426 = vmatpush2.bf16.xpose.msra.mxu0 0
        %2427 = vmatprep.subr.bf16.mxu0 0
        %2428 = vmatpush2.bf16.xpose.msra.mxu0 0
        %2429 = vmatprep.subr.bf16.mxu0 0
        %2430 = vmatpush2.bf16.xpose.msra.mxu0 0
        %2431 = vmatprep.mubr.bf16.mxu0 0
        %2432 = vmatmul.mubr.bf16.gmra.mxu0 %v2398
        %v2433 = vpop.f32.mrf.mxu0
        %v2434 = vadd.f32 0.0, %v2433
        %v2435 = vpop.f32.mrf.mxu0
        %v2436 = vpop.f32.mrf.mxu0
        %v2437 = vpop.f32.mrf.mxu0
        %2438 = vdwg.mxu0
        %v2439 = vmul.f32 %v2434, 0.25
        %v2440 = vsel %vm2024, %v2439, -inf
        %2441 = vmax.xlane.f32.xlu0 %v2440
        %v2442 = vpop.xlane.xlu0 %2441
        %v2443 = vsub.f32 %v2439, %v2442
        %v2444 = vmul.f32 %v2443, 1.442695
        %v2445 = vpow.pop %v2444
        %v2446 = vsel %vm2024, %v2445, 0.0
        %2447 = vadd.xlane.f32.xlu0 %v2446
        %v2448 = vpop.xlane.xlu0 %2447
        %v2449 = vrcp.pop %v2448
        %v2450 = vmul.f32 %v2445, %v2449
        %v2451 = vpack.c.bf16 %v2450, %v2450
        %v2453 = vsel %vm2024, %v2451, 0
        %v2456 = vsel %vm2040, %v1981, 0
        %2458 = vmatprep.subr.bf16.mxu0 0
        %2459 = vmatpush1.bf16.msra.mxu0 0
        %2460 = vmatprep.subr.bf16.mxu0 0
        %2461 = vmatpush1.bf16.msra.mxu0 0
        %2462 = vmatprep.subr.bf16.mxu0 0
        %2463 = vmatpush1.bf16.msra.mxu0 0
        %2464 = vmatprep.subr.bf16.mxu0 0
        %2465 = vmatpush1.bf16.msra.mxu0 0
        %2466 = vmatprep.subr.bf16.mxu0 0
        %2467 = vmatpush1.bf16.msra.mxu0 0
        %2468 = vmatprep.subr.bf16.mxu0 0
        %2469 = vmatpush1.bf16.msra.mxu0 0
        %2470 = vmatprep.subr.bf16.mxu0 0
        %2471 = vmatpush1.bf16.msra.mxu0 0
        %2472 = vmatprep.subr.bf16.mxu0 0
        %2473 = vmatpush1.bf16.msra.mxu0 %v2456
        %2474 = vmatprep.subr.bf16.mxu0 0
        %2475 = vmatpush2.bf16.msra.mxu0 0
        %2476 = vmatprep.subr.bf16.mxu0 0
        %2477 = vmatpush2.bf16.msra.mxu0 0
        %2478 = vmatprep.subr.bf16.mxu0 0
        %2479 = vmatpush2.bf16.msra.mxu0 0
        %2480 = vmatprep.subr.bf16.mxu0 0
        %2481 = vmatpush2.bf16.msra.mxu0 0
        %2482 = vmatprep.subr.bf16.mxu0 0
        %2483 = vmatpush2.bf16.msra.mxu0 0
        %2484 = vmatprep.subr.bf16.mxu0 0
        %2485 = vmatpush2.bf16.msra.mxu0 0
        %2486 = vmatprep.subr.bf16.mxu0 0
        %2487 = vmatpush2.bf16.msra.mxu0 0
        %2488 = vmatprep.subr.bf16.mxu0 0
        %2489 = vmatpush2.bf16.msra.mxu0 0
        %2490 = vmatprep.mubr.bf16.mxu0 0
        %2491 = vmatmul.mubr.bf16.gmra.mxu0 %v2453
        %v2492 = vpop.f32.mrf.mxu0
        %v2493 = vadd.f32 0.0, %v2492
        %v2494 = vpop.f32.mrf.mxu0
        %v2495 = vpop.f32.mrf.mxu0
        %v2496 = vpop.f32.mrf.mxu0
        %2497 = vdwg.mxu0
        %v2498 = vpack.c.bf16 %v1972, %v1972
        %v2500 = vunpack.c.h.b16 %v1978
        %v2501 = vpack.c.b16 %v2500, %v2500
        %2503 = vmatprep.subr.bf16.mxu0 0
        %2504 = vmatpush1.bf16.xpose.msra.mxu0 0
        %2505 = vmatprep.subr.bf16.mxu0 0
        %2506 = vmatpush1.bf16.xpose.msra.mxu0 0
        %2507 = vmatprep.subr.bf16.mxu0 0
        %2508 = vmatpush1.bf16.xpose.msra.mxu0 0
        %2509 = vmatprep.subr.bf16.mxu0 0
        %2510 = vmatpush1.bf16.xpose.msra.mxu0 0
        %2511 = vmatprep.subr.bf16.mxu0 0
        %2512 = vmatpush1.bf16.xpose.msra.mxu0 0
        %2513 = vmatprep.subr.bf16.mxu0 0
        %2514 = vmatpush1.bf16.xpose.msra.mxu0 0
        %2515 = vmatprep.subr.bf16.mxu0 0
        %2516 = vmatpush1.bf16.xpose.msra.mxu0 0
        %2517 = vmatprep.subr.bf16.mxu0 0
        %2518 = vmatpush1.bf16.xpose.msra.mxu0 %v2501
        %2519 = vmatprep.subr.bf16.mxu0 0
        %2520 = vmatpush2.bf16.xpose.msra.mxu0 0
        %2521 = vmatprep.subr.bf16.mxu0 0
        %2522 = vmatpush2.bf16.xpose.msra.mxu0 0
        %2523 = vmatprep.subr.bf16.mxu0 0
        %2524 = vmatpush2.bf16.xpose.msra.mxu0 0
        %2525 = vmatprep.subr.bf16.mxu0 0
        %2526 = vmatpush2.bf16.xpose.msra.mxu0 0
        %2527 = vmatprep.subr.bf16.mxu0 0
        %2528 = vmatpush2.bf16.xpose.msra.mxu0 0
        %2529 = vmatprep.subr.bf16.mxu0 0
        %2530 = vmatpush2.bf16.xpose.msra.mxu0 0
        %2531 = vmatprep.subr.bf16.mxu0 0
        %2532 = vmatpush2.bf16.xpose.msra.mxu0 0
        %2533 = vmatprep.subr.bf16.mxu0 0
        %2534 = vmatpush2.bf16.xpose.msra.mxu0 0
        %2535 = vmatprep.mubr.bf16.mxu0 0
        %2536 = vmatmul.mubr.bf16.gmra.mxu0 %v2498
        %v2537 = vpop.f32.mrf.mxu0
        %v2538 = vadd.f32 0.0, %v2537
        %v2539 = vpop.f32.mrf.mxu0
        %v2540 = vpop.f32.mrf.mxu0
        %v2541 = vpop.f32.mrf.mxu0
        %2542 = vdwg.mxu0
        %v2543 = vmul.f32 %v2538, 0.25
        %v2544 = vsel %vm2024, %v2543, -inf
        %2545 = vmax.xlane.f32.xlu0 %v2544
        %v2546 = vpop.xlane.xlu0 %2545
        %v2547 = vsub.f32 %v2543, %v2546
        %v2548 = vmul.f32 %v2547, 1.442695
        %v2549 = vpow.pop %v2548
        %v2550 = vsel %vm2024, %v2549, 0.0
        %2551 = vadd.xlane.f32.xlu0 %v2550
        %v2552 = vpop.xlane.xlu0 %2551
        %v2553 = vrcp.pop %v2552
        %v2554 = vmul.f32 %v2549, %v2553
        %v2555 = vpack.c.bf16 %v2554, %v2554
        %v2557 = vunpack.c.h.b16 %v1981
        %v2558 = vpack.c.b16 %v2557, %v2557
        %v2560 = vsel %vm2024, %v2555, 0
        %v2563 = vsel %vm2040, %v2558, 0
        %2565 = vmatprep.subr.bf16.mxu0 0
        %2566 = vmatpush1.bf16.msra.mxu0 0
        %2567 = vmatprep.subr.bf16.mxu0 0
        %2568 = vmatpush1.bf16.msra.mxu0 0
        %2569 = vmatprep.subr.bf16.mxu0 0
        %2570 = vmatpush1.bf16.msra.mxu0 0
        %2571 = vmatprep.subr.bf16.mxu0 0
        %2572 = vmatpush1.bf16.msra.mxu0 0
        %2573 = vmatprep.subr.bf16.mxu0 0
        %2574 = vmatpush1.bf16.msra.mxu0 0
        %2575 = vmatprep.subr.bf16.mxu0 0
        %2576 = vmatpush1.bf16.msra.mxu0 0
        %2577 = vmatprep.subr.bf16.mxu0 0
        %2578 = vmatpush1.bf16.msra.mxu0 0
        %2579 = vmatprep.subr.bf16.mxu0 0
        %2580 = vmatpush1.bf16.msra.mxu0 %v2563
        %2581 = vmatprep.subr.bf16.mxu0 0
        %2582 = vmatpush2.bf16.msra.mxu0 0
        %2583 = vmatprep.subr.bf16.mxu0 0
        %2584 = vmatpush2.bf16.msra.mxu0 0
        %2585 = vmatprep.subr.bf16.mxu0 0
        %2586 = vmatpush2.bf16.msra.mxu0 0
        %2587 = vmatprep.subr.bf16.mxu0 0
        %2588 = vmatpush2.bf16.msra.mxu0 0
        %2589 = vmatprep.subr.bf16.mxu0 0
        %2590 = vmatpush2.bf16.msra.mxu0 0
        %2591 = vmatprep.subr.bf16.mxu0 0
        %2592 = vmatpush2.bf16.msra.mxu0 0
        %2593 = vmatprep.subr.bf16.mxu0 0
        %2594 = vmatpush2.bf16.msra.mxu0 0
        %2595 = vmatprep.subr.bf16.mxu0 0
        %2596 = vmatpush2.bf16.msra.mxu0 0
        %2597 = vmatprep.mubr.bf16.mxu0 0
        %2598 = vmatmul.mubr.bf16.gmra.mxu0 %v2560
        %v2599 = vpop.f32.mrf.mxu0
        %v2600 = vadd.f32 0.0, %v2599
        %v2601 = vpop.f32.mrf.mxu0
        %v2602 = vpop.f32.mrf.mxu0
        %v2603 = vpop.f32.mrf.mxu0
        %2604 = vdwg.mxu0
        %v2605 = vpack.c.bf16 %v2079, %v2079
        %v2606 = vpack.c.bf16 %v2186, %v2186
        %v2607 = vpack.c.bf16 %v2286, %v2286
        %v2608 = vpack.c.bf16 %v2393, %v2393
        %v2609 = vpack.c.bf16 %v2493, %v2493
        %v2610 = vpack.c.bf16 %v2600, %v2600
        %v2611 = vld [vmem:[#allocation12] sm:$0xf]
        %v2612 = vld [vmem:[#allocation12 + $0x4] sm:$0xf]
        %v2613 = vld [vmem:[#allocation12 + $0x8] sm:$0xf]
        %v2614 = vld [vmem:[#allocation12 + $0xc] sm:$0xf]
        %v2615 = vld [vmem:[#allocation12 + $0x10] sm:$0xf]
        %v2616 = vld [vmem:[#allocation12 + $0x14] sm:$0xf]
        %v2617 = vld [vmem:[#allocation12 + $0x18] sm:$0xf]
        %v2618 = vld [vmem:[#allocation12 + $0x1c] sm:$0xf]
        %v2619 = vld [vmem:[#allocation12 + $0x20] sm:$0xf]
        %v2620 = vld [vmem:[#allocation12 + $0x24] sm:$0xf]
        %v2621 = vld [vmem:[#allocation12 + $0x28] sm:$0xf]
        %v2622 = vld [vmem:[#allocation12 + $0x2c] sm:$0xf]
        %v2623 = vld [vmem:[#allocation12 + $0x30] sm:$0xf]
        %v2624 = vld [vmem:[#allocation12 + $0x34] sm:$0xf]
        %v2625 = vld [vmem:[#allocation12 + $0x38] sm:$0xf]
        %v2626 = vld [vmem:[#allocation12 + $0x3c] sm:$0xf]
        %v2627 = vld [vmem:[#allocation12 + $0x40] sm:$0xf]
        %v2628 = vld [vmem:[#allocation12 + $0x44] sm:$0xf]
        %v2629 = vld [vmem:[#allocation12 + $0x48] sm:$0xf]
        %v2630 = vld [vmem:[#allocation12 + $0x4c] sm:$0xf]
        %v2631 = vld [vmem:[#allocation12 + $0x50] sm:$0xf]
        %v2632 = vld [vmem:[#allocation12 + $0x54] sm:$0xf]
        %v2633 = vld [vmem:[#allocation12 + $0x58] sm:$0xf]
        %v2634 = vld [vmem:[#allocation12 + $0x5c] sm:$0xf]
        %v2635 = vld [vmem:[#allocation12 + $0x60] sm:$0xf]
        %v2636 = vld [vmem:[#allocation12 + $0x64] sm:$0xf]
        %v2637 = vld [vmem:[#allocation12 + $0x68] sm:$0xf]
        %v2638 = vld [vmem:[#allocation12 + $0x6c] sm:$0xf]
        %v2639 = vld [vmem:[#allocation12 + $0x70] sm:$0xf]
        %v2640 = vld [vmem:[#allocation12 + $0x74] sm:$0xf]
        %v2641 = vld [vmem:[#allocation12 + $0x78] sm:$0xf]
        %v2642 = vld [vmem:[#allocation12 + $0x7c] sm:$0xf]
        %v2643 = vld [vmem:[#allocation12 + $0x80] sm:$0xf]
        %v2644 = vld [vmem:[#allocation12 + $0x84] sm:$0xf]
        %v2645 = vld [vmem:[#allocation12 + $0x88] sm:$0xf]
        %v2646 = vld [vmem:[#allocation12 + $0x8c] sm:$0xf]
        %v2647 = vld [vmem:[#allocation12 + $0x90] sm:$0xf]
        %v2648 = vld [vmem:[#allocation12 + $0x94] sm:$0xf]
        %v2649 = vld [vmem:[#allocation12 + $0x98] sm:$0xf]
        %v2650 = vld [vmem:[#allocation12 + $0x9c] sm:$0xf]
        %v2651 = vld [vmem:[#allocation12 + $0xa0] sm:$0xf]
        %v2652 = vld [vmem:[#allocation12 + $0xa4] sm:$0xf]
        %v2653 = vld [vmem:[#allocation12 + $0xa8] sm:$0xf]
        %v2654 = vld [vmem:[#allocation12 + $0xac] sm:$0xf]
        %v2655 = vld [vmem:[#allocation12 + $0xb0] sm:$0xf]
        %v2656 = vld [vmem:[#allocation12 + $0xb4] sm:$0xf]
        %v2657 = vld [vmem:[#allocation12 + $0xb8] sm:$0xf]
        %v2658 = vld [vmem:[#allocation12 + $0xbc] sm:$0xf]
        %v2659 = vld [vmem:[#allocation12 + $0xc0] sm:$0xf]
        %v2660 = vld [vmem:[#allocation12 + $0xc4] sm:$0xf]
        %v2661 = vld [vmem:[#allocation12 + $0xc8] sm:$0xf]
        %v2662 = vld [vmem:[#allocation12 + $0xcc] sm:$0xf]
        %v2663 = vld [vmem:[#allocation12 + $0xd0] sm:$0xf]
        %v2664 = vld [vmem:[#allocation12 + $0xd4] sm:$0xf]
        %v2665 = vld [vmem:[#allocation12 + $0xd8] sm:$0xf]
        %v2666 = vld [vmem:[#allocation12 + $0xdc] sm:$0xf]
        %v2667 = vld [vmem:[#allocation12 + $0xe0] sm:$0xf]
        %v2668 = vld [vmem:[#allocation12 + $0xe4] sm:$0xf]
        %v2669 = vld [vmem:[#allocation12 + $0xe8] sm:$0xf]
        %v2670 = vld [vmem:[#allocation12 + $0xec] sm:$0xf]
        %v2671 = vld [vmem:[#allocation12 + $0xf0] sm:$0xf]
        %v2672 = vld [vmem:[#allocation12 + $0xf4] sm:$0xf]
        %v2673 = vld [vmem:[#allocation12 + $0xf8] sm:$0xf]
        %v2674 = vld [vmem:[#allocation12 + $0xfc] sm:$0xf]
        %v2675 = vld [vmem:[#allocation12 + $0x100] sm:$0xf]
        %v2676 = vld [vmem:[#allocation12 + $0x104] sm:$0xf]
        %v2677 = vld [vmem:[#allocation12 + $0x108] sm:$0xf]
        %v2678 = vld [vmem:[#allocation12 + $0x10c] sm:$0xf]
        %v2679 = vld [vmem:[#allocation12 + $0x110] sm:$0xf]
        %v2680 = vld [vmem:[#allocation12 + $0x114] sm:$0xf]
        %v2681 = vld [vmem:[#allocation12 + $0x118] sm:$0xf]
        %v2682 = vld [vmem:[#allocation12 + $0x11c] sm:$0xf]
        %v2683 = vld [vmem:[#allocation12 + $0x120] sm:$0xf]
        %v2684 = vld [vmem:[#allocation12 + $0x124] sm:$0xf]
        %v2685 = vld [vmem:[#allocation12 + $0x128] sm:$0xf]
        %v2686 = vld [vmem:[#allocation12 + $0x12c] sm:$0xf]
        %v2687 = vld [vmem:[#allocation12 + $0x130] sm:$0xf]
        %v2688 = vld [vmem:[#allocation12 + $0x134] sm:$0xf]
        %v2689 = vld [vmem:[#allocation12 + $0x138] sm:$0xf]
        %v2690 = vld [vmem:[#allocation12 + $0x13c] sm:$0xf]
        %v2691 = vld [vmem:[#allocation12 + $0x140] sm:$0xf]
        %v2692 = vld [vmem:[#allocation12 + $0x144] sm:$0xf]
        %v2693 = vld [vmem:[#allocation12 + $0x148] sm:$0xf]
        %v2694 = vld [vmem:[#allocation12 + $0x14c] sm:$0xf]
        %v2695 = vld [vmem:[#allocation12 + $0x150] sm:$0xf]
        %v2696 = vld [vmem:[#allocation12 + $0x154] sm:$0xf]
        %v2697 = vld [vmem:[#allocation12 + $0x158] sm:$0xf]
        %v2698 = vld [vmem:[#allocation12 + $0x15c] sm:$0xf]
        %v2699 = vld [vmem:[#allocation12 + $0x160] sm:$0xf]
        %v2700 = vld [vmem:[#allocation12 + $0x164] sm:$0xf]
        %v2701 = vld [vmem:[#allocation12 + $0x168] sm:$0xf]
        %v2702 = vld [vmem:[#allocation12 + $0x16c] sm:$0xf]
        %v2703 = vld [vmem:[#allocation12 + $0x170] sm:$0xf]
        %v2704 = vld [vmem:[#allocation12 + $0x174] sm:$0xf]
        %v2705 = vld [vmem:[#allocation12 + $0x178] sm:$0xf]
        %v2706 = vld [vmem:[#allocation12 + $0x17c] sm:$0xf]
        %v2707 = vld [vmem:[%s8] sm:$0x1]
        %v2709 = vlaneseq
        %v2710 = vshrl.u32 %v2709, 7
        %v2711 = vsub.s32 0, %v2710
        %v2712 = vrot.slane %v2707, %v2711
        %v2810 = vunpack.c.l.b16 %v2611
        %v2811 = vunpack.c.l.b16 %v2612
        %v2812 = vunpack.c.l.b16 %v2613
        %v2813 = vunpack.c.l.b16 %v2614
        %v2814 = vunpack.c.l.b16 %v2615
        %v2815 = vunpack.c.l.b16 %v2616
        %v2816 = vunpack.c.l.b16 %v2617
        %v2817 = vunpack.c.l.b16 %v2618
        %v2818 = vunpack.c.l.b16 %v2619
        %v2819 = vunpack.c.l.b16 %v2620
        %v2820 = vunpack.c.l.b16 %v2621
        %v2821 = vunpack.c.l.b16 %v2622
        %v2822 = vunpack.c.l.b16 %v2623
        %v2823 = vunpack.c.l.b16 %v2624
        %v2824 = vunpack.c.l.b16 %v2625
        %v2825 = vunpack.c.l.b16 %v2626
        %v2826 = vunpack.c.l.b16 %v2627
        %v2827 = vunpack.c.l.b16 %v2628
        %v2828 = vunpack.c.l.b16 %v2629
        %v2829 = vunpack.c.l.b16 %v2630
        %v2830 = vunpack.c.l.b16 %v2631
        %v2831 = vunpack.c.l.b16 %v2632
        %v2832 = vunpack.c.l.b16 %v2633
        %v2833 = vunpack.c.l.b16 %v2634
        %v2834 = vunpack.c.l.b16 %v2635
        %v2835 = vunpack.c.l.b16 %v2636
        %v2836 = vunpack.c.l.b16 %v2637
        %v2837 = vunpack.c.l.b16 %v2638
        %v2838 = vunpack.c.l.b16 %v2639
        %v2839 = vunpack.c.l.b16 %v2640
        %v2840 = vunpack.c.l.b16 %v2641
        %v2841 = vunpack.c.l.b16 %v2642
        %v2842 = vunpack.c.l.b16 %v2643
        %v2843 = vunpack.c.l.b16 %v2644
        %v2844 = vunpack.c.l.b16 %v2645
        %v2845 = vunpack.c.l.b16 %v2646
        %v2846 = vunpack.c.l.b16 %v2647
        %v2847 = vunpack.c.l.b16 %v2648
        %v2848 = vunpack.c.l.b16 %v2649
        %v2849 = vunpack.c.l.b16 %v2650
        %v2850 = vunpack.c.l.b16 %v2651
        %v2851 = vunpack.c.l.b16 %v2652
        %v2852 = vunpack.c.l.b16 %v2653
        %v2853 = vunpack.c.l.b16 %v2654
        %v2854 = vunpack.c.l.b16 %v2655
        %v2855 = vunpack.c.l.b16 %v2656
        %v2856 = vunpack.c.l.b16 %v2657
        %v2857 = vunpack.c.l.b16 %v2658
        %v2858 = vunpack.c.l.b16 %v2659
        %v2859 = vunpack.c.l.b16 %v2660
        %v2860 = vunpack.c.l.b16 %v2661
        %v2861 = vunpack.c.l.b16 %v2662
        %v2862 = vunpack.c.l.b16 %v2663
        %v2863 = vunpack.c.l.b16 %v2664
        %v2864 = vunpack.c.l.b16 %v2665
        %v2865 = vunpack.c.l.b16 %v2666
        %v2866 = vunpack.c.l.b16 %v2667
        %v2867 = vunpack.c.l.b16 %v2668
        %v2868 = vunpack.c.l.b16 %v2669
        %v2869 = vunpack.c.l.b16 %v2670
        %v2870 = vunpack.c.l.b16 %v2671
        %v2871 = vunpack.c.l.b16 %v2672
        %v2872 = vunpack.c.l.b16 %v2673
        %v2873 = vunpack.c.l.b16 %v2674
        %v2874 = vunpack.c.l.b16 %v2675
        %v2875 = vunpack.c.l.b16 %v2676
        %v2876 = vunpack.c.l.b16 %v2677
        %v2877 = vunpack.c.l.b16 %v2678
        %v2878 = vunpack.c.l.b16 %v2679
        %v2879 = vunpack.c.l.b16 %v2680
        %v2880 = vunpack.c.l.b16 %v2681
        %v2881 = vunpack.c.l.b16 %v2682
        %v2882 = vunpack.c.l.b16 %v2683
        %v2883 = vunpack.c.l.b16 %v2684
        %v2884 = vunpack.c.l.b16 %v2685
        %v2885 = vunpack.c.l.b16 %v2686
        %v2886 = vunpack.c.l.b16 %v2687
        %v2887 = vunpack.c.l.b16 %v2688
        %v2888 = vunpack.c.l.b16 %v2689
        %v2889 = vunpack.c.l.b16 %v2690
        %v2890 = vunpack.c.l.b16 %v2691
        %v2891 = vunpack.c.l.b16 %v2692
        %v2892 = vunpack.c.l.b16 %v2693
        %v2893 = vunpack.c.l.b16 %v2694
        %v2894 = vunpack.c.l.b16 %v2695
        %v2895 = vunpack.c.l.b16 %v2696
        %v2896 = vunpack.c.l.b16 %v2697
        %v2897 = vunpack.c.l.b16 %v2698
        %v2898 = vunpack.c.l.b16 %v2699
        %v2899 = vunpack.c.l.b16 %v2700
        %v2900 = vunpack.c.l.b16 %v2701
        %v2901 = vunpack.c.l.b16 %v2702
        %v2902 = vunpack.c.l.b16 %v2703
        %v2903 = vunpack.c.l.b16 %v2704
        %v2904 = vunpack.c.l.b16 %v2705
        %v2905 = vunpack.c.l.b16 %v2706
        %v2906 = vpack.c.b16 %v2811, %v2810
        %v2907 = vpack.c.b16 %v2813, %v2812
        %v2908 = vpack.c.b16 %v2815, %v2814
        %v2909 = vpack.c.b16 %v2817, %v2816
        %v2910 = vpack.c.b16 %v2819, %v2818
        %v2911 = vpack.c.b16 %v2821, %v2820
        %v2912 = vpack.c.b16 %v2823, %v2822
        %v2913 = vpack.c.b16 %v2825, %v2824
        %v2914 = vpack.c.b16 %v2827, %v2826
        %v2915 = vpack.c.b16 %v2829, %v2828
        %v2916 = vpack.c.b16 %v2831, %v2830
        %v2917 = vpack.c.b16 %v2833, %v2832
        %v2918 = vpack.c.b16 %v2835, %v2834
        %v2919 = vpack.c.b16 %v2837, %v2836
        %v2920 = vpack.c.b16 %v2839, %v2838
        %v2921 = vpack.c.b16 %v2841, %v2840
        %v2922 = vpack.c.b16 %v2843, %v2842
        %v2923 = vpack.c.b16 %v2845, %v2844
        %v2924 = vpack.c.b16 %v2847, %v2846
        %v2925 = vpack.c.b16 %v2849, %v2848
        %v2926 = vpack.c.b16 %v2851, %v2850
        %v2927 = vpack.c.b16 %v2853, %v2852
        %v2928 = vpack.c.b16 %v2855, %v2854
        %v2929 = vpack.c.b16 %v2857, %v2856
        %v2930 = vpack.c.b16 %v2859, %v2858
        %v2931 = vpack.c.b16 %v2861, %v2860
        %v2932 = vpack.c.b16 %v2863, %v2862
        %v2933 = vpack.c.b16 %v2865, %v2864
        %v2934 = vpack.c.b16 %v2867, %v2866
        %v2935 = vpack.c.b16 %v2869, %v2868
        %v2936 = vpack.c.b16 %v2871, %v2870
        %v2937 = vpack.c.b16 %v2873, %v2872
        %v2938 = vpack.c.b16 %v2875, %v2874
        %v2939 = vpack.c.b16 %v2877, %v2876
        %v2940 = vpack.c.b16 %v2879, %v2878
        %v2941 = vpack.c.b16 %v2881, %v2880
        %v2942 = vpack.c.b16 %v2883, %v2882
        %v2943 = vpack.c.b16 %v2885, %v2884
        %v2944 = vpack.c.b16 %v2887, %v2886
        %v2945 = vpack.c.b16 %v2889, %v2888
        %v2946 = vpack.c.b16 %v2891, %v2890
        %v2947 = vpack.c.b16 %v2893, %v2892
        %v2948 = vpack.c.b16 %v2895, %v2894
        %v2949 = vpack.c.b16 %v2897, %v2896
        %v2950 = vpack.c.b16 %v2899, %v2898
        %v2951 = vpack.c.b16 %v2901, %v2900
        %v2952 = vpack.c.b16 %v2903, %v2902
        %v2953 = vpack.c.b16 %v2905, %v2904
        %3002 = vmatprep.subr.bf16.mxu0 0
        %3003 = vmatpush1.bf16.msra.mxu0 %v2913
        %3004 = vmatprep.subr.bf16.mxu0 0
        %3005 = vmatpush1.bf16.msra.mxu0 %v2912
        %3006 = vmatprep.subr.bf16.mxu0 0
        %3007 = vmatpush1.bf16.msra.mxu0 %v2911
        %3008 = vmatprep.subr.bf16.mxu0 0
        %3009 = vmatpush1.bf16.msra.mxu0 %v2910
        %3010 = vmatprep.subr.bf16.mxu0 0
        %3011 = vmatpush1.bf16.msra.mxu0 %v2909
        %3012 = vmatprep.subr.bf16.mxu0 0
        %3013 = vmatpush1.bf16.msra.mxu0 %v2908
        %3014 = vmatprep.subr.bf16.mxu0 0
        %3015 = vmatpush1.bf16.msra.mxu0 %v2907
        %3016 = vmatprep.subr.bf16.mxu0 0
        %3017 = vmatpush1.bf16.msra.mxu0 %v2906
        %3018 = vmatprep.subr.bf16.mxu0 0
        %3019 = vmatpush2.bf16.msra.mxu0 %v2921
        %3020 = vmatprep.subr.bf16.mxu0 0
        %3021 = vmatpush2.bf16.msra.mxu0 %v2920
        %3022 = vmatprep.subr.bf16.mxu0 0
        %3023 = vmatpush2.bf16.msra.mxu0 %v2919
        %3024 = vmatprep.subr.bf16.mxu0 0
        %3025 = vmatpush2.bf16.msra.mxu0 %v2918
        %3026 = vmatprep.subr.bf16.mxu0 0
        %3027 = vmatpush2.bf16.msra.mxu0 %v2917
        %3028 = vmatprep.subr.bf16.mxu0 0
        %3029 = vmatpush2.bf16.msra.mxu0 %v2916
        %3030 = vmatprep.subr.bf16.mxu0 0
        %3031 = vmatpush2.bf16.msra.mxu0 %v2915
        %3032 = vmatprep.subr.bf16.mxu0 0
        %3033 = vmatpush2.bf16.msra.mxu0 %v2914
        %3034 = vmatprep.mubr.bf16.mxu0 %v2606
        %3035 = vmatmul.mubr.bf16.gmra.mxu0 %v2605
        %v3036 = vpop.f32.mrf.mxu0
        %v3037 = vadd.f32 %v2712, %v3036
        %v3038 = vpop.f32.mrf.mxu0
        %v3039 = vpop.f32.mrf.mxu0
        %v3040 = vpop.f32.mrf.mxu0
        %3041 = vdwg.mxu0
        %3042 = vmatprep.subr.bf16.mxu0 0
        %3043 = vmatpush1.bf16.msra.mxu0 %v2929
        %3044 = vmatprep.subr.bf16.mxu0 0
        %3045 = vmatpush1.bf16.msra.mxu0 %v2928
        %3046 = vmatprep.subr.bf16.mxu0 0
        %3047 = vmatpush1.bf16.msra.mxu0 %v2927
        %3048 = vmatprep.subr.bf16.mxu0 0
        %3049 = vmatpush1.bf16.msra.mxu0 %v2926
        %3050 = vmatprep.subr.bf16.mxu0 0
        %3051 = vmatpush1.bf16.msra.mxu0 %v2925
        %3052 = vmatprep.subr.bf16.mxu0 0
        %3053 = vmatpush1.bf16.msra.mxu0 %v2924
        %3054 = vmatprep.subr.bf16.mxu0 0
        %3055 = vmatpush1.bf16.msra.mxu0 %v2923
        %3056 = vmatprep.subr.bf16.mxu0 0
        %3057 = vmatpush1.bf16.msra.mxu0 %v2922
        %3058 = vmatprep.subr.bf16.mxu0 0
        %3059 = vmatpush2.bf16.msra.mxu0 %v2937
        %3060 = vmatprep.subr.bf16.mxu0 0
        %3061 = vmatpush2.bf16.msra.mxu0 %v2936
        %3062 = vmatprep.subr.bf16.mxu0 0
        %3063 = vmatpush2.bf16.msra.mxu0 %v2935
        %3064 = vmatprep.subr.bf16.mxu0 0
        %3065 = vmatpush2.bf16.msra.mxu0 %v2934
        %3066 = vmatprep.subr.bf16.mxu0 0
        %3067 = vmatpush2.bf16.msra.mxu0 %v2933
        %3068 = vmatprep.subr.bf16.mxu0 0
        %3069 = vmatpush2.bf16.msra.mxu0 %v2932
        %3070 = vmatprep.subr.bf16.mxu0 0
        %3071 = vmatpush2.bf16.msra.mxu0 %v2931
        %3072 = vmatprep.subr.bf16.mxu0 0
        %3073 = vmatpush2.bf16.msra.mxu0 %v2930
        %3074 = vmatprep.mubr.bf16.mxu0 %v2608
        %3075 = vmatmul.mubr.bf16.gmra.mxu0 %v2607
        %v3076 = vpop.f32.mrf.mxu0
        %v3077 = vadd.f32 %v3037, %v3076
        %v3078 = vpop.f32.mrf.mxu0
        %v3079 = vpop.f32.mrf.mxu0
        %v3080 = vpop.f32.mrf.mxu0
        %3081 = vdwg.mxu0
        %3082 = vmatprep.subr.bf16.mxu0 0
        %3083 = vmatpush1.bf16.msra.mxu0 %v2945
        %3084 = vmatprep.subr.bf16.mxu0 0
        %3085 = vmatpush1.bf16.msra.mxu0 %v2944
        %3086 = vmatprep.subr.bf16.mxu0 0
        %3087 = vmatpush1.bf16.msra.mxu0 %v2943
        %3088 = vmatprep.subr.bf16.mxu0 0
        %3089 = vmatpush1.bf16.msra.mxu0 %v2942
        %3090 = vmatprep.subr.bf16.mxu0 0
        %3091 = vmatpush1.bf16.msra.mxu0 %v2941
        %3092 = vmatprep.subr.bf16.mxu0 0
        %3093 = vmatpush1.bf16.msra.mxu0 %v2940
        %3094 = vmatprep.subr.bf16.mxu0 0
        %3095 = vmatpush1.bf16.msra.mxu0 %v2939
        %3096 = vmatprep.subr.bf16.mxu0 0
        %3097 = vmatpush1.bf16.msra.mxu0 %v2938
        %3098 = vmatprep.subr.bf16.mxu0 0
        %3099 = vmatpush2.bf16.msra.mxu0 %v2953
        %3100 = vmatprep.subr.bf16.mxu0 0
        %3101 = vmatpush2.bf16.msra.mxu0 %v2952
        %3102 = vmatprep.subr.bf16.mxu0 0
        %3103 = vmatpush2.bf16.msra.mxu0 %v2951
        %3104 = vmatprep.subr.bf16.mxu0 0
        %3105 = vmatpush2.bf16.msra.mxu0 %v2950
        %3106 = vmatprep.subr.bf16.mxu0 0
        %3107 = vmatpush2.bf16.msra.mxu0 %v2949
        %3108 = vmatprep.subr.bf16.mxu0 0
        %3109 = vmatpush2.bf16.msra.mxu0 %v2948
        %3110 = vmatprep.subr.bf16.mxu0 0
        %3111 = vmatpush2.bf16.msra.mxu0 %v2947
        %3112 = vmatprep.subr.bf16.mxu0 0
        %3113 = vmatpush2.bf16.msra.mxu0 %v2946
        %3114 = vmatprep.mubr.bf16.mxu0 %v2610
        %3115 = vmatmul.mubr.bf16.gmra.mxu0 %v2609
        %v3116 = vpop.f32.mrf.mxu0
        %v3117 = vadd.f32 %v3077, %v3116
        %v3118 = vpop.f32.mrf.mxu0
        %v3119 = vpop.f32.mrf.mxu0
        %v3120 = vpop.f32.mrf.mxu0
        %3121 = vdwg.mxu0
        %v3122 = vadd.f32 %v1531, %v3117
        %v3123 = vld [vmem:[%s9] sm:$0x1]
        %v3124 = vld [vmem:[%s10] sm:$0x1]
        %3125 = vadd.xlane.f32.xlu0 %v3122
        %v3126 = vpop.xlane.xlu0 %3125
        %v3127 = vmul.f32 %v3126, 0.01
        %v3128 = vsub.f32 %v3122, %v3127
        %v3129 = vmul.f32 %v3128, %v1540
        %v3130 = vmul.f32 %v3129, %v3129
        %3131 = vadd.xlane.f32.xlu0 %v3130
        %v3132 = vpop.xlane.xlu0 %3131
        %v3133 = vmul.f32 %v3132, 0.01
        %v3134 = vadd.f32 %v3133, 1e-05
        %v3135 = vrsqrt.pop %v3134
        %v3136 = vmul.f32 %v3129, %v3135
        %v3138 = vlaneseq
        %v3139 = vshrl.u32 %v3138, 7
        %v3140 = vsub.s32 0, %v3139
        %v3141 = vrot.slane %v3123, %v3140
        %v3143 = vmul.f32 %v3136, %v3141
        %v3145 = vlaneseq
        %v3146 = vshrl.u32 %v3145, 7
        %v3147 = vsub.s32 0, %v3146
        %v3148 = vrot.slane %v3124, %v3147
        %v3150 = vadd.f32 %v3143, %v3148
        %v3151 = vpack.c.bf16 %v3150, %v3150
        %v3152 = vld [vmem:[#allocation13] sm:$0xff]
        %v3153 = vld [vmem:[#allocation13 + $0x8] sm:$0xff]
        %v3154 = vld [vmem:[#allocation13 + $0x10] sm:$0xff]
        %v3155 = vld [vmem:[#allocation13 + $0x18] sm:$0xff]
        %v3156 = vld [vmem:[#allocation13 + $0x20] sm:$0xff]
        %v3157 = vld [vmem:[#allocation13 + $0x28] sm:$0xff]
        %v3158 = vld [vmem:[#allocation13 + $0x30] sm:$0xff]
        %v3159 = vld [vmem:[#allocation13 + $0x38] sm:$0xff]
        %v3160 = vld [vmem:[#allocation13 + $0x40] sm:$0xff]
        %v3161 = vld [vmem:[#allocation13 + $0x48] sm:$0xff]
        %v3162 = vld [vmem:[#allocation13 + $0x50] sm:$0xff]
        %v3163 = vld [vmem:[#allocation13 + $0x58] sm:$0xff]
        %v3164 = vld [vmem:[#allocation13 + $0x60] sm:$0xff]
        %v3165 = vld [vmem:[#allocation13 + $0x68] sm:$0xff]
        %v3166 = vld [vmem:[#allocation13 + $0x70] sm:$0xff]
        %v3167 = vld [vmem:[#allocation13 + $0x78] sm:$0xff]
        %v3168 = vld [vmem:[#allocation13 + $0x80] sm:$0xff]
        %v3169 = vld [vmem:[#allocation13 + $0x88] sm:$0xff]
        %v3170 = vld [vmem:[#allocation13 + $0x90] sm:$0xff]
        %v3171 = vld [vmem:[#allocation13 + $0x98] sm:$0xff]
        %v3172 = vld [vmem:[#allocation13 + $0xa0] sm:$0xff]
        %v3173 = vld [vmem:[#allocation13 + $0xa8] sm:$0xff]
        %v3174 = vld [vmem:[#allocation13 + $0xb0] sm:$0xff]
        %v3175 = vld [vmem:[#allocation13 + $0xb8] sm:$0xff]
        %v3176 = vld [vmem:[#allocation13 + $0xc0] sm:$0xff]
        %v3177 = vld [vmem:[#allocation13 + $0xc8] sm:$0xff]
        %v3178 = vld [vmem:[#allocation13 + $0xd0] sm:$0xff]
        %v3179 = vld [vmem:[#allocation13 + $0xd8] sm:$0xff]
        %v3180 = vld [vmem:[#allocation13 + $0xe0] sm:$0xff]
        %v3181 = vld [vmem:[#allocation13 + $0xe8] sm:$0xff]
        %v3182 = vld [vmem:[#allocation13 + $0xf0] sm:$0xff]
        %v3183 = vld [vmem:[#allocation13 + $0xf8] sm:$0xff]
        %v3184 = vld [vmem:[%s12] sm:$0xf]
        %v3186 = vlaneseq
        %v3187 = vshrl.u32 %v3186, 7
        %v3188 = vsub.s32 0, %v3187
        %v3189 = vrot.slane %v3184, %v3188
        %v3190 = vlaneseq
        %v3191 = vshrl.u32 %v3190, 7
        %v3192 = vsub.s32 1, %v3191
        %v3193 = vrot.slane %v3184, %v3192
        %v3194 = vlaneseq
        %v3195 = vshrl.u32 %v3194, 7
        %v3196 = vsub.s32 2, %v3195
        %v3197 = vrot.slane %v3184, %v3196
        %v3198 = vlaneseq
        %v3199 = vshrl.u32 %v3198, 7
        %v3200 = vsub.s32 3, %v3199
        %v3201 = vrot.slane %v3184, %v3200
        %v3238 = vunpack.c.l.b16 %v3152
        %v3239 = vunpack.c.h.b16 %v3152
        %v3240 = vunpack.c.l.b16 %v3153
        %v3241 = vunpack.c.h.b16 %v3153
        %v3242 = vunpack.c.l.b16 %v3154
        %v3243 = vunpack.c.h.b16 %v3154
        %v3244 = vunpack.c.l.b16 %v3155
        %v3245 = vunpack.c.h.b16 %v3155
        %v3246 = vunpack.c.l.b16 %v3156
        %v3247 = vunpack.c.h.b16 %v3156
        %v3248 = vunpack.c.l.b16 %v3157
        %v3249 = vunpack.c.h.b16 %v3157
        %v3250 = vunpack.c.l.b16 %v3158
        %v3251 = vunpack.c.h.b16 %v3158
        %v3252 = vunpack.c.l.b16 %v3159
        %v3253 = vunpack.c.h.b16 %v3159
        %v3254 = vunpack.c.l.b16 %v3160
        %v3255 = vunpack.c.h.b16 %v3160
        %v3256 = vunpack.c.l.b16 %v3161
        %v3257 = vunpack.c.h.b16 %v3161
        %v3258 = vunpack.c.l.b16 %v3162
        %v3259 = vunpack.c.h.b16 %v3162
        %v3260 = vunpack.c.l.b16 %v3163
        %v3261 = vunpack.c.h.b16 %v3163
        %v3262 = vunpack.c.l.b16 %v3164
        %v3263 = vunpack.c.h.b16 %v3164
        %v3264 = vunpack.c.l.b16 %v3165
        %v3265 = vunpack.c.h.b16 %v3165
        %v3266 = vunpack.c.l.b16 %v3166
        %v3267 = vunpack.c.h.b16 %v3166
        %v3268 = vunpack.c.l.b16 %v3167
        %v3269 = vunpack.c.h.b16 %v3167
        %v3270 = vunpack.c.l.b16 %v3168
        %v3271 = vunpack.c.h.b16 %v3168
        %v3272 = vunpack.c.l.b16 %v3169
        %v3273 = vunpack.c.h.b16 %v3169
        %v3274 = vunpack.c.l.b16 %v3170
        %v3275 = vunpack.c.h.b16 %v3170
        %v3276 = vunpack.c.l.b16 %v3171
        %v3277 = vunpack.c.h.b16 %v3171
        %v3278 = vunpack.c.l.b16 %v3172
        %v3279 = vunpack.c.h.b16 %v3172
        %v3280 = vunpack.c.l.b16 %v3173
        %v3281 = vunpack.c.h.b16 %v3173
        %v3282 = vunpack.c.l.b16 %v3174
        %v3283 = vunpack.c.h.b16 %v3174
        %v3284 = vunpack.c.l.b16 %v3175
        %v3285 = vunpack.c.h.b16 %v3175
        %v3286 = vunpack.c.l.b16 %v3176
        %v3287 = vunpack.c.h.b16 %v3176
        %v3288 = vunpack.c.l.b16 %v3177
        %v3289 = vunpack.c.h.b16 %v3177
        %v3290 = vunpack.c.l.b16 %v3178
        %v3291 = vunpack.c.h.b16 %v3178
        %v3292 = vunpack.c.l.b16 %v3179
        %v3293 = vunpack.c.h.b16 %v3179
        %v3294 = vunpack.c.l.b16 %v3180
        %v3295 = vunpack.c.h.b16 %v3180
        %v3296 = vunpack.c.l.b16 %v3181
        %v3297 = vunpack.c.h.b16 %v3181
        %v3298 = vunpack.c.l.b16 %v3182
        %v3299 = vunpack.c.h.b16 %v3182
        %v3300 = vunpack.c.l.b16 %v3183
        %v3301 = vunpack.c.h.b16 %v3183
        %v3302 = vpack.c.b16 %v3242, %v3238
        %v3303 = vpack.c.b16 %v3243, %v3239
        %v3304 = vpack.c.b16 %v3244, %v3240
        %v3305 = vpack.c.b16 %v3245, %v3241
        %v3306 = vpack.c.b16 %v3250, %v3246
        %v3307 = vpack.c.b16 %v3251, %v3247
        %v3308 = vpack.c.b16 %v3252, %v3248
        %v3309 = vpack.c.b16 %v3253, %v3249
        %v3310 = vpack.c.b16 %v3258, %v3254
        %v3311 = vpack.c.b16 %v3259, %v3255
        %v3312 = vpack.c.b16 %v3260, %v3256
        %v3313 = vpack.c.b16 %v3261, %v3257
        %v3314 = vpack.c.b16 %v3266, %v3262
        %v3315 = vpack.c.b16 %v3267, %v3263
        %v3316 = vpack.c.b16 %v3268, %v3264
        %v3317 = vpack.c.b16 %v3269, %v3265
        %v3318 = vpack.c.b16 %v3274, %v3270
        %v3319 = vpack.c.b16 %v3275, %v3271
        %v3320 = vpack.c.b16 %v3276, %v3272
        %v3321 = vpack.c.b16 %v3277, %v3273
        %v3322 = vpack.c.b16 %v3282, %v3278
        %v3323 = vpack.c.b16 %v3283, %v3279
        %v3324 = vpack.c.b16 %v3284, %v3280
        %v3325 = vpack.c.b16 %v3285, %v3281
        %v3326 = vpack.c.b16 %v3290, %v3286
        %v3327 = vpack.c.b16 %v3291, %v3287
        %v3328 = vpack.c.b16 %v3292, %v3288
        %v3329 = vpack.c.b16 %v3293, %v3289
        %v3330 = vpack.c.b16 %v3298, %v3294
        %v3331 = vpack.c.b16 %v3299, %v3295
        %v3332 = vpack.c.b16 %v3300, %v3296
        %v3333 = vpack.c.b16 %v3301, %v3297
        %3366 = vmatprep.subr.bf16.mxu0 %v3331
        %3367 = vmatpush1.bf16.msra.mxu0 %v3330
        %3368 = vmatprep.subr.bf16.mxu0 %v3327
        %3369 = vmatpush1.bf16.msra.mxu0 %v3326
        %3370 = vmatprep.subr.bf16.mxu0 %v3323
        %3371 = vmatpush1.bf16.msra.mxu0 %v3322
        %3372 = vmatprep.subr.bf16.mxu0 %v3319
        %3373 = vmatpush1.bf16.msra.mxu0 %v3318
        %3374 = vmatprep.subr.bf16.mxu0 %v3315
        %3375 = vmatpush1.bf16.msra.mxu0 %v3314
        %3376 = vmatprep.subr.bf16.mxu0 %v3311
        %3377 = vmatpush1.bf16.msra.mxu0 %v3310
        %3378 = vmatprep.subr.bf16.mxu0 %v3307
        %3379 = vmatpush1.bf16.msra.mxu0 %v3306
        %3380 = vmatprep.subr.bf16.mxu0 %v3303
        %3381 = vmatpush1.bf16.msra.mxu0 %v3302
        %3382 = vmatprep.subr.bf16.mxu0 0
        %3383 = vmatpush2.bf16.msra.mxu0 0
        %3384 = vmatprep.subr.bf16.mxu0 0
        %3385 = vmatpush2.bf16.msra.mxu0 0
        %3386 = vmatprep.subr.bf16.mxu0 0
        %3387 = vmatpush2.bf16.msra.mxu0 0
        %3388 = vmatprep.subr.bf16.mxu0 0
        %3389 = vmatpush2.bf16.msra.mxu0 0
        %3390 = vmatprep.subr.bf16.mxu0 0
        %3391 = vmatpush2.bf16.msra.mxu0 0
        %3392 = vmatprep.subr.bf16.mxu0 0
        %3393 = vmatpush2.bf16.msra.mxu0 0
        %3394 = vmatprep.subr.bf16.mxu0 0
        %3395 = vmatpush2.bf16.msra.mxu0 0
        %3396 = vmatprep.subr.bf16.mxu0 0
        %3397 = vmatpush2.bf16.msra.mxu0 0
        %3398 = vmatprep.mubr.bf16.mxu0 0
        %3399 = vmatmul.mubr.bf16.gmra.mxu0 %v3151
        %v3400 = vpop.f32.mrf.mxu0
        %v3401 = vadd.f32 %v3189, %v3400
        %v3402 = vpop.f32.mrf.mxu0
        %v3403 = vadd.f32 %v3193, %v3402
        %v3404 = vpop.f32.mrf.mxu0
        %v3405 = vpop.f32.mrf.mxu0
        %3406 = vdwg.mxu0
        %3407 = vmatprep.subr.bf16.mxu0 %v3333
        %3408 = vmatpush1.bf16.msra.mxu0 %v3332
        %3409 = vmatprep.subr.bf16.mxu0 %v3329
        %3410 = vmatpush1.bf16.msra.mxu0 %v3328
        %3411 = vmatprep.subr.bf16.mxu0 %v3325
        %3412 = vmatpush1.bf16.msra.mxu0 %v3324
        %3413 = vmatprep.subr.bf16.mxu0 %v3321
        %3414 = vmatpush1.bf16.msra.mxu0 %v3320
        %3415 = vmatprep.subr.bf16.mxu0 %v3317
        %3416 = vmatpush1.bf16.msra.mxu0 %v3316
        %3417 = vmatprep.subr.bf16.mxu0 %v3313
        %3418 = vmatpush1.bf16.msra.mxu0 %v3312
        %3419 = vmatprep.subr.bf16.mxu0 %v3309
        %3420 = vmatpush1.bf16.msra.mxu0 %v3308
        %3421 = vmatprep.subr.bf16.mxu0 %v3305
        %3422 = vmatpush1.bf16.msra.mxu0 %v3304
        %3423 = vmatprep.subr.bf16.mxu0 0
        %3424 = vmatpush2.bf16.msra.mxu0 0
        %3425 = vmatprep.subr.bf16.mxu0 0
        %3426 = vmatpush2.bf16.msra.mxu0 0
        %3427 = vmatprep.subr.bf16.mxu0 0
        %3428 = vmatpush2.bf16.msra.mxu0 0
        %3429 = vmatprep.subr.bf16.mxu0 0
        %3430 = vmatpush2.bf16.msra.mxu0 0
        %3431 = vmatprep.subr.bf16.mxu0 0
        %3432 = vmatpush2.bf16.msra.mxu0 0
        %3433 = vmatprep.subr.bf16.mxu0 0
        %3434 = vmatpush2.bf16.msra.mxu0 0
        %3435 = vmatprep.subr.bf16.mxu0 0
        %3436 = vmatpush2.bf16.msra.mxu0 0
        %3437 = vmatprep.subr.bf16.mxu0 0
        %3438 = vmatpush2.bf16.msra.mxu0 0
        %3439 = vmatprep.mubr.bf16.mxu0 0
        %3440 = vmatmul.mubr.bf16.gmra.mxu0 %v3151
        %v3441 = vpop.f32.mrf.mxu0
        %v3442 = vadd.f32 %v3197, %v3441
        %v3443 = vpop.f32.mrf.mxu0
        %v3444 = vadd.f32 %v3201, %v3443
        %v3445 = vpop.f32.mrf.mxu0
        %v3446 = vpop.f32.mrf.mxu0
        %3447 = vdwg.mxu0
        %v3448 = vmax.f32 %v3401, 0.0
        %v3449 = vmax.f32 %v3403, 0.0
        %v3450 = vmax.f32 %v3442, 0.0
        %v3451 = vmax.f32 %v3444, 0.0
        %v3452 = vpack.c.bf16 %v3448, %v3448
        %v3453 = vpack.c.bf16 %v3449, %v3449
        %v3454 = vpack.c.bf16 %v3450, %v3450
        %v3455 = vpack.c.bf16 %v3451, %v3451
        %v3456 = vld [vmem:[#allocation15] sm:$0xf]
        %v3457 = vld [vmem:[#allocation15 + $0x4] sm:$0xf]
        %v3458 = vld [vmem:[#allocation15 + $0x8] sm:$0xf]
        %v3459 = vld [vmem:[#allocation15 + $0xc] sm:$0xf]
        %v3460 = vld [vmem:[#allocation15 + $0x10] sm:$0xf]
        %v3461 = vld [vmem:[#allocation15 + $0x14] sm:$0xf]
        %v3462 = vld [vmem:[#allocation15 + $0x18] sm:$0xf]
        %v3463 = vld [vmem:[#allocation15 + $0x1c] sm:$0xf]
        %v3464 = vld [vmem:[#allocation15 + $0x20] sm:$0xf]
        %v3465 = vld [vmem:[#allocation15 + $0x24] sm:$0xf]
        %v3466 = vld [vmem:[#allocation15 + $0x28] sm:$0xf]
        %v3467 = vld [vmem:[#allocation15 + $0x2c] sm:$0xf]
        %v3468 = vld [vmem:[#allocation15 + $0x30] sm:$0xf]
        %v3469 = vld [vmem:[#allocation15 + $0x34] sm:$0xf]
        %v3470 = vld [vmem:[#allocation15 + $0x38] sm:$0xf]
        %v3471 = vld [vmem:[#allocation15 + $0x3c] sm:$0xf]
        %v3472 = vld [vmem:[#allocation15 + $0x40] sm:$0xf]
        %v3473 = vld [vmem:[#allocation15 + $0x44] sm:$0xf]
        %v3474 = vld [vmem:[#allocation15 + $0x48] sm:$0xf]
        %v3475 = vld [vmem:[#allocation15 + $0x4c] sm:$0xf]
        %v3476 = vld [vmem:[#allocation15 + $0x50] sm:$0xf]
        %v3477 = vld [vmem:[#allocation15 + $0x54] sm:$0xf]
        %v3478 = vld [vmem:[#allocation15 + $0x58] sm:$0xf]
        %v3479 = vld [vmem:[#allocation15 + $0x5c] sm:$0xf]
        %v3480 = vld [vmem:[#allocation15 + $0x60] sm:$0xf]
        %v3481 = vld [vmem:[#allocation15 + $0x64] sm:$0xf]
        %v3482 = vld [vmem:[#allocation15 + $0x68] sm:$0xf]
        %v3483 = vld [vmem:[#allocation15 + $0x6c] sm:$0xf]
        %v3484 = vld [vmem:[#allocation15 + $0x70] sm:$0xf]
        %v3485 = vld [vmem:[#allocation15 + $0x74] sm:$0xf]
        %v3486 = vld [vmem:[#allocation15 + $0x78] sm:$0xf]
        %v3487 = vld [vmem:[#allocation15 + $0x7c] sm:$0xf]
        %v3488 = vld [vmem:[#allocation15 + $0x80] sm:$0xf]
        %v3489 = vld [vmem:[#allocation15 + $0x84] sm:$0xf]
        %v3490 = vld [vmem:[#allocation15 + $0x88] sm:$0xf]
        %v3491 = vld [vmem:[#allocation15 + $0x8c] sm:$0xf]
        %v3492 = vld [vmem:[#allocation15 + $0x90] sm:$0xf]
        %v3493 = vld [vmem:[#allocation15 + $0x94] sm:$0xf]
        %v3494 = vld [vmem:[#allocation15 + $0x98] sm:$0xf]
        %v3495 = vld [vmem:[#allocation15 + $0x9c] sm:$0xf]
        %v3496 = vld [vmem:[#allocation15 + $0xa0] sm:$0xf]
        %v3497 = vld [vmem:[#allocation15 + $0xa4] sm:$0xf]
        %v3498 = vld [vmem:[#allocation15 + $0xa8] sm:$0xf]
        %v3499 = vld [vmem:[#allocation15 + $0xac] sm:$0xf]
        %v3500 = vld [vmem:[#allocation15 + $0xb0] sm:$0xf]
        %v3501 = vld [vmem:[#allocation15 + $0xb4] sm:$0xf]
        %v3502 = vld [vmem:[#allocation15 + $0xb8] sm:$0xf]
        %v3503 = vld [vmem:[#allocation15 + $0xbc] sm:$0xf]
        %v3504 = vld [vmem:[#allocation15 + $0xc0] sm:$0xf]
        %v3505 = vld [vmem:[#allocation15 + $0xc4] sm:$0xf]
        %v3506 = vld [vmem:[#allocation15 + $0xc8] sm:$0xf]
        %v3507 = vld [vmem:[#allocation15 + $0xcc] sm:$0xf]
        %v3508 = vld [vmem:[#allocation15 + $0xd0] sm:$0xf]
        %v3509 = vld [vmem:[#allocation15 + $0xd4] sm:$0xf]
        %v3510 = vld [vmem:[#allocation15 + $0xd8] sm:$0xf]
        %v3511 = vld [vmem:[#allocation15 + $0xdc] sm:$0xf]
        %v3512 = vld [vmem:[#allocation15 + $0xe0] sm:$0xf]
        %v3513 = vld [vmem:[#allocation15 + $0xe4] sm:$0xf]
        %v3514 = vld [vmem:[#allocation15 + $0xe8] sm:$0xf]
        %v3515 = vld [vmem:[#allocation15 + $0xec] sm:$0xf]
        %v3516 = vld [vmem:[#allocation15 + $0xf0] sm:$0xf]
        %v3517 = vld [vmem:[#allocation15 + $0xf4] sm:$0xf]
        %v3518 = vld [vmem:[#allocation15 + $0xf8] sm:$0xf]
        %v3519 = vld [vmem:[#allocation15 + $0xfc] sm:$0xf]
        %v3520 = vld [vmem:[%s14] sm:$0x1]
        %v3522 = vlaneseq
        %v3523 = vshrl.u32 %v3522, 7
        %v3524 = vsub.s32 0, %v3523
        %v3525 = vrot.slane %v3520, %v3524
        %v3591 = vunpack.c.l.b16 %v3456
        %v3592 = vunpack.c.l.b16 %v3457
        %v3593 = vunpack.c.l.b16 %v3458
        %v3594 = vunpack.c.l.b16 %v3459
        %v3595 = vunpack.c.l.b16 %v3460
        %v3596 = vunpack.c.l.b16 %v3461
        %v3597 = vunpack.c.l.b16 %v3462
        %v3598 = vunpack.c.l.b16 %v3463
        %v3599 = vunpack.c.l.b16 %v3464
        %v3600 = vunpack.c.l.b16 %v3465
        %v3601 = vunpack.c.l.b16 %v3466
        %v3602 = vunpack.c.l.b16 %v3467
        %v3603 = vunpack.c.l.b16 %v3468
        %v3604 = vunpack.c.l.b16 %v3469
        %v3605 = vunpack.c.l.b16 %v3470
        %v3606 = vunpack.c.l.b16 %v3471
        %v3607 = vunpack.c.l.b16 %v3472
        %v3608 = vunpack.c.l.b16 %v3473
        %v3609 = vunpack.c.l.b16 %v3474
        %v3610 = vunpack.c.l.b16 %v3475
        %v3611 = vunpack.c.l.b16 %v3476
        %v3612 = vunpack.c.l.b16 %v3477
        %v3613 = vunpack.c.l.b16 %v3478
        %v3614 = vunpack.c.l.b16 %v3479
        %v3615 = vunpack.c.l.b16 %v3480
        %v3616 = vunpack.c.l.b16 %v3481
        %v3617 = vunpack.c.l.b16 %v3482
        %v3618 = vunpack.c.l.b16 %v3483
        %v3619 = vunpack.c.l.b16 %v3484
        %v3620 = vunpack.c.l.b16 %v3485
        %v3621 = vunpack.c.l.b16 %v3486
        %v3622 = vunpack.c.l.b16 %v3487
        %v3623 = vunpack.c.l.b16 %v3488
        %v3624 = vunpack.c.l.b16 %v3489
        %v3625 = vunpack.c.l.b16 %v3490
        %v3626 = vunpack.c.l.b16 %v3491
        %v3627 = vunpack.c.l.b16 %v3492
        %v3628 = vunpack.c.l.b16 %v3493
        %v3629 = vunpack.c.l.b16 %v3494
        %v3630 = vunpack.c.l.b16 %v3495
        %v3631 = vunpack.c.l.b16 %v3496
        %v3632 = vunpack.c.l.b16 %v3497
        %v3633 = vunpack.c.l.b16 %v3498
        %v3634 = vunpack.c.l.b16 %v3499
        %v3635 = vunpack.c.l.b16 %v3500
        %v3636 = vunpack.c.l.b16 %v3501
        %v3637 = vunpack.c.l.b16 %v3502
        %v3638 = vunpack.c.l.b16 %v3503
        %v3639 = vunpack.c.l.b16 %v3504
        %v3640 = vunpack.c.l.b16 %v3505
        %v3641 = vunpack.c.l.b16 %v3506
        %v3642 = vunpack.c.l.b16 %v3507
        %v3643 = vunpack.c.l.b16 %v3508
        %v3644 = vunpack.c.l.b16 %v3509
        %v3645 = vunpack.c.l.b16 %v3510
        %v3646 = vunpack.c.l.b16 %v3511
        %v3647 = vunpack.c.l.b16 %v3512
        %v3648 = vunpack.c.l.b16 %v3513
        %v3649 = vunpack.c.l.b16 %v3514
        %v3650 = vunpack.c.l.b16 %v3515
        %v3651 = vunpack.c.l.b16 %v3516
        %v3652 = vunpack.c.l.b16 %v3517
        %v3653 = vunpack.c.l.b16 %v3518
        %v3654 = vunpack.c.l.b16 %v3519
        %v3655 = vpack.c.b16 %v3592, %v3591
        %v3656 = vpack.c.b16 %v3594, %v3593
        %v3657 = vpack.c.b16 %v3596, %v3595
        %v3658 = vpack.c.b16 %v3598, %v3597
        %v3659 = vpack.c.b16 %v3600, %v3599
        %v3660 = vpack.c.b16 %v3602, %v3601
        %v3661 = vpack.c.b16 %v3604, %v3603
        %v3662 = vpack.c.b16 %v3606, %v3605
        %v3663 = vpack.c.b16 %v3608, %v3607
        %v3664 = vpack.c.b16 %v3610, %v3609
        %v3665 = vpack.c.b16 %v3612, %v3611
        %v3666 = vpack.c.b16 %v3614, %v3613
        %v3667 = vpack.c.b16 %v3616, %v3615
        %v3668 = vpack.c.b16 %v3618, %v3617
        %v3669 = vpack.c.b16 %v3620, %v3619
        %v3670 = vpack.c.b16 %v3622, %v3621
        %v3671 = vpack.c.b16 %v3624, %v3623
        %v3672 = vpack.c.b16 %v3626, %v3625
        %v3673 = vpack.c.b16 %v3628, %v3627
        %v3674 = vpack.c.b16 %v3630, %v3629
        %v3675 = vpack.c.b16 %v3632, %v3631
        %v3676 = vpack.c.b16 %v3634, %v3633
        %v3677 = vpack.c.b16 %v3636, %v3635
        %v3678 = vpack.c.b16 %v3638, %v3637
        %v3679 = vpack.c.b16 %v3640, %v3639
        %v3680 = vpack.c.b16 %v3642, %v3641
        %v3681 = vpack.c.b16 %v3644, %v3643
        %v3682 = vpack.c.b16 %v3646, %v3645
        %v3683 = vpack.c.b16 %v3648, %v3647
        %v3684 = vpack.c.b16 %v3650, %v3649
        %v3685 = vpack.c.b16 %v3652, %v3651
        %v3686 = vpack.c.b16 %v3654, %v3653
        %3719 = vmatprep.subr.bf16.mxu0 0
        %3720 = vmatpush1.bf16.msra.mxu0 %v3662
        %3721 = vmatprep.subr.bf16.mxu0 0
        %3722 = vmatpush1.bf16.msra.mxu0 %v3661
        %3723 = vmatprep.subr.bf16.mxu0 0
        %3724 = vmatpush1.bf16.msra.mxu0 %v3660
        %3725 = vmatprep.subr.bf16.mxu0 0
        %3726 = vmatpush1.bf16.msra.mxu0 %v3659
        %3727 = vmatprep.subr.bf16.mxu0 0
        %3728 = vmatpush1.bf16.msra.mxu0 %v3658
        %3729 = vmatprep.subr.bf16.mxu0 0
        %3730 = vmatpush1.bf16.msra.mxu0 %v3657
        %3731 = vmatprep.subr.bf16.mxu0 0
        %3732 = vmatpush1.bf16.msra.mxu0 %v3656
        %3733 = vmatprep.subr.bf16.mxu0 0
        %3734 = vmatpush1.bf16.msra.mxu0 %v3655
        %3735 = vmatprep.subr.bf16.mxu0 0
        %3736 = vmatpush2.bf16.msra.mxu0 %v3670
        %3737 = vmatprep.subr.bf16.mxu0 0
        %3738 = vmatpush2.bf16.msra.mxu0 %v3669
        %3739 = vmatprep.subr.bf16.mxu0 0
        %3740 = vmatpush2.bf16.msra.mxu0 %v3668
        %3741 = vmatprep.subr.bf16.mxu0 0
        %3742 = vmatpush2.bf16.msra.mxu0 %v3667
        %3743 = vmatprep.subr.bf16.mxu0 0
        %3744 = vmatpush2.bf16.msra.mxu0 %v3666
        %3745 = vmatprep.subr.bf16.mxu0 0
        %3746 = vmatpush2.bf16.msra.mxu0 %v3665
        %3747 = vmatprep.subr.bf16.mxu0 0
        %3748 = vmatpush2.bf16.msra.mxu0 %v3664
        %3749 = vmatprep.subr.bf16.mxu0 0
        %3750 = vmatpush2.bf16.msra.mxu0 %v3663
        %3751 = vmatprep.mubr.bf16.mxu0 %v3453
        %3752 = vmatmul.mubr.bf16.gmra.mxu0 %v3452
        %v3753 = vpop.f32.mrf.mxu0
        %v3754 = vadd.f32 %v3525, %v3753
        %v3755 = vpop.f32.mrf.mxu0
        %v3756 = vpop.f32.mrf.mxu0
        %v3757 = vpop.f32.mrf.mxu0
        %3758 = vdwg.mxu0
        %3759 = vmatprep.subr.bf16.mxu0 0
        %3760 = vmatpush1.bf16.msra.mxu0 %v3678
        %3761 = vmatprep.subr.bf16.mxu0 0
        %3762 = vmatpush1.bf16.msra.mxu0 %v3677
        %3763 = vmatprep.subr.bf16.mxu0 0
        %3764 = vmatpush1.bf16.msra.mxu0 %v3676
        %3765 = vmatprep.subr.bf16.mxu0 0
        %3766 = vmatpush1.bf16.msra.mxu0 %v3675
        %3767 = vmatprep.subr.bf16.mxu0 0
        %3768 = vmatpush1.bf16.msra.mxu0 %v3674
        %3769 = vmatprep.subr.bf16.mxu0 0
        %3770 = vmatpush1.bf16.msra.mxu0 %v3673
        %3771 = vmatprep.subr.bf16.mxu0 0
        %3772 = vmatpush1.bf16.msra.mxu0 %v3672
        %3773 = vmatprep.subr.bf16.mxu0 0
        %3774 = vmatpush1.bf16.msra.mxu0 %v3671
        %3775 = vmatprep.subr.bf16.mxu0 0
        %3776 = vmatpush2.bf16.msra.mxu0 %v3686
        %3777 = vmatprep.subr.bf16.mxu0 0
        %3778 = vmatpush2.bf16.msra.mxu0 %v3685
        %3779 = vmatprep.subr.bf16.mxu0 0
        %3780 = vmatpush2.bf16.msra.mxu0 %v3684
        %3781 = vmatprep.subr.bf16.mxu0 0
        %3782 = vmatpush2.bf16.msra.mxu0 %v3683
        %3783 = vmatprep.subr.bf16.mxu0 0
        %3784 = vmatpush2.bf16.msra.mxu0 %v3682
        %3785 = vmatprep.subr.bf16.mxu0 0
        %3786 = vmatpush2.bf16.msra.mxu0 %v3681
        %3787 = vmatprep.subr.bf16.mxu0 0
        %3788 = vmatpush2.bf16.msra.mxu0 %v3680
        %3789 = vmatprep.subr.bf16.mxu0 0
        %3790 = vmatpush2.bf16.msra.mxu0 %v3679
        %3791 = vmatprep.mubr.bf16.mxu0 %v3455
        %3792 = vmatmul.mubr.bf16.gmra.mxu0 %v3454
        %v3793 = vpop.f32.mrf.mxu0
        %v3794 = vadd.f32 %v3754, %v3793
        %v3795 = vpop.f32.mrf.mxu0
        %v3796 = vpop.f32.mrf.mxu0
        %v3797 = vpop.f32.mrf.mxu0
        %3798 = vdwg.mxu0
        %v3799 = vadd.f32 %v3122, %v3794
        %3800 = vst [vmem:[%s610] sm:$0xff] %v3799
        %s3801 = sand.u32 %s377, 1
        %s3802 = scalar_lea.sflag [#allocation6], %s3801
        %s3803 = sand.u32 %s377, 1
        %s3804 = smul.addr %s3803, 8
        %s3805 = scalar_lea.vmem [#allocation16], %s3804
        // Predicated region
        $region113: #{tpu_custom_call.1} parent=79 // pred_check
          %p3806 = pneg %p387
        $region114: #{tpu_custom_call.1} parent=79 // pred_check_branch
          %3808 = sbr.rel (%p3806) target = $region116
        $region115: #{tpu_custom_call.1} parent=79 // pred_region
          %s3810 = ssub.s32 128, 128
          %3811 = vsyncadd %s3802, %s3810
          %s3812 = sadd.s32 %s40, %s39
          %s3813 = smul.addr %s3812, 128
          %s3814 = scalar_lea.hbm %s15, %s3813
          %s3816 = sshll.u32 %s3805, 4
          %s3817 = int_to_ptr.vmem [resolvable:$true] %s3816
          %3819 = dma.vmem_to_hbm [thread:$0]  %s3817, 128, %s3814, %s3802
        $region116: #{tpu_custom_call.1} parent=79 // pred_fallthru
          _
      $region80: #{tpu_custom_call.1} parent=5 // pred_fallthru
        _
      %p3820 = scmp.le.s32.totalorder 2, %s30
      // Predicated region
      $region117: #{tpu_custom_call.1} parent=5 // pred_check
        %p3821 = pneg %p3820
      $region118: #{tpu_custom_call.1} parent=5 // pred_check_branch
        %3823 = sbr.rel (%p3821) target = $region120
      $region119: #{tpu_custom_call.1} parent=5 // pred_region
        %s3824 = ssub.s32 %s30, 2
        // Predicated region
        $region121: #{tpu_custom_call.1} parent=119 // pred_check
          %p3825 = pneg %p393
        $region122: #{tpu_custom_call.1} parent=119 // pred_check_branch
          %3827 = sbr.rel (%p3825) target = $region124
        $region123: #{tpu_custom_call.1} parent=119 // pred_region
          %s3828 = sand.u32 %s378, 1
          %s3829 = scalar_lea.sflag [#allocation6], %s3828
          %s3830 = sand.u32 %s378, 1
          %s3831 = smul.addr %s3830, 8
          %s3832 = scalar_lea.vmem [#allocation16], %s3831
          %3833 = dma.done %s3829, 128
        $region124: #{tpu_custom_call.1} parent=119 // pred_fallthru
          _
      $region120: #{tpu_custom_call.1} parent=5 // pred_fallthru
        _
    $region6: #{tpu_custom_call.1} parent=1 // loop_footer
      %s34 = sadd.s32 1, %s30
    $region7: #{tpu_custom_call.1} parent=1 // loop_footer_branch
      %29 = sbr.rel target = $region3
    $region8: #{tpu_custom_call.1} parent=1 // loop_exit
      _
    %3834 = vsyncpa [#allocation5], 1
    %s3835 = scalar_lea.sflag [#allocation5], 1
    %3836 = vsyncpa %s3835, 1
    %3837 = vsyncpa [#allocation8], 1
    %3838 = vsyncpa [#allocation11], 1
    %3839 = vsyncpa [#allocation14], 1
    %3840 = vsyncpa [#allocation6], 1
    %s3841 = scalar_lea.sflag [#allocation6], 1
    %3842 = vsyncpa %s3841, 1

</llo_original>
